<compile_context>
chip_gen: v7x
topology: tpu7x:2x2x1
jax: 0.10.0
libtpu: 0.0.40
codegen_flags: <defaults>
</compile_context>

<pallas_src>
import jax
import jax.numpy as jnp
import numpy as np
from jax.experimental import pallas as pl
from jax.experimental.pallas import tpu as pltpu

# ----------------------------- configuration ------------------------------
DIM = 32                      # channels
HEADS = 4
HEAD_DIM = 16
INNER = HEADS * HEAD_DIM      # 64
HIDDEN = int(DIM * 1.0)       # res_expansion = 1.0  (HIDDEN == DIM, needed for packing)
SCALE = HEAD_DIM ** (-0.5)
BN_EPS = 1e-5
XYZ_C = 3                     # xyz coordinate channels
XYZ_PAD = 8                   # padded to a full sublane tile
ONES_ROW = 3                  # padded xyz row that carries the folded pos-embed bias
TQ_MAX = 512                  # q-tile size cap (bounds the [H, TQ, N] score tensor)

# row offsets inside the packed main weight slab [3*INNER + DIM + HIDDEN + DIM, DIM]
_OFF_QKV = 0
_OFF_WP2 = _OFF_QKV + 3 * INNER      # 192
_OFF_W1 = _OFF_WP2 + DIM             # 224
_OFF_W2 = _OFF_W1 + HIDDEN           # 256
_W_ROWS = _OFF_W2 + DIM              # 288


# ------------------------------ Pallas kernel ------------------------------
def pos_extraction_kernel(
    x_ref,      # [DIM, Bt*N]        bf16   (channels-first lane slab)
    xyz_ref,    # [Bt, 8, N]         f32    (rows 0..2 coords, row 3 ones, 4..7 zero)
    wmain_ref,  # [288, DIM]         bf16   (wqkv | wp2 | w1 | w2, BN folded)
    wp1_ref,    # [HIDDEN, 8]        bf16   (pos-embed conv1, BN + bias folded)
    wout_ref,   # [DIM, INNER]       bf16
    bias_ref,   # [DIM, 8]           f32    (cols: bp2, bout, b1, b2, 0...)
    o_ref,      # [DIM, Bt*N]        f32
):
    bt, _, n = xyz_ref.shape
    l = bt * n

    x = x_ref[...].astype(jnp.float32)                               # [D, L]

    wm = wmain_ref[...]
    wqkv = wm[_OFF_QKV:_OFF_WP2]                                     # [192, D]
    wp2 = wm[_OFF_WP2:_OFF_W1]                                       # [D, D]
    w1 = wm[_OFF_W1:_OFF_W2]                                         # [H, D]
    w2 = wm[_OFF_W2:_W_ROWS]                                         # [D, H]

    bias = bias_ref[...]                                             # [D, 8]
    bp2 = bias[:, 0:1]
    bout = bias[:, 1:2]
    b1 = bias[:, 2:3]
    b2 = bias[:, 3:4]

    # ---- per-batch xyz normalization over the point axis (faithful to the
    #      module's swapped `mean, std = torch.std_mean(...)`), flattened into
    #      the [8, Bt*N] lane slab. Constant padding rows map to ~1 / exactly 0.
    xyz_cols = []
    for b in range(bt):
        xb = xyz_ref[b]                                              # [8, N] f32
        mu = jnp.mean(xb, axis=-1, keepdims=True)                    # true mean
        var = jnp.sum((xb - mu) ** 2, axis=-1, keepdims=True) / (n - 1)
        sd = jnp.sqrt(var)                                           # unbiased std
        xyz_cols.append(((xb - sd) / (mu + 1e-5)).astype(jnp.bfloat16))
    xyz_n = xyz_cols[0] if bt == 1 else jnp.concatenate(xyz_cols, axis=-1)   # [8, L]

    # ---- position embedding: two folded Conv+BN+ReLU (1x1); conv1 bias rides
    #      in the ones row of the padded xyz slab.
    p1 = jnp.maximum(jnp.dot(wp1_ref[...], xyz_n,
                             preferred_element_type=jnp.float32), 0.0)       # [H, L]
    pos = jnp.maximum(jnp.dot(wp2, p1.astype(jnp.bfloat16),
                              preferred_element_type=jnp.float32) + bp2, 0.0)
    x = x + pos                                                              # [D, L]

    # ---- multi-head attention ----
    qkv = jnp.dot(wqkv, x.astype(jnp.bfloat16),
                  preferred_element_type=jnp.float32)                        # [192, L]
    qkv16 = qkv.astype(jnp.bfloat16)       # cast once, before any relayout

    tq = min(n, TQ_MAX)
    while n % tq:                          # n is a multiple of 128 -> terminates
        tq -= 128

    head_cols = []
    for b in range(bt):                    # Bt <= 8, statically unrolled; 128-aligned views
        sl = qkv16[:, b * n:(b + 1) * n]                                     # [192, N]
        q = sl[0 * INNER:1 * INNER].reshape(HEADS, HEAD_DIM, n)              # [h, d, j]
        k = sl[1 * INNER:2 * INNER].reshape(HEADS, HEAD_DIM, n)
        v = sl[2 * INNER:3 * INNER].reshape(HEADS, HEAD_DIM, n)
        q_t = jnp.swapaxes(q, 1, 2)                                          # [h, i, d] (bf16)

        ho_tiles = []
        for t in range(n // tq):           # q-tiling caps the score tensor at [h, tq, n]
            qt = q_t[:, t * tq:(t + 1) * tq, :]
            s = jnp.einsum('hid,hdj->hij', qt, k,
                           preferred_element_type=jnp.float32) * SCALE       # [h, tq, n]
            s = s - jnp.max(s, axis=-1, keepdims=True)
            p = jnp.exp(s)
            a = p * pl.reciprocal(jnp.sum(p, axis=-1, keepdims=True), approx=True)
            ho_tiles.append(jnp.einsum('hdj,hij->hdi', v, a.astype(jnp.bfloat16),
                                       preferred_element_type=jnp.float32))  # [h, d, tq]
        ho = ho_tiles[0] if len(ho_tiles) == 1 else jnp.concatenate(ho_tiles, axis=-1)
        head_cols.append(ho.astype(jnp.bfloat16).reshape(INNER, n))          # channel = h*d_hd + d
    head_out = head_cols[0] if bt == 1 else jnp.concatenate(head_cols, axis=-1)  # [INNER, L]

    att = jnp.dot(wout_ref[...], head_out,
                  preferred_element_type=jnp.float32) + bout                 # [D, L]
    att = jnp.maximum(att + x, 0.0)                                          # residual + ReLU

    # ---- FFN: Conv1+BN1(folded)+ReLU -> Conv2(+bias)+BN2(folded) ----
    h1 = jnp.maximum(jnp.dot(w1, att.astype(jnp.bfloat16),
                             preferred_element_type=jnp.float32) + b1, 0.0)
    f2 = jnp.dot(w2, h1.astype(jnp.bfloat16),
                 preferred_element_type=jnp.float32) + b2

    o_ref[...] = jnp.maximum(att + f2, 0.0)                                  # residual + ReLU


# ------------------------------ wrapper ------------------------------------
def _choose_bt(batch, n):
    """Largest divisor of `batch` that gives ~1024-lane slabs, while keeping
    >=2 grid steps (v7x megacore) whenever the batch allows it."""
    target = max(1, 1024 // n)
    bt = 1
    for d in range(1, batch + 1):
        if batch % d == 0 and d <= target:
            bt = d
    if batch // bt < 2:
        for d in range(bt - 1, 0, -1):
            if batch % d == 0 and batch // d >= 2:
                bt = d
                break
    return bt


@jax.jit
def pos_extraction(x, xyz, kparams):
    """x: [B, D, N] (PyTorch Conv1d layout), xyz: [B, N, 3]. Returns [B, D, N] f32."""
    B, D, N = x.shape
    assert D == DIM
    assert N % 128 == 0, "N must be a multiple of 128 so all blocks stay lane-dense"
    bt = _choose_bt(B, N)
    grid = B // bt
    L = bt * N

    # channels-first lane slab, bf16 over HBM: points*batch on the 128-lane axis.
    x_slab = jnp.transpose(x, (1, 0, 2)).reshape(DIM, B * N).astype(jnp.bfloat16)

    # xyz -> [B, 8, N]: rows 0..2 coords, row 3 ones (carries the folded
    # pos-embed conv1 bias), rows 4..7 zero.
    xyz_cn = jnp.transpose(xyz, (0, 2, 1)).astype(jnp.float32)               # [B, 3, N]
    ones = jnp.ones((B, 1, N), jnp.float32)
    zeros = jnp.zeros((B, XYZ_PAD - XYZ_C - 1, N), jnp.float32)
    xyz_p = jnp.concatenate([xyz_cn, ones, zeros], axis=1)                   # [B, 8, N]

    w_main, wp1b, wout, bias = kparams

    full = lambda a: pl.BlockSpec(a.shape, lambda i, nd=a.ndim: (0,) * nd)

    flops = (2 * B * N * (HIDDEN * XYZ_PAD + DIM * HIDDEN + 3 * INNER * DIM
                          + DIM * INNER + HIDDEN * DIM + DIM * HIDDEN)
             + 4 * B * HEADS * N * N * HEAD_DIM)
    bytes_accessed = (B * DIM * N * (2 + 4) + B * XYZ_PAD * N * 4
                      + sum(int(np.prod(a.shape)) * a.dtype.itemsize for a in kparams))
    cost = pl.CostEstimate(flops=int(flops),
                           transcendentals=int(B * HEADS * N * N),
                           bytes_accessed=int(bytes_accessed))

    out_slab = pl.pallas_call(
        pos_extraction_kernel,
        out_shape=jax.ShapeDtypeStruct((DIM, B * N), jnp.float32),
        grid_spec=pltpu.PrefetchScalarGridSpec(
            num_scalar_prefetch=0,
            grid=(grid,),
            in_specs=[
                pl.BlockSpec((DIM, L), lambda i: (0, i)),            # x slab
                pl.BlockSpec((bt, XYZ_PAD, N), lambda i: (i, 0, 0)),  # xyz
                full(w_main), full(wp1b), full(wout), full(bias),
            ],
            out_specs=pl.BlockSpec((DIM, L), lambda i: (0, i)),
        ),
        compiler_params=pltpu.CompilerParams(
            dimension_semantics=("parallel",)),
        cost_estimate=cost,
    )(x_slab, xyz_p, w_main, wp1b, wout, bias)

    return jnp.transpose(out_slab.reshape(DIM, B, N), (1, 0, 2))


# -------------------------- parameter construction -------------------------
def make_raw_params(key):
    ks = jax.random.split(key, 15)
    s = 0.1
    nrm = lambda k, shape: s * jax.random.normal(k, shape, jnp.float32)

    def bn(k, c):
        k1, k2, k3, k4 = jax.random.split(k, 4)
        gamma = 1.0 + s * jax.random.normal(k1, (c,), jnp.float32)
        beta = s * jax.random.normal(k2, (c,), jnp.float32)
        rmean = s * jax.random.normal(k3, (c,), jnp.float32)
        rvar = jax.random.uniform(k4, (c,), jnp.float32, 0.5, 1.5)
        return gamma, beta, rmean, rvar

    return dict(
        wp1=nrm(ks[0], (HIDDEN, XYZ_C)), bp1=nrm(ks[1], (HIDDEN,)), bnp1=bn(ks[2], HIDDEN),
        wp2=nrm(ks[3], (DIM, HIDDEN)),   bp2=nrm(ks[4], (DIM,)),    bnp2=bn(ks[5], DIM),
        wqkv=nrm(ks[6], (3 * INNER, DIM)),
        wout=nrm(ks[7], (DIM, INNER)),   bout=nrm(ks[8], (DIM,)),
        w1=nrm(ks[9], (HIDDEN, DIM)),    b1=nrm(ks[10], (HIDDEN,)), bn1=bn(ks[11], HIDDEN),
        w2=nrm(ks[12], (DIM, HIDDEN)),   b2=nrm(ks[13], (DIM,)),    bn2=bn(ks[14], DIM),
    )


def fold_conv_bn(w, b, stats):
    """Fold eval-mode BatchNorm1d into a preceding 1x1 Conv1d."""
    gamma, beta, rmean, rvar = stats
    scale = gamma / jnp.sqrt(rvar + BN_EPS)
    return w * scale[:, None], b * scale + (beta - rmean * scale)


def prepare_kernel_params(raw):
    """BN folding + packing: one bf16 [288,32] weight slab, pos-embed conv1
    weight (bias folded via the ones row), attention output weight, and one
    f32 [32,8] bias slab -> 4 operands instead of 11."""
    assert HIDDEN == DIM, "weight-slab packing assumes res_expansion == 1.0"
    wp1, bp1 = fold_conv_bn(raw['wp1'], raw['bp1'], raw['bnp1'])
    wp2, bp2 = fold_conv_bn(raw['wp2'], raw['bp2'], raw['bnp2'])
    w1, b1 = fold_conv_bn(raw['w1'], raw['b1'], raw['bn1'])
    w2, b2 = fold_conv_bn(raw['w2'], raw['b2'], raw['bn2'])

    wp1b = jnp.zeros((HIDDEN, XYZ_PAD), jnp.float32)
    wp1b = wp1b.at[:, :XYZ_C].set(wp1)
    # the ones row normalizes to 1/(1+1e-5) inside the kernel; compensate so the
    # extra weight column contributes exactly bp1.
    wp1b = wp1b.at[:, ONES_ROW].set(bp1 * (1.0 + 1e-5))

    w_main = jnp.concatenate([raw['wqkv'], wp2, w1, w2], axis=0)     # [288, 32]

    bias = jnp.zeros((DIM, 8), jnp.float32)
    bias = bias.at[:, 0].set(bp2)
    bias = bias.at[:, 1].set(raw['bout'])
    bias = bias.at[:, 2].set(b1)
    bias = bias.at[:, 3].set(b2)

    return (w_main.astype(jnp.bfloat16), wp1b.astype(jnp.bfloat16),
            raw['wout'].astype(jnp.bfloat16), bias)


# ----------------------------- pure-JAX reference ---------------------------
def reference(x, xyz, raw):
    """f32 reference of PosExtraction.forward (eval mode, un-folded params)."""
    # torch.std_mean returns (std, mean); the module assigns them to (mean, std).
    sd = jnp.std(xyz, axis=1, keepdims=True, ddof=1)
    mu = jnp.mean(xyz, axis=1, keepdims=True)
    xyz_n = (xyz - sd) / (mu + 1e-5)
    xyz_cn = jnp.transpose(xyz_n, (0, 2, 1))                         # [B, 3, N]

    def conv1x1(t, w, b=None):
        y = jnp.einsum('oc,bcn->bon', w, t)
        return y if b is None else y + b[None, :, None]

    def bn(t, stats):
        gamma, beta, rmean, rvar = stats
        inv = gamma / jnp.sqrt(rvar + BN_EPS)
        return (t - rmean[None, :, None]) * inv[None, :, None] + beta[None, :, None]

    pos = jnp.maximum(bn(conv1x1(xyz_cn, raw['wp1'], raw['bp1']), raw['bnp1']), 0.0)
    pos = jnp.maximum(bn(conv1x1(pos, raw['wp2'], raw['bp2']), raw['bnp2']), 0.0)
    x = x + pos

    qkv = conv1x1(x, raw['wqkv'])                                    # [B, 3*INNER, N]
    q, k, v = jnp.split(qkv, 3, axis=1)
    B, _, N = x.shape
    heads = lambda t: t.reshape(B, HEADS, HEAD_DIM, N)
    q, k, v = map(heads, (q, k, v))
    smi = jnp.einsum('bhdi,bhdj->bhij', q, k) * SCALE
    attn = jax.nn.softmax(smi, axis=-1)
    o = jnp.einsum('bhij,bhdj->bhdi', attn, v).reshape(B, INNER, N)
    att = conv1x1(o, raw['wout'], raw['bout'])
    att = jnp.maximum(att + x, 0.0)

    h1 = jnp.maximum(bn(conv1x1(att, raw['w1'], raw['b1']), raw['bn1']), 0.0)
    f2 = bn(conv1x1(h1, raw['w2'], raw['b2']), raw['bn2'])
    return jnp.maximum(att + f2, 0.0)


# ---------------------------------- main ------------------------------------
if __name__ == "__main__":
    key = jax.random.PRNGKey(0)
    kx, kxyz, kp = jax.random.split(key, 3)

    B, N = 8, 128                      # -> Bt=4, grid=(2,) "parallel", 512-lane slabs
    x = jax.random.normal(kx, (B, DIM, N), jnp.float32)              # [B, D, N]
    xyz = jax.random.uniform(kxyz, (B, N, XYZ_C), jnp.float32)       # coords in [0, 1)

    raw = make_raw_params(kp)
    kparams = prepare_kernel_params(raw)

    out = pos_extraction(x, xyz, kparams)
    out = jax.block_until_ready(out)

    ref = reference(x, xyz, raw)
    # bf16 HBM activations + bf16 MXU operands + EUP approx reciprocal
    # vs. the all-f32 reference.
    np.testing.assert_allclose(np.asarray(out), np.asarray(ref),
                               rtol=2e-2, atol=3e-2)

    print("KERNEL_OK")
</pallas_src>

<mosaic_0001>
module attributes {stable_mosaic.version = 11 : i64} {
  func.func @pos_extraction_kernel(%arg0: i32, %arg1: memref<32x512xbf16, #tpu.memory_space<vmem>>, %arg2: memref<4x8x128xf32, #tpu.memory_space<vmem>>, %arg3: memref<288x32xbf16, #tpu.memory_space<vmem>>, %arg4: memref<32x8xbf16, #tpu.memory_space<vmem>>, %arg5: memref<32x64xbf16, #tpu.memory_space<vmem>>, %arg6: memref<32x8xf32, #tpu.memory_space<vmem>>, %arg7: memref<32x512xf32, #tpu.memory_space<vmem>>) attributes {dimension_semantics = [#tpu.dimension_semantics<parallel>], iteration_bounds = array<i64: 2>, scalar_prefetch = 0 : i64, scratch_operands = 0 : i64, tpu.core_type = #tpu.core_type<tc>, window_params = [{transform_indices = @transform_0, window_bounds = array<i64: 32, 512>}, {transform_indices = @transform_1, window_bounds = array<i64: 4, 8, 128>}, {pipeline_mode = #tpu.pipeline_mode<synchronous>, transform_indices = @transform_2, window_bounds = array<i64: 288, 32>}, {pipeline_mode = #tpu.pipeline_mode<synchronous>, transform_indices = @transform_3, window_bounds = array<i64: 32, 8>}, {pipeline_mode = #tpu.pipeline_mode<synchronous>, transform_indices = @transform_4, window_bounds = array<i64: 32, 64>}, {pipeline_mode = #tpu.pipeline_mode<synchronous>, transform_indices = @transform_5, window_bounds = array<i64: 32, 8>}, {transform_indices = @transform_6, window_bounds = array<i64: 32, 512>}]} {
    %c0 = arith.constant 0 : index
    %c0_0 = arith.constant 0 : index
    %0 = vector.load %arg1[%c0, %c0_0] : memref<32x512xbf16, #tpu.memory_space<vmem>>, vector<32x512xbf16>
    %1 = arith.extf %0 : vector<32x512xbf16> to vector<32x512xf32>
    %c0_1 = arith.constant 0 : index
    %c0_2 = arith.constant 0 : index
    %2 = vector.load %arg3[%c0_1, %c0_2] : memref<288x32xbf16, #tpu.memory_space<vmem>>, vector<288x32xbf16>
    %3 = vector.extract_strided_slice %2 {offsets = [0, 0], sizes = [192, 32], strides = [1, 1]} : vector<288x32xbf16> to vector<192x32xbf16>
    %4 = vector.extract_strided_slice %2 {offsets = [192, 0], sizes = [32, 32], strides = [1, 1]} : vector<288x32xbf16> to vector<32x32xbf16>
    %5 = vector.extract_strided_slice %2 {offsets = [224, 0], sizes = [32, 32], strides = [1, 1]} : vector<288x32xbf16> to vector<32x32xbf16>
    %6 = vector.extract_strided_slice %2 {offsets = [256, 0], sizes = [32, 32], strides = [1, 1]} : vector<288x32xbf16> to vector<32x32xbf16>
    %c0_3 = arith.constant 0 : index
    %c0_4 = arith.constant 0 : index
    %7 = vector.load %arg6[%c0_3, %c0_4] : memref<32x8xf32, #tpu.memory_space<vmem>>, vector<32x8xf32>
    %8 = vector.extract_strided_slice %7 {offsets = [0, 0], sizes = [32, 1], strides = [1, 1]} : vector<32x8xf32> to vector<32x1xf32>
    %9 = vector.extract_strided_slice %7 {offsets = [0, 1], sizes = [32, 1], strides = [1, 1]} : vector<32x8xf32> to vector<32x1xf32>
    %10 = vector.extract_strided_slice %7 {offsets = [0, 2], sizes = [32, 1], strides = [1, 1]} : vector<32x8xf32> to vector<32x1xf32>
    %11 = vector.extract_strided_slice %7 {offsets = [0, 3], sizes = [32, 1], strides = [1, 1]} : vector<32x8xf32> to vector<32x1xf32>
    %c0_5 = arith.constant 0 : index
    %c0_6 = arith.constant 0 : index
    %c0_7 = arith.constant 0 : index
    %12 = vector.load %arg2[%c0_5, %c0_6, %c0_7] : memref<4x8x128xf32, #tpu.memory_space<vmem>>, vector<1x8x128xf32>
    %13 = vector.shape_cast %12 : vector<1x8x128xf32> to vector<8x128xf32>
    %cst = arith.constant dense<0.000000e+00> : vector<8xf32>
    %14 = vector.multi_reduction <add>, %13, %cst [1] : vector<8x128xf32> to vector<8xf32>
    %15 = vector.shape_cast %14 : vector<8xf32> to vector<8x1xf32>
    %cst_8 = arith.constant 1.280000e+02 : f32
    %16 = vector.broadcast %cst_8 : f32 to vector<8x1xf32>
    %17 = arith.divf %15, %16 : vector<8x1xf32>
    %18 = vector.broadcast %17 : vector<8x1xf32> to vector<8x128xf32>
    %19 = arith.subf %13, %18 : vector<8x128xf32>
    %20 = arith.mulf %19, %19 : vector<8x128xf32>
    %cst_9 = arith.constant dense<0.000000e+00> : vector<8xf32>
    %21 = vector.multi_reduction <add>, %20, %cst_9 [1] : vector<8x128xf32> to vector<8xf32>
    %22 = vector.shape_cast %21 : vector<8xf32> to vector<8x1xf32>
    %cst_10 = arith.constant 1.270000e+02 : f32
    %23 = vector.broadcast %cst_10 : f32 to vector<8x1xf32>
    %24 = arith.divf %22, %23 : vector<8x1xf32>
    %25 = math.sqrt %24 : vector<8x1xf32>
    %26 = vector.broadcast %25 : vector<8x1xf32> to vector<8x128xf32>
    %27 = arith.subf %13, %26 : vector<8x128xf32>
    %cst_11 = arith.constant 9.99999974E-6 : f32
    %28 = vector.broadcast %cst_11 : f32 to vector<8x1xf32>
    %29 = arith.addf %17, %28 : vector<8x1xf32>
    %30 = vector.broadcast %29 : vector<8x1xf32> to vector<8x128xf32>
    %31 = arith.divf %27, %30 : vector<8x128xf32>
    %32 = arith.truncf %31 : vector<8x128xf32> to vector<8x128xbf16>
    %c1 = arith.constant 1 : index
    %c0_12 = arith.constant 0 : index
    %c0_13 = arith.constant 0 : index
    %33 = vector.load %arg2[%c1, %c0_12, %c0_13] : memref<4x8x128xf32, #tpu.memory_space<vmem>>, vector<1x8x128xf32>
    %34 = vector.shape_cast %33 : vector<1x8x128xf32> to vector<8x128xf32>
    %cst_14 = arith.constant dense<0.000000e+00> : vector<8xf32>
    %35 = vector.multi_reduction <add>, %34, %cst_14 [1] : vector<8x128xf32> to vector<8xf32>
    %36 = vector.shape_cast %35 : vector<8xf32> to vector<8x1xf32>
    %cst_15 = arith.constant 1.280000e+02 : f32
    %37 = vector.broadcast %cst_15 : f32 to vector<8x1xf32>
    %38 = arith.divf %36, %37 : vector<8x1xf32>
    %39 = vector.broadcast %38 : vector<8x1xf32> to vector<8x128xf32>
    %40 = arith.subf %34, %39 : vector<8x128xf32>
    %41 = arith.mulf %40, %40 : vector<8x128xf32>
    %cst_16 = arith.constant dense<0.000000e+00> : vector<8xf32>
    %42 = vector.multi_reduction <add>, %41, %cst_16 [1] : vector<8x128xf32> to vector<8xf32>
    %43 = vector.shape_cast %42 : vector<8xf32> to vector<8x1xf32>
    %cst_17 = arith.constant 1.270000e+02 : f32
    %44 = vector.broadcast %cst_17 : f32 to vector<8x1xf32>
    %45 = arith.divf %43, %44 : vector<8x1xf32>
    %46 = math.sqrt %45 : vector<8x1xf32>
    %47 = vector.broadcast %46 : vector<8x1xf32> to vector<8x128xf32>
    %48 = arith.subf %34, %47 : vector<8x128xf32>
    %cst_18 = arith.constant 9.99999974E-6 : f32
    %49 = vector.broadcast %cst_18 : f32 to vector<8x1xf32>
    %50 = arith.addf %38, %49 : vector<8x1xf32>
    %51 = vector.broadcast %50 : vector<8x1xf32> to vector<8x128xf32>
    %52 = arith.divf %48, %51 : vector<8x128xf32>
    %53 = arith.truncf %52 : vector<8x128xf32> to vector<8x128xbf16>
    %c2 = arith.constant 2 : index
    %c0_19 = arith.constant 0 : index
    %c0_20 = arith.constant 0 : index
    %54 = vector.load %arg2[%c2, %c0_19, %c0_20] : memref<4x8x128xf32, #tpu.memory_space<vmem>>, vector<1x8x128xf32>
    %55 = vector.shape_cast %54 : vector<1x8x128xf32> to vector<8x128xf32>
    %cst_21 = arith.constant dense<0.000000e+00> : vector<8xf32>
    %56 = vector.multi_reduction <add>, %55, %cst_21 [1] : vector<8x128xf32> to vector<8xf32>
    %57 = vector.shape_cast %56 : vector<8xf32> to vector<8x1xf32>
    %cst_22 = arith.constant 1.280000e+02 : f32
    %58 = vector.broadcast %cst_22 : f32 to vector<8x1xf32>
    %59 = arith.divf %57, %58 : vector<8x1xf32>
    %60 = vector.broadcast %59 : vector<8x1xf32> to vector<8x128xf32>
    %61 = arith.subf %55, %60 : vector<8x128xf32>
    %62 = arith.mulf %61, %61 : vector<8x128xf32>
    %cst_23 = arith.constant dense<0.000000e+00> : vector<8xf32>
    %63 = vector.multi_reduction <add>, %62, %cst_23 [1] : vector<8x128xf32> to vector<8xf32>
    %64 = vector.shape_cast %63 : vector<8xf32> to vector<8x1xf32>
    %cst_24 = arith.constant 1.270000e+02 : f32
    %65 = vector.broadcast %cst_24 : f32 to vector<8x1xf32>
    %66 = arith.divf %64, %65 : vector<8x1xf32>
    %67 = math.sqrt %66 : vector<8x1xf32>
    %68 = vector.broadcast %67 : vector<8x1xf32> to vector<8x128xf32>
    %69 = arith.subf %55, %68 : vector<8x128xf32>
    %cst_25 = arith.constant 9.99999974E-6 : f32
    %70 = vector.broadcast %cst_25 : f32 to vector<8x1xf32>
    %71 = arith.addf %59, %70 : vector<8x1xf32>
    %72 = vector.broadcast %71 : vector<8x1xf32> to vector<8x128xf32>
    %73 = arith.divf %69, %72 : vector<8x128xf32>
    %74 = arith.truncf %73 : vector<8x128xf32> to vector<8x128xbf16>
    %c3 = arith.constant 3 : index
    %c0_26 = arith.constant 0 : index
    %c0_27 = arith.constant 0 : index
    %75 = vector.load %arg2[%c3, %c0_26, %c0_27] : memref<4x8x128xf32, #tpu.memory_space<vmem>>, vector<1x8x128xf32>
    %76 = vector.shape_cast %75 : vector<1x8x128xf32> to vector<8x128xf32>
    %cst_28 = arith.constant dense<0.000000e+00> : vector<8xf32>
    %77 = vector.multi_reduction <add>, %76, %cst_28 [1] : vector<8x128xf32> to vector<8xf32>
    %78 = vector.shape_cast %77 : vector<8xf32> to vector<8x1xf32>
    %cst_29 = arith.constant 1.280000e+02 : f32
    %79 = vector.broadcast %cst_29 : f32 to vector<8x1xf32>
    %80 = arith.divf %78, %79 : vector<8x1xf32>
    %81 = vector.broadcast %80 : vector<8x1xf32> to vector<8x128xf32>
    %82 = arith.subf %76, %81 : vector<8x128xf32>
    %83 = arith.mulf %82, %82 : vector<8x128xf32>
    %cst_30 = arith.constant dense<0.000000e+00> : vector<8xf32>
    %84 = vector.multi_reduction <add>, %83, %cst_30 [1] : vector<8x128xf32> to vector<8xf32>
    %85 = vector.shape_cast %84 : vector<8xf32> to vector<8x1xf32>
    %cst_31 = arith.constant 1.270000e+02 : f32
    %86 = vector.broadcast %cst_31 : f32 to vector<8x1xf32>
    %87 = arith.divf %85, %86 : vector<8x1xf32>
    %88 = math.sqrt %87 : vector<8x1xf32>
    %89 = vector.broadcast %88 : vector<8x1xf32> to vector<8x128xf32>
    %90 = arith.subf %76, %89 : vector<8x128xf32>
    %cst_32 = arith.constant 9.99999974E-6 : f32
    %91 = vector.broadcast %cst_32 : f32 to vector<8x1xf32>
    %92 = arith.addf %80, %91 : vector<8x1xf32>
    %93 = vector.broadcast %92 : vector<8x1xf32> to vector<8x128xf32>
    %94 = arith.divf %90, %93 : vector<8x128xf32>
    %95 = arith.truncf %94 : vector<8x128xf32> to vector<8x128xbf16>
    %96 = tpu.concatenate %32, %53, %74, %95 in 1 : vector<8x128xbf16>, vector<8x128xbf16>, vector<8x128xbf16>, vector<8x128xbf16> -> vector<8x512xbf16>
    %c0_33 = arith.constant 0 : index
    %c0_34 = arith.constant 0 : index
    %97 = vector.load %arg4[%c0_33, %c0_34] : memref<32x8xbf16, #tpu.memory_space<vmem>>, vector<32x8xbf16>
    %cst_35 = arith.constant dense<0.000000e+00> : vector<32x512xf32>
    %98 = tpu.matmul %97, %96, %cst_35 {dimension_numbers = #tpu.dot_dimension_numbers<[1], [0], [0], [1], [0, 0, 1, 1], [], []>} : vector<32x8xbf16>, vector<8x512xbf16>, vector<32x512xf32> -> vector<32x512xf32>
    %cst_36 = arith.constant 0.000000e+00 : f32
    %99 = vector.broadcast %cst_36 : f32 to vector<32x512xf32>
    %100 = arith.maximumf %98, %99 : vector<32x512xf32>
    %101 = arith.truncf %100 : vector<32x512xf32> to vector<32x512xbf16>
    %cst_37 = arith.constant dense<0.000000e+00> : vector<32x512xf32>
    %102 = tpu.matmul %4, %101, %cst_37 {dimension_numbers = #tpu.dot_dimension_numbers<[1], [0], [0], [1], [0, 0, 1, 1], [], []>} : vector<32x32xbf16>, vector<32x512xbf16>, vector<32x512xf32> -> vector<32x512xf32>
    %103 = vector.broadcast %8 : vector<32x1xf32> to vector<32x512xf32>
    %104 = arith.addf %102, %103 : vector<32x512xf32>
    %cst_38 = arith.constant 0.000000e+00 : f32
    %105 = vector.broadcast %cst_38 : f32 to vector<32x512xf32>
    %106 = arith.maximumf %104, %105 : vector<32x512xf32>
    %107 = arith.addf %1, %106 : vector<32x512xf32>
    %108 = arith.truncf %107 : vector<32x512xf32> to vector<32x512xbf16>
    %cst_39 = arith.constant dense<0.000000e+00> : vector<192x512xf32>
    %109 = tpu.matmul %3, %108, %cst_39 {dimension_numbers = #tpu.dot_dimension_numbers<[1], [0], [0], [1], [0, 0, 1, 1], [], []>} : vector<192x32xbf16>, vector<32x512xbf16>, vector<192x512xf32> -> vector<192x512xf32>
    %110 = arith.truncf %109 : vector<192x512xf32> to vector<192x512xbf16>
    %111 = vector.extract_strided_slice %110 {offsets = [0, 0], sizes = [192, 128], strides = [1, 1]} : vector<192x512xbf16> to vector<192x128xbf16>
    %112 = vector.extract_strided_slice %111 {offsets = [0, 0], sizes = [64, 128], strides = [1, 1]} : vector<192x128xbf16> to vector<64x128xbf16>
    %113 = vector.shape_cast %112 : vector<64x128xbf16> to vector<4x16x128xbf16>
    %114 = vector.extract_strided_slice %111 {offsets = [64, 0], sizes = [64, 128], strides = [1, 1]} : vector<192x128xbf16> to vector<64x128xbf16>
    %115 = vector.shape_cast %114 : vector<64x128xbf16> to vector<4x16x128xbf16>
    %116 = vector.extract_strided_slice %111 {offsets = [128, 0], sizes = [64, 128], strides = [1, 1]} : vector<192x128xbf16> to vector<64x128xbf16>
    %117 = vector.shape_cast %116 : vector<64x128xbf16> to vector<4x16x128xbf16>
    %118 = tpu.transpose %113, [0, 2, 1] : vector<4x16x128xbf16> -> vector<4x128x16xbf16>
    "tpu.trace_start"() <{level = 10 : i32, message = "hid,hdj->hij"}> : () -> ()
    %cst_40 = arith.constant dense<0.000000e+00> : vector<4x128x128xf32>
    %119 = tpu.matmul %118, %115, %cst_40 {dimension_numbers = #tpu.dot_dimension_numbers<[2], [1], [1], [2], [0, 0, 0, 1, 1, 2], [0], [0]>} : vector<4x128x16xbf16>, vector<4x16x128xbf16>, vector<4x128x128xf32> -> vector<4x128x128xf32>
    "tpu.trace_stop"() : () -> ()
    %cst_41 = arith.constant 2.500000e-01 : f32
    %120 = vector.broadcast %cst_41 : f32 to vector<4x128x128xf32>
    %121 = arith.mulf %119, %120 : vector<4x128x128xf32>
    %cst_42 = arith.constant dense<0xFF800000> : vector<4x128xf32>
    %122 = vector.multi_reduction <maximumf>, %121, %cst_42 [2] : vector<4x128x128xf32> to vector<4x128xf32>
    %123 = vector.shape_cast %122 : vector<4x128xf32> to vector<4x128x1xf32>
    %124 = vector.broadcast %123 : vector<4x128x1xf32> to vector<4x128x128xf32>
    %125 = arith.subf %121, %124 : vector<4x128x128xf32>
    %126 = math.exp %125 : vector<4x128x128xf32>
    %cst_43 = arith.constant dense<0.000000e+00> : vector<4x128xf32>
    %127 = vector.multi_reduction <add>, %126, %cst_43 [2] : vector<4x128x128xf32> to vector<4x128xf32>
    %128 = vector.shape_cast %127 : vector<4x128xf32> to vector<4x128x1xf32>
    %129 = tpu.reciprocal %128 {approx = true} : vector<4x128x1xf32> -> vector<4x128x1xf32>
    %130 = vector.broadcast %129 : vector<4x128x1xf32> to vector<4x128x128xf32>
    %131 = arith.mulf %126, %130 : vector<4x128x128xf32>
    %132 = arith.truncf %131 : vector<4x128x128xf32> to vector<4x128x128xbf16>
    "tpu.trace_start"() <{level = 10 : i32, message = "hdj,hij->hdi"}> : () -> ()
    %cst_44 = arith.constant dense<0.000000e+00> : vector<4x16x128xf32>
    %133 = tpu.matmul %117, %132, %cst_44 {dimension_numbers = #tpu.dot_dimension_numbers<[2], [2], [1], [1], [0, 0, 0, 1, 1, 1], [0], [0]>} : vector<4x16x128xbf16>, vector<4x128x128xbf16>, vector<4x16x128xf32> -> vector<4x16x128xf32>
    "tpu.trace_stop"() : () -> ()
    %134 = arith.truncf %133 : vector<4x16x128xf32> to vector<4x16x128xbf16>
    %135 = vector.shape_cast %134 : vector<4x16x128xbf16> to vector<64x128xbf16>
    %136 = vector.extract_strided_slice %110 {offsets = [0, 128], sizes = [192, 128], strides = [1, 1]} : vector<192x512xbf16> to vector<192x128xbf16>
    %137 = vector.extract_strided_slice %136 {offsets = [0, 0], sizes = [64, 128], strides = [1, 1]} : vector<192x128xbf16> to vector<64x128xbf16>
    %138 = vector.shape_cast %137 : vector<64x128xbf16> to vector<4x16x128xbf16>
    %139 = vector.extract_strided_slice %136 {offsets = [64, 0], sizes = [64, 128], strides = [1, 1]} : vector<192x128xbf16> to vector<64x128xbf16>
    %140 = vector.shape_cast %139 : vector<64x128xbf16> to vector<4x16x128xbf16>
    %141 = vector.extract_strided_slice %136 {offsets = [128, 0], sizes = [64, 128], strides = [1, 1]} : vector<192x128xbf16> to vector<64x128xbf16>
    %142 = vector.shape_cast %141 : vector<64x128xbf16> to vector<4x16x128xbf16>
    %143 = tpu.transpose %138, [0, 2, 1] : vector<4x16x128xbf16> -> vector<4x128x16xbf16>
    "tpu.trace_start"() <{level = 10 : i32, message = "hid,hdj->hij"}> : () -> ()
    %cst_45 = arith.constant dense<0.000000e+00> : vector<4x128x128xf32>
    %144 = tpu.matmul %143, %140, %cst_45 {dimension_numbers = #tpu.dot_dimension_numbers<[2], [1], [1], [2], [0, 0, 0, 1, 1, 2], [0], [0]>} : vector<4x128x16xbf16>, vector<4x16x128xbf16>, vector<4x128x128xf32> -> vector<4x128x128xf32>
    "tpu.trace_stop"() : () -> ()
    %cst_46 = arith.constant 2.500000e-01 : f32
    %145 = vector.broadcast %cst_46 : f32 to vector<4x128x128xf32>
    %146 = arith.mulf %144, %145 : vector<4x128x128xf32>
    %cst_47 = arith.constant dense<0xFF800000> : vector<4x128xf32>
    %147 = vector.multi_reduction <maximumf>, %146, %cst_47 [2] : vector<4x128x128xf32> to vector<4x128xf32>
    %148 = vector.shape_cast %147 : vector<4x128xf32> to vector<4x128x1xf32>
    %149 = vector.broadcast %148 : vector<4x128x1xf32> to vector<4x128x128xf32>
    %150 = arith.subf %146, %149 : vector<4x128x128xf32>
    %151 = math.exp %150 : vector<4x128x128xf32>
    %cst_48 = arith.constant dense<0.000000e+00> : vector<4x128xf32>
    %152 = vector.multi_reduction <add>, %151, %cst_48 [2] : vector<4x128x128xf32> to vector<4x128xf32>
    %153 = vector.shape_cast %152 : vector<4x128xf32> to vector<4x128x1xf32>
    %154 = tpu.reciprocal %153 {approx = true} : vector<4x128x1xf32> -> vector<4x128x1xf32>
    %155 = vector.broadcast %154 : vector<4x128x1xf32> to vector<4x128x128xf32>
    %156 = arith.mulf %151, %155 : vector<4x128x128xf32>
    %157 = arith.truncf %156 : vector<4x128x128xf32> to vector<4x128x128xbf16>
    "tpu.trace_start"() <{level = 10 : i32, message = "hdj,hij->hdi"}> : () -> ()
    %cst_49 = arith.constant dense<0.000000e+00> : vector<4x16x128xf32>
    %158 = tpu.matmul %142, %157, %cst_49 {dimension_numbers = #tpu.dot_dimension_numbers<[2], [2], [1], [1], [0, 0, 0, 1, 1, 1], [0], [0]>} : vector<4x16x128xbf16>, vector<4x128x128xbf16>, vector<4x16x128xf32> -> vector<4x16x128xf32>
    "tpu.trace_stop"() : () -> ()
    %159 = arith.truncf %158 : vector<4x16x128xf32> to vector<4x16x128xbf16>
    %160 = vector.shape_cast %159 : vector<4x16x128xbf16> to vector<64x128xbf16>
    %161 = vector.extract_strided_slice %110 {offsets = [0, 256], sizes = [192, 128], strides = [1, 1]} : vector<192x512xbf16> to vector<192x128xbf16>
    %162 = vector.extract_strided_slice %161 {offsets = [0, 0], sizes = [64, 128], strides = [1, 1]} : vector<192x128xbf16> to vector<64x128xbf16>
    %163 = vector.shape_cast %162 : vector<64x128xbf16> to vector<4x16x128xbf16>
    %164 = vector.extract_strided_slice %161 {offsets = [64, 0], sizes = [64, 128], strides = [1, 1]} : vector<192x128xbf16> to vector<64x128xbf16>
    %165 = vector.shape_cast %164 : vector<64x128xbf16> to vector<4x16x128xbf16>
    %166 = vector.extract_strided_slice %161 {offsets = [128, 0], sizes = [64, 128], strides = [1, 1]} : vector<192x128xbf16> to vector<64x128xbf16>
    %167 = vector.shape_cast %166 : vector<64x128xbf16> to vector<4x16x128xbf16>
    %168 = tpu.transpose %163, [0, 2, 1] : vector<4x16x128xbf16> -> vector<4x128x16xbf16>
    "tpu.trace_start"() <{level = 10 : i32, message = "hid,hdj->hij"}> : () -> ()
    %cst_50 = arith.constant dense<0.000000e+00> : vector<4x128x128xf32>
    %169 = tpu.matmul %168, %165, %cst_50 {dimension_numbers = #tpu.dot_dimension_numbers<[2], [1], [1], [2], [0, 0, 0, 1, 1, 2], [0], [0]>} : vector<4x128x16xbf16>, vector<4x16x128xbf16>, vector<4x128x128xf32> -> vector<4x128x128xf32>
    "tpu.trace_stop"() : () -> ()
    %cst_51 = arith.constant 2.500000e-01 : f32
    %170 = vector.broadcast %cst_51 : f32 to vector<4x128x128xf32>
    %171 = arith.mulf %169, %170 : vector<4x128x128xf32>
    %cst_52 = arith.constant dense<0xFF800000> : vector<4x128xf32>
    %172 = vector.multi_reduction <maximumf>, %171, %cst_52 [2] : vector<4x128x128xf32> to vector<4x128xf32>
    %173 = vector.shape_cast %172 : vector<4x128xf32> to vector<4x128x1xf32>
    %174 = vector.broadcast %173 : vector<4x128x1xf32> to vector<4x128x128xf32>
    %175 = arith.subf %171, %174 : vector<4x128x128xf32>
    %176 = math.exp %175 : vector<4x128x128xf32>
    %cst_53 = arith.constant dense<0.000000e+00> : vector<4x128xf32>
    %177 = vector.multi_reduction <add>, %176, %cst_53 [2] : vector<4x128x128xf32> to vector<4x128xf32>
    %178 = vector.shape_cast %177 : vector<4x128xf32> to vector<4x128x1xf32>
    %179 = tpu.reciprocal %178 {approx = true} : vector<4x128x1xf32> -> vector<4x128x1xf32>
    %180 = vector.broadcast %179 : vector<4x128x1xf32> to vector<4x128x128xf32>
    %181 = arith.mulf %176, %180 : vector<4x128x128xf32>
    %182 = arith.truncf %181 : vector<4x128x128xf32> to vector<4x128x128xbf16>
    "tpu.trace_start"() <{level = 10 : i32, message = "hdj,hij->hdi"}> : () -> ()
    %cst_54 = arith.constant dense<0.000000e+00> : vector<4x16x128xf32>
    %183 = tpu.matmul %167, %182, %cst_54 {dimension_numbers = #tpu.dot_dimension_numbers<[2], [2], [1], [1], [0, 0, 0, 1, 1, 1], [0], [0]>} : vector<4x16x128xbf16>, vector<4x128x128xbf16>, vector<4x16x128xf32> -> vector<4x16x128xf32>
    "tpu.trace_stop"() : () -> ()
    %184 = arith.truncf %183 : vector<4x16x128xf32> to vector<4x16x128xbf16>
    %185 = vector.shape_cast %184 : vector<4x16x128xbf16> to vector<64x128xbf16>
    %186 = vector.extract_strided_slice %110 {offsets = [0, 384], sizes = [192, 128], strides = [1, 1]} : vector<192x512xbf16> to vector<192x128xbf16>
    %187 = vector.extract_strided_slice %186 {offsets = [0, 0], sizes = [64, 128], strides = [1, 1]} : vector<192x128xbf16> to vector<64x128xbf16>
    %188 = vector.shape_cast %187 : vector<64x128xbf16> to vector<4x16x128xbf16>
    %189 = vector.extract_strided_slice %186 {offsets = [64, 0], sizes = [64, 128], strides = [1, 1]} : vector<192x128xbf16> to vector<64x128xbf16>
    %190 = vector.shape_cast %189 : vector<64x128xbf16> to vector<4x16x128xbf16>
    %191 = vector.extract_strided_slice %186 {offsets = [128, 0], sizes = [64, 128], strides = [1, 1]} : vector<192x128xbf16> to vector<64x128xbf16>
    %192 = vector.shape_cast %191 : vector<64x128xbf16> to vector<4x16x128xbf16>
    %193 = tpu.transpose %188, [0, 2, 1] : vector<4x16x128xbf16> -> vector<4x128x16xbf16>
    "tpu.trace_start"() <{level = 10 : i32, message = "hid,hdj->hij"}> : () -> ()
    %cst_55 = arith.constant dense<0.000000e+00> : vector<4x128x128xf32>
    %194 = tpu.matmul %193, %190, %cst_55 {dimension_numbers = #tpu.dot_dimension_numbers<[2], [1], [1], [2], [0, 0, 0, 1, 1, 2], [0], [0]>} : vector<4x128x16xbf16>, vector<4x16x128xbf16>, vector<4x128x128xf32> -> vector<4x128x128xf32>
    "tpu.trace_stop"() : () -> ()
    %cst_56 = arith.constant 2.500000e-01 : f32
    %195 = vector.broadcast %cst_56 : f32 to vector<4x128x128xf32>
    %196 = arith.mulf %194, %195 : vector<4x128x128xf32>
    %cst_57 = arith.constant dense<0xFF800000> : vector<4x128xf32>
    %197 = vector.multi_reduction <maximumf>, %196, %cst_57 [2] : vector<4x128x128xf32> to vector<4x128xf32>
    %198 = vector.shape_cast %197 : vector<4x128xf32> to vector<4x128x1xf32>
    %199 = vector.broadcast %198 : vector<4x128x1xf32> to vector<4x128x128xf32>
    %200 = arith.subf %196, %199 : vector<4x128x128xf32>
    %201 = math.exp %200 : vector<4x128x128xf32>
    %cst_58 = arith.constant dense<0.000000e+00> : vector<4x128xf32>
    %202 = vector.multi_reduction <add>, %201, %cst_58 [2] : vector<4x128x128xf32> to vector<4x128xf32>
    %203 = vector.shape_cast %202 : vector<4x128xf32> to vector<4x128x1xf32>
    %204 = tpu.reciprocal %203 {approx = true} : vector<4x128x1xf32> -> vector<4x128x1xf32>
    %205 = vector.broadcast %204 : vector<4x128x1xf32> to vector<4x128x128xf32>
    %206 = arith.mulf %201, %205 : vector<4x128x128xf32>
    %207 = arith.truncf %206 : vector<4x128x128xf32> to vector<4x128x128xbf16>
    "tpu.trace_start"() <{level = 10 : i32, message = "hdj,hij->hdi"}> : () -> ()
    %cst_59 = arith.constant dense<0.000000e+00> : vector<4x16x128xf32>
    %208 = tpu.matmul %192, %207, %cst_59 {dimension_numbers = #tpu.dot_dimension_numbers<[2], [2], [1], [1], [0, 0, 0, 1, 1, 1], [0], [0]>} : vector<4x16x128xbf16>, vector<4x128x128xbf16>, vector<4x16x128xf32> -> vector<4x16x128xf32>
    "tpu.trace_stop"() : () -> ()
    %209 = arith.truncf %208 : vector<4x16x128xf32> to vector<4x16x128xbf16>
    %210 = vector.shape_cast %209 : vector<4x16x128xbf16> to vector<64x128xbf16>
    %211 = tpu.concatenate %135, %160, %185, %210 in 1 : vector<64x128xbf16>, vector<64x128xbf16>, vector<64x128xbf16>, vector<64x128xbf16> -> vector<64x512xbf16>
    %c0_60 = arith.constant 0 : index
    %c0_61 = arith.constant 0 : index
    %212 = vector.load %arg5[%c0_60, %c0_61] : memref<32x64xbf16, #tpu.memory_space<vmem>>, vector<32x64xbf16>
    %cst_62 = arith.constant dense<0.000000e+00> : vector<32x512xf32>
    %213 = tpu.matmul %212, %211, %cst_62 {dimension_numbers = #tpu.dot_dimension_numbers<[1], [0], [0], [1], [0, 0, 1, 1], [], []>} : vector<32x64xbf16>, vector<64x512xbf16>, vector<32x512xf32> -> vector<32x512xf32>
    %214 = vector.broadcast %9 : vector<32x1xf32> to vector<32x512xf32>
    %215 = arith.addf %213, %214 : vector<32x512xf32>
    %216 = arith.addf %215, %107 : vector<32x512xf32>
    %cst_63 = arith.constant 0.000000e+00 : f32
    %217 = vector.broadcast %cst_63 : f32 to vector<32x512xf32>
    %218 = arith.maximumf %216, %217 : vector<32x512xf32>
    %219 = arith.truncf %218 : vector<32x512xf32> to vector<32x512xbf16>
    %cst_64 = arith.constant dense<0.000000e+00> : vector<32x512xf32>
    %220 = tpu.matmul %5, %219, %cst_64 {dimension_numbers = #tpu.dot_dimension_numbers<[1], [0], [0], [1], [0, 0, 1, 1], [], []>} : vector<32x32xbf16>, vector<32x512xbf16>, vector<32x512xf32> -> vector<32x512xf32>
    %221 = vector.broadcast %10 : vector<32x1xf32> to vector<32x512xf32>
    %222 = arith.addf %220, %221 : vector<32x512xf32>
    %cst_65 = arith.constant 0.000000e+00 : f32
    %223 = vector.broadcast %cst_65 : f32 to vector<32x512xf32>
    %224 = arith.maximumf %222, %223 : vector<32x512xf32>
    %225 = arith.truncf %224 : vector<32x512xf32> to vector<32x512xbf16>
    %cst_66 = arith.constant dense<0.000000e+00> : vector<32x512xf32>
    %226 = tpu.matmul %6, %225, %cst_66 {dimension_numbers = #tpu.dot_dimension_numbers<[1], [0], [0], [1], [0, 0, 1, 1], [], []>} : vector<32x32xbf16>, vector<32x512xbf16>, vector<32x512xf32> -> vector<32x512xf32>
    %227 = vector.broadcast %11 : vector<32x1xf32> to vector<32x512xf32>
    %228 = arith.addf %226, %227 : vector<32x512xf32>
    %229 = arith.addf %218, %228 : vector<32x512xf32>
    %cst_67 = arith.constant 0.000000e+00 : f32
    %230 = vector.broadcast %cst_67 : f32 to vector<32x512xf32>
    %231 = arith.maximumf %229, %230 : vector<32x512xf32>
    %c0_68 = arith.constant 0 : index
    %c0_69 = arith.constant 0 : index
    %232 = vector.load %arg7[%c0_68, %c0_69] : memref<32x512xf32, #tpu.memory_space<vmem>>, vector<32x512xf32>
    tpu.vector_store %arg7[%c0_68, %c0_69], %231 {strides = array<i32>} : memref<32x512xf32, #tpu.memory_space<vmem>>, vector<32x512xf32>,
    return
  }
  func.func @transform_0(%arg0: i32) -> (i32, i32) {
    %c0_i32 = arith.constant 0 : i32
    %c0_i32_0 = arith.constant 0 : i32
    return %c0_i32, %arg0 : i32, i32
  }
  func.func @transform_1(%arg0: i32) -> (i32, i32, i32) {
    %c0_i32 = arith.constant 0 : i32
    %c0_i32_0 = arith.constant 0 : i32
    %c0_i32_1 = arith.constant 0 : i32
    return %arg0, %c0_i32, %c0_i32_0 : i32, i32, i32
  }
  func.func @transform_2(%arg0: i32) -> (i32, i32) {
    %c0_i32 = arith.constant 0 : i32
    %c0_i32_0 = arith.constant 0 : i32
    %c0_i32_1 = arith.constant 0 : i32
    return %c0_i32, %c0_i32_0 : i32, i32
  }
  func.func @transform_3(%arg0: i32) -> (i32, i32) {
    %c0_i32 = arith.constant 0 : i32
    %c0_i32_0 = arith.constant 0 : i32
    %c0_i32_1 = arith.constant 0 : i32
    return %c0_i32, %c0_i32_0 : i32, i32
  }
  func.func @transform_4(%arg0: i32) -> (i32, i32) {
    %c0_i32 = arith.constant 0 : i32
    %c0_i32_0 = arith.constant 0 : i32
    %c0_i32_1 = arith.constant 0 : i32
    return %c0_i32, %c0_i32_0 : i32, i32
  }
  func.func @transform_5(%arg0: i32) -> (i32, i32) {
    %c0_i32 = arith.constant 0 : i32
    %c0_i32_0 = arith.constant 0 : i32
    %c0_i32_1 = arith.constant 0 : i32
    return %c0_i32, %c0_i32_0 : i32, i32
  }
  func.func @transform_6(%arg0: i32) -> (i32, i32) {
    %c0_i32 = arith.constant 0 : i32
    %c0_i32_0 = arith.constant 0 : i32
    return %c0_i32, %arg0 : i32, i32
  }
}

</mosaic_0001>

<llo_original>
// kernel: pos_extraction.1
$region0: #{pos_extraction.1}
  #allocation0 [shape = 'u32[]', space=smem, size = 0x4, offset = 0x4, fixed_abs, tag = 'smem constant byte address 0x4 - core index']
  #allocation1 [shape = 'u32[144,128]{1,0:T(1,128)}', space=vmem, size = 0x12000, scoped, tag = 'internal scratch']
  %s0 = inlined_call_operand.vmem [shape: bf16[32,1024], index: 0, kind: input, shape index: {}]
  %s1 = inlined_call_operand.vmem [shape: f32[8,8,128], index: 1, kind: input, shape index: {}]
  %s2 = inlined_call_operand.vmem [shape: bf16[288,32], index: 2, kind: input, shape index: {}]
  %s3 = inlined_call_operand.vmem [shape: bf16[32,8], index: 3, kind: input, shape index: {}]
  %s4 = inlined_call_operand.vmem [shape: bf16[32,64], index: 4, kind: input, shape index: {}]
  %s5 = inlined_call_operand.vmem [shape: f32[32,8], index: 5, kind: input, shape index: {}]
  %s6 = inlined_call_operand.vmem [shape: f32[32,1024], index: 6, kind: output, shape index: {}]
  %s7 = sld [smem:[#allocation0]]
  $region99: #{pos_extraction.1} parent=0
    _
  %s9 = ssub.s32 1, %s7
  %s10 = scalar_select 0, %s9, %s7
  $region1: #{pos_extraction.1} parent=0
    #allocation2 [shape = 'u8[65536]{0}', space=vmem, size = 0x10000, scoped, tag = 'input window, operand 0']
    #allocation3 [shape = 'u8[131072]{0}', space=vmem, size = 0x20000, scoped, tag = 'output window, operand 0']
    loop: start=0, step=1, limit=4
    $region2: #{pos_extraction.1} parent=1 // loop_pre_header
      _
    $region3: #{pos_extraction.1} parent=1 // loop_header
      %s12 = sphi 0, %s16
      %p13 = scmp.ge.s32.totalorder %s12, 4
      %s22 = sphi 0, %s24
      %s25 = sphi 0, %s22
      %s26 = sphi 0, %s25
      %s42 = sphi 0, %s26
      %s48 = sphi 0, %s50
      %s51 = sphi 0, %s48
      %s52 = sphi 0, %s51
      %s68 = sphi 0, %s52
      %s72 = sphi 0, %s72
      %s74 = sphi 0, %s72
      %s75 = sphi 0, %s74
      %s89 = sphi 0, %s75
      %s93 = sphi 0, %s93
      %s95 = sphi 0, %s93
      %s96 = sphi 0, %s95
      %s110 = sphi 0, %s96
      %s114 = sphi 0, %s114
      %s116 = sphi 0, %s114
      %s117 = sphi 0, %s116
      %s131 = sphi 0, %s117
      %s135 = sphi 0, %s135
      %s137 = sphi 0, %s135
      %s138 = sphi 0, %s137
      %s152 = sphi 0, %s138
      %s158 = sphi 0, %s160
      %s161 = sphi 0, %s158
      %s162 = sphi 0, %s161
      %s178 = sphi 0, %s162
    $region4: #{pos_extraction.1} parent=1 // loop_header_branch
      %15 = sbr.rel (%p13) target = $region8
    $region5: #{pos_extraction.1} parent=1 // loop_body
      %s17 = ssub.s32 %s12, 1
      %s18 = ssub.s32 %s12, 2
      %s19 = sadd.s32 %s12, 1
      %s20 = ssub.s32 %s12, %s19
      %p21 = scmp.eq.s32.totalorder %s20, 0
      %s23 = sadd.s32 %s22, 1
      %s24 = scalar_select %p21, %s22, %s23
      %p27 = pneg %p21
      %p28 = scmp.eq.s32.totalorder %s12, 1
      %p29 = por %p27, %p28
      %p30 = scmp.ne.s32.totalorder %s22, %s25
      %p31 = scmp.eq.s32.totalorder %s12, 0
      %p32 = por %p30, %p31
      %p33 = scmp.ne.s32.totalorder %s22, %s25
      %p34 = scmp.eq.s32.totalorder %s17, 1
      %p35 = por %p33, %p34
      %p36 = scmp.ne.s32.totalorder %s25, %s26
      %p37 = scmp.eq.s32.totalorder %s17, 0
      %p38 = por %p36, %p37
      %p39 = scmp.ne.s32.totalorder %s25, %s26
      %p40 = scmp.eq.s32.totalorder %s18, 1
      %p41 = por %p39, %p40
      %p43 = scmp.ne.s32.totalorder %s26, %s42
      %p44 = scmp.eq.s32.totalorder %s18, 0
      %p45 = por %p43, %p44
      %s46 = ssub.s32 %s12, %s19
      %p47 = scmp.eq.s32.totalorder %s46, 0
      %s49 = sadd.s32 %s48, 1
      %s50 = scalar_select %p47, %s48, %s49
      %p53 = pneg %p47
      %p54 = scmp.eq.s32.totalorder %s12, 1
      %p55 = por %p53, %p54
      %p56 = scmp.ne.s32.totalorder %s48, %s51
      %p57 = scmp.eq.s32.totalorder %s12, 0
      %p58 = por %p56, %p57
      %p59 = scmp.ne.s32.totalorder %s48, %s51
      %p60 = scmp.eq.s32.totalorder %s17, 1
      %p61 = por %p59, %p60
      %p62 = scmp.ne.s32.totalorder %s51, %s52
      %p63 = scmp.eq.s32.totalorder %s17, 0
      %p64 = por %p62, %p63
      %p65 = scmp.ne.s32.totalorder %s51, %s52
      %p66 = scmp.eq.s32.totalorder %s18, 1
      %p67 = por %p65, %p66
      %p69 = scmp.ne.s32.totalorder %s52, %s68
      %p70 = scmp.eq.s32.totalorder %s18, 0
      %p71 = por %p69, %p70
      %s73 = sadd.s32 %s72, 1
      %p76 = scmp.eq.s32.totalorder %s12, 1
      %p77 = scmp.ne.s32.totalorder %s72, %s74
      %p78 = scmp.eq.s32.totalorder %s12, 0
      %p79 = por %p77, %p78
      %p80 = scmp.ne.s32.totalorder %s72, %s74
      %p81 = scmp.eq.s32.totalorder %s17, 1
      %p82 = por %p80, %p81
      %p83 = scmp.ne.s32.totalorder %s74, %s75
      %p84 = scmp.eq.s32.totalorder %s17, 0
      %p85 = por %p83, %p84
      %p86 = scmp.ne.s32.totalorder %s74, %s75
      %p87 = scmp.eq.s32.totalorder %s18, 1
      %p88 = por %p86, %p87
      %p90 = scmp.ne.s32.totalorder %s75, %s89
      %p91 = scmp.eq.s32.totalorder %s18, 0
      %p92 = por %p90, %p91
      %s94 = sadd.s32 %s93, 1
      %p97 = scmp.eq.s32.totalorder %s12, 1
      %p98 = scmp.ne.s32.totalorder %s93, %s95
      %p99 = scmp.eq.s32.totalorder %s12, 0
      %p100 = por %p98, %p99
      %p101 = scmp.ne.s32.totalorder %s93, %s95
      %p102 = scmp.eq.s32.totalorder %s17, 1
      %p103 = por %p101, %p102
      %p104 = scmp.ne.s32.totalorder %s95, %s96
      %p105 = scmp.eq.s32.totalorder %s17, 0
      %p106 = por %p104, %p105
      %p107 = scmp.ne.s32.totalorder %s95, %s96
      %p108 = scmp.eq.s32.totalorder %s18, 1
      %p109 = por %p107, %p108
      %p111 = scmp.ne.s32.totalorder %s96, %s110
      %p112 = scmp.eq.s32.totalorder %s18, 0
      %p113 = por %p111, %p112
      %s115 = sadd.s32 %s114, 1
      %p118 = scmp.eq.s32.totalorder %s12, 1
      %p119 = scmp.ne.s32.totalorder %s114, %s116
      %p120 = scmp.eq.s32.totalorder %s12, 0
      %p121 = por %p119, %p120
      %p122 = scmp.ne.s32.totalorder %s114, %s116
      %p123 = scmp.eq.s32.totalorder %s17, 1
      %p124 = por %p122, %p123
      %p125 = scmp.ne.s32.totalorder %s116, %s117
      %p126 = scmp.eq.s32.totalorder %s17, 0
      %p127 = por %p125, %p126
      %p128 = scmp.ne.s32.totalorder %s116, %s117
      %p129 = scmp.eq.s32.totalorder %s18, 1
      %p130 = por %p128, %p129
      %p132 = scmp.ne.s32.totalorder %s117, %s131
      %p133 = scmp.eq.s32.totalorder %s18, 0
      %p134 = por %p132, %p133
      %s136 = sadd.s32 %s135, 1
      %p139 = scmp.eq.s32.totalorder %s12, 1
      %p140 = scmp.ne.s32.totalorder %s135, %s137
      %p141 = scmp.eq.s32.totalorder %s12, 0
      %p142 = por %p140, %p141
      %p143 = scmp.ne.s32.totalorder %s135, %s137
      %p144 = scmp.eq.s32.totalorder %s17, 1
      %p145 = por %p143, %p144
      %p146 = scmp.ne.s32.totalorder %s137, %s138
      %p147 = scmp.eq.s32.totalorder %s17, 0
      %p148 = por %p146, %p147
      %p149 = scmp.ne.s32.totalorder %s137, %s138
      %p150 = scmp.eq.s32.totalorder %s18, 1
      %p151 = por %p149, %p150
      %p153 = scmp.ne.s32.totalorder %s138, %s152
      %p154 = scmp.eq.s32.totalorder %s18, 0
      %p155 = por %p153, %p154
      %s156 = ssub.s32 %s12, %s19
      %p157 = scmp.eq.s32.totalorder %s156, 0
      %s159 = sadd.s32 %s158, 1
      %s160 = scalar_select %p157, %s158, %s159
      %p163 = pneg %p157
      %p164 = scmp.eq.s32.totalorder %s12, 1
      %p165 = por %p163, %p164
      %p166 = scmp.ne.s32.totalorder %s158, %s161
      %p167 = scmp.eq.s32.totalorder %s12, 0
      %p168 = por %p166, %p167
      %p169 = scmp.ne.s32.totalorder %s158, %s161
      %p170 = scmp.eq.s32.totalorder %s17, 1
      %p171 = por %p169, %p170
      %p172 = scmp.ne.s32.totalorder %s161, %s162
      %p173 = scmp.eq.s32.totalorder %s17, 0
      %p174 = por %p172, %p173
      %p175 = scmp.ne.s32.totalorder %s161, %s162
      %p176 = scmp.eq.s32.totalorder %s18, 1
      %p177 = por %p175, %p176
      %p179 = scmp.ne.s32.totalorder %s162, %s178
      %p180 = scmp.eq.s32.totalorder %s18, 0
      %p181 = por %p179, %p180
      %p182 = scmp.le.s32.totalorder 1, %s12
      %p183 = scmp.lt.s32.totalorder %s12, 3
      %p184 = pnand %p182, %p183
      %p185 = pneg %p184
      // Predicated region
      $region9: #{pos_extraction.1} parent=5 // pred_check
        _
      $region10: #{pos_extraction.1} parent=5 // pred_check_branch
        %187 = sbr.rel (%p184) target = $region12
      $region11: #{pos_extraction.1} parent=5 // pred_region
        %s188 = ssub.s32 %s12, 1
        // Predicated region
        $region13: #{pos_extraction.1} parent=11 // pred_check
          %p189 = pneg %p85
        $region14: #{pos_extraction.1} parent=11 // pred_check_branch
          %191 = sbr.rel (%p189) target = $region16
        $region15: #{pos_extraction.1} parent=11 // pred_region
          _
        $region16: #{pos_extraction.1} parent=11 // pred_fallthru
          _
        // Predicated region
        $region17: #{pos_extraction.1} parent=11 // pred_check
          %p192 = pneg %p106
        $region18: #{pos_extraction.1} parent=11 // pred_check_branch
          %194 = sbr.rel (%p192) target = $region20
        $region19: #{pos_extraction.1} parent=11 // pred_region
          _
        $region20: #{pos_extraction.1} parent=11 // pred_fallthru
          _
        // Predicated region
        $region21: #{pos_extraction.1} parent=11 // pred_check
          %p195 = pneg %p127
        $region22: #{pos_extraction.1} parent=11 // pred_check_branch
          %197 = sbr.rel (%p195) target = $region24
        $region23: #{pos_extraction.1} parent=11 // pred_region
          _
        $region24: #{pos_extraction.1} parent=11 // pred_fallthru
          _
        // Predicated region
        $region25: #{pos_extraction.1} parent=11 // pred_check
          %p198 = pneg %p148
        $region26: #{pos_extraction.1} parent=11 // pred_check_branch
          %200 = sbr.rel (%p198) target = $region28
        $region27: #{pos_extraction.1} parent=11 // pred_region
          _
        $region28: #{pos_extraction.1} parent=11 // pred_fallthru
          _
      $region12: #{pos_extraction.1} parent=5 // pred_fallthru
        _
      %p201 = scmp.lt.s32.totalorder %s12, 2
      // Predicated region
      $region29: #{pos_extraction.1} parent=5 // pred_check
        %p202 = pneg %p201
      $region30: #{pos_extraction.1} parent=5 // pred_check_branch
        %204 = sbr.rel (%p202) target = $region32
      $region31: #{pos_extraction.1} parent=5 // pred_region
        // Predicated region
        $region33: #{pos_extraction.1} parent=31 // pred_check
          %p205 = pneg %p32
        $region34: #{pos_extraction.1} parent=31 // pred_check_branch
          %207 = sbr.rel (%p205) target = $region36
        $region35: #{pos_extraction.1} parent=31 // pred_region
          %s208 = sand.u32 %s22, 1
          %s209 = sand.u32 %s22, 1
          %s210 = smul.addr %s209, 64
          %s211 = scalar_lea.vmem [#allocation2], %s210
          %s212 = smul.u32 4, %s12
          %s213 = smul.addr %s212, 4
          %s214 = scalar_lea.vmem %s0, %s213
          // Predicated region
          $region37: #{pos_extraction.1} parent=35 // pred_check
            _
          $region38: #{pos_extraction.1} parent=35 // pred_check_branch
            %216 = sbr.rel (0) target = $region40
          $region39: #{pos_extraction.1} parent=35 // pred_region
            // Predicated region
            $region41: #{pos_extraction.1} parent=39 // pred_check
              _
            $region42: #{pos_extraction.1} parent=39 // pred_check_branch
              %218 = sbr.rel (0) target = $region44
            $region43: #{pos_extraction.1} parent=39 // pred_region
              loop: start=0, step=1, limit=1
              $region45: #{pos_extraction.1} parent=43 // loop_pre_header
                _
              $region46: #{pos_extraction.1} parent=43 // loop_header
                %s220 = sphi 0, %s224
                %p221 = scmp.ge.s32.totalorder %s220, 1
                %s225 = sphi %s214, %s214
                %s226 = sphi %s211, %s211
              $region47: #{pos_extraction.1} parent=43 // loop_header_branch
                %223 = sbr.rel (%p221) target = $region51
              $region48: #{pos_extraction.1} parent=43 // loop_body
                %v227 = vld [vmem:[%s225] sm:$0xff]
                %228 = vst [vmem:[%s226] sm:$0xff] %v227
                %v229 = vld [vmem:[%s225 + $0x8] sm:$0xff]
                %230 = vst [vmem:[%s226 + $0x8] sm:$0xff] %v229
                %v231 = vld [vmem:[%s225 + $0x20] sm:$0xff]
                %232 = vst [vmem:[%s226 + $0x10] sm:$0xff] %v231
                %v233 = vld [vmem:[%s225 + $0x28] sm:$0xff]
                %234 = vst [vmem:[%s226 + $0x18] sm:$0xff] %v233
                %v235 = vld [vmem:[%s225 + $0x40] sm:$0xff]
                %236 = vst [vmem:[%s226 + $0x20] sm:$0xff] %v235
                %v237 = vld [vmem:[%s225 + $0x48] sm:$0xff]
                %238 = vst [vmem:[%s226 + $0x28] sm:$0xff] %v237
                %v239 = vld [vmem:[%s225 + $0x60] sm:$0xff]
                %240 = vst [vmem:[%s226 + $0x30] sm:$0xff] %v239
                %v241 = vld [vmem:[%s225 + $0x68] sm:$0xff]
                %242 = vst [vmem:[%s226 + $0x38] sm:$0xff] %v241
              $region49: #{pos_extraction.1} parent=43 // loop_footer
                %s224 = sadd.s32 1, %s220
              $region50: #{pos_extraction.1} parent=43 // loop_footer_branch
                %219 = sbr.rel target = $region46
              $region51: #{pos_extraction.1} parent=43 // loop_exit
                _
            $region44: #{pos_extraction.1} parent=39 // pred_fallthru
              _
            // Predicated region
            $region52: #{pos_extraction.1} parent=39 // pred_check
              _
            $region53: #{pos_extraction.1} parent=39 // pred_check_branch
              %244 = sbr.rel target = $region55
            $region54: #{pos_extraction.1} parent=39 // pred_region
              _
            $region55: #{pos_extraction.1} parent=39 // pred_fallthru
              _
          $region40: #{pos_extraction.1} parent=35 // pred_fallthru
            _
          %245 = vnop
        $region36: #{pos_extraction.1} parent=31 // pred_fallthru
          _
        // Predicated region
        $region56: #{pos_extraction.1} parent=31 // pred_check
          %p246 = pneg %p58
        $region57: #{pos_extraction.1} parent=31 // pred_check_branch
          %248 = sbr.rel (%p246) target = $region59
        $region58: #{pos_extraction.1} parent=31 // pred_region
          %s249 = smul.u32 4, %s12
          %p250 = scmp.lt.s32.totalorder %s249, 7
          %s251 = scalar_select %p250, %s249, 7
          %s252 = smul.addr %s251, 8
          %s253 = scalar_lea.vmem %s1, %s252
          %s254 = smul.u32 4, %s12
        $region59: #{pos_extraction.1} parent=31 // pred_fallthru
          _
      $region32: #{pos_extraction.1} parent=5 // pred_fallthru
        _
      %p255 = scmp.le.s32.totalorder 1, %s12
      %p256 = scmp.lt.s32.totalorder %s12, 3
      %p257 = pnand %p255, %p256
      %p258 = pneg %p257
      // Predicated region
      $region60: #{pos_extraction.1} parent=5 // pred_check
        _
      $region61: #{pos_extraction.1} parent=5 // pred_check_branch
        %260 = sbr.rel (%p257) target = $region63
      $region62: #{pos_extraction.1} parent=5 // pred_region
        %s261 = ssub.s32 %s12, 1
        %s262 = sand.u32 %s25, 1
        %s263 = sand.u32 %s25, 1
        %s264 = smul.addr %s263, 64
        %s265 = scalar_lea.vmem [#allocation2], %s264
        // Predicated region
        $region64: #{pos_extraction.1} parent=62 // pred_check
          %p266 = pneg %p38
        $region65: #{pos_extraction.1} parent=62 // pred_check_branch
          %268 = sbr.rel (%p266) target = $region67
        $region66: #{pos_extraction.1} parent=62 // pred_region
          _
        $region67: #{pos_extraction.1} parent=62 // pred_fallthru
          _
        %s269 = sand.u32 %s25, 1
        %s270 = sand.u32 %s25, 1
        %s271 = smul.addr %s270, 64
        %s272 = scalar_lea.vmem [#allocation2], %s271
        %p273 = pneg %p38
        %p274 = pneg %p35
        %s275 = smul.u32 4, %s17
        %p276 = scmp.lt.s32.totalorder %s275, 7
        %s277 = scalar_select %p276, %s275, 7
        %s278 = smul.addr %s277, 8
        %s279 = scalar_lea.vmem %s1, %s278
        %p280 = pneg %p64
        %p281 = pneg %p61
        %p282 = pneg %p85
        %p283 = pneg %p82
        %p284 = pneg %p106
        %p285 = pneg %p103
        %p286 = pneg %p127
        %p287 = pneg %p124
        %p288 = pneg %p148
        %p289 = pneg %p145
        %p290 = pneg %p174
        %p291 = pneg %p171
        %s292 = sand.u32 %s161, 1
        %s293 = sand.u32 %s161, 1
        %s294 = smul.addr %s293, 128
        %s295 = scalar_lea.vmem [#allocation3], %s294
        %s296 = smul.u32 4, %s17
        %s297 = smul.u32 4, %s17
        %p298 = scmp.lt.s32.totalorder %s297, 7
        %s299 = scalar_select %p298, %s297, 7
        %s300 = smul.addr %s299, 8
        %s301 = scalar_lea.vmem %s1, %s300
        %s302 = smul.u32 4, %s17
        %s303 = smul.u32 4, %s17
        %v305 = vld [vmem:[%s265] sm:$0xff]
        %v306 = vld [vmem:[%s265 + $0x8] sm:$0xff]
        %v307 = vld [vmem:[%s265 + $0x10] sm:$0xff]
        %v308 = vld [vmem:[%s265 + $0x18] sm:$0xff]
        %v309 = vld [vmem:[%s265 + $0x20] sm:$0xff]
        %v310 = vld [vmem:[%s265 + $0x28] sm:$0xff]
        %v311 = vld [vmem:[%s265 + $0x30] sm:$0xff]
        %v312 = vld [vmem:[%s265 + $0x38] sm:$0xff]
        %v313 = vunpack.c.l.bf16 %v305
        %v314 = vunpack.c.h.bf16 %v305
        %v315 = vunpack.c.l.bf16 %v306
        %v316 = vunpack.c.h.bf16 %v306
        %v317 = vunpack.c.l.bf16 %v307
        %v318 = vunpack.c.h.bf16 %v307
        %v319 = vunpack.c.l.bf16 %v308
        %v320 = vunpack.c.h.bf16 %v308
        %v321 = vunpack.c.l.bf16 %v309
        %v322 = vunpack.c.h.bf16 %v309
        %v323 = vunpack.c.l.bf16 %v310
        %v324 = vunpack.c.h.bf16 %v310
        %v325 = vunpack.c.l.bf16 %v311
        %v326 = vunpack.c.h.bf16 %v311
        %v327 = vunpack.c.l.bf16 %v312
        %v328 = vunpack.c.h.bf16 %v312
        %v329 = vld [vmem:[%s2] sm:$0xf]
        %v330 = vld [vmem:[%s2 + $0x4] sm:$0xf]
        %v331 = vld [vmem:[%s2 + $0x8] sm:$0xf]
        %v332 = vld [vmem:[%s2 + $0xc] sm:$0xf]
        %v333 = vld [vmem:[%s2 + $0x10] sm:$0xf]
        %v334 = vld [vmem:[%s2 + $0x14] sm:$0xf]
        %v335 = vld [vmem:[%s2 + $0x18] sm:$0xf]
        %v336 = vld [vmem:[%s2 + $0x1c] sm:$0xf]
        %v337 = vld [vmem:[%s2 + $0x20] sm:$0xf]
        %v338 = vld [vmem:[%s2 + $0x24] sm:$0xf]
        %v339 = vld [vmem:[%s2 + $0x28] sm:$0xf]
        %v340 = vld [vmem:[%s2 + $0x2c] sm:$0xf]
        %v341 = vld [vmem:[%s2 + $0x30] sm:$0xf]
        %v342 = vld [vmem:[%s2 + $0x34] sm:$0xf]
        %v343 = vld [vmem:[%s2 + $0x38] sm:$0xf]
        %v344 = vld [vmem:[%s2 + $0x3c] sm:$0xf]
        %v345 = vld [vmem:[%s2 + $0x40] sm:$0xf]
        %v346 = vld [vmem:[%s2 + $0x44] sm:$0xf]
        %v347 = vld [vmem:[%s2 + $0x48] sm:$0xf]
        %v348 = vld [vmem:[%s2 + $0x4c] sm:$0xf]
        %v349 = vld [vmem:[%s2 + $0x50] sm:$0xf]
        %v350 = vld [vmem:[%s2 + $0x54] sm:$0xf]
        %v351 = vld [vmem:[%s2 + $0x58] sm:$0xf]
        %v352 = vld [vmem:[%s2 + $0x5c] sm:$0xf]
        %v353 = vld [vmem:[%s2 + $0x60] sm:$0xf]
        %v354 = vld [vmem:[%s2 + $0x64] sm:$0xf]
        %v355 = vld [vmem:[%s2 + $0x68] sm:$0xf]
        %v356 = vld [vmem:[%s2 + $0x6c] sm:$0xf]
        %v357 = vld [vmem:[%s2 + $0x70] sm:$0xf]
        %v358 = vld [vmem:[%s2 + $0x74] sm:$0xf]
        %v359 = vld [vmem:[%s2 + $0x78] sm:$0xf]
        %v360 = vld [vmem:[%s2 + $0x7c] sm:$0xf]
        %v361 = vld [vmem:[%s2 + $0x80] sm:$0xf]
        %v362 = vld [vmem:[%s2 + $0x84] sm:$0xf]
        %v363 = vld [vmem:[%s2 + $0x88] sm:$0xf]
        %v364 = vld [vmem:[%s2 + $0x8c] sm:$0xf]
        %v365 = vld [vmem:[%s5] sm:$0xff]
        %v366 = vld [vmem:[%s5 + $0x8] sm:$0xff]
        %v367 = vld [vmem:[%s5 + $0x10] sm:$0xff]
        %v368 = vld [vmem:[%s5 + $0x18] sm:$0xff]
        %v369 = vld [vmem:[%s301] sm:$0xff]
        %370 = vadd.xlane.f32.xlu0 %v369
        %v371 = vpop.xlane.xlu0 %370
        %v372 = vrcp.pop 128.0
        %v373 = vmul.f32 %v371, %v372
        %v374 = vsub.f32 %v369, %v373
        %v375 = vmul.f32 %v374, %v374
        %376 = vadd.xlane.f32.xlu0 %v375
        %v377 = vpop.xlane.xlu0 %376
        %v378 = vrcp.pop 127.0
        %v379 = vmul.f32 %v377, %v378
        %v380 = vrsqrt.pop %v379
        %v381 = vmul.f32 %v379, %v380
        %vm382 = vcmp.eq.f32.partialorder %v379, inf
        %v383 = vsel %vm382, %v379, %v381
        %vm384 = vcmp.eq.f32.partialorder %v379, 0.0
        %v385 = vand.u32 %v379, 2147483648
        %v386 = vsel %vm384, %v385, %v383
        %v387 = vsub.f32 %v369, %v386
        %v388 = vadd.f32 %v373, 1e-05
        %v389 = vrcp.pop %v388
        %v390 = vmul.f32 %v387, %v389
        %v391 = vpack.c.bf16 %v390, %v390
        %s392 = scalar_lea.vmem %s301, 8
        %v393 = vld [vmem:[%s392] sm:$0xff]
        %394 = vadd.xlane.f32.xlu0 %v393
        %v395 = vpop.xlane.xlu0 %394
        %v396 = vmul.f32 %v395, %v372
        %v397 = vsub.f32 %v393, %v396
        %v398 = vmul.f32 %v397, %v397
        %399 = vadd.xlane.f32.xlu0 %v398
        %v400 = vpop.xlane.xlu0 %399
        %v401 = vmul.f32 %v400, %v378
        %v402 = vrsqrt.pop %v401
        %v403 = vmul.f32 %v401, %v402
        %vm404 = vcmp.eq.f32.partialorder %v401, inf
        %v405 = vsel %vm404, %v401, %v403
        %vm406 = vcmp.eq.f32.partialorder %v401, 0.0
        %v407 = vand.u32 %v401, 2147483648
        %v408 = vsel %vm406, %v407, %v405
        %v409 = vsub.f32 %v393, %v408
        %v410 = vadd.f32 %v396, 1e-05
        %v411 = vrcp.pop %v410
        %v412 = vmul.f32 %v409, %v411
        %v413 = vpack.c.bf16 %v412, %v412
        %s414 = scalar_lea.vmem %s301, 16
        %v415 = vld [vmem:[%s414] sm:$0xff]
        %416 = vadd.xlane.f32.xlu0 %v415
        %v417 = vpop.xlane.xlu0 %416
        %v418 = vmul.f32 %v417, %v372
        %v419 = vsub.f32 %v415, %v418
        %v420 = vmul.f32 %v419, %v419
        %421 = vadd.xlane.f32.xlu0 %v420
        %v422 = vpop.xlane.xlu0 %421
        %v423 = vmul.f32 %v422, %v378
        %v424 = vrsqrt.pop %v423
        %v425 = vmul.f32 %v423, %v424
        %vm426 = vcmp.eq.f32.partialorder %v423, inf
        %v427 = vsel %vm426, %v423, %v425
        %vm428 = vcmp.eq.f32.partialorder %v423, 0.0
        %v429 = vand.u32 %v423, 2147483648
        %v430 = vsel %vm428, %v429, %v427
        %v431 = vsub.f32 %v415, %v430
        %v432 = vadd.f32 %v418, 1e-05
        %v433 = vrcp.pop %v432
        %v434 = vmul.f32 %v431, %v433
        %v435 = vpack.c.bf16 %v434, %v434
        %s436 = scalar_lea.vmem %s301, 24
        %v437 = vld [vmem:[%s436] sm:$0xff]
        %438 = vadd.xlane.f32.xlu0 %v437
        %v439 = vpop.xlane.xlu0 %438
        %v440 = vmul.f32 %v439, %v372
        %v441 = vsub.f32 %v437, %v440
        %v442 = vmul.f32 %v441, %v441
        %443 = vadd.xlane.f32.xlu0 %v442
        %v444 = vpop.xlane.xlu0 %443
        %v445 = vmul.f32 %v444, %v378
        %v446 = vrsqrt.pop %v445
        %v447 = vmul.f32 %v445, %v446
        %vm448 = vcmp.eq.f32.partialorder %v445, inf
        %v449 = vsel %vm448, %v445, %v447
        %vm450 = vcmp.eq.f32.partialorder %v445, 0.0
        %v451 = vand.u32 %v445, 2147483648
        %v452 = vsel %vm450, %v451, %v449
        %v453 = vsub.f32 %v437, %v452
        %v454 = vadd.f32 %v440, 1e-05
        %v455 = vrcp.pop %v454
        %v456 = vmul.f32 %v453, %v455
        %v457 = vpack.c.bf16 %v456, %v456
        %v458 = vld [vmem:[%s3] sm:$0xf]
        %v459 = vld [vmem:[%s3 + $0x4] sm:$0xf]
        %v460 = vld [vmem:[%s3 + $0x8] sm:$0xf]
        %v461 = vld [vmem:[%s3 + $0xc] sm:$0xf]
        %v466 = vunpack.c.l.b16 %v458
        %v467 = vunpack.c.l.b16 %v459
        %v468 = vunpack.c.l.b16 %v460
        %v469 = vunpack.c.l.b16 %v461
        %v470 = vpack.c.b16 %v467, %v466
        %v471 = vpack.c.b16 %v469, %v468
        %vm472 = vcmask 64512
        %v474 = vsel %vm472, %v470, 0
        %v477 = vsel %vm472, %v471, 0
        %vm479 = vcmask 1043456
        %v481 = vsel %vm479, %v391, 0
        %v484 = vsel %vm479, %v413, 0
        %v487 = vsel %vm479, %v435, 0
        %v490 = vsel %vm479, %v457, 0
        %492 = vmatprep.subr.bf16.mxu0 %v484
        %493 = vmatpush1.bf16.msra.mxu0 %v481
        %494 = vmatprep.subr.bf16.mxu0 0
        %495 = vmatpush1.bf16.msra.mxu0 0
        %496 = vmatprep.subr.bf16.mxu0 0
        %497 = vmatpush1.bf16.msra.mxu0 0
        %498 = vmatprep.subr.bf16.mxu0 0
        %499 = vmatpush1.bf16.msra.mxu0 0
        %500 = vmatprep.subr.bf16.mxu0 0
        %501 = vmatpush1.bf16.msra.mxu0 0
        %502 = vmatprep.subr.bf16.mxu0 0
        %503 = vmatpush1.bf16.msra.mxu0 0
        %504 = vmatprep.subr.bf16.mxu0 0
        %505 = vmatpush1.bf16.msra.mxu0 0
        %506 = vmatprep.subr.bf16.mxu0 0
        %507 = vmatpush1.bf16.msra.mxu0 0
        %508 = vmatprep.subr.bf16.mxu0 0
        %509 = vmatpush1.bf16.msra.mxu0 0
        %510 = vmatprep.subr.bf16.mxu0 0
        %511 = vmatpush1.bf16.msra.mxu0 0
        %512 = vmatprep.subr.bf16.mxu0 0
        %513 = vmatpush1.bf16.msra.mxu0 0
        %514 = vmatprep.subr.bf16.mxu0 0
        %515 = vmatpush1.bf16.msra.mxu0 0
        %516 = vmatprep.subr.bf16.mxu0 0
        %517 = vmatpush1.bf16.msra.mxu0 0
        %518 = vmatprep.subr.bf16.mxu0 0
        %519 = vmatpush1.bf16.msra.mxu0 0
        %520 = vmatprep.subr.bf16.mxu0 0
        %521 = vmatpush1.bf16.msra.mxu0 0
        %522 = vmatprep.subr.bf16.mxu0 0
        %523 = vmatpush1.bf16.msra.mxu0 0
        %524 = vmatprep.mubr.bf16.mxu0 0
        %525 = vmatmul.mubr.bf16.gmra.mrb[0].mxu0 %v474
        %v526 = vpop.f32.mrb[0].mxu0
        %v527 = vadd.f32 0.0, %v526
        %v528 = vpop.f32.mrb[0].mxu0
        %v529 = vadd.f32 0.0, %v528
        %v530 = vpop.f32.mrb[0].mxu0
        %v531 = vadd.f32 0.0, %v530
        %v532 = vpop.f32.mrb[0].mxu0
        %v533 = vadd.f32 0.0, %v532
        %534 = vmatprep.mubr.bf16.mxu0 0
        %535 = vmatmul.mubr.bf16.gmra.mrb[0].mxu0 %v477
        %v536 = vpop.f32.mrb[0].mxu0
        %v537 = vadd.f32 0.0, %v536
        %v538 = vpop.f32.mrb[0].mxu0
        %v539 = vadd.f32 0.0, %v538
        %v540 = vpop.f32.mrb[0].mxu0
        %v541 = vadd.f32 0.0, %v540
        %v542 = vpop.f32.mrb[0].mxu0
        %v543 = vadd.f32 0.0, %v542
        %544 = vdwg.mxu0
        %545 = vmatprep.subr.bf16.mxu0 %v490
        %546 = vmatpush1.bf16.msra.mxu0 %v487
        %547 = vmatprep.subr.bf16.mxu0 0
        %548 = vmatpush1.bf16.msra.mxu0 0
        %549 = vmatprep.subr.bf16.mxu0 0
        %550 = vmatpush1.bf16.msra.mxu0 0
        %551 = vmatprep.subr.bf16.mxu0 0
        %552 = vmatpush1.bf16.msra.mxu0 0
        %553 = vmatprep.subr.bf16.mxu0 0
        %554 = vmatpush1.bf16.msra.mxu0 0
        %555 = vmatprep.subr.bf16.mxu0 0
        %556 = vmatpush1.bf16.msra.mxu0 0
        %557 = vmatprep.subr.bf16.mxu0 0
        %558 = vmatpush1.bf16.msra.mxu0 0
        %559 = vmatprep.subr.bf16.mxu0 0
        %560 = vmatpush1.bf16.msra.mxu0 0
        %561 = vmatprep.subr.bf16.mxu0 0
        %562 = vmatpush1.bf16.msra.mxu0 0
        %563 = vmatprep.subr.bf16.mxu0 0
        %564 = vmatpush1.bf16.msra.mxu0 0
        %565 = vmatprep.subr.bf16.mxu0 0
        %566 = vmatpush1.bf16.msra.mxu0 0
        %567 = vmatprep.subr.bf16.mxu0 0
        %568 = vmatpush1.bf16.msra.mxu0 0
        %569 = vmatprep.subr.bf16.mxu0 0
        %570 = vmatpush1.bf16.msra.mxu0 0
        %571 = vmatprep.subr.bf16.mxu0 0
        %572 = vmatpush1.bf16.msra.mxu0 0
        %573 = vmatprep.subr.bf16.mxu0 0
        %574 = vmatpush1.bf16.msra.mxu0 0
        %575 = vmatprep.subr.bf16.mxu0 0
        %576 = vmatpush1.bf16.msra.mxu0 0
        %577 = vmatprep.mubr.bf16.mxu0 0
        %578 = vmatmul.mubr.bf16.gmra.mrb[0].mxu0 %v474
        %v579 = vpop.f32.mrb[0].mxu0
        %v580 = vadd.f32 0.0, %v579
        %v581 = vpop.f32.mrb[0].mxu0
        %v582 = vadd.f32 0.0, %v581
        %v583 = vpop.f32.mrb[0].mxu0
        %v584 = vadd.f32 0.0, %v583
        %v585 = vpop.f32.mrb[0].mxu0
        %v586 = vadd.f32 0.0, %v585
        %587 = vmatprep.mubr.bf16.mxu0 0
        %588 = vmatmul.mubr.bf16.gmra.mrb[0].mxu0 %v477
        %v589 = vpop.f32.mrb[0].mxu0
        %v590 = vadd.f32 0.0, %v589
        %v591 = vpop.f32.mrb[0].mxu0
        %v592 = vadd.f32 0.0, %v591
        %v593 = vpop.f32.mrb[0].mxu0
        %v594 = vadd.f32 0.0, %v593
        %v595 = vpop.f32.mrb[0].mxu0
        %v596 = vadd.f32 0.0, %v595
        %597 = vdwg.mxu0
        %v598 = vmax.f32 %v527, 0.0
        %v599 = vmax.f32 %v529, 0.0
        %v600 = vmax.f32 %v580, 0.0
        %v601 = vmax.f32 %v582, 0.0
        %v602 = vmax.f32 %v531, 0.0
        %v603 = vmax.f32 %v533, 0.0
        %v604 = vmax.f32 %v584, 0.0
        %v605 = vmax.f32 %v586, 0.0
        %v606 = vmax.f32 %v537, 0.0
        %v607 = vmax.f32 %v539, 0.0
        %v608 = vmax.f32 %v590, 0.0
        %v609 = vmax.f32 %v592, 0.0
        %v610 = vmax.f32 %v541, 0.0
        %v611 = vmax.f32 %v543, 0.0
        %v612 = vmax.f32 %v594, 0.0
        %v613 = vmax.f32 %v596, 0.0
        %v614 = vpack.c.bf16 %v602, %v598
        %v615 = vpack.c.bf16 %v603, %v599
        %v616 = vpack.c.bf16 %v604, %v600
        %v617 = vpack.c.bf16 %v605, %v601
        %v618 = vpack.c.bf16 %v610, %v606
        %v619 = vpack.c.bf16 %v611, %v607
        %v620 = vpack.c.bf16 %v612, %v608
        %v621 = vpack.c.bf16 %v613, %v609
        %623 = vset.pattern.permute.xlu0 0
        %624 = vperm.xlu0 %623, %v365
        %v625 = vpop.permute.xlu0 %624
        %628 = vset.pattern.permute.xlu0 0
        %629 = vperm.xlu0 %628, %v366
        %v630 = vpop.permute.xlu0 %629
        %633 = vset.pattern.permute.xlu0 0
        %634 = vperm.xlu0 %633, %v367
        %v635 = vpop.permute.xlu0 %634
        %638 = vset.pattern.permute.xlu0 0
        %639 = vperm.xlu0 %638, %v368
        %v640 = vpop.permute.xlu0 %639
        %v646 = vunpack.c.l.b16 %v353
        %v647 = vunpack.c.l.b16 %v354
        %v648 = vunpack.c.l.b16 %v355
        %v649 = vunpack.c.l.b16 %v356
        %v650 = vpack.c.b16 %v647, %v646
        %v651 = vpack.c.b16 %v649, %v648
        %vm652 = vcmask 261120
        %v654 = vsel %vm652, %v650, 0
        %v657 = vsel %vm652, %v651, 0
        %659 = vmatprep.subr.bf16.mxu0 %v615
        %660 = vmatpush1.bf16.msra.mxu0 %v614
        %661 = vmatprep.subr.bf16.mxu0 %v619
        %662 = vmatpush1.bf16.msra.mxu0 %v618
        %663 = vmatprep.subr.bf16.mxu0 0
        %664 = vmatpush1.bf16.msra.mxu0 0
        %665 = vmatprep.subr.bf16.mxu0 0
        %666 = vmatpush1.bf16.msra.mxu0 0
        %667 = vmatprep.subr.bf16.mxu0 0
        %668 = vmatpush1.bf16.msra.mxu0 0
        %669 = vmatprep.subr.bf16.mxu0 0
        %670 = vmatpush1.bf16.msra.mxu0 0
        %671 = vmatprep.subr.bf16.mxu0 0
        %672 = vmatpush1.bf16.msra.mxu0 0
        %673 = vmatprep.subr.bf16.mxu0 0
        %674 = vmatpush1.bf16.msra.mxu0 0
        %675 = vmatprep.subr.bf16.mxu0 0
        %676 = vmatpush1.bf16.msra.mxu0 0
        %677 = vmatprep.subr.bf16.mxu0 0
        %678 = vmatpush1.bf16.msra.mxu0 0
        %679 = vmatprep.subr.bf16.mxu0 0
        %680 = vmatpush1.bf16.msra.mxu0 0
        %681 = vmatprep.subr.bf16.mxu0 0
        %682 = vmatpush1.bf16.msra.mxu0 0
        %683 = vmatprep.subr.bf16.mxu0 0
        %684 = vmatpush1.bf16.msra.mxu0 0
        %685 = vmatprep.subr.bf16.mxu0 0
        %686 = vmatpush1.bf16.msra.mxu0 0
        %687 = vmatprep.subr.bf16.mxu0 0
        %688 = vmatpush1.bf16.msra.mxu0 0
        %689 = vmatprep.subr.bf16.mxu0 0
        %690 = vmatpush1.bf16.msra.mxu0 0
        %691 = vmatprep.mubr.bf16.mxu0 0
        %692 = vmatmul.mubr.bf16.gmra.mrb[0].mxu0 %v654
        %v693 = vpop.f32.mrb[0].mxu0
        %v694 = vadd.f32 %v625, %v693
        %v695 = vpop.f32.mrb[0].mxu0
        %v696 = vadd.f32 %v625, %v695
        %v697 = vpop.f32.mrb[0].mxu0
        %v698 = vadd.f32 %v630, %v697
        %v699 = vpop.f32.mrb[0].mxu0
        %v700 = vadd.f32 %v630, %v699
        %701 = vmatprep.mubr.bf16.mxu0 0
        %702 = vmatmul.mubr.bf16.gmra.mrb[0].mxu0 %v657
        %v703 = vpop.f32.mrb[0].mxu0
        %v704 = vadd.f32 %v635, %v703
        %v705 = vpop.f32.mrb[0].mxu0
        %v706 = vadd.f32 %v635, %v705
        %v707 = vpop.f32.mrb[0].mxu0
        %v708 = vadd.f32 %v640, %v707
        %v709 = vpop.f32.mrb[0].mxu0
        %v710 = vadd.f32 %v640, %v709
        %711 = vdwg.mxu0
        %712 = vmatprep.subr.bf16.mxu0 %v617
        %713 = vmatpush1.bf16.msra.mxu0 %v616
        %714 = vmatprep.subr.bf16.mxu0 %v621
        %715 = vmatpush1.bf16.msra.mxu0 %v620
        %716 = vmatprep.subr.bf16.mxu0 0
        %717 = vmatpush1.bf16.msra.mxu0 0
        %718 = vmatprep.subr.bf16.mxu0 0
        %719 = vmatpush1.bf16.msra.mxu0 0
        %720 = vmatprep.subr.bf16.mxu0 0
        %721 = vmatpush1.bf16.msra.mxu0 0
        %722 = vmatprep.subr.bf16.mxu0 0
        %723 = vmatpush1.bf16.msra.mxu0 0
        %724 = vmatprep.subr.bf16.mxu0 0
        %725 = vmatpush1.bf16.msra.mxu0 0
        %726 = vmatprep.subr.bf16.mxu0 0
        %727 = vmatpush1.bf16.msra.mxu0 0
        %728 = vmatprep.subr.bf16.mxu0 0
        %729 = vmatpush1.bf16.msra.mxu0 0
        %730 = vmatprep.subr.bf16.mxu0 0
        %731 = vmatpush1.bf16.msra.mxu0 0
        %732 = vmatprep.subr.bf16.mxu0 0
        %733 = vmatpush1.bf16.msra.mxu0 0
        %734 = vmatprep.subr.bf16.mxu0 0
        %735 = vmatpush1.bf16.msra.mxu0 0
        %736 = vmatprep.subr.bf16.mxu0 0
        %737 = vmatpush1.bf16.msra.mxu0 0
        %738 = vmatprep.subr.bf16.mxu0 0
        %739 = vmatpush1.bf16.msra.mxu0 0
        %740 = vmatprep.subr.bf16.mxu0 0
        %741 = vmatpush1.bf16.msra.mxu0 0
        %742 = vmatprep.subr.bf16.mxu0 0
        %743 = vmatpush1.bf16.msra.mxu0 0
        %744 = vmatprep.mubr.bf16.mxu0 0
        %745 = vmatmul.mubr.bf16.gmra.mrb[0].mxu0 %v654
        %v746 = vpop.f32.mrb[0].mxu0
        %v747 = vadd.f32 %v625, %v746
        %v748 = vpop.f32.mrb[0].mxu0
        %v749 = vadd.f32 %v625, %v748
        %v750 = vpop.f32.mrb[0].mxu0
        %v751 = vadd.f32 %v630, %v750
        %v752 = vpop.f32.mrb[0].mxu0
        %v753 = vadd.f32 %v630, %v752
        %754 = vmatprep.mubr.bf16.mxu0 0
        %755 = vmatmul.mubr.bf16.gmra.mrb[0].mxu0 %v657
        %v756 = vpop.f32.mrb[0].mxu0
        %v757 = vadd.f32 %v635, %v756
        %v758 = vpop.f32.mrb[0].mxu0
        %v759 = vadd.f32 %v635, %v758
        %v760 = vpop.f32.mrb[0].mxu0
        %v761 = vadd.f32 %v640, %v760
        %v762 = vpop.f32.mrb[0].mxu0
        %v763 = vadd.f32 %v640, %v762
        %764 = vdwg.mxu0
        %v765 = vmax.f32 %v694, 0.0
        %v766 = vmax.f32 %v696, 0.0
        %v767 = vmax.f32 %v747, 0.0
        %v768 = vmax.f32 %v749, 0.0
        %v769 = vmax.f32 %v698, 0.0
        %v770 = vmax.f32 %v700, 0.0
        %v771 = vmax.f32 %v751, 0.0
        %v772 = vmax.f32 %v753, 0.0
        %v773 = vmax.f32 %v704, 0.0
        %v774 = vmax.f32 %v706, 0.0
        %v775 = vmax.f32 %v757, 0.0
        %v776 = vmax.f32 %v759, 0.0
        %v777 = vmax.f32 %v708, 0.0
        %v778 = vmax.f32 %v710, 0.0
        %v779 = vmax.f32 %v761, 0.0
        %v780 = vmax.f32 %v763, 0.0
        %v781 = vadd.f32 %v313, %v765
        %v782 = vadd.f32 %v314, %v766
        %v783 = vadd.f32 %v315, %v767
        %v784 = vadd.f32 %v316, %v768
        %v785 = vadd.f32 %v317, %v769
        %v786 = vadd.f32 %v318, %v770
        %v787 = vadd.f32 %v319, %v771
        %v788 = vadd.f32 %v320, %v772
        %v789 = vadd.f32 %v321, %v773
        %v790 = vadd.f32 %v322, %v774
        %v791 = vadd.f32 %v323, %v775
        %v792 = vadd.f32 %v324, %v776
        %v793 = vadd.f32 %v325, %v777
        %v794 = vadd.f32 %v326, %v778
        %v795 = vadd.f32 %v327, %v779
        %v796 = vadd.f32 %v328, %v780
        %v797 = vpack.c.bf16 %v785, %v781
        %v798 = vpack.c.bf16 %v786, %v782
        %v799 = vpack.c.bf16 %v787, %v783
        %v800 = vpack.c.bf16 %v788, %v784
        %v801 = vpack.c.bf16 %v793, %v789
        %v802 = vpack.c.bf16 %v794, %v790
        %v803 = vpack.c.bf16 %v795, %v791
        %v804 = vpack.c.bf16 %v796, %v792
        %v829 = vunpack.c.l.b16 %v329
        %v830 = vunpack.c.l.b16 %v330
        %v831 = vunpack.c.l.b16 %v331
        %v832 = vunpack.c.l.b16 %v332
        %v833 = vunpack.c.l.b16 %v333
        %v834 = vunpack.c.l.b16 %v334
        %v835 = vunpack.c.l.b16 %v335
        %v836 = vunpack.c.l.b16 %v336
        %v837 = vunpack.c.l.b16 %v337
        %v838 = vunpack.c.l.b16 %v338
        %v839 = vunpack.c.l.b16 %v339
        %v840 = vunpack.c.l.b16 %v340
        %v841 = vunpack.c.l.b16 %v341
        %v842 = vunpack.c.l.b16 %v342
        %v843 = vunpack.c.l.b16 %v343
        %v844 = vunpack.c.l.b16 %v344
        %v845 = vunpack.c.l.b16 %v345
        %v846 = vunpack.c.l.b16 %v346
        %v847 = vunpack.c.l.b16 %v347
        %v848 = vunpack.c.l.b16 %v348
        %v849 = vunpack.c.l.b16 %v349
        %v850 = vunpack.c.l.b16 %v350
        %v851 = vunpack.c.l.b16 %v351
        %v852 = vunpack.c.l.b16 %v352
        %v853 = vpack.c.b16 %v830, %v829
        %v854 = vpack.c.b16 %v832, %v831
        %v855 = vpack.c.b16 %v834, %v833
        %v856 = vpack.c.b16 %v836, %v835
        %v857 = vpack.c.b16 %v838, %v837
        %v858 = vpack.c.b16 %v840, %v839
        %v859 = vpack.c.b16 %v842, %v841
        %v860 = vpack.c.b16 %v844, %v843
        %v861 = vpack.c.b16 %v846, %v845
        %v862 = vpack.c.b16 %v848, %v847
        %v863 = vpack.c.b16 %v850, %v849
        %v864 = vpack.c.b16 %v852, %v851
        %v866 = vsel %vm652, %v853, 0
        %v869 = vsel %vm652, %v854, 0
        %v872 = vsel %vm652, %v855, 0
        %v875 = vsel %vm652, %v856, 0
        %v878 = vsel %vm652, %v857, 0
        %v881 = vsel %vm652, %v858, 0
        %v884 = vsel %vm652, %v859, 0
        %v887 = vsel %vm652, %v860, 0
        %v890 = vsel %vm652, %v861, 0
        %v893 = vsel %vm652, %v862, 0
        %v896 = vsel %vm652, %v863, 0
        %v899 = vsel %vm652, %v864, 0
        %901 = vmatprep.subr.bf16.mxu0 %v798
        %902 = vmatpush1.bf16.msra.mxu0 %v797
        %903 = vmatprep.subr.bf16.mxu0 %v802
        %904 = vmatpush1.bf16.msra.mxu0 %v801
        %905 = vmatprep.subr.bf16.mxu0 0
        %906 = vmatpush1.bf16.msra.mxu0 0
        %907 = vmatprep.subr.bf16.mxu0 0
        %908 = vmatpush1.bf16.msra.mxu0 0
        %909 = vmatprep.subr.bf16.mxu0 0
        %910 = vmatpush1.bf16.msra.mxu0 0
        %911 = vmatprep.subr.bf16.mxu0 0
        %912 = vmatpush1.bf16.msra.mxu0 0
        %913 = vmatprep.subr.bf16.mxu0 0
        %914 = vmatpush1.bf16.msra.mxu0 0
        %915 = vmatprep.subr.bf16.mxu0 0
        %916 = vmatpush1.bf16.msra.mxu0 0
        %917 = vmatprep.subr.bf16.mxu0 0
        %918 = vmatpush1.bf16.msra.mxu0 0
        %919 = vmatprep.subr.bf16.mxu0 0
        %920 = vmatpush1.bf16.msra.mxu0 0
        %921 = vmatprep.subr.bf16.mxu0 0
        %922 = vmatpush1.bf16.msra.mxu0 0
        %923 = vmatprep.subr.bf16.mxu0 0
        %924 = vmatpush1.bf16.msra.mxu0 0
        %925 = vmatprep.subr.bf16.mxu0 0
        %926 = vmatpush1.bf16.msra.mxu0 0
        %927 = vmatprep.subr.bf16.mxu0 0
        %928 = vmatpush1.bf16.msra.mxu0 0
        %929 = vmatprep.subr.bf16.mxu0 0
        %930 = vmatpush1.bf16.msra.mxu0 0
        %931 = vmatprep.subr.bf16.mxu0 0
        %932 = vmatpush1.bf16.msra.mxu0 0
        %933 = vmatprep.mubr.bf16.mxu0 0
        %934 = vmatmul.mubr.bf16.gmra.mrb[0].mxu0 %v866
        %v935 = vpop.f32.mrb[0].mxu0
        %v936 = vadd.f32 0.0, %v935
        %v937 = vpop.f32.mrb[0].mxu0
        %v938 = vadd.f32 0.0, %v937
        %v939 = vpop.f32.mrb[0].mxu0
        %v940 = vadd.f32 0.0, %v939
        %v941 = vpop.f32.mrb[0].mxu0
        %v942 = vadd.f32 0.0, %v941
        %943 = vmatprep.mubr.bf16.mxu0 0
        %944 = vmatmul.mubr.bf16.gmra.mrb[0].mxu0 %v869
        %v945 = vpop.f32.mrb[0].mxu0
        %v946 = vadd.f32 0.0, %v945
        %v947 = vpop.f32.mrb[0].mxu0
        %v948 = vadd.f32 0.0, %v947
        %v949 = vpop.f32.mrb[0].mxu0
        %v950 = vadd.f32 0.0, %v949
        %v951 = vpop.f32.mrb[0].mxu0
        %v952 = vadd.f32 0.0, %v951
        %953 = vmatprep.mubr.bf16.mxu0 0
        %954 = vmatmul.mubr.bf16.gmra.mrb[0].mxu0 %v872
        %v955 = vpop.f32.mrb[0].mxu0
        %v956 = vadd.f32 0.0, %v955
        %v957 = vpop.f32.mrb[0].mxu0
        %v958 = vadd.f32 0.0, %v957
        %v959 = vpop.f32.mrb[0].mxu0
        %v960 = vadd.f32 0.0, %v959
        %v961 = vpop.f32.mrb[0].mxu0
        %v962 = vadd.f32 0.0, %v961
        %963 = vmatprep.mubr.bf16.mxu0 0
        %964 = vmatmul.mubr.bf16.gmra.mrb[0].mxu0 %v875
        %v965 = vpop.f32.mrb[0].mxu0
        %v966 = vadd.f32 0.0, %v965
        %v967 = vpop.f32.mrb[0].mxu0
        %v968 = vadd.f32 0.0, %v967
        %v969 = vpop.f32.mrb[0].mxu0
        %v970 = vadd.f32 0.0, %v969
        %v971 = vpop.f32.mrb[0].mxu0
        %v972 = vadd.f32 0.0, %v971
        %973 = vmatprep.mubr.bf16.mxu0 0
        %974 = vmatmul.mubr.bf16.gmra.mrb[0].mxu0 %v878
        %v975 = vpop.f32.mrb[0].mxu0
        %v976 = vadd.f32 0.0, %v975
        %v977 = vpop.f32.mrb[0].mxu0
        %v978 = vadd.f32 0.0, %v977
        %v979 = vpop.f32.mrb[0].mxu0
        %v980 = vadd.f32 0.0, %v979
        %v981 = vpop.f32.mrb[0].mxu0
        %v982 = vadd.f32 0.0, %v981
        %983 = vmatprep.mubr.bf16.mxu0 0
        %984 = vmatmul.mubr.bf16.gmra.mrb[0].mxu0 %v881
        %v985 = vpop.f32.mrb[0].mxu0
        %v986 = vadd.f32 0.0, %v985
        %v987 = vpop.f32.mrb[0].mxu0
        %v988 = vadd.f32 0.0, %v987
        %v989 = vpop.f32.mrb[0].mxu0
        %v990 = vadd.f32 0.0, %v989
        %v991 = vpop.f32.mrb[0].mxu0
        %v992 = vadd.f32 0.0, %v991
        %993 = vmatprep.mubr.bf16.mxu0 0
        %994 = vmatmul.mubr.bf16.gmra.mrb[0].mxu0 %v884
        %v995 = vpop.f32.mrb[0].mxu0
        %v996 = vadd.f32 0.0, %v995
        %v997 = vpop.f32.mrb[0].mxu0
        %v998 = vadd.f32 0.0, %v997
        %v999 = vpop.f32.mrb[0].mxu0
        %v1000 = vadd.f32 0.0, %v999
        %v1001 = vpop.f32.mrb[0].mxu0
        %v1002 = vadd.f32 0.0, %v1001
        %1003 = vmatprep.mubr.bf16.mxu0 0
        %1004 = vmatmul.mubr.bf16.gmra.mrb[0].mxu0 %v887
        %v1005 = vpop.f32.mrb[0].mxu0
        %v1006 = vadd.f32 0.0, %v1005
        %v1007 = vpop.f32.mrb[0].mxu0
        %v1008 = vadd.f32 0.0, %v1007
        %v1009 = vpop.f32.mrb[0].mxu0
        %v1010 = vadd.f32 0.0, %v1009
        %v1011 = vpop.f32.mrb[0].mxu0
        %v1012 = vadd.f32 0.0, %v1011
        %1013 = vmatprep.mubr.bf16.mxu0 0
        %1014 = vmatmul.mubr.bf16.gmra.mrb[0].mxu0 %v890
        %v1015 = vpop.f32.mrb[0].mxu0
        %v1016 = vadd.f32 0.0, %v1015
        %v1017 = vpop.f32.mrb[0].mxu0
        %v1018 = vadd.f32 0.0, %v1017
        %v1019 = vpop.f32.mrb[0].mxu0
        %v1020 = vadd.f32 0.0, %v1019
        %v1021 = vpop.f32.mrb[0].mxu0
        %v1022 = vadd.f32 0.0, %v1021
        %1023 = vmatprep.mubr.bf16.mxu0 0
        %1024 = vmatmul.mubr.bf16.gmra.mrb[0].mxu0 %v893
        %v1025 = vpop.f32.mrb[0].mxu0
        %v1026 = vadd.f32 0.0, %v1025
        %v1027 = vpop.f32.mrb[0].mxu0
        %v1028 = vadd.f32 0.0, %v1027
        %v1029 = vpop.f32.mrb[0].mxu0
        %v1030 = vadd.f32 0.0, %v1029
        %v1031 = vpop.f32.mrb[0].mxu0
        %v1032 = vadd.f32 0.0, %v1031
        %1033 = vmatprep.mubr.bf16.mxu0 0
        %1034 = vmatmul.mubr.bf16.gmra.mrb[0].mxu0 %v896
        %v1035 = vpop.f32.mrb[0].mxu0
        %v1036 = vadd.f32 0.0, %v1035
        %v1037 = vpop.f32.mrb[0].mxu0
        %v1038 = vadd.f32 0.0, %v1037
        %v1039 = vpop.f32.mrb[0].mxu0
        %v1040 = vadd.f32 0.0, %v1039
        %v1041 = vpop.f32.mrb[0].mxu0
        %v1042 = vadd.f32 0.0, %v1041
        %1043 = vmatprep.mubr.bf16.mxu0 0
        %1044 = vmatmul.mubr.bf16.gmra.mrb[0].mxu0 %v899
        %v1045 = vpop.f32.mrb[0].mxu0
        %v1046 = vadd.f32 0.0, %v1045
        %v1047 = vpop.f32.mrb[0].mxu0
        %v1048 = vadd.f32 0.0, %v1047
        %v1049 = vpop.f32.mrb[0].mxu0
        %v1050 = vadd.f32 0.0, %v1049
        %v1051 = vpop.f32.mrb[0].mxu0
        %v1052 = vadd.f32 0.0, %v1051
        %1053 = vdwg.mxu0
        %1054 = vmatprep.subr.bf16.mxu0 %v800
        %1055 = vmatpush1.bf16.msra.mxu0 %v799
        %1056 = vmatprep.subr.bf16.mxu0 %v804
        %1057 = vmatpush1.bf16.msra.mxu0 %v803
        %1058 = vmatprep.subr.bf16.mxu0 0
        %1059 = vmatpush1.bf16.msra.mxu0 0
        %1060 = vmatprep.subr.bf16.mxu0 0
        %1061 = vmatpush1.bf16.msra.mxu0 0
        %1062 = vmatprep.subr.bf16.mxu0 0
        %1063 = vmatpush1.bf16.msra.mxu0 0
        %1064 = vmatprep.subr.bf16.mxu0 0
        %1065 = vmatpush1.bf16.msra.mxu0 0
        %1066 = vmatprep.subr.bf16.mxu0 0
        %1067 = vmatpush1.bf16.msra.mxu0 0
        %1068 = vmatprep.subr.bf16.mxu0 0
        %1069 = vmatpush1.bf16.msra.mxu0 0
        %1070 = vmatprep.subr.bf16.mxu0 0
        %1071 = vmatpush1.bf16.msra.mxu0 0
        %1072 = vmatprep.subr.bf16.mxu0 0
        %1073 = vmatpush1.bf16.msra.mxu0 0
        %1074 = vmatprep.subr.bf16.mxu0 0
        %1075 = vmatpush1.bf16.msra.mxu0 0
        %1076 = vmatprep.subr.bf16.mxu0 0
        %1077 = vmatpush1.bf16.msra.mxu0 0
        %1078 = vmatprep.subr.bf16.mxu0 0
        %1079 = vmatpush1.bf16.msra.mxu0 0
        %1080 = vmatprep.subr.bf16.mxu0 0
        %1081 = vmatpush1.bf16.msra.mxu0 0
        %1082 = vmatprep.subr.bf16.mxu0 0
        %1083 = vmatpush1.bf16.msra.mxu0 0
        %1084 = vmatprep.subr.bf16.mxu0 0
        %1085 = vmatpush1.bf16.msra.mxu0 0
        %1086 = vmatprep.mubr.bf16.mxu0 0
        %1087 = vmatmul.mubr.bf16.gmra.mrb[0].mxu0 %v866
        %v1088 = vpop.f32.mrb[0].mxu0
        %v1089 = vadd.f32 0.0, %v1088
        %v1090 = vpop.f32.mrb[0].mxu0
        %v1091 = vadd.f32 0.0, %v1090
        %v1092 = vpop.f32.mrb[0].mxu0
        %v1093 = vadd.f32 0.0, %v1092
        %v1094 = vpop.f32.mrb[0].mxu0
        %v1095 = vadd.f32 0.0, %v1094
        %1096 = vmatprep.mubr.bf16.mxu0 0
        %1097 = vmatmul.mubr.bf16.gmra.mrb[0].mxu0 %v869
        %v1098 = vpop.f32.mrb[0].mxu0
        %v1099 = vadd.f32 0.0, %v1098
        %v1100 = vpop.f32.mrb[0].mxu0
        %v1101 = vadd.f32 0.0, %v1100
        %v1102 = vpop.f32.mrb[0].mxu0
        %v1103 = vadd.f32 0.0, %v1102
        %v1104 = vpop.f32.mrb[0].mxu0
        %v1105 = vadd.f32 0.0, %v1104
        %1106 = vmatprep.mubr.bf16.mxu0 0
        %1107 = vmatmul.mubr.bf16.gmra.mrb[0].mxu0 %v872
        %v1108 = vpop.f32.mrb[0].mxu0
        %v1109 = vadd.f32 0.0, %v1108
        %v1110 = vpop.f32.mrb[0].mxu0
        %v1111 = vadd.f32 0.0, %v1110
        %v1112 = vpop.f32.mrb[0].mxu0
        %v1113 = vadd.f32 0.0, %v1112
        %v1114 = vpop.f32.mrb[0].mxu0
        %v1115 = vadd.f32 0.0, %v1114
        %1116 = vmatprep.mubr.bf16.mxu0 0
        %1117 = vmatmul.mubr.bf16.gmra.mrb[0].mxu0 %v875
        %v1118 = vpop.f32.mrb[0].mxu0
        %v1119 = vadd.f32 0.0, %v1118
        %v1120 = vpop.f32.mrb[0].mxu0
        %v1121 = vadd.f32 0.0, %v1120
        %v1122 = vpop.f32.mrb[0].mxu0
        %v1123 = vadd.f32 0.0, %v1122
        %v1124 = vpop.f32.mrb[0].mxu0
        %v1125 = vadd.f32 0.0, %v1124
        %1126 = vmatprep.mubr.bf16.mxu0 0
        %1127 = vmatmul.mubr.bf16.gmra.mrb[0].mxu0 %v878
        %v1128 = vpop.f32.mrb[0].mxu0
        %v1129 = vadd.f32 0.0, %v1128
        %v1130 = vpop.f32.mrb[0].mxu0
        %v1131 = vadd.f32 0.0, %v1130
        %v1132 = vpop.f32.mrb[0].mxu0
        %v1133 = vadd.f32 0.0, %v1132
        %v1134 = vpop.f32.mrb[0].mxu0
        %v1135 = vadd.f32 0.0, %v1134
        %1136 = vmatprep.mubr.bf16.mxu0 0
        %1137 = vmatmul.mubr.bf16.gmra.mrb[0].mxu0 %v881
        %v1138 = vpop.f32.mrb[0].mxu0
        %v1139 = vadd.f32 0.0, %v1138
        %v1140 = vpop.f32.mrb[0].mxu0
        %v1141 = vadd.f32 0.0, %v1140
        %v1142 = vpop.f32.mrb[0].mxu0
        %v1143 = vadd.f32 0.0, %v1142
        %v1144 = vpop.f32.mrb[0].mxu0
        %v1145 = vadd.f32 0.0, %v1144
        %1146 = vmatprep.mubr.bf16.mxu0 0
        %1147 = vmatmul.mubr.bf16.gmra.mrb[0].mxu0 %v884
        %v1148 = vpop.f32.mrb[0].mxu0
        %v1149 = vadd.f32 0.0, %v1148
        %v1150 = vpop.f32.mrb[0].mxu0
        %v1151 = vadd.f32 0.0, %v1150
        %v1152 = vpop.f32.mrb[0].mxu0
        %v1153 = vadd.f32 0.0, %v1152
        %v1154 = vpop.f32.mrb[0].mxu0
        %v1155 = vadd.f32 0.0, %v1154
        %1156 = vmatprep.mubr.bf16.mxu0 0
        %1157 = vmatmul.mubr.bf16.gmra.mrb[0].mxu0 %v887
        %v1158 = vpop.f32.mrb[0].mxu0
        %v1159 = vadd.f32 0.0, %v1158
        %v1160 = vpop.f32.mrb[0].mxu0
        %v1161 = vadd.f32 0.0, %v1160
        %v1162 = vpop.f32.mrb[0].mxu0
        %v1163 = vadd.f32 0.0, %v1162
        %v1164 = vpop.f32.mrb[0].mxu0
        %v1165 = vadd.f32 0.0, %v1164
        %1166 = vmatprep.mubr.bf16.mxu0 0
        %1167 = vmatmul.mubr.bf16.gmra.mrb[0].mxu0 %v890
        %v1168 = vpop.f32.mrb[0].mxu0
        %v1169 = vadd.f32 0.0, %v1168
        %v1170 = vpop.f32.mrb[0].mxu0
        %v1171 = vadd.f32 0.0, %v1170
        %v1172 = vpop.f32.mrb[0].mxu0
        %v1173 = vadd.f32 0.0, %v1172
        %v1174 = vpop.f32.mrb[0].mxu0
        %v1175 = vadd.f32 0.0, %v1174
        %1176 = vmatprep.mubr.bf16.mxu0 0
        %1177 = vmatmul.mubr.bf16.gmra.mrb[0].mxu0 %v893
        %v1178 = vpop.f32.mrb[0].mxu0
        %v1179 = vadd.f32 0.0, %v1178
        %v1180 = vpop.f32.mrb[0].mxu0
        %v1181 = vadd.f32 0.0, %v1180
        %v1182 = vpop.f32.mrb[0].mxu0
        %v1183 = vadd.f32 0.0, %v1182
        %v1184 = vpop.f32.mrb[0].mxu0
        %v1185 = vadd.f32 0.0, %v1184
        %1186 = vmatprep.mubr.bf16.mxu0 0
        %1187 = vmatmul.mubr.bf16.gmra.mrb[0].mxu0 %v896
        %v1188 = vpop.f32.mrb[0].mxu0
        %v1189 = vadd.f32 0.0, %v1188
        %v1190 = vpop.f32.mrb[0].mxu0
        %v1191 = vadd.f32 0.0, %v1190
        %v1192 = vpop.f32.mrb[0].mxu0
        %v1193 = vadd.f32 0.0, %v1192
        %v1194 = vpop.f32.mrb[0].mxu0
        %v1195 = vadd.f32 0.0, %v1194
        %1196 = vmatprep.mubr.bf16.mxu0 0
        %1197 = vmatmul.mubr.bf16.gmra.mrb[0].mxu0 %v899
        %v1198 = vpop.f32.mrb[0].mxu0
        %v1199 = vadd.f32 0.0, %v1198
        %v1200 = vpop.f32.mrb[0].mxu0
        %v1201 = vadd.f32 0.0, %v1200
        %v1202 = vpop.f32.mrb[0].mxu0
        %v1203 = vadd.f32 0.0, %v1202
        %v1204 = vpop.f32.mrb[0].mxu0
        %v1205 = vadd.f32 0.0, %v1204
        %1206 = vdwg.mxu0
        %v1207 = vpack.c.bf16 %v940, %v936
        %v1208 = vpack.c.bf16 %v942, %v938
        %v1209 = vpack.c.bf16 %v1093, %v1089
        %v1210 = vpack.c.bf16 %v1095, %v1091
        %v1211 = vpack.c.bf16 %v950, %v946
        %v1212 = vpack.c.bf16 %v952, %v948
        %v1213 = vpack.c.bf16 %v1103, %v1099
        %v1214 = vpack.c.bf16 %v1105, %v1101
        %v1215 = vpack.c.bf16 %v960, %v956
        %v1216 = vpack.c.bf16 %v962, %v958
        %v1217 = vpack.c.bf16 %v1113, %v1109
        %v1218 = vpack.c.bf16 %v1115, %v1111
        %v1219 = vpack.c.bf16 %v970, %v966
        %v1220 = vpack.c.bf16 %v972, %v968
        %v1221 = vpack.c.bf16 %v1123, %v1119
        %v1222 = vpack.c.bf16 %v1125, %v1121
        %v1223 = vpack.c.bf16 %v980, %v976
        %v1224 = vpack.c.bf16 %v982, %v978
        %v1225 = vpack.c.bf16 %v1133, %v1129
        %v1226 = vpack.c.bf16 %v1135, %v1131
        %v1227 = vpack.c.bf16 %v990, %v986
        %v1228 = vpack.c.bf16 %v992, %v988
        %v1229 = vpack.c.bf16 %v1143, %v1139
        %v1230 = vpack.c.bf16 %v1145, %v1141
        %v1231 = vpack.c.bf16 %v1000, %v996
        %v1232 = vpack.c.bf16 %v1002, %v998
        %v1233 = vpack.c.bf16 %v1153, %v1149
        %v1234 = vpack.c.bf16 %v1155, %v1151
        %v1235 = vpack.c.bf16 %v1010, %v1006
        %v1236 = vpack.c.bf16 %v1012, %v1008
        %v1237 = vpack.c.bf16 %v1163, %v1159
        %v1238 = vpack.c.bf16 %v1165, %v1161
        %v1239 = vpack.c.bf16 %v1020, %v1016
        %v1240 = vpack.c.bf16 %v1022, %v1018
        %v1241 = vpack.c.bf16 %v1173, %v1169
        %v1242 = vpack.c.bf16 %v1175, %v1171
        %v1243 = vpack.c.bf16 %v1030, %v1026
        %v1244 = vpack.c.bf16 %v1032, %v1028
        %v1245 = vpack.c.bf16 %v1183, %v1179
        %v1246 = vpack.c.bf16 %v1185, %v1181
        %v1247 = vpack.c.bf16 %v1040, %v1036
        %v1248 = vpack.c.bf16 %v1042, %v1038
        %v1249 = vpack.c.bf16 %v1193, %v1189
        %v1250 = vpack.c.bf16 %v1195, %v1191
        %v1251 = vpack.c.bf16 %v1050, %v1046
        %v1252 = vpack.c.bf16 %v1052, %v1048
        %v1253 = vpack.c.bf16 %v1203, %v1199
        %v1254 = vpack.c.bf16 %v1205, %v1201
        %1255 = vxpose.xlu0.c.b16.start [1/8] %v1207, 128
        %1256 = vxpose.xlu0.c.b16.cont [2/8] 0, 128
        %1257 = vxpose.xlu0.c.b16.cont [3/8] 0, 128
        %1258 = vxpose.xlu0.c.b16.cont [4/8] 0, 128
        %1259 = vxpose.xlu0.c.b16.cont [5/8] 0, 128
        %1260 = vxpose.xlu0.c.b16.cont [6/8] 0, 128
        %1261 = vxpose.xlu0.c.b16.cont [7/8] 0, 128
        %1262 = vxpose.xlu0.c.b16.end [8/8] 0, 128
        %v1263 = vpop.trf.xlu0
        %v1264 = vpop.trf.xlu0
        %v1265 = vpop.trf.xlu0
        %v1266 = vpop.trf.xlu0
        %v1267 = vpop.trf.xlu0
        %v1268 = vpop.trf.xlu0
        %v1269 = vpop.trf.xlu0
        %v1270 = vpop.trf.xlu0
        %1271 = vxpose.xlu0.c.b16.start [1/8] %v1211, 128
        %1272 = vxpose.xlu0.c.b16.cont [2/8] 0, 128
        %1273 = vxpose.xlu0.c.b16.cont [3/8] 0, 128
        %1274 = vxpose.xlu0.c.b16.cont [4/8] 0, 128
        %1275 = vxpose.xlu0.c.b16.cont [5/8] 0, 128
        %1276 = vxpose.xlu0.c.b16.cont [6/8] 0, 128
        %1277 = vxpose.xlu0.c.b16.cont [7/8] 0, 128
        %1278 = vxpose.xlu0.c.b16.end [8/8] 0, 128
        %v1279 = vpop.trf.xlu0
        %v1280 = vpop.trf.xlu0
        %v1281 = vpop.trf.xlu0
        %v1282 = vpop.trf.xlu0
        %v1283 = vpop.trf.xlu0
        %v1284 = vpop.trf.xlu0
        %v1285 = vpop.trf.xlu0
        %v1286 = vpop.trf.xlu0
        %1287 = vxpose.xlu0.c.b16.start [1/8] %v1215, 128
        %1288 = vxpose.xlu0.c.b16.cont [2/8] 0, 128
        %1289 = vxpose.xlu0.c.b16.cont [3/8] 0, 128
        %1290 = vxpose.xlu0.c.b16.cont [4/8] 0, 128
        %1291 = vxpose.xlu0.c.b16.cont [5/8] 0, 128
        %1292 = vxpose.xlu0.c.b16.cont [6/8] 0, 128
        %1293 = vxpose.xlu0.c.b16.cont [7/8] 0, 128
        %1294 = vxpose.xlu0.c.b16.end [8/8] 0, 128
        %v1295 = vpop.trf.xlu0
        %v1296 = vpop.trf.xlu0
        %v1297 = vpop.trf.xlu0
        %v1298 = vpop.trf.xlu0
        %v1299 = vpop.trf.xlu0
        %v1300 = vpop.trf.xlu0
        %v1301 = vpop.trf.xlu0
        %v1302 = vpop.trf.xlu0
        %1303 = vxpose.xlu0.c.b16.start [1/8] %v1219, 128
        %1304 = vxpose.xlu0.c.b16.cont [2/8] 0, 128
        %1305 = vxpose.xlu0.c.b16.cont [3/8] 0, 128
        %1306 = vxpose.xlu0.c.b16.cont [4/8] 0, 128
        %1307 = vxpose.xlu0.c.b16.cont [5/8] 0, 128
        %1308 = vxpose.xlu0.c.b16.cont [6/8] 0, 128
        %1309 = vxpose.xlu0.c.b16.cont [7/8] 0, 128
        %1310 = vxpose.xlu0.c.b16.end [8/8] 0, 128
        %v1311 = vpop.trf.xlu0
        %v1312 = vpop.trf.xlu0
        %v1313 = vpop.trf.xlu0
        %v1314 = vpop.trf.xlu0
        %v1315 = vpop.trf.xlu0
        %v1316 = vpop.trf.xlu0
        %v1317 = vpop.trf.xlu0
        %v1318 = vpop.trf.xlu0
        %vm1319 = vcmask 130048
        %v1321 = vsel %vm1319, %v1263, 0
        %v1324 = vsel %vm1319, %v1264, 0
        %v1327 = vsel %vm1319, %v1265, 0
        %v1330 = vsel %vm1319, %v1266, 0
        %v1333 = vsel %vm1319, %v1267, 0
        %v1336 = vsel %vm1319, %v1268, 0
        %v1339 = vsel %vm1319, %v1269, 0
        %v1342 = vsel %vm1319, %v1270, 0
        %1344 = vmatprep.subr.bf16.mxu0 0
        %1345 = vmatpush1.bf16.msra.mxu0 %v1223
        %1346 = vmatprep.subr.bf16.mxu0 0
        %1347 = vmatpush1.bf16.msra.mxu0 0
        %1348 = vmatprep.subr.bf16.mxu0 0
        %1349 = vmatpush1.bf16.msra.mxu0 0
        %1350 = vmatprep.subr.bf16.mxu0 0
        %1351 = vmatpush1.bf16.msra.mxu0 0
        %1352 = vmatprep.subr.bf16.mxu0 0
        %1353 = vmatpush1.bf16.msra.mxu0 0
        %1354 = vmatprep.subr.bf16.mxu0 0
        %1355 = vmatpush1.bf16.msra.mxu0 0
        %1356 = vmatprep.subr.bf16.mxu0 0
        %1357 = vmatpush1.bf16.msra.mxu0 0
        %1358 = vmatprep.subr.bf16.mxu0 0
        %1359 = vmatpush1.bf16.msra.mxu0 0
        %1360 = vmatprep.subr.bf16.mxu0 0
        %1361 = vmatpush1.bf16.msra.mxu0 0
        %1362 = vmatprep.subr.bf16.mxu0 0
        %1363 = vmatpush1.bf16.msra.mxu0 0
        %1364 = vmatprep.subr.bf16.mxu0 0
        %1365 = vmatpush1.bf16.msra.mxu0 0
        %1366 = vmatprep.subr.bf16.mxu0 0
        %1367 = vmatpush1.bf16.msra.mxu0 0
        %1368 = vmatprep.subr.bf16.mxu0 0
        %1369 = vmatpush1.bf16.msra.mxu0 0
        %1370 = vmatprep.subr.bf16.mxu0 0
        %1371 = vmatpush1.bf16.msra.mxu0 0
        %1372 = vmatprep.subr.bf16.mxu0 0
        %1373 = vmatpush1.bf16.msra.mxu0 0
        %1374 = vmatprep.subr.bf16.mxu0 0
        %1375 = vmatpush1.bf16.msra.mxu0 0
        %1376 = vmatprep.mubr.bf16.mxu0 0
        %1377 = vmatmul.mubr.bf16.gmra.mrb[0].mxu0 %v1321
        %v1378 = vpop.f32.mrb[0].mxu0
        %v1379 = vadd.f32 0.0, %v1378
        %v1380 = vpop.f32.mrb[0].mxu0
        %v1381 = vpop.f32.mrb[0].mxu0
        %v1382 = vadd.f32 0.0, %v1381
        %v1383 = vpop.f32.mrb[0].mxu0
        %1384 = vmatprep.mubr.bf16.mxu0 0
        %1385 = vmatmul.mubr.bf16.gmra.mrb[0].mxu0 %v1324
        %v1386 = vpop.f32.mrb[0].mxu0
        %v1387 = vadd.f32 0.0, %v1386
        %v1388 = vpop.f32.mrb[0].mxu0
        %v1389 = vpop.f32.mrb[0].mxu0
        %v1390 = vadd.f32 0.0, %v1389
        %v1391 = vpop.f32.mrb[0].mxu0
        %1392 = vmatprep.mubr.bf16.mxu0 0
        %1393 = vmatmul.mubr.bf16.gmra.mrb[0].mxu0 %v1327
        %v1394 = vpop.f32.mrb[0].mxu0
        %v1395 = vadd.f32 0.0, %v1394
        %v1396 = vpop.f32.mrb[0].mxu0
        %v1397 = vpop.f32.mrb[0].mxu0
        %v1398 = vadd.f32 0.0, %v1397
        %v1399 = vpop.f32.mrb[0].mxu0
        %1400 = vmatprep.mubr.bf16.mxu0 0
        %1401 = vmatmul.mubr.bf16.gmra.mrb[0].mxu0 %v1330
        %v1402 = vpop.f32.mrb[0].mxu0
        %v1403 = vadd.f32 0.0, %v1402
        %v1404 = vpop.f32.mrb[0].mxu0
        %v1405 = vpop.f32.mrb[0].mxu0
        %v1406 = vadd.f32 0.0, %v1405
        %v1407 = vpop.f32.mrb[0].mxu0
        %1408 = vmatprep.mubr.bf16.mxu0 0
        %1409 = vmatmul.mubr.bf16.gmra.mrb[0].mxu0 %v1333
        %v1410 = vpop.f32.mrb[0].mxu0
        %v1411 = vadd.f32 0.0, %v1410
        %v1412 = vpop.f32.mrb[0].mxu0
        %v1413 = vpop.f32.mrb[0].mxu0
        %v1414 = vadd.f32 0.0, %v1413
        %v1415 = vpop.f32.mrb[0].mxu0
        %1416 = vmatprep.mubr.bf16.mxu0 0
        %1417 = vmatmul.mubr.bf16.gmra.mrb[0].mxu0 %v1336
        %v1418 = vpop.f32.mrb[0].mxu0
        %v1419 = vadd.f32 0.0, %v1418
        %v1420 = vpop.f32.mrb[0].mxu0
        %v1421 = vpop.f32.mrb[0].mxu0
        %v1422 = vadd.f32 0.0, %v1421
        %v1423 = vpop.f32.mrb[0].mxu0
        %1424 = vmatprep.mubr.bf16.mxu0 0
        %1425 = vmatmul.mubr.bf16.gmra.mrb[0].mxu0 %v1339
        %v1426 = vpop.f32.mrb[0].mxu0
        %v1427 = vadd.f32 0.0, %v1426
        %v1428 = vpop.f32.mrb[0].mxu0
        %v1429 = vpop.f32.mrb[0].mxu0
        %v1430 = vadd.f32 0.0, %v1429
        %v1431 = vpop.f32.mrb[0].mxu0
        %1432 = vmatprep.mubr.bf16.mxu0 0
        %1433 = vmatmul.mubr.bf16.gmra.mrb[0].mxu0 %v1342
        %v1434 = vpop.f32.mrb[0].mxu0
        %v1435 = vadd.f32 0.0, %v1434
        %v1436 = vpop.f32.mrb[0].mxu0
        %v1437 = vpop.f32.mrb[0].mxu0
        %v1438 = vadd.f32 0.0, %v1437
        %v1439 = vpop.f32.mrb[0].mxu0
        %1440 = vdwg.mxu0
        %v1442 = vsel %vm1319, %v1279, 0
        %v1445 = vsel %vm1319, %v1280, 0
        %v1448 = vsel %vm1319, %v1281, 0
        %v1451 = vsel %vm1319, %v1282, 0
        %v1454 = vsel %vm1319, %v1283, 0
        %v1457 = vsel %vm1319, %v1284, 0
        %v1460 = vsel %vm1319, %v1285, 0
        %v1463 = vsel %vm1319, %v1286, 0
        %1465 = vmatprep.subr.bf16.mxu0 0
        %1466 = vmatpush1.bf16.msra.mxu0 %v1227
        %1467 = vmatprep.subr.bf16.mxu0 0
        %1468 = vmatpush1.bf16.msra.mxu0 0
        %1469 = vmatprep.subr.bf16.mxu0 0
        %1470 = vmatpush1.bf16.msra.mxu0 0
        %1471 = vmatprep.subr.bf16.mxu0 0
        %1472 = vmatpush1.bf16.msra.mxu0 0
        %1473 = vmatprep.subr.bf16.mxu0 0
        %1474 = vmatpush1.bf16.msra.mxu0 0
        %1475 = vmatprep.subr.bf16.mxu0 0
        %1476 = vmatpush1.bf16.msra.mxu0 0
        %1477 = vmatprep.subr.bf16.mxu0 0
        %1478 = vmatpush1.bf16.msra.mxu0 0
        %1479 = vmatprep.subr.bf16.mxu0 0
        %1480 = vmatpush1.bf16.msra.mxu0 0
        %1481 = vmatprep.subr.bf16.mxu0 0
        %1482 = vmatpush1.bf16.msra.mxu0 0
        %1483 = vmatprep.subr.bf16.mxu0 0
        %1484 = vmatpush1.bf16.msra.mxu0 0
        %1485 = vmatprep.subr.bf16.mxu0 0
        %1486 = vmatpush1.bf16.msra.mxu0 0
        %1487 = vmatprep.subr.bf16.mxu0 0
        %1488 = vmatpush1.bf16.msra.mxu0 0
        %1489 = vmatprep.subr.bf16.mxu0 0
        %1490 = vmatpush1.bf16.msra.mxu0 0
        %1491 = vmatprep.subr.bf16.mxu0 0
        %1492 = vmatpush1.bf16.msra.mxu0 0
        %1493 = vmatprep.subr.bf16.mxu0 0
        %1494 = vmatpush1.bf16.msra.mxu0 0
        %1495 = vmatprep.subr.bf16.mxu0 0
        %1496 = vmatpush1.bf16.msra.mxu0 0
        %1497 = vmatprep.mubr.bf16.mxu0 0
        %1498 = vmatmul.mubr.bf16.gmra.mrb[0].mxu0 %v1442
        %v1499 = vpop.f32.mrb[0].mxu0
        %v1500 = vadd.f32 0.0, %v1499
        %v1501 = vpop.f32.mrb[0].mxu0
        %v1502 = vpop.f32.mrb[0].mxu0
        %v1503 = vadd.f32 0.0, %v1502
        %v1504 = vpop.f32.mrb[0].mxu0
        %1505 = vmatprep.mubr.bf16.mxu0 0
        %1506 = vmatmul.mubr.bf16.gmra.mrb[0].mxu0 %v1445
        %v1507 = vpop.f32.mrb[0].mxu0
        %v1508 = vadd.f32 0.0, %v1507
        %v1509 = vpop.f32.mrb[0].mxu0
        %v1510 = vpop.f32.mrb[0].mxu0
        %v1511 = vadd.f32 0.0, %v1510
        %v1512 = vpop.f32.mrb[0].mxu0
        %1513 = vmatprep.mubr.bf16.mxu0 0
        %1514 = vmatmul.mubr.bf16.gmra.mrb[0].mxu0 %v1448
        %v1515 = vpop.f32.mrb[0].mxu0
        %v1516 = vadd.f32 0.0, %v1515
        %v1517 = vpop.f32.mrb[0].mxu0
        %v1518 = vpop.f32.mrb[0].mxu0
        %v1519 = vadd.f32 0.0, %v1518
        %v1520 = vpop.f32.mrb[0].mxu0
        %1521 = vmatprep.mubr.bf16.mxu0 0
        %1522 = vmatmul.mubr.bf16.gmra.mrb[0].mxu0 %v1451
        %v1523 = vpop.f32.mrb[0].mxu0
        %v1524 = vadd.f32 0.0, %v1523
        %v1525 = vpop.f32.mrb[0].mxu0
        %v1526 = vpop.f32.mrb[0].mxu0
        %v1527 = vadd.f32 0.0, %v1526
        %v1528 = vpop.f32.mrb[0].mxu0
        %1529 = vmatprep.mubr.bf16.mxu0 0
        %1530 = vmatmul.mubr.bf16.gmra.mrb[0].mxu0 %v1454
        %v1531 = vpop.f32.mrb[0].mxu0
        %v1532 = vadd.f32 0.0, %v1531
        %v1533 = vpop.f32.mrb[0].mxu0
        %v1534 = vpop.f32.mrb[0].mxu0
        %v1535 = vadd.f32 0.0, %v1534
        %v1536 = vpop.f32.mrb[0].mxu0
        %1537 = vmatprep.mubr.bf16.mxu0 0
        %1538 = vmatmul.mubr.bf16.gmra.mrb[0].mxu0 %v1457
        %v1539 = vpop.f32.mrb[0].mxu0
        %v1540 = vadd.f32 0.0, %v1539
        %v1541 = vpop.f32.mrb[0].mxu0
        %v1542 = vpop.f32.mrb[0].mxu0
        %v1543 = vadd.f32 0.0, %v1542
        %v1544 = vpop.f32.mrb[0].mxu0
        %1545 = vmatprep.mubr.bf16.mxu0 0
        %1546 = vmatmul.mubr.bf16.gmra.mrb[0].mxu0 %v1460
        %v1547 = vpop.f32.mrb[0].mxu0
        %v1548 = vadd.f32 0.0, %v1547
        %v1549 = vpop.f32.mrb[0].mxu0
        %v1550 = vpop.f32.mrb[0].mxu0
        %v1551 = vadd.f32 0.0, %v1550
        %v1552 = vpop.f32.mrb[0].mxu0
        %1553 = vmatprep.mubr.bf16.mxu0 0
        %1554 = vmatmul.mubr.bf16.gmra.mrb[0].mxu0 %v1463
        %v1555 = vpop.f32.mrb[0].mxu0
        %v1556 = vadd.f32 0.0, %v1555
        %v1557 = vpop.f32.mrb[0].mxu0
        %v1558 = vpop.f32.mrb[0].mxu0
        %v1559 = vadd.f32 0.0, %v1558
        %v1560 = vpop.f32.mrb[0].mxu0
        %1561 = vdwg.mxu0
        %v1563 = vsel %vm1319, %v1295, 0
        %v1566 = vsel %vm1319, %v1296, 0
        %v1569 = vsel %vm1319, %v1297, 0
        %v1572 = vsel %vm1319, %v1298, 0
        %v1575 = vsel %vm1319, %v1299, 0
        %v1578 = vsel %vm1319, %v1300, 0
        %v1581 = vsel %vm1319, %v1301, 0
        %v1584 = vsel %vm1319, %v1302, 0
        %1586 = vmatprep.subr.bf16.mxu0 0
        %1587 = vmatpush1.bf16.msra.mxu0 %v1231
        %1588 = vmatprep.subr.bf16.mxu0 0
        %1589 = vmatpush1.bf16.msra.mxu0 0
        %1590 = vmatprep.subr.bf16.mxu0 0
        %1591 = vmatpush1.bf16.msra.mxu0 0
        %1592 = vmatprep.subr.bf16.mxu0 0
        %1593 = vmatpush1.bf16.msra.mxu0 0
        %1594 = vmatprep.subr.bf16.mxu0 0
        %1595 = vmatpush1.bf16.msra.mxu0 0
        %1596 = vmatprep.subr.bf16.mxu0 0
        %1597 = vmatpush1.bf16.msra.mxu0 0
        %1598 = vmatprep.subr.bf16.mxu0 0
        %1599 = vmatpush1.bf16.msra.mxu0 0
        %1600 = vmatprep.subr.bf16.mxu0 0
        %1601 = vmatpush1.bf16.msra.mxu0 0
        %1602 = vmatprep.subr.bf16.mxu0 0
        %1603 = vmatpush1.bf16.msra.mxu0 0
        %1604 = vmatprep.subr.bf16.mxu0 0
        %1605 = vmatpush1.bf16.msra.mxu0 0
        %1606 = vmatprep.subr.bf16.mxu0 0
        %1607 = vmatpush1.bf16.msra.mxu0 0
        %1608 = vmatprep.subr.bf16.mxu0 0
        %1609 = vmatpush1.bf16.msra.mxu0 0
        %1610 = vmatprep.subr.bf16.mxu0 0
        %1611 = vmatpush1.bf16.msra.mxu0 0
        %1612 = vmatprep.subr.bf16.mxu0 0
        %1613 = vmatpush1.bf16.msra.mxu0 0
        %1614 = vmatprep.subr.bf16.mxu0 0
        %1615 = vmatpush1.bf16.msra.mxu0 0
        %1616 = vmatprep.subr.bf16.mxu0 0
        %1617 = vmatpush1.bf16.msra.mxu0 0
        %1618 = vmatprep.mubr.bf16.mxu0 0
        %1619 = vmatmul.mubr.bf16.gmra.mrb[0].mxu0 %v1563
        %v1620 = vpop.f32.mrb[0].mxu0
        %v1621 = vadd.f32 0.0, %v1620
        %v1622 = vpop.f32.mrb[0].mxu0
        %v1623 = vpop.f32.mrb[0].mxu0
        %v1624 = vadd.f32 0.0, %v1623
        %v1625 = vpop.f32.mrb[0].mxu0
        %1626 = vmatprep.mubr.bf16.mxu0 0
        %1627 = vmatmul.mubr.bf16.gmra.mrb[0].mxu0 %v1566
        %v1628 = vpop.f32.mrb[0].mxu0
        %v1629 = vadd.f32 0.0, %v1628
        %v1630 = vpop.f32.mrb[0].mxu0
        %v1631 = vpop.f32.mrb[0].mxu0
        %v1632 = vadd.f32 0.0, %v1631
        %v1633 = vpop.f32.mrb[0].mxu0
        %1634 = vmatprep.mubr.bf16.mxu0 0
        %1635 = vmatmul.mubr.bf16.gmra.mrb[0].mxu0 %v1569
        %v1636 = vpop.f32.mrb[0].mxu0
        %v1637 = vadd.f32 0.0, %v1636
        %v1638 = vpop.f32.mrb[0].mxu0
        %v1639 = vpop.f32.mrb[0].mxu0
        %v1640 = vadd.f32 0.0, %v1639
        %v1641 = vpop.f32.mrb[0].mxu0
        %1642 = vmatprep.mubr.bf16.mxu0 0
        %1643 = vmatmul.mubr.bf16.gmra.mrb[0].mxu0 %v1572
        %v1644 = vpop.f32.mrb[0].mxu0
        %v1645 = vadd.f32 0.0, %v1644
        %v1646 = vpop.f32.mrb[0].mxu0
        %v1647 = vpop.f32.mrb[0].mxu0
        %v1648 = vadd.f32 0.0, %v1647
        %v1649 = vpop.f32.mrb[0].mxu0
        %1650 = vmatprep.mubr.bf16.mxu0 0
        %1651 = vmatmul.mubr.bf16.gmra.mrb[0].mxu0 %v1575
        %v1652 = vpop.f32.mrb[0].mxu0
        %v1653 = vadd.f32 0.0, %v1652
        %v1654 = vpop.f32.mrb[0].mxu0
        %v1655 = vpop.f32.mrb[0].mxu0
        %v1656 = vadd.f32 0.0, %v1655
        %v1657 = vpop.f32.mrb[0].mxu0
        %1658 = vmatprep.mubr.bf16.mxu0 0
        %1659 = vmatmul.mubr.bf16.gmra.mrb[0].mxu0 %v1578
        %v1660 = vpop.f32.mrb[0].mxu0
        %v1661 = vadd.f32 0.0, %v1660
        %v1662 = vpop.f32.mrb[0].mxu0
        %v1663 = vpop.f32.mrb[0].mxu0
        %v1664 = vadd.f32 0.0, %v1663
        %v1665 = vpop.f32.mrb[0].mxu0
        %1666 = vmatprep.mubr.bf16.mxu0 0
        %1667 = vmatmul.mubr.bf16.gmra.mrb[0].mxu0 %v1581
        %v1668 = vpop.f32.mrb[0].mxu0
        %v1669 = vadd.f32 0.0, %v1668
        %v1670 = vpop.f32.mrb[0].mxu0
        %v1671 = vpop.f32.mrb[0].mxu0
        %v1672 = vadd.f32 0.0, %v1671
        %v1673 = vpop.f32.mrb[0].mxu0
        %1674 = vmatprep.mubr.bf16.mxu0 0
        %1675 = vmatmul.mubr.bf16.gmra.mrb[0].mxu0 %v1584
        %v1676 = vpop.f32.mrb[0].mxu0
        %v1677 = vadd.f32 0.0, %v1676
        %v1678 = vpop.f32.mrb[0].mxu0
        %v1679 = vpop.f32.mrb[0].mxu0
        %v1680 = vadd.f32 0.0, %v1679
        %v1681 = vpop.f32.mrb[0].mxu0
        %1682 = vdwg.mxu0
        %v1684 = vsel %vm1319, %v1311, 0
        %v1687 = vsel %vm1319, %v1312, 0
        %v1690 = vsel %vm1319, %v1313, 0
        %v1693 = vsel %vm1319, %v1314, 0
        %v1696 = vsel %vm1319, %v1315, 0
        %v1699 = vsel %vm1319, %v1316, 0
        %v1702 = vsel %vm1319, %v1317, 0
        %v1705 = vsel %vm1319, %v1318, 0
        %1707 = vmatprep.subr.bf16.mxu0 0
        %1708 = vmatpush1.bf16.msra.mxu0 %v1235
        %1709 = vmatprep.subr.bf16.mxu0 0
        %1710 = vmatpush1.bf16.msra.mxu0 0
        %1711 = vmatprep.subr.bf16.mxu0 0
        %1712 = vmatpush1.bf16.msra.mxu0 0
        %1713 = vmatprep.subr.bf16.mxu0 0
        %1714 = vmatpush1.bf16.msra.mxu0 0
        %1715 = vmatprep.subr.bf16.mxu0 0
        %1716 = vmatpush1.bf16.msra.mxu0 0
        %1717 = vmatprep.subr.bf16.mxu0 0
        %1718 = vmatpush1.bf16.msra.mxu0 0
        %1719 = vmatprep.subr.bf16.mxu0 0
        %1720 = vmatpush1.bf16.msra.mxu0 0
        %1721 = vmatprep.subr.bf16.mxu0 0
        %1722 = vmatpush1.bf16.msra.mxu0 0
        %1723 = vmatprep.subr.bf16.mxu0 0
        %1724 = vmatpush1.bf16.msra.mxu0 0
        %1725 = vmatprep.subr.bf16.mxu0 0
        %1726 = vmatpush1.bf16.msra.mxu0 0
        %1727 = vmatprep.subr.bf16.mxu0 0
        %1728 = vmatpush1.bf16.msra.mxu0 0
        %1729 = vmatprep.subr.bf16.mxu0 0
        %1730 = vmatpush1.bf16.msra.mxu0 0
        %1731 = vmatprep.subr.bf16.mxu0 0
        %1732 = vmatpush1.bf16.msra.mxu0 0
        %1733 = vmatprep.subr.bf16.mxu0 0
        %1734 = vmatpush1.bf16.msra.mxu0 0
        %1735 = vmatprep.subr.bf16.mxu0 0
        %1736 = vmatpush1.bf16.msra.mxu0 0
        %1737 = vmatprep.subr.bf16.mxu0 0
        %1738 = vmatpush1.bf16.msra.mxu0 0
        %1739 = vmatprep.mubr.bf16.mxu0 0
        %1740 = vmatmul.mubr.bf16.gmra.mrb[0].mxu0 %v1684
        %v1741 = vpop.f32.mrb[0].mxu0
        %v1742 = vadd.f32 0.0, %v1741
        %v1743 = vpop.f32.mrb[0].mxu0
        %v1744 = vpop.f32.mrb[0].mxu0
        %v1745 = vadd.f32 0.0, %v1744
        %v1746 = vpop.f32.mrb[0].mxu0
        %1747 = vmatprep.mubr.bf16.mxu0 0
        %1748 = vmatmul.mubr.bf16.gmra.mrb[0].mxu0 %v1687
        %v1749 = vpop.f32.mrb[0].mxu0
        %v1750 = vadd.f32 0.0, %v1749
        %v1751 = vpop.f32.mrb[0].mxu0
        %v1752 = vpop.f32.mrb[0].mxu0
        %v1753 = vadd.f32 0.0, %v1752
        %v1754 = vpop.f32.mrb[0].mxu0
        %1755 = vmatprep.mubr.bf16.mxu0 0
        %1756 = vmatmul.mubr.bf16.gmra.mrb[0].mxu0 %v1690
        %v1757 = vpop.f32.mrb[0].mxu0
        %v1758 = vadd.f32 0.0, %v1757
        %v1759 = vpop.f32.mrb[0].mxu0
        %v1760 = vpop.f32.mrb[0].mxu0
        %v1761 = vadd.f32 0.0, %v1760
        %v1762 = vpop.f32.mrb[0].mxu0
        %1763 = vmatprep.mubr.bf16.mxu0 0
        %1764 = vmatmul.mubr.bf16.gmra.mrb[0].mxu0 %v1693
        %v1765 = vpop.f32.mrb[0].mxu0
        %v1766 = vadd.f32 0.0, %v1765
        %v1767 = vpop.f32.mrb[0].mxu0
        %v1768 = vpop.f32.mrb[0].mxu0
        %v1769 = vadd.f32 0.0, %v1768
        %v1770 = vpop.f32.mrb[0].mxu0
        %1771 = vmatprep.mubr.bf16.mxu0 0
        %1772 = vmatmul.mubr.bf16.gmra.mrb[0].mxu0 %v1696
        %v1773 = vpop.f32.mrb[0].mxu0
        %v1774 = vadd.f32 0.0, %v1773
        %v1775 = vpop.f32.mrb[0].mxu0
        %v1776 = vpop.f32.mrb[0].mxu0
        %v1777 = vadd.f32 0.0, %v1776
        %v1778 = vpop.f32.mrb[0].mxu0
        %1779 = vmatprep.mubr.bf16.mxu0 0
        %1780 = vmatmul.mubr.bf16.gmra.mrb[0].mxu0 %v1699
        %v1781 = vpop.f32.mrb[0].mxu0
        %v1782 = vadd.f32 0.0, %v1781
        %v1783 = vpop.f32.mrb[0].mxu0
        %v1784 = vpop.f32.mrb[0].mxu0
        %v1785 = vadd.f32 0.0, %v1784
        %v1786 = vpop.f32.mrb[0].mxu0
        %1787 = vmatprep.mubr.bf16.mxu0 0
        %1788 = vmatmul.mubr.bf16.gmra.mrb[0].mxu0 %v1702
        %v1789 = vpop.f32.mrb[0].mxu0
        %v1790 = vadd.f32 0.0, %v1789
        %v1791 = vpop.f32.mrb[0].mxu0
        %v1792 = vpop.f32.mrb[0].mxu0
        %v1793 = vadd.f32 0.0, %v1792
        %v1794 = vpop.f32.mrb[0].mxu0
        %1795 = vmatprep.mubr.bf16.mxu0 0
        %1796 = vmatmul.mubr.bf16.gmra.mrb[0].mxu0 %v1705
        %v1797 = vpop.f32.mrb[0].mxu0
        %v1798 = vadd.f32 0.0, %v1797
        %v1799 = vpop.f32.mrb[0].mxu0
        %v1800 = vpop.f32.mrb[0].mxu0
        %v1801 = vadd.f32 0.0, %v1800
        %v1802 = vpop.f32.mrb[0].mxu0
        %1803 = vdwg.mxu0
        %v1804 = vmul.f32 %v1379, 0.25
        %v1805 = vmul.f32 %v1382, 0.25
        %v1806 = vmul.f32 %v1387, 0.25
        %v1807 = vmul.f32 %v1390, 0.25
        %v1808 = vmul.f32 %v1395, 0.25
        %v1809 = vmul.f32 %v1398, 0.25
        %v1810 = vmul.f32 %v1403, 0.25
        %v1811 = vmul.f32 %v1406, 0.25
        %v1812 = vmul.f32 %v1411, 0.25
        %v1813 = vmul.f32 %v1414, 0.25
        %v1814 = vmul.f32 %v1419, 0.25
        %v1815 = vmul.f32 %v1422, 0.25
        %v1816 = vmul.f32 %v1427, 0.25
        %v1817 = vmul.f32 %v1430, 0.25
        %v1818 = vmul.f32 %v1435, 0.25
        %v1819 = vmul.f32 %v1438, 0.25
        %v1820 = vmul.f32 %v1500, 0.25
        %v1821 = vmul.f32 %v1503, 0.25
        %v1822 = vmul.f32 %v1508, 0.25
        %v1823 = vmul.f32 %v1511, 0.25
        %v1824 = vmul.f32 %v1516, 0.25
        %v1825 = vmul.f32 %v1519, 0.25
        %v1826 = vmul.f32 %v1524, 0.25
        %v1827 = vmul.f32 %v1527, 0.25
        %v1828 = vmul.f32 %v1532, 0.25
        %v1829 = vmul.f32 %v1535, 0.25
        %v1830 = vmul.f32 %v1540, 0.25
        %v1831 = vmul.f32 %v1543, 0.25
        %v1832 = vmul.f32 %v1548, 0.25
        %v1833 = vmul.f32 %v1551, 0.25
        %v1834 = vmul.f32 %v1556, 0.25
        %v1835 = vmul.f32 %v1559, 0.25
        %v1836 = vmul.f32 %v1621, 0.25
        %v1837 = vmul.f32 %v1624, 0.25
        %v1838 = vmul.f32 %v1629, 0.25
        %v1839 = vmul.f32 %v1632, 0.25
        %v1840 = vmul.f32 %v1637, 0.25
        %v1841 = vmul.f32 %v1640, 0.25
        %v1842 = vmul.f32 %v1645, 0.25
        %v1843 = vmul.f32 %v1648, 0.25
        %v1844 = vmul.f32 %v1653, 0.25
        %v1845 = vmul.f32 %v1656, 0.25
        %v1846 = vmul.f32 %v1661, 0.25
        %v1847 = vmul.f32 %v1664, 0.25
        %v1848 = vmul.f32 %v1669, 0.25
        %v1849 = vmul.f32 %v1672, 0.25
        %v1850 = vmul.f32 %v1677, 0.25
        %v1851 = vmul.f32 %v1680, 0.25
        %v1852 = vmul.f32 %v1742, 0.25
        %v1853 = vmul.f32 %v1745, 0.25
        %v1854 = vmul.f32 %v1750, 0.25
        %v1855 = vmul.f32 %v1753, 0.25
        %v1856 = vmul.f32 %v1758, 0.25
        %v1857 = vmul.f32 %v1761, 0.25
        %v1858 = vmul.f32 %v1766, 0.25
        %v1859 = vmul.f32 %v1769, 0.25
        %v1860 = vmul.f32 %v1774, 0.25
        %v1861 = vmul.f32 %v1777, 0.25
        %v1862 = vmul.f32 %v1782, 0.25
        %v1863 = vmul.f32 %v1785, 0.25
        %v1864 = vmul.f32 %v1790, 0.25
        %v1865 = vmul.f32 %v1793, 0.25
        %v1866 = vmul.f32 %v1798, 0.25
        %v1867 = vmul.f32 %v1801, 0.25
        %1868 = vmax.xlane.f32.xlu0 %v1804
        %v1869 = vpop.xlane.xlu0 %1868
        %1870 = vmax.xlane.f32.xlu0 %v1805
        %v1871 = vpop.xlane.xlu0 %1870
        %1872 = vmax.xlane.f32.xlu0 %v1806
        %v1873 = vpop.xlane.xlu0 %1872
        %1874 = vmax.xlane.f32.xlu0 %v1807
        %v1875 = vpop.xlane.xlu0 %1874
        %1876 = vmax.xlane.f32.xlu0 %v1808
        %v1877 = vpop.xlane.xlu0 %1876
        %1878 = vmax.xlane.f32.xlu0 %v1809
        %v1879 = vpop.xlane.xlu0 %1878
        %1880 = vmax.xlane.f32.xlu0 %v1810
        %v1881 = vpop.xlane.xlu0 %1880
        %1882 = vmax.xlane.f32.xlu0 %v1811
        %v1883 = vpop.xlane.xlu0 %1882
        %1884 = vmax.xlane.f32.xlu0 %v1812
        %v1885 = vpop.xlane.xlu0 %1884
        %1886 = vmax.xlane.f32.xlu0 %v1813
        %v1887 = vpop.xlane.xlu0 %1886
        %1888 = vmax.xlane.f32.xlu0 %v1814
        %v1889 = vpop.xlane.xlu0 %1888
        %1890 = vmax.xlane.f32.xlu0 %v1815
        %v1891 = vpop.xlane.xlu0 %1890
        %1892 = vmax.xlane.f32.xlu0 %v1816
        %v1893 = vpop.xlane.xlu0 %1892
        %1894 = vmax.xlane.f32.xlu0 %v1817
        %v1895 = vpop.xlane.xlu0 %1894
        %1896 = vmax.xlane.f32.xlu0 %v1818
        %v1897 = vpop.xlane.xlu0 %1896
        %1898 = vmax.xlane.f32.xlu0 %v1819
        %v1899 = vpop.xlane.xlu0 %1898
        %1900 = vmax.xlane.f32.xlu0 %v1820
        %v1901 = vpop.xlane.xlu0 %1900
        %1902 = vmax.xlane.f32.xlu0 %v1821
        %v1903 = vpop.xlane.xlu0 %1902
        %1904 = vmax.xlane.f32.xlu0 %v1822
        %v1905 = vpop.xlane.xlu0 %1904
        %1906 = vmax.xlane.f32.xlu0 %v1823
        %v1907 = vpop.xlane.xlu0 %1906
        %1908 = vmax.xlane.f32.xlu0 %v1824
        %v1909 = vpop.xlane.xlu0 %1908
        %1910 = vmax.xlane.f32.xlu0 %v1825
        %v1911 = vpop.xlane.xlu0 %1910
        %1912 = vmax.xlane.f32.xlu0 %v1826
        %v1913 = vpop.xlane.xlu0 %1912
        %1914 = vmax.xlane.f32.xlu0 %v1827
        %v1915 = vpop.xlane.xlu0 %1914
        %1916 = vmax.xlane.f32.xlu0 %v1828
        %v1917 = vpop.xlane.xlu0 %1916
        %1918 = vmax.xlane.f32.xlu0 %v1829
        %v1919 = vpop.xlane.xlu0 %1918
        %1920 = vmax.xlane.f32.xlu0 %v1830
        %v1921 = vpop.xlane.xlu0 %1920
        %1922 = vmax.xlane.f32.xlu0 %v1831
        %v1923 = vpop.xlane.xlu0 %1922
        %1924 = vmax.xlane.f32.xlu0 %v1832
        %v1925 = vpop.xlane.xlu0 %1924
        %1926 = vmax.xlane.f32.xlu0 %v1833
        %v1927 = vpop.xlane.xlu0 %1926
        %1928 = vmax.xlane.f32.xlu0 %v1834
        %v1929 = vpop.xlane.xlu0 %1928
        %1930 = vmax.xlane.f32.xlu0 %v1835
        %v1931 = vpop.xlane.xlu0 %1930
        %1932 = vmax.xlane.f32.xlu0 %v1836
        %v1933 = vpop.xlane.xlu0 %1932
        %1934 = vmax.xlane.f32.xlu0 %v1837
        %v1935 = vpop.xlane.xlu0 %1934
        %1936 = vmax.xlane.f32.xlu0 %v1838
        %v1937 = vpop.xlane.xlu0 %1936
        %1938 = vmax.xlane.f32.xlu0 %v1839
        %v1939 = vpop.xlane.xlu0 %1938
        %1940 = vmax.xlane.f32.xlu0 %v1840
        %v1941 = vpop.xlane.xlu0 %1940
        %1942 = vmax.xlane.f32.xlu0 %v1841
        %v1943 = vpop.xlane.xlu0 %1942
        %1944 = vmax.xlane.f32.xlu0 %v1842
        %v1945 = vpop.xlane.xlu0 %1944
        %1946 = vmax.xlane.f32.xlu0 %v1843
        %v1947 = vpop.xlane.xlu0 %1946
        %1948 = vmax.xlane.f32.xlu0 %v1844
        %v1949 = vpop.xlane.xlu0 %1948
        %1950 = vmax.xlane.f32.xlu0 %v1845
        %v1951 = vpop.xlane.xlu0 %1950
        %1952 = vmax.xlane.f32.xlu0 %v1846
        %v1953 = vpop.xlane.xlu0 %1952
        %1954 = vmax.xlane.f32.xlu0 %v1847
        %v1955 = vpop.xlane.xlu0 %1954
        %1956 = vmax.xlane.f32.xlu0 %v1848
        %v1957 = vpop.xlane.xlu0 %1956
        %1958 = vmax.xlane.f32.xlu0 %v1849
        %v1959 = vpop.xlane.xlu0 %1958
        %1960 = vmax.xlane.f32.xlu0 %v1850
        %v1961 = vpop.xlane.xlu0 %1960
        %1962 = vmax.xlane.f32.xlu0 %v1851
        %v1963 = vpop.xlane.xlu0 %1962
        %1964 = vmax.xlane.f32.xlu0 %v1852
        %v1965 = vpop.xlane.xlu0 %1964
        %1966 = vmax.xlane.f32.xlu0 %v1853
        %v1967 = vpop.xlane.xlu0 %1966
        %1968 = vmax.xlane.f32.xlu0 %v1854
        %v1969 = vpop.xlane.xlu0 %1968
        %1970 = vmax.xlane.f32.xlu0 %v1855
        %v1971 = vpop.xlane.xlu0 %1970
        %1972 = vmax.xlane.f32.xlu0 %v1856
        %v1973 = vpop.xlane.xlu0 %1972
        %1974 = vmax.xlane.f32.xlu0 %v1857
        %v1975 = vpop.xlane.xlu0 %1974
        %1976 = vmax.xlane.f32.xlu0 %v1858
        %v1977 = vpop.xlane.xlu0 %1976
        %1978 = vmax.xlane.f32.xlu0 %v1859
        %v1979 = vpop.xlane.xlu0 %1978
        %1980 = vmax.xlane.f32.xlu0 %v1860
        %v1981 = vpop.xlane.xlu0 %1980
        %1982 = vmax.xlane.f32.xlu0 %v1861
        %v1983 = vpop.xlane.xlu0 %1982
        %1984 = vmax.xlane.f32.xlu0 %v1862
        %v1985 = vpop.xlane.xlu0 %1984
        %1986 = vmax.xlane.f32.xlu0 %v1863
        %v1987 = vpop.xlane.xlu0 %1986
        %1988 = vmax.xlane.f32.xlu0 %v1864
        %v1989 = vpop.xlane.xlu0 %1988
        %1990 = vmax.xlane.f32.xlu0 %v1865
        %v1991 = vpop.xlane.xlu0 %1990
        %1992 = vmax.xlane.f32.xlu0 %v1866
        %v1993 = vpop.xlane.xlu0 %1992
        %1994 = vmax.xlane.f32.xlu0 %v1867
        %v1995 = vpop.xlane.xlu0 %1994
        %v1996 = vsub.f32 %v1804, %v1869
        %v1997 = vsub.f32 %v1805, %v1871
        %v1998 = vsub.f32 %v1806, %v1873
        %v1999 = vsub.f32 %v1807, %v1875
        %v2000 = vsub.f32 %v1808, %v1877
        %v2001 = vsub.f32 %v1809, %v1879
        %v2002 = vsub.f32 %v1810, %v1881
        %v2003 = vsub.f32 %v1811, %v1883
        %v2004 = vsub.f32 %v1812, %v1885
        %v2005 = vsub.f32 %v1813, %v1887
        %v2006 = vsub.f32 %v1814, %v1889
        %v2007 = vsub.f32 %v1815, %v1891
        %v2008 = vsub.f32 %v1816, %v1893
        %v2009 = vsub.f32 %v1817, %v1895
        %v2010 = vsub.f32 %v1818, %v1897
        %v2011 = vsub.f32 %v1819, %v1899
        %v2012 = vsub.f32 %v1820, %v1901
        %v2013 = vsub.f32 %v1821, %v1903
        %v2014 = vsub.f32 %v1822, %v1905
        %v2015 = vsub.f32 %v1823, %v1907
        %v2016 = vsub.f32 %v1824, %v1909
        %v2017 = vsub.f32 %v1825, %v1911
        %v2018 = vsub.f32 %v1826, %v1913
        %v2019 = vsub.f32 %v1827, %v1915
        %v2020 = vsub.f32 %v1828, %v1917
        %v2021 = vsub.f32 %v1829, %v1919
        %v2022 = vsub.f32 %v1830, %v1921
        %v2023 = vsub.f32 %v1831, %v1923
        %v2024 = vsub.f32 %v1832, %v1925
        %v2025 = vsub.f32 %v1833, %v1927
        %v2026 = vsub.f32 %v1834, %v1929
        %v2027 = vsub.f32 %v1835, %v1931
        %v2028 = vsub.f32 %v1836, %v1933
        %v2029 = vsub.f32 %v1837, %v1935
        %v2030 = vsub.f32 %v1838, %v1937
        %v2031 = vsub.f32 %v1839, %v1939
        %v2032 = vsub.f32 %v1840, %v1941
        %v2033 = vsub.f32 %v1841, %v1943
        %v2034 = vsub.f32 %v1842, %v1945
        %v2035 = vsub.f32 %v1843, %v1947
        %v2036 = vsub.f32 %v1844, %v1949
        %v2037 = vsub.f32 %v1845, %v1951
        %v2038 = vsub.f32 %v1846, %v1953
        %v2039 = vsub.f32 %v1847, %v1955
        %v2040 = vsub.f32 %v1848, %v1957
        %v2041 = vsub.f32 %v1849, %v1959
        %v2042 = vsub.f32 %v1850, %v1961
        %v2043 = vsub.f32 %v1851, %v1963
        %v2044 = vsub.f32 %v1852, %v1965
        %v2045 = vsub.f32 %v1853, %v1967
        %v2046 = vsub.f32 %v1854, %v1969
        %v2047 = vsub.f32 %v1855, %v1971
        %v2048 = vsub.f32 %v1856, %v1973
        %v2049 = vsub.f32 %v1857, %v1975
        %v2050 = vsub.f32 %v1858, %v1977
        %v2051 = vsub.f32 %v1859, %v1979
        %v2052 = vsub.f32 %v1860, %v1981
        %v2053 = vsub.f32 %v1861, %v1983
        %v2054 = vsub.f32 %v1862, %v1985
        %v2055 = vsub.f32 %v1863, %v1987
        %v2056 = vsub.f32 %v1864, %v1989
        %v2057 = vsub.f32 %v1865, %v1991
        %v2058 = vsub.f32 %v1866, %v1993
        %v2059 = vsub.f32 %v1867, %v1995
        %v2060 = vmul.f32 %v1996, 1.442695
        %v2061 = vpow.pop %v2060
        %v2062 = vmul.f32 %v1997, 1.442695
        %v2063 = vpow.pop %v2062
        %v2064 = vmul.f32 %v1998, 1.442695
        %v2065 = vpow.pop %v2064
        %v2066 = vmul.f32 %v1999, 1.442695
        %v2067 = vpow.pop %v2066
        %v2068 = vmul.f32 %v2000, 1.442695
        %v2069 = vpow.pop %v2068
        %v2070 = vmul.f32 %v2001, 1.442695
        %v2071 = vpow.pop %v2070
        %v2072 = vmul.f32 %v2002, 1.442695
        %v2073 = vpow.pop %v2072
        %v2074 = vmul.f32 %v2003, 1.442695
        %v2075 = vpow.pop %v2074
        %v2076 = vmul.f32 %v2004, 1.442695
        %v2077 = vpow.pop %v2076
        %v2078 = vmul.f32 %v2005, 1.442695
        %v2079 = vpow.pop %v2078
        %v2080 = vmul.f32 %v2006, 1.442695
        %v2081 = vpow.pop %v2080
        %v2082 = vmul.f32 %v2007, 1.442695
        %v2083 = vpow.pop %v2082
        %v2084 = vmul.f32 %v2008, 1.442695
        %v2085 = vpow.pop %v2084
        %v2086 = vmul.f32 %v2009, 1.442695
        %v2087 = vpow.pop %v2086
        %v2088 = vmul.f32 %v2010, 1.442695
        %v2089 = vpow.pop %v2088
        %v2090 = vmul.f32 %v2011, 1.442695
        %v2091 = vpow.pop %v2090
        %v2092 = vmul.f32 %v2012, 1.442695
        %v2093 = vpow.pop %v2092
        %v2094 = vmul.f32 %v2013, 1.442695
        %v2095 = vpow.pop %v2094
        %v2096 = vmul.f32 %v2014, 1.442695
        %v2097 = vpow.pop %v2096
        %v2098 = vmul.f32 %v2015, 1.442695
        %v2099 = vpow.pop %v2098
        %v2100 = vmul.f32 %v2016, 1.442695
        %v2101 = vpow.pop %v2100
        %v2102 = vmul.f32 %v2017, 1.442695
        %v2103 = vpow.pop %v2102
        %v2104 = vmul.f32 %v2018, 1.442695
        %v2105 = vpow.pop %v2104
        %v2106 = vmul.f32 %v2019, 1.442695
        %v2107 = vpow.pop %v2106
        %v2108 = vmul.f32 %v2020, 1.442695
        %v2109 = vpow.pop %v2108
        %v2110 = vmul.f32 %v2021, 1.442695
        %v2111 = vpow.pop %v2110
        %v2112 = vmul.f32 %v2022, 1.442695
        %v2113 = vpow.pop %v2112
        %v2114 = vmul.f32 %v2023, 1.442695
        %v2115 = vpow.pop %v2114
        %v2116 = vmul.f32 %v2024, 1.442695
        %v2117 = vpow.pop %v2116
        %v2118 = vmul.f32 %v2025, 1.442695
        %v2119 = vpow.pop %v2118
        %v2120 = vmul.f32 %v2026, 1.442695
        %v2121 = vpow.pop %v2120
        %v2122 = vmul.f32 %v2027, 1.442695
        %v2123 = vpow.pop %v2122
        %v2124 = vmul.f32 %v2028, 1.442695
        %v2125 = vpow.pop %v2124
        %v2126 = vmul.f32 %v2029, 1.442695
        %v2127 = vpow.pop %v2126
        %v2128 = vmul.f32 %v2030, 1.442695
        %v2129 = vpow.pop %v2128
        %v2130 = vmul.f32 %v2031, 1.442695
        %v2131 = vpow.pop %v2130
        %v2132 = vmul.f32 %v2032, 1.442695
        %v2133 = vpow.pop %v2132
        %v2134 = vmul.f32 %v2033, 1.442695
        %v2135 = vpow.pop %v2134
        %v2136 = vmul.f32 %v2034, 1.442695
        %v2137 = vpow.pop %v2136
        %v2138 = vmul.f32 %v2035, 1.442695
        %v2139 = vpow.pop %v2138
        %v2140 = vmul.f32 %v2036, 1.442695
        %v2141 = vpow.pop %v2140
        %v2142 = vmul.f32 %v2037, 1.442695
        %v2143 = vpow.pop %v2142
        %v2144 = vmul.f32 %v2038, 1.442695
        %v2145 = vpow.pop %v2144
        %v2146 = vmul.f32 %v2039, 1.442695
        %v2147 = vpow.pop %v2146
        %v2148 = vmul.f32 %v2040, 1.442695
        %v2149 = vpow.pop %v2148
        %v2150 = vmul.f32 %v2041, 1.442695
        %v2151 = vpow.pop %v2150
        %v2152 = vmul.f32 %v2042, 1.442695
        %v2153 = vpow.pop %v2152
        %v2154 = vmul.f32 %v2043, 1.442695
        %v2155 = vpow.pop %v2154
        %v2156 = vmul.f32 %v2044, 1.442695
        %v2157 = vpow.pop %v2156
        %v2158 = vmul.f32 %v2045, 1.442695
        %v2159 = vpow.pop %v2158
        %v2160 = vmul.f32 %v2046, 1.442695
        %v2161 = vpow.pop %v2160
        %v2162 = vmul.f32 %v2047, 1.442695
        %v2163 = vpow.pop %v2162
        %v2164 = vmul.f32 %v2048, 1.442695
        %v2165 = vpow.pop %v2164
        %v2166 = vmul.f32 %v2049, 1.442695
        %v2167 = vpow.pop %v2166
        %v2168 = vmul.f32 %v2050, 1.442695
        %v2169 = vpow.pop %v2168
        %v2170 = vmul.f32 %v2051, 1.442695
        %v2171 = vpow.pop %v2170
        %v2172 = vmul.f32 %v2052, 1.442695
        %v2173 = vpow.pop %v2172
        %v2174 = vmul.f32 %v2053, 1.442695
        %v2175 = vpow.pop %v2174
        %v2176 = vmul.f32 %v2054, 1.442695
        %v2177 = vpow.pop %v2176
        %v2178 = vmul.f32 %v2055, 1.442695
        %v2179 = vpow.pop %v2178
        %v2180 = vmul.f32 %v2056, 1.442695
        %v2181 = vpow.pop %v2180
        %v2182 = vmul.f32 %v2057, 1.442695
        %v2183 = vpow.pop %v2182
        %v2184 = vmul.f32 %v2058, 1.442695
        %v2185 = vpow.pop %v2184
        %v2186 = vmul.f32 %v2059, 1.442695
        %v2187 = vpow.pop %v2186
        %2188 = vadd.xlane.f32.xlu0 %v2061
        %v2189 = vpop.xlane.xlu0 %2188
        %2190 = vadd.xlane.f32.xlu0 %v2063
        %v2191 = vpop.xlane.xlu0 %2190
        %2192 = vadd.xlane.f32.xlu0 %v2065
        %v2193 = vpop.xlane.xlu0 %2192
        %2194 = vadd.xlane.f32.xlu0 %v2067
        %v2195 = vpop.xlane.xlu0 %2194
        %2196 = vadd.xlane.f32.xlu0 %v2069
        %v2197 = vpop.xlane.xlu0 %2196
        %2198 = vadd.xlane.f32.xlu0 %v2071
        %v2199 = vpop.xlane.xlu0 %2198
        %2200 = vadd.xlane.f32.xlu0 %v2073
        %v2201 = vpop.xlane.xlu0 %2200
        %2202 = vadd.xlane.f32.xlu0 %v2075
        %v2203 = vpop.xlane.xlu0 %2202
        %2204 = vadd.xlane.f32.xlu0 %v2077
        %v2205 = vpop.xlane.xlu0 %2204
        %2206 = vadd.xlane.f32.xlu0 %v2079
        %v2207 = vpop.xlane.xlu0 %2206
        %2208 = vadd.xlane.f32.xlu0 %v2081
        %v2209 = vpop.xlane.xlu0 %2208
        %2210 = vadd.xlane.f32.xlu0 %v2083
        %v2211 = vpop.xlane.xlu0 %2210
        %2212 = vadd.xlane.f32.xlu0 %v2085
        %v2213 = vpop.xlane.xlu0 %2212
        %2214 = vadd.xlane.f32.xlu0 %v2087
        %v2215 = vpop.xlane.xlu0 %2214
        %2216 = vadd.xlane.f32.xlu0 %v2089
        %v2217 = vpop.xlane.xlu0 %2216
        %2218 = vadd.xlane.f32.xlu0 %v2091
        %v2219 = vpop.xlane.xlu0 %2218
        %2220 = vadd.xlane.f32.xlu0 %v2093
        %v2221 = vpop.xlane.xlu0 %2220
        %2222 = vadd.xlane.f32.xlu0 %v2095
        %v2223 = vpop.xlane.xlu0 %2222
        %2224 = vadd.xlane.f32.xlu0 %v2097
        %v2225 = vpop.xlane.xlu0 %2224
        %2226 = vadd.xlane.f32.xlu0 %v2099
        %v2227 = vpop.xlane.xlu0 %2226
        %2228 = vadd.xlane.f32.xlu0 %v2101
        %v2229 = vpop.xlane.xlu0 %2228
        %2230 = vadd.xlane.f32.xlu0 %v2103
        %v2231 = vpop.xlane.xlu0 %2230
        %2232 = vadd.xlane.f32.xlu0 %v2105
        %v2233 = vpop.xlane.xlu0 %2232
        %2234 = vadd.xlane.f32.xlu0 %v2107
        %v2235 = vpop.xlane.xlu0 %2234
        %2236 = vadd.xlane.f32.xlu0 %v2109
        %v2237 = vpop.xlane.xlu0 %2236
        %2238 = vadd.xlane.f32.xlu0 %v2111
        %v2239 = vpop.xlane.xlu0 %2238
        %2240 = vadd.xlane.f32.xlu0 %v2113
        %v2241 = vpop.xlane.xlu0 %2240
        %2242 = vadd.xlane.f32.xlu0 %v2115
        %v2243 = vpop.xlane.xlu0 %2242
        %2244 = vadd.xlane.f32.xlu0 %v2117
        %v2245 = vpop.xlane.xlu0 %2244
        %2246 = vadd.xlane.f32.xlu0 %v2119
        %v2247 = vpop.xlane.xlu0 %2246
        %2248 = vadd.xlane.f32.xlu0 %v2121
        %v2249 = vpop.xlane.xlu0 %2248
        %2250 = vadd.xlane.f32.xlu0 %v2123
        %v2251 = vpop.xlane.xlu0 %2250
        %2252 = vadd.xlane.f32.xlu0 %v2125
        %v2253 = vpop.xlane.xlu0 %2252
        %2254 = vadd.xlane.f32.xlu0 %v2127
        %v2255 = vpop.xlane.xlu0 %2254
        %2256 = vadd.xlane.f32.xlu0 %v2129
        %v2257 = vpop.xlane.xlu0 %2256
        %2258 = vadd.xlane.f32.xlu0 %v2131
        %v2259 = vpop.xlane.xlu0 %2258
        %2260 = vadd.xlane.f32.xlu0 %v2133
        %v2261 = vpop.xlane.xlu0 %2260
        %2262 = vadd.xlane.f32.xlu0 %v2135
        %v2263 = vpop.xlane.xlu0 %2262
        %2264 = vadd.xlane.f32.xlu0 %v2137
        %v2265 = vpop.xlane.xlu0 %2264
        %2266 = vadd.xlane.f32.xlu0 %v2139
        %v2267 = vpop.xlane.xlu0 %2266
        %2268 = vadd.xlane.f32.xlu0 %v2141
        %v2269 = vpop.xlane.xlu0 %2268
        %2270 = vadd.xlane.f32.xlu0 %v2143
        %v2271 = vpop.xlane.xlu0 %2270
        %2272 = vadd.xlane.f32.xlu0 %v2145
        %v2273 = vpop.xlane.xlu0 %2272
        %2274 = vadd.xlane.f32.xlu0 %v2147
        %v2275 = vpop.xlane.xlu0 %2274
        %2276 = vadd.xlane.f32.xlu0 %v2149
        %v2277 = vpop.xlane.xlu0 %2276
        %2278 = vadd.xlane.f32.xlu0 %v2151
        %v2279 = vpop.xlane.xlu0 %2278
        %2280 = vadd.xlane.f32.xlu0 %v2153
        %v2281 = vpop.xlane.xlu0 %2280
        %2282 = vadd.xlane.f32.xlu0 %v2155
        %v2283 = vpop.xlane.xlu0 %2282
        %2284 = vadd.xlane.f32.xlu0 %v2157
        %v2285 = vpop.xlane.xlu0 %2284
        %2286 = vadd.xlane.f32.xlu0 %v2159
        %v2287 = vpop.xlane.xlu0 %2286
        %2288 = vadd.xlane.f32.xlu0 %v2161
        %v2289 = vpop.xlane.xlu0 %2288
        %2290 = vadd.xlane.f32.xlu0 %v2163
        %v2291 = vpop.xlane.xlu0 %2290
        %2292 = vadd.xlane.f32.xlu0 %v2165
        %v2293 = vpop.xlane.xlu0 %2292
        %2294 = vadd.xlane.f32.xlu0 %v2167
        %v2295 = vpop.xlane.xlu0 %2294
        %2296 = vadd.xlane.f32.xlu0 %v2169
        %v2297 = vpop.xlane.xlu0 %2296
        %2298 = vadd.xlane.f32.xlu0 %v2171
        %v2299 = vpop.xlane.xlu0 %2298
        %2300 = vadd.xlane.f32.xlu0 %v2173
        %v2301 = vpop.xlane.xlu0 %2300
        %2302 = vadd.xlane.f32.xlu0 %v2175
        %v2303 = vpop.xlane.xlu0 %2302
        %2304 = vadd.xlane.f32.xlu0 %v2177
        %v2305 = vpop.xlane.xlu0 %2304
        %2306 = vadd.xlane.f32.xlu0 %v2179
        %v2307 = vpop.xlane.xlu0 %2306
        %2308 = vadd.xlane.f32.xlu0 %v2181
        %v2309 = vpop.xlane.xlu0 %2308
        %2310 = vadd.xlane.f32.xlu0 %v2183
        %v2311 = vpop.xlane.xlu0 %2310
        %2312 = vadd.xlane.f32.xlu0 %v2185
        %v2313 = vpop.xlane.xlu0 %2312
        %2314 = vadd.xlane.f32.xlu0 %v2187
        %v2315 = vpop.xlane.xlu0 %2314
        %v2316 = vrcp.pop %v2189
        %v2317 = vrcp.pop %v2191
        %v2318 = vrcp.pop %v2193
        %v2319 = vrcp.pop %v2195
        %v2320 = vrcp.pop %v2197
        %v2321 = vrcp.pop %v2199
        %v2322 = vrcp.pop %v2201
        %v2323 = vrcp.pop %v2203
        %v2324 = vrcp.pop %v2205
        %v2325 = vrcp.pop %v2207
        %v2326 = vrcp.pop %v2209
        %v2327 = vrcp.pop %v2211
        %v2328 = vrcp.pop %v2213
        %v2329 = vrcp.pop %v2215
        %v2330 = vrcp.pop %v2217
        %v2331 = vrcp.pop %v2219
        %v2332 = vrcp.pop %v2221
        %v2333 = vrcp.pop %v2223
        %v2334 = vrcp.pop %v2225
        %v2335 = vrcp.pop %v2227
        %v2336 = vrcp.pop %v2229
        %v2337 = vrcp.pop %v2231
        %v2338 = vrcp.pop %v2233
        %v2339 = vrcp.pop %v2235
        %v2340 = vrcp.pop %v2237
        %v2341 = vrcp.pop %v2239
        %v2342 = vrcp.pop %v2241
        %v2343 = vrcp.pop %v2243
        %v2344 = vrcp.pop %v2245
        %v2345 = vrcp.pop %v2247
        %v2346 = vrcp.pop %v2249
        %v2347 = vrcp.pop %v2251
        %v2348 = vrcp.pop %v2253
        %v2349 = vrcp.pop %v2255
        %v2350 = vrcp.pop %v2257
        %v2351 = vrcp.pop %v2259
        %v2352 = vrcp.pop %v2261
        %v2353 = vrcp.pop %v2263
        %v2354 = vrcp.pop %v2265
        %v2355 = vrcp.pop %v2267
        %v2356 = vrcp.pop %v2269
        %v2357 = vrcp.pop %v2271
        %v2358 = vrcp.pop %v2273
        %v2359 = vrcp.pop %v2275
        %v2360 = vrcp.pop %v2277
        %v2361 = vrcp.pop %v2279
        %v2362 = vrcp.pop %v2281
        %v2363 = vrcp.pop %v2283
        %v2364 = vrcp.pop %v2285
        %v2365 = vrcp.pop %v2287
        %v2366 = vrcp.pop %v2289
        %v2367 = vrcp.pop %v2291
        %v2368 = vrcp.pop %v2293
        %v2369 = vrcp.pop %v2295
        %v2370 = vrcp.pop %v2297
        %v2371 = vrcp.pop %v2299
        %v2372 = vrcp.pop %v2301
        %v2373 = vrcp.pop %v2303
        %v2374 = vrcp.pop %v2305
        %v2375 = vrcp.pop %v2307
        %v2376 = vrcp.pop %v2309
        %v2377 = vrcp.pop %v2311
        %v2378 = vrcp.pop %v2313
        %v2379 = vrcp.pop %v2315
        %v2380 = vmul.f32 %v2061, %v2316
        %v2381 = vmul.f32 %v2063, %v2317
        %v2382 = vmul.f32 %v2065, %v2318
        %v2383 = vmul.f32 %v2067, %v2319
        %v2384 = vmul.f32 %v2069, %v2320
        %v2385 = vmul.f32 %v2071, %v2321
        %v2386 = vmul.f32 %v2073, %v2322
        %v2387 = vmul.f32 %v2075, %v2323
        %v2388 = vmul.f32 %v2077, %v2324
        %v2389 = vmul.f32 %v2079, %v2325
        %v2390 = vmul.f32 %v2081, %v2326
        %v2391 = vmul.f32 %v2083, %v2327
        %v2392 = vmul.f32 %v2085, %v2328
        %v2393 = vmul.f32 %v2087, %v2329
        %v2394 = vmul.f32 %v2089, %v2330
        %v2395 = vmul.f32 %v2091, %v2331
        %v2396 = vmul.f32 %v2093, %v2332
        %v2397 = vmul.f32 %v2095, %v2333
        %v2398 = vmul.f32 %v2097, %v2334
        %v2399 = vmul.f32 %v2099, %v2335
        %v2400 = vmul.f32 %v2101, %v2336
        %v2401 = vmul.f32 %v2103, %v2337
        %v2402 = vmul.f32 %v2105, %v2338
        %v2403 = vmul.f32 %v2107, %v2339
        %v2404 = vmul.f32 %v2109, %v2340
        %v2405 = vmul.f32 %v2111, %v2341
        %v2406 = vmul.f32 %v2113, %v2342
        %v2407 = vmul.f32 %v2115, %v2343
        %v2408 = vmul.f32 %v2117, %v2344
        %v2409 = vmul.f32 %v2119, %v2345
        %v2410 = vmul.f32 %v2121, %v2346
        %v2411 = vmul.f32 %v2123, %v2347
        %v2412 = vmul.f32 %v2125, %v2348
        %v2413 = vmul.f32 %v2127, %v2349
        %v2414 = vmul.f32 %v2129, %v2350
        %v2415 = vmul.f32 %v2131, %v2351
        %v2416 = vmul.f32 %v2133, %v2352
        %v2417 = vmul.f32 %v2135, %v2353
        %v2418 = vmul.f32 %v2137, %v2354
        %v2419 = vmul.f32 %v2139, %v2355
        %v2420 = vmul.f32 %v2141, %v2356
        %v2421 = vmul.f32 %v2143, %v2357
        %v2422 = vmul.f32 %v2145, %v2358
        %v2423 = vmul.f32 %v2147, %v2359
        %v2424 = vmul.f32 %v2149, %v2360
        %v2425 = vmul.f32 %v2151, %v2361
        %v2426 = vmul.f32 %v2153, %v2362
        %v2427 = vmul.f32 %v2155, %v2363
        %v2428 = vmul.f32 %v2157, %v2364
        %v2429 = vmul.f32 %v2159, %v2365
        %v2430 = vmul.f32 %v2161, %v2366
        %v2431 = vmul.f32 %v2163, %v2367
        %v2432 = vmul.f32 %v2165, %v2368
        %v2433 = vmul.f32 %v2167, %v2369
        %v2434 = vmul.f32 %v2169, %v2370
        %v2435 = vmul.f32 %v2171, %v2371
        %v2436 = vmul.f32 %v2173, %v2372
        %v2437 = vmul.f32 %v2175, %v2373
        %v2438 = vmul.f32 %v2177, %v2374
        %v2439 = vmul.f32 %v2179, %v2375
        %v2440 = vmul.f32 %v2181, %v2376
        %v2441 = vmul.f32 %v2183, %v2377
        %v2442 = vmul.f32 %v2185, %v2378
        %v2443 = vmul.f32 %v2187, %v2379
        %v2444 = vpack.c.bf16 %v2381, %v2380
        %v2445 = vpack.c.bf16 %v2383, %v2382
        %v2446 = vpack.c.bf16 %v2385, %v2384
        %v2447 = vpack.c.bf16 %v2387, %v2386
        %v2448 = vpack.c.bf16 %v2389, %v2388
        %v2449 = vpack.c.bf16 %v2391, %v2390
        %v2450 = vpack.c.bf16 %v2393, %v2392
        %v2451 = vpack.c.bf16 %v2395, %v2394
        %v2452 = vpack.c.bf16 %v2397, %v2396
        %v2453 = vpack.c.bf16 %v2399, %v2398
        %v2454 = vpack.c.bf16 %v2401, %v2400
        %v2455 = vpack.c.bf16 %v2403, %v2402
        %v2456 = vpack.c.bf16 %v2405, %v2404
        %v2457 = vpack.c.bf16 %v2407, %v2406
        %v2458 = vpack.c.bf16 %v2409, %v2408
        %v2459 = vpack.c.bf16 %v2411, %v2410
        %v2460 = vpack.c.bf16 %v2413, %v2412
        %v2461 = vpack.c.bf16 %v2415, %v2414
        %v2462 = vpack.c.bf16 %v2417, %v2416
        %v2463 = vpack.c.bf16 %v2419, %v2418
        %v2464 = vpack.c.bf16 %v2421, %v2420
        %v2465 = vpack.c.bf16 %v2423, %v2422
        %v2466 = vpack.c.bf16 %v2425, %v2424
        %v2467 = vpack.c.bf16 %v2427, %v2426
        %v2468 = vpack.c.bf16 %v2429, %v2428
        %v2469 = vpack.c.bf16 %v2431, %v2430
        %v2470 = vpack.c.bf16 %v2433, %v2432
        %v2471 = vpack.c.bf16 %v2435, %v2434
        %v2472 = vpack.c.bf16 %v2437, %v2436
        %v2473 = vpack.c.bf16 %v2439, %v2438
        %v2474 = vpack.c.bf16 %v2441, %v2440
        %v2475 = vpack.c.bf16 %v2443, %v2442
        %2476 = vmatprep.subr.bf16.mxu0 0
        %2477 = vmatpush1.bf16.xpose.msra.mxu0 %v2444
        %2478 = vmatprep.subr.bf16.mxu0 0
        %2479 = vmatpush1.bf16.xpose.msra.mxu0 %v2445
        %2480 = vmatprep.subr.bf16.mxu0 0
        %2481 = vmatpush1.bf16.xpose.msra.mxu0 %v2446
        %2482 = vmatprep.subr.bf16.mxu0 0
        %2483 = vmatpush1.bf16.xpose.msra.mxu0 %v2447
        %2484 = vmatprep.subr.bf16.mxu0 0
        %2485 = vmatpush1.bf16.xpose.msra.mxu0 %v2448
        %2486 = vmatprep.subr.bf16.mxu0 0
        %2487 = vmatpush1.bf16.xpose.msra.mxu0 %v2449
        %2488 = vmatprep.subr.bf16.mxu0 0
        %2489 = vmatpush1.bf16.xpose.msra.mxu0 %v2450
        %2490 = vmatprep.subr.bf16.mxu0 0
        %2491 = vmatpush1.bf16.xpose.msra.mxu0 %v2451
        %2492 = vmatprep.subr.bf16.mxu0 0
        %2493 = vmatpush1.bf16.xpose.msra.mxu0 0
        %2494 = vmatprep.subr.bf16.mxu0 0
        %2495 = vmatpush1.bf16.xpose.msra.mxu0 0
        %2496 = vmatprep.subr.bf16.mxu0 0
        %2497 = vmatpush1.bf16.xpose.msra.mxu0 0
        %2498 = vmatprep.subr.bf16.mxu0 0
        %2499 = vmatpush1.bf16.xpose.msra.mxu0 0
        %2500 = vmatprep.subr.bf16.mxu0 0
        %2501 = vmatpush1.bf16.xpose.msra.mxu0 0
        %2502 = vmatprep.subr.bf16.mxu0 0
        %2503 = vmatpush1.bf16.xpose.msra.mxu0 0
        %2504 = vmatprep.subr.bf16.mxu0 0
        %2505 = vmatpush1.bf16.xpose.msra.mxu0 0
        %2506 = vmatprep.subr.bf16.mxu0 0
        %2507 = vmatpush1.bf16.xpose.msra.mxu0 0
        %2508 = vmatprep.mubr.bf16.mxu0 0
        %2509 = vmatmul.mubr.bf16.gmra.mrb[0].mxu0 %v1239
        %v2510 = vpop.f32.mrb[0].mxu0
        %v2511 = vadd.f32 0.0, %v2510
        %v2512 = vpop.f32.mrb[0].mxu0
        %v2513 = vpop.f32.mrb[0].mxu0
        %v2514 = vadd.f32 0.0, %v2513
        %v2515 = vpop.f32.mrb[0].mxu0
        %2516 = vdwg.mxu0
        %2517 = vmatprep.subr.bf16.mxu0 0
        %2518 = vmatpush1.bf16.xpose.msra.mxu0 %v2452
        %2519 = vmatprep.subr.bf16.mxu0 0
        %2520 = vmatpush1.bf16.xpose.msra.mxu0 %v2453
        %2521 = vmatprep.subr.bf16.mxu0 0
        %2522 = vmatpush1.bf16.xpose.msra.mxu0 %v2454
        %2523 = vmatprep.subr.bf16.mxu0 0
        %2524 = vmatpush1.bf16.xpose.msra.mxu0 %v2455
        %2525 = vmatprep.subr.bf16.mxu0 0
        %2526 = vmatpush1.bf16.xpose.msra.mxu0 %v2456
        %2527 = vmatprep.subr.bf16.mxu0 0
        %2528 = vmatpush1.bf16.xpose.msra.mxu0 %v2457
        %2529 = vmatprep.subr.bf16.mxu0 0
        %2530 = vmatpush1.bf16.xpose.msra.mxu0 %v2458
        %2531 = vmatprep.subr.bf16.mxu0 0
        %2532 = vmatpush1.bf16.xpose.msra.mxu0 %v2459
        %2533 = vmatprep.subr.bf16.mxu0 0
        %2534 = vmatpush1.bf16.xpose.msra.mxu0 0
        %2535 = vmatprep.subr.bf16.mxu0 0
        %2536 = vmatpush1.bf16.xpose.msra.mxu0 0
        %2537 = vmatprep.subr.bf16.mxu0 0
        %2538 = vmatpush1.bf16.xpose.msra.mxu0 0
        %2539 = vmatprep.subr.bf16.mxu0 0
        %2540 = vmatpush1.bf16.xpose.msra.mxu0 0
        %2541 = vmatprep.subr.bf16.mxu0 0
        %2542 = vmatpush1.bf16.xpose.msra.mxu0 0
        %2543 = vmatprep.subr.bf16.mxu0 0
        %2544 = vmatpush1.bf16.xpose.msra.mxu0 0
        %2545 = vmatprep.subr.bf16.mxu0 0
        %2546 = vmatpush1.bf16.xpose.msra.mxu0 0
        %2547 = vmatprep.subr.bf16.mxu0 0
        %2548 = vmatpush1.bf16.xpose.msra.mxu0 0
        %2549 = vmatprep.mubr.bf16.mxu0 0
        %2550 = vmatmul.mubr.bf16.gmra.mrb[0].mxu0 %v1243
        %v2551 = vpop.f32.mrb[0].mxu0
        %v2552 = vadd.f32 0.0, %v2551
        %v2553 = vpop.f32.mrb[0].mxu0
        %v2554 = vpop.f32.mrb[0].mxu0
        %v2555 = vadd.f32 0.0, %v2554
        %v2556 = vpop.f32.mrb[0].mxu0
        %2557 = vdwg.mxu0
        %2558 = vmatprep.subr.bf16.mxu0 0
        %2559 = vmatpush1.bf16.xpose.msra.mxu0 %v2460
        %2560 = vmatprep.subr.bf16.mxu0 0
        %2561 = vmatpush1.bf16.xpose.msra.mxu0 %v2461
        %2562 = vmatprep.subr.bf16.mxu0 0
        %2563 = vmatpush1.bf16.xpose.msra.mxu0 %v2462
        %2564 = vmatprep.subr.bf16.mxu0 0
        %2565 = vmatpush1.bf16.xpose.msra.mxu0 %v2463
        %2566 = vmatprep.subr.bf16.mxu0 0
        %2567 = vmatpush1.bf16.xpose.msra.mxu0 %v2464
        %2568 = vmatprep.subr.bf16.mxu0 0
        %2569 = vmatpush1.bf16.xpose.msra.mxu0 %v2465
        %2570 = vmatprep.subr.bf16.mxu0 0
        %2571 = vmatpush1.bf16.xpose.msra.mxu0 %v2466
        %2572 = vmatprep.subr.bf16.mxu0 0
        %2573 = vmatpush1.bf16.xpose.msra.mxu0 %v2467
        %2574 = vmatprep.subr.bf16.mxu0 0
        %2575 = vmatpush1.bf16.xpose.msra.mxu0 0
        %2576 = vmatprep.subr.bf16.mxu0 0
        %2577 = vmatpush1.bf16.xpose.msra.mxu0 0
        %2578 = vmatprep.subr.bf16.mxu0 0
        %2579 = vmatpush1.bf16.xpose.msra.mxu0 0
        %2580 = vmatprep.subr.bf16.mxu0 0
        %2581 = vmatpush1.bf16.xpose.msra.mxu0 0
        %2582 = vmatprep.subr.bf16.mxu0 0
        %2583 = vmatpush1.bf16.xpose.msra.mxu0 0
        %2584 = vmatprep.subr.bf16.mxu0 0
        %2585 = vmatpush1.bf16.xpose.msra.mxu0 0
        %2586 = vmatprep.subr.bf16.mxu0 0
        %2587 = vmatpush1.bf16.xpose.msra.mxu0 0
        %2588 = vmatprep.subr.bf16.mxu0 0
        %2589 = vmatpush1.bf16.xpose.msra.mxu0 0
        %2590 = vmatprep.mubr.bf16.mxu0 0
        %2591 = vmatmul.mubr.bf16.gmra.mrb[0].mxu0 %v1247
        %v2592 = vpop.f32.mrb[0].mxu0
        %v2593 = vadd.f32 0.0, %v2592
        %v2594 = vpop.f32.mrb[0].mxu0
        %v2595 = vpop.f32.mrb[0].mxu0
        %v2596 = vadd.f32 0.0, %v2595
        %v2597 = vpop.f32.mrb[0].mxu0
        %2598 = vdwg.mxu0
        %2599 = vmatprep.subr.bf16.mxu0 0
        %2600 = vmatpush1.bf16.xpose.msra.mxu0 %v2468
        %2601 = vmatprep.subr.bf16.mxu0 0
        %2602 = vmatpush1.bf16.xpose.msra.mxu0 %v2469
        %2603 = vmatprep.subr.bf16.mxu0 0
        %2604 = vmatpush1.bf16.xpose.msra.mxu0 %v2470
        %2605 = vmatprep.subr.bf16.mxu0 0
        %2606 = vmatpush1.bf16.xpose.msra.mxu0 %v2471
        %2607 = vmatprep.subr.bf16.mxu0 0
        %2608 = vmatpush1.bf16.xpose.msra.mxu0 %v2472
        %2609 = vmatprep.subr.bf16.mxu0 0
        %2610 = vmatpush1.bf16.xpose.msra.mxu0 %v2473
        %2611 = vmatprep.subr.bf16.mxu0 0
        %2612 = vmatpush1.bf16.xpose.msra.mxu0 %v2474
        %2613 = vmatprep.subr.bf16.mxu0 0
        %2614 = vmatpush1.bf16.xpose.msra.mxu0 %v2475
        %2615 = vmatprep.subr.bf16.mxu0 0
        %2616 = vmatpush1.bf16.xpose.msra.mxu0 0
        %2617 = vmatprep.subr.bf16.mxu0 0
        %2618 = vmatpush1.bf16.xpose.msra.mxu0 0
        %2619 = vmatprep.subr.bf16.mxu0 0
        %2620 = vmatpush1.bf16.xpose.msra.mxu0 0
        %2621 = vmatprep.subr.bf16.mxu0 0
        %2622 = vmatpush1.bf16.xpose.msra.mxu0 0
        %2623 = vmatprep.subr.bf16.mxu0 0
        %2624 = vmatpush1.bf16.xpose.msra.mxu0 0
        %2625 = vmatprep.subr.bf16.mxu0 0
        %2626 = vmatpush1.bf16.xpose.msra.mxu0 0
        %2627 = vmatprep.subr.bf16.mxu0 0
        %2628 = vmatpush1.bf16.xpose.msra.mxu0 0
        %2629 = vmatprep.subr.bf16.mxu0 0
        %2630 = vmatpush1.bf16.xpose.msra.mxu0 0
        %2631 = vmatprep.mubr.bf16.mxu0 0
        %2632 = vmatmul.mubr.bf16.gmra.mrb[0].mxu0 %v1251
        %v2633 = vpop.f32.mrb[0].mxu0
        %v2634 = vadd.f32 0.0, %v2633
        %v2635 = vpop.f32.mrb[0].mxu0
        %v2636 = vpop.f32.mrb[0].mxu0
        %v2637 = vadd.f32 0.0, %v2636
        %v2638 = vpop.f32.mrb[0].mxu0
        %2639 = vdwg.mxu0
        %v2640 = vpack.c.bf16 %v2514, %v2511
        %v2641 = vpack.c.bf16 %v2555, %v2552
        %v2642 = vpack.c.bf16 %v2596, %v2593
        %v2643 = vpack.c.bf16 %v2637, %v2634
        %2644 = vxpose.xlu0.c.b16.start [1/8] %v1208, 128
        %2645 = vxpose.xlu0.c.b16.cont [2/8] 0, 128
        %2646 = vxpose.xlu0.c.b16.cont [3/8] 0, 128
        %2647 = vxpose.xlu0.c.b16.cont [4/8] 0, 128
        %2648 = vxpose.xlu0.c.b16.cont [5/8] 0, 128
        %2649 = vxpose.xlu0.c.b16.cont [6/8] 0, 128
        %2650 = vxpose.xlu0.c.b16.cont [7/8] 0, 128
        %2651 = vxpose.xlu0.c.b16.end [8/8] 0, 128
        %v2652 = vpop.trf.xlu0
        %v2653 = vpop.trf.xlu0
        %v2654 = vpop.trf.xlu0
        %v2655 = vpop.trf.xlu0
        %v2656 = vpop.trf.xlu0
        %v2657 = vpop.trf.xlu0
        %v2658 = vpop.trf.xlu0
        %v2659 = vpop.trf.xlu0
        %2660 = vxpose.xlu0.c.b16.start [1/8] %v1212, 128
        %2661 = vxpose.xlu0.c.b16.cont [2/8] 0, 128
        %2662 = vxpose.xlu0.c.b16.cont [3/8] 0, 128
        %2663 = vxpose.xlu0.c.b16.cont [4/8] 0, 128
        %2664 = vxpose.xlu0.c.b16.cont [5/8] 0, 128
        %2665 = vxpose.xlu0.c.b16.cont [6/8] 0, 128
        %2666 = vxpose.xlu0.c.b16.cont [7/8] 0, 128
        %2667 = vxpose.xlu0.c.b16.end [8/8] 0, 128
        %v2668 = vpop.trf.xlu0
        %v2669 = vpop.trf.xlu0
        %v2670 = vpop.trf.xlu0
        %v2671 = vpop.trf.xlu0
        %v2672 = vpop.trf.xlu0
        %v2673 = vpop.trf.xlu0
        %v2674 = vpop.trf.xlu0
        %v2675 = vpop.trf.xlu0
        %2676 = vxpose.xlu0.c.b16.start [1/8] %v1216, 128
        %2677 = vxpose.xlu0.c.b16.cont [2/8] 0, 128
        %2678 = vxpose.xlu0.c.b16.cont [3/8] 0, 128
        %2679 = vxpose.xlu0.c.b16.cont [4/8] 0, 128
        %2680 = vxpose.xlu0.c.b16.cont [5/8] 0, 128
        %2681 = vxpose.xlu0.c.b16.cont [6/8] 0, 128
        %2682 = vxpose.xlu0.c.b16.cont [7/8] 0, 128
        %2683 = vxpose.xlu0.c.b16.end [8/8] 0, 128
        %v2684 = vpop.trf.xlu0
        %v2685 = vpop.trf.xlu0
        %v2686 = vpop.trf.xlu0
        %v2687 = vpop.trf.xlu0
        %v2688 = vpop.trf.xlu0
        %v2689 = vpop.trf.xlu0
        %v2690 = vpop.trf.xlu0
        %v2691 = vpop.trf.xlu0
        %2692 = vxpose.xlu0.c.b16.start [1/8] %v1220, 128
        %2693 = vxpose.xlu0.c.b16.cont [2/8] 0, 128
        %2694 = vxpose.xlu0.c.b16.cont [3/8] 0, 128
        %2695 = vxpose.xlu0.c.b16.cont [4/8] 0, 128
        %2696 = vxpose.xlu0.c.b16.cont [5/8] 0, 128
        %2697 = vxpose.xlu0.c.b16.cont [6/8] 0, 128
        %2698 = vxpose.xlu0.c.b16.cont [7/8] 0, 128
        %2699 = vxpose.xlu0.c.b16.end [8/8] 0, 128
        %v2700 = vpop.trf.xlu0
        %v2701 = vpop.trf.xlu0
        %v2702 = vpop.trf.xlu0
        %v2703 = vpop.trf.xlu0
        %v2704 = vpop.trf.xlu0
        %v2705 = vpop.trf.xlu0
        %v2706 = vpop.trf.xlu0
        %v2707 = vpop.trf.xlu0
        %v2709 = vsel %vm1319, %v2652, 0
        %v2712 = vsel %vm1319, %v2653, 0
        %v2715 = vsel %vm1319, %v2654, 0
        %v2718 = vsel %vm1319, %v2655, 0
        %v2721 = vsel %vm1319, %v2656, 0
        %v2724 = vsel %vm1319, %v2657, 0
        %v2727 = vsel %vm1319, %v2658, 0
        %v2730 = vsel %vm1319, %v2659, 0
        %2732 = vmatprep.subr.bf16.mxu0 0
        %2733 = vmatpush1.bf16.msra.mxu0 %v1224
        %2734 = vmatprep.subr.bf16.mxu0 0
        %2735 = vmatpush1.bf16.msra.mxu0 0
        %2736 = vmatprep.subr.bf16.mxu0 0
        %2737 = vmatpush1.bf16.msra.mxu0 0
        %2738 = vmatprep.subr.bf16.mxu0 0
        %2739 = vmatpush1.bf16.msra.mxu0 0
        %2740 = vmatprep.subr.bf16.mxu0 0
        %2741 = vmatpush1.bf16.msra.mxu0 0
        %2742 = vmatprep.subr.bf16.mxu0 0
        %2743 = vmatpush1.bf16.msra.mxu0 0
        %2744 = vmatprep.subr.bf16.mxu0 0
        %2745 = vmatpush1.bf16.msra.mxu0 0
        %2746 = vmatprep.subr.bf16.mxu0 0
        %2747 = vmatpush1.bf16.msra.mxu0 0
        %2748 = vmatprep.subr.bf16.mxu0 0
        %2749 = vmatpush1.bf16.msra.mxu0 0
        %2750 = vmatprep.subr.bf16.mxu0 0
        %2751 = vmatpush1.bf16.msra.mxu0 0
        %2752 = vmatprep.subr.bf16.mxu0 0
        %2753 = vmatpush1.bf16.msra.mxu0 0
        %2754 = vmatprep.subr.bf16.mxu0 0
        %2755 = vmatpush1.bf16.msra.mxu0 0
        %2756 = vmatprep.subr.bf16.mxu0 0
        %2757 = vmatpush1.bf16.msra.mxu0 0
        %2758 = vmatprep.subr.bf16.mxu0 0
        %2759 = vmatpush1.bf16.msra.mxu0 0
        %2760 = vmatprep.subr.bf16.mxu0 0
        %2761 = vmatpush1.bf16.msra.mxu0 0
        %2762 = vmatprep.subr.bf16.mxu0 0
        %2763 = vmatpush1.bf16.msra.mxu0 0
        %2764 = vmatprep.mubr.bf16.mxu0 0
        %2765 = vmatmul.mubr.bf16.gmra.mrb[0].mxu0 %v2709
        %v2766 = vpop.f32.mrb[0].mxu0
        %v2767 = vadd.f32 0.0, %v2766
        %v2768 = vpop.f32.mrb[0].mxu0
        %v2769 = vpop.f32.mrb[0].mxu0
        %v2770 = vadd.f32 0.0, %v2769
        %v2771 = vpop.f32.mrb[0].mxu0
        %2772 = vmatprep.mubr.bf16.mxu0 0
        %2773 = vmatmul.mubr.bf16.gmra.mrb[0].mxu0 %v2712
        %v2774 = vpop.f32.mrb[0].mxu0
        %v2775 = vadd.f32 0.0, %v2774
        %v2776 = vpop.f32.mrb[0].mxu0
        %v2777 = vpop.f32.mrb[0].mxu0
        %v2778 = vadd.f32 0.0, %v2777
        %v2779 = vpop.f32.mrb[0].mxu0
        %2780 = vmatprep.mubr.bf16.mxu0 0
        %2781 = vmatmul.mubr.bf16.gmra.mrb[0].mxu0 %v2715
        %v2782 = vpop.f32.mrb[0].mxu0
        %v2783 = vadd.f32 0.0, %v2782
        %v2784 = vpop.f32.mrb[0].mxu0
        %v2785 = vpop.f32.mrb[0].mxu0
        %v2786 = vadd.f32 0.0, %v2785
        %v2787 = vpop.f32.mrb[0].mxu0
        %2788 = vmatprep.mubr.bf16.mxu0 0
        %2789 = vmatmul.mubr.bf16.gmra.mrb[0].mxu0 %v2718
        %v2790 = vpop.f32.mrb[0].mxu0
        %v2791 = vadd.f32 0.0, %v2790
        %v2792 = vpop.f32.mrb[0].mxu0
        %v2793 = vpop.f32.mrb[0].mxu0
        %v2794 = vadd.f32 0.0, %v2793
        %v2795 = vpop.f32.mrb[0].mxu0
        %2796 = vmatprep.mubr.bf16.mxu0 0
        %2797 = vmatmul.mubr.bf16.gmra.mrb[0].mxu0 %v2721
        %v2798 = vpop.f32.mrb[0].mxu0
        %v2799 = vadd.f32 0.0, %v2798
        %v2800 = vpop.f32.mrb[0].mxu0
        %v2801 = vpop.f32.mrb[0].mxu0
        %v2802 = vadd.f32 0.0, %v2801
        %v2803 = vpop.f32.mrb[0].mxu0
        %2804 = vmatprep.mubr.bf16.mxu0 0
        %2805 = vmatmul.mubr.bf16.gmra.mrb[0].mxu0 %v2724
        %v2806 = vpop.f32.mrb[0].mxu0
        %v2807 = vadd.f32 0.0, %v2806
        %v2808 = vpop.f32.mrb[0].mxu0
        %v2809 = vpop.f32.mrb[0].mxu0
        %v2810 = vadd.f32 0.0, %v2809
        %v2811 = vpop.f32.mrb[0].mxu0
        %2812 = vmatprep.mubr.bf16.mxu0 0
        %2813 = vmatmul.mubr.bf16.gmra.mrb[0].mxu0 %v2727
        %v2814 = vpop.f32.mrb[0].mxu0
        %v2815 = vadd.f32 0.0, %v2814
        %v2816 = vpop.f32.mrb[0].mxu0
        %v2817 = vpop.f32.mrb[0].mxu0
        %v2818 = vadd.f32 0.0, %v2817
        %v2819 = vpop.f32.mrb[0].mxu0
        %2820 = vmatprep.mubr.bf16.mxu0 0
        %2821 = vmatmul.mubr.bf16.gmra.mrb[0].mxu0 %v2730
        %v2822 = vpop.f32.mrb[0].mxu0
        %v2823 = vadd.f32 0.0, %v2822
        %v2824 = vpop.f32.mrb[0].mxu0
        %v2825 = vpop.f32.mrb[0].mxu0
        %v2826 = vadd.f32 0.0, %v2825
        %v2827 = vpop.f32.mrb[0].mxu0
        %2828 = vdwg.mxu0
        %v2830 = vsel %vm1319, %v2668, 0
        %v2833 = vsel %vm1319, %v2669, 0
        %v2836 = vsel %vm1319, %v2670, 0
        %v2839 = vsel %vm1319, %v2671, 0
        %v2842 = vsel %vm1319, %v2672, 0
        %v2845 = vsel %vm1319, %v2673, 0
        %v2848 = vsel %vm1319, %v2674, 0
        %v2851 = vsel %vm1319, %v2675, 0
        %2853 = vmatprep.subr.bf16.mxu0 0
        %2854 = vmatpush1.bf16.msra.mxu0 %v1228
        %2855 = vmatprep.subr.bf16.mxu0 0
        %2856 = vmatpush1.bf16.msra.mxu0 0
        %2857 = vmatprep.subr.bf16.mxu0 0
        %2858 = vmatpush1.bf16.msra.mxu0 0
        %2859 = vmatprep.subr.bf16.mxu0 0
        %2860 = vmatpush1.bf16.msra.mxu0 0
        %2861 = vmatprep.subr.bf16.mxu0 0
        %2862 = vmatpush1.bf16.msra.mxu0 0
        %2863 = vmatprep.subr.bf16.mxu0 0
        %2864 = vmatpush1.bf16.msra.mxu0 0
        %2865 = vmatprep.subr.bf16.mxu0 0
        %2866 = vmatpush1.bf16.msra.mxu0 0
        %2867 = vmatprep.subr.bf16.mxu0 0
        %2868 = vmatpush1.bf16.msra.mxu0 0
        %2869 = vmatprep.subr.bf16.mxu0 0
        %2870 = vmatpush1.bf16.msra.mxu0 0
        %2871 = vmatprep.subr.bf16.mxu0 0
        %2872 = vmatpush1.bf16.msra.mxu0 0
        %2873 = vmatprep.subr.bf16.mxu0 0
        %2874 = vmatpush1.bf16.msra.mxu0 0
        %2875 = vmatprep.subr.bf16.mxu0 0
        %2876 = vmatpush1.bf16.msra.mxu0 0
        %2877 = vmatprep.subr.bf16.mxu0 0
        %2878 = vmatpush1.bf16.msra.mxu0 0
        %2879 = vmatprep.subr.bf16.mxu0 0
        %2880 = vmatpush1.bf16.msra.mxu0 0
        %2881 = vmatprep.subr.bf16.mxu0 0
        %2882 = vmatpush1.bf16.msra.mxu0 0
        %2883 = vmatprep.subr.bf16.mxu0 0
        %2884 = vmatpush1.bf16.msra.mxu0 0
        %2885 = vmatprep.mubr.bf16.mxu0 0
        %2886 = vmatmul.mubr.bf16.gmra.mrb[0].mxu0 %v2830
        %v2887 = vpop.f32.mrb[0].mxu0
        %v2888 = vadd.f32 0.0, %v2887
        %v2889 = vpop.f32.mrb[0].mxu0
        %v2890 = vpop.f32.mrb[0].mxu0
        %v2891 = vadd.f32 0.0, %v2890
        %v2892 = vpop.f32.mrb[0].mxu0
        %2893 = vmatprep.mubr.bf16.mxu0 0
        %2894 = vmatmul.mubr.bf16.gmra.mrb[0].mxu0 %v2833
        %v2895 = vpop.f32.mrb[0].mxu0
        %v2896 = vadd.f32 0.0, %v2895
        %v2897 = vpop.f32.mrb[0].mxu0
        %v2898 = vpop.f32.mrb[0].mxu0
        %v2899 = vadd.f32 0.0, %v2898
        %v2900 = vpop.f32.mrb[0].mxu0
        %2901 = vmatprep.mubr.bf16.mxu0 0
        %2902 = vmatmul.mubr.bf16.gmra.mrb[0].mxu0 %v2836
        %v2903 = vpop.f32.mrb[0].mxu0
        %v2904 = vadd.f32 0.0, %v2903
        %v2905 = vpop.f32.mrb[0].mxu0
        %v2906 = vpop.f32.mrb[0].mxu0
        %v2907 = vadd.f32 0.0, %v2906
        %v2908 = vpop.f32.mrb[0].mxu0
        %2909 = vmatprep.mubr.bf16.mxu0 0
        %2910 = vmatmul.mubr.bf16.gmra.mrb[0].mxu0 %v2839
        %v2911 = vpop.f32.mrb[0].mxu0
        %v2912 = vadd.f32 0.0, %v2911
        %v2913 = vpop.f32.mrb[0].mxu0
        %v2914 = vpop.f32.mrb[0].mxu0
        %v2915 = vadd.f32 0.0, %v2914
        %v2916 = vpop.f32.mrb[0].mxu0
        %2917 = vmatprep.mubr.bf16.mxu0 0
        %2918 = vmatmul.mubr.bf16.gmra.mrb[0].mxu0 %v2842
        %v2919 = vpop.f32.mrb[0].mxu0
        %v2920 = vadd.f32 0.0, %v2919
        %v2921 = vpop.f32.mrb[0].mxu0
        %v2922 = vpop.f32.mrb[0].mxu0
        %v2923 = vadd.f32 0.0, %v2922
        %v2924 = vpop.f32.mrb[0].mxu0
        %2925 = vmatprep.mubr.bf16.mxu0 0
        %2926 = vmatmul.mubr.bf16.gmra.mrb[0].mxu0 %v2845
        %v2927 = vpop.f32.mrb[0].mxu0
        %v2928 = vadd.f32 0.0, %v2927
        %v2929 = vpop.f32.mrb[0].mxu0
        %v2930 = vpop.f32.mrb[0].mxu0
        %v2931 = vadd.f32 0.0, %v2930
        %v2932 = vpop.f32.mrb[0].mxu0
        %2933 = vmatprep.mubr.bf16.mxu0 0
        %2934 = vmatmul.mubr.bf16.gmra.mrb[0].mxu0 %v2848
        %v2935 = vpop.f32.mrb[0].mxu0
        %v2936 = vadd.f32 0.0, %v2935
        %v2937 = vpop.f32.mrb[0].mxu0
        %v2938 = vpop.f32.mrb[0].mxu0
        %v2939 = vadd.f32 0.0, %v2938
        %v2940 = vpop.f32.mrb[0].mxu0
        %2941 = vmatprep.mubr.bf16.mxu0 0
        %2942 = vmatmul.mubr.bf16.gmra.mrb[0].mxu0 %v2851
        %v2943 = vpop.f32.mrb[0].mxu0
        %v2944 = vadd.f32 0.0, %v2943
        %v2945 = vpop.f32.mrb[0].mxu0
        %v2946 = vpop.f32.mrb[0].mxu0
        %v2947 = vadd.f32 0.0, %v2946
        %v2948 = vpop.f32.mrb[0].mxu0
        %2949 = vdwg.mxu0
        %v2951 = vsel %vm1319, %v2684, 0
        %v2954 = vsel %vm1319, %v2685, 0
        %v2957 = vsel %vm1319, %v2686, 0
        %v2960 = vsel %vm1319, %v2687, 0
        %v2963 = vsel %vm1319, %v2688, 0
        %v2966 = vsel %vm1319, %v2689, 0
        %v2969 = vsel %vm1319, %v2690, 0
        %v2972 = vsel %vm1319, %v2691, 0
        %2974 = vmatprep.subr.bf16.mxu0 0
        %2975 = vmatpush1.bf16.msra.mxu0 %v1232
        %2976 = vmatprep.subr.bf16.mxu0 0
        %2977 = vmatpush1.bf16.msra.mxu0 0
        %2978 = vmatprep.subr.bf16.mxu0 0
        %2979 = vmatpush1.bf16.msra.mxu0 0
        %2980 = vmatprep.subr.bf16.mxu0 0
        %2981 = vmatpush1.bf16.msra.mxu0 0
        %2982 = vmatprep.subr.bf16.mxu0 0
        %2983 = vmatpush1.bf16.msra.mxu0 0
        %2984 = vmatprep.subr.bf16.mxu0 0
        %2985 = vmatpush1.bf16.msra.mxu0 0
        %2986 = vmatprep.subr.bf16.mxu0 0
        %2987 = vmatpush1.bf16.msra.mxu0 0
        %2988 = vmatprep.subr.bf16.mxu0 0
        %2989 = vmatpush1.bf16.msra.mxu0 0
        %2990 = vmatprep.subr.bf16.mxu0 0
        %2991 = vmatpush1.bf16.msra.mxu0 0
        %2992 = vmatprep.subr.bf16.mxu0 0
        %2993 = vmatpush1.bf16.msra.mxu0 0
        %2994 = vmatprep.subr.bf16.mxu0 0
        %2995 = vmatpush1.bf16.msra.mxu0 0
        %2996 = vmatprep.subr.bf16.mxu0 0
        %2997 = vmatpush1.bf16.msra.mxu0 0
        %2998 = vmatprep.subr.bf16.mxu0 0
        %2999 = vmatpush1.bf16.msra.mxu0 0
        %3000 = vmatprep.subr.bf16.mxu0 0
        %3001 = vmatpush1.bf16.msra.mxu0 0
        %3002 = vmatprep.subr.bf16.mxu0 0
        %3003 = vmatpush1.bf16.msra.mxu0 0
        %3004 = vmatprep.subr.bf16.mxu0 0
        %3005 = vmatpush1.bf16.msra.mxu0 0
        %3006 = vmatprep.mubr.bf16.mxu0 0
        %3007 = vmatmul.mubr.bf16.gmra.mrb[0].mxu0 %v2951
        %v3008 = vpop.f32.mrb[0].mxu0
        %v3009 = vadd.f32 0.0, %v3008
        %v3010 = vpop.f32.mrb[0].mxu0
        %v3011 = vpop.f32.mrb[0].mxu0
        %v3012 = vadd.f32 0.0, %v3011
        %v3013 = vpop.f32.mrb[0].mxu0
        %3014 = vmatprep.mubr.bf16.mxu0 0
        %3015 = vmatmul.mubr.bf16.gmra.mrb[0].mxu0 %v2954
        %v3016 = vpop.f32.mrb[0].mxu0
        %v3017 = vadd.f32 0.0, %v3016
        %v3018 = vpop.f32.mrb[0].mxu0
        %v3019 = vpop.f32.mrb[0].mxu0
        %v3020 = vadd.f32 0.0, %v3019
        %v3021 = vpop.f32.mrb[0].mxu0
        %3022 = vmatprep.mubr.bf16.mxu0 0
        %3023 = vmatmul.mubr.bf16.gmra.mrb[0].mxu0 %v2957
        %v3024 = vpop.f32.mrb[0].mxu0
        %v3025 = vadd.f32 0.0, %v3024
        %v3026 = vpop.f32.mrb[0].mxu0
        %v3027 = vpop.f32.mrb[0].mxu0
        %v3028 = vadd.f32 0.0, %v3027
        %v3029 = vpop.f32.mrb[0].mxu0
        %3030 = vmatprep.mubr.bf16.mxu0 0
        %3031 = vmatmul.mubr.bf16.gmra.mrb[0].mxu0 %v2960
        %v3032 = vpop.f32.mrb[0].mxu0
        %v3033 = vadd.f32 0.0, %v3032
        %v3034 = vpop.f32.mrb[0].mxu0
        %v3035 = vpop.f32.mrb[0].mxu0
        %v3036 = vadd.f32 0.0, %v3035
        %v3037 = vpop.f32.mrb[0].mxu0
        %3038 = vmatprep.mubr.bf16.mxu0 0
        %3039 = vmatmul.mubr.bf16.gmra.mrb[0].mxu0 %v2963
        %v3040 = vpop.f32.mrb[0].mxu0
        %v3041 = vadd.f32 0.0, %v3040
        %v3042 = vpop.f32.mrb[0].mxu0
        %v3043 = vpop.f32.mrb[0].mxu0
        %v3044 = vadd.f32 0.0, %v3043
        %v3045 = vpop.f32.mrb[0].mxu0
        %3046 = vmatprep.mubr.bf16.mxu0 0
        %3047 = vmatmul.mubr.bf16.gmra.mrb[0].mxu0 %v2966
        %v3048 = vpop.f32.mrb[0].mxu0
        %v3049 = vadd.f32 0.0, %v3048
        %v3050 = vpop.f32.mrb[0].mxu0
        %v3051 = vpop.f32.mrb[0].mxu0
        %v3052 = vadd.f32 0.0, %v3051
        %v3053 = vpop.f32.mrb[0].mxu0
        %3054 = vmatprep.mubr.bf16.mxu0 0
        %3055 = vmatmul.mubr.bf16.gmra.mrb[0].mxu0 %v2969
        %v3056 = vpop.f32.mrb[0].mxu0
        %v3057 = vadd.f32 0.0, %v3056
        %v3058 = vpop.f32.mrb[0].mxu0
        %v3059 = vpop.f32.mrb[0].mxu0
        %v3060 = vadd.f32 0.0, %v3059
        %v3061 = vpop.f32.mrb[0].mxu0
        %3062 = vmatprep.mubr.bf16.mxu0 0
        %3063 = vmatmul.mubr.bf16.gmra.mrb[0].mxu0 %v2972
        %v3064 = vpop.f32.mrb[0].mxu0
        %v3065 = vadd.f32 0.0, %v3064
        %v3066 = vpop.f32.mrb[0].mxu0
        %v3067 = vpop.f32.mrb[0].mxu0
        %v3068 = vadd.f32 0.0, %v3067
        %v3069 = vpop.f32.mrb[0].mxu0
        %3070 = vdwg.mxu0
        %v3072 = vsel %vm1319, %v2700, 0
        %v3075 = vsel %vm1319, %v2701, 0
        %v3078 = vsel %vm1319, %v2702, 0
        %v3081 = vsel %vm1319, %v2703, 0
        %v3084 = vsel %vm1319, %v2704, 0
        %v3087 = vsel %vm1319, %v2705, 0
        %v3090 = vsel %vm1319, %v2706, 0
        %v3093 = vsel %vm1319, %v2707, 0
        %3095 = vmatprep.subr.bf16.mxu0 0
        %3096 = vmatpush1.bf16.msra.mxu0 %v1236
        %3097 = vmatprep.subr.bf16.mxu0 0
        %3098 = vmatpush1.bf16.msra.mxu0 0
        %3099 = vmatprep.subr.bf16.mxu0 0
        %3100 = vmatpush1.bf16.msra.mxu0 0
        %3101 = vmatprep.subr.bf16.mxu0 0
        %3102 = vmatpush1.bf16.msra.mxu0 0
        %3103 = vmatprep.subr.bf16.mxu0 0
        %3104 = vmatpush1.bf16.msra.mxu0 0
        %3105 = vmatprep.subr.bf16.mxu0 0
        %3106 = vmatpush1.bf16.msra.mxu0 0
        %3107 = vmatprep.subr.bf16.mxu0 0
        %3108 = vmatpush1.bf16.msra.mxu0 0
        %3109 = vmatprep.subr.bf16.mxu0 0
        %3110 = vmatpush1.bf16.msra.mxu0 0
        %3111 = vmatprep.subr.bf16.mxu0 0
        %3112 = vmatpush1.bf16.msra.mxu0 0
        %3113 = vmatprep.subr.bf16.mxu0 0
        %3114 = vmatpush1.bf16.msra.mxu0 0
        %3115 = vmatprep.subr.bf16.mxu0 0
        %3116 = vmatpush1.bf16.msra.mxu0 0
        %3117 = vmatprep.subr.bf16.mxu0 0
        %3118 = vmatpush1.bf16.msra.mxu0 0
        %3119 = vmatprep.subr.bf16.mxu0 0
        %3120 = vmatpush1.bf16.msra.mxu0 0
        %3121 = vmatprep.subr.bf16.mxu0 0
        %3122 = vmatpush1.bf16.msra.mxu0 0
        %3123 = vmatprep.subr.bf16.mxu0 0
        %3124 = vmatpush1.bf16.msra.mxu0 0
        %3125 = vmatprep.subr.bf16.mxu0 0
        %3126 = vmatpush1.bf16.msra.mxu0 0
        %3127 = vmatprep.mubr.bf16.mxu0 0
        %3128 = vmatmul.mubr.bf16.gmra.mrb[0].mxu0 %v3072
        %v3129 = vpop.f32.mrb[0].mxu0
        %v3130 = vadd.f32 0.0, %v3129
        %v3131 = vpop.f32.mrb[0].mxu0
        %v3132 = vpop.f32.mrb[0].mxu0
        %v3133 = vadd.f32 0.0, %v3132
        %v3134 = vpop.f32.mrb[0].mxu0
        %3135 = vmatprep.mubr.bf16.mxu0 0
        %3136 = vmatmul.mubr.bf16.gmra.mrb[0].mxu0 %v3075
        %v3137 = vpop.f32.mrb[0].mxu0
        %v3138 = vadd.f32 0.0, %v3137
        %v3139 = vpop.f32.mrb[0].mxu0
        %v3140 = vpop.f32.mrb[0].mxu0
        %v3141 = vadd.f32 0.0, %v3140
        %v3142 = vpop.f32.mrb[0].mxu0
        %3143 = vmatprep.mubr.bf16.mxu0 0
        %3144 = vmatmul.mubr.bf16.gmra.mrb[0].mxu0 %v3078
        %v3145 = vpop.f32.mrb[0].mxu0
        %v3146 = vadd.f32 0.0, %v3145
        %v3147 = vpop.f32.mrb[0].mxu0
        %v3148 = vpop.f32.mrb[0].mxu0
        %v3149 = vadd.f32 0.0, %v3148
        %v3150 = vpop.f32.mrb[0].mxu0
        %3151 = vmatprep.mubr.bf16.mxu0 0
        %3152 = vmatmul.mubr.bf16.gmra.mrb[0].mxu0 %v3081
        %v3153 = vpop.f32.mrb[0].mxu0
        %v3154 = vadd.f32 0.0, %v3153
        %v3155 = vpop.f32.mrb[0].mxu0
        %v3156 = vpop.f32.mrb[0].mxu0
        %v3157 = vadd.f32 0.0, %v3156
        %v3158 = vpop.f32.mrb[0].mxu0
        %3159 = vmatprep.mubr.bf16.mxu0 0
        %3160 = vmatmul.mubr.bf16.gmra.mrb[0].mxu0 %v3084
        %v3161 = vpop.f32.mrb[0].mxu0
        %v3162 = vadd.f32 0.0, %v3161
        %v3163 = vpop.f32.mrb[0].mxu0
        %v3164 = vpop.f32.mrb[0].mxu0
        %v3165 = vadd.f32 0.0, %v3164
        %v3166 = vpop.f32.mrb[0].mxu0
        %3167 = vmatprep.mubr.bf16.mxu0 0
        %3168 = vmatmul.mubr.bf16.gmra.mrb[0].mxu0 %v3087
        %v3169 = vpop.f32.mrb[0].mxu0
        %v3170 = vadd.f32 0.0, %v3169
        %v3171 = vpop.f32.mrb[0].mxu0
        %v3172 = vpop.f32.mrb[0].mxu0
        %v3173 = vadd.f32 0.0, %v3172
        %v3174 = vpop.f32.mrb[0].mxu0
        %3175 = vmatprep.mubr.bf16.mxu0 0
        %3176 = vmatmul.mubr.bf16.gmra.mrb[0].mxu0 %v3090
        %v3177 = vpop.f32.mrb[0].mxu0
        %v3178 = vadd.f32 0.0, %v3177
        %v3179 = vpop.f32.mrb[0].mxu0
        %v3180 = vpop.f32.mrb[0].mxu0
        %v3181 = vadd.f32 0.0, %v3180
        %v3182 = vpop.f32.mrb[0].mxu0
        %3183 = vmatprep.mubr.bf16.mxu0 0
        %3184 = vmatmul.mubr.bf16.gmra.mrb[0].mxu0 %v3093
        %v3185 = vpop.f32.mrb[0].mxu0
        %v3186 = vadd.f32 0.0, %v3185
        %v3187 = vpop.f32.mrb[0].mxu0
        %v3188 = vpop.f32.mrb[0].mxu0
        %v3189 = vadd.f32 0.0, %v3188
        %v3190 = vpop.f32.mrb[0].mxu0
        %3191 = vdwg.mxu0
        %v3192 = vmul.f32 %v2767, 0.25
        %v3193 = vmul.f32 %v2770, 0.25
        %v3194 = vmul.f32 %v2775, 0.25
        %v3195 = vmul.f32 %v2778, 0.25
        %v3196 = vmul.f32 %v2783, 0.25
        %v3197 = vmul.f32 %v2786, 0.25
        %v3198 = vmul.f32 %v2791, 0.25
        %v3199 = vmul.f32 %v2794, 0.25
        %v3200 = vmul.f32 %v2799, 0.25
        %v3201 = vmul.f32 %v2802, 0.25
        %v3202 = vmul.f32 %v2807, 0.25
        %v3203 = vmul.f32 %v2810, 0.25
        %v3204 = vmul.f32 %v2815, 0.25
        %v3205 = vmul.f32 %v2818, 0.25
        %v3206 = vmul.f32 %v2823, 0.25
        %v3207 = vmul.f32 %v2826, 0.25
        %v3208 = vmul.f32 %v2888, 0.25
        %v3209 = vmul.f32 %v2891, 0.25
        %v3210 = vmul.f32 %v2896, 0.25
        %v3211 = vmul.f32 %v2899, 0.25
        %v3212 = vmul.f32 %v2904, 0.25
        %v3213 = vmul.f32 %v2907, 0.25
        %v3214 = vmul.f32 %v2912, 0.25
        %v3215 = vmul.f32 %v2915, 0.25
        %v3216 = vmul.f32 %v2920, 0.25
        %v3217 = vmul.f32 %v2923, 0.25
        %v3218 = vmul.f32 %v2928, 0.25
        %v3219 = vmul.f32 %v2931, 0.25
        %v3220 = vmul.f32 %v2936, 0.25
        %v3221 = vmul.f32 %v2939, 0.25
        %v3222 = vmul.f32 %v2944, 0.25
        %v3223 = vmul.f32 %v2947, 0.25
        %v3224 = vmul.f32 %v3009, 0.25
        %v3225 = vmul.f32 %v3012, 0.25
        %v3226 = vmul.f32 %v3017, 0.25
        %v3227 = vmul.f32 %v3020, 0.25
        %v3228 = vmul.f32 %v3025, 0.25
        %v3229 = vmul.f32 %v3028, 0.25
        %v3230 = vmul.f32 %v3033, 0.25
        %v3231 = vmul.f32 %v3036, 0.25
        %v3232 = vmul.f32 %v3041, 0.25
        %v3233 = vmul.f32 %v3044, 0.25
        %v3234 = vmul.f32 %v3049, 0.25
        %v3235 = vmul.f32 %v3052, 0.25
        %v3236 = vmul.f32 %v3057, 0.25
        %v3237 = vmul.f32 %v3060, 0.25
        %v3238 = vmul.f32 %v3065, 0.25
        %v3239 = vmul.f32 %v3068, 0.25
        %v3240 = vmul.f32 %v3130, 0.25
        %v3241 = vmul.f32 %v3133, 0.25
        %v3242 = vmul.f32 %v3138, 0.25
        %v3243 = vmul.f32 %v3141, 0.25
        %v3244 = vmul.f32 %v3146, 0.25
        %v3245 = vmul.f32 %v3149, 0.25
        %v3246 = vmul.f32 %v3154, 0.25
        %v3247 = vmul.f32 %v3157, 0.25
        %v3248 = vmul.f32 %v3162, 0.25
        %v3249 = vmul.f32 %v3165, 0.25
        %v3250 = vmul.f32 %v3170, 0.25
        %v3251 = vmul.f32 %v3173, 0.25
        %v3252 = vmul.f32 %v3178, 0.25
        %v3253 = vmul.f32 %v3181, 0.25
        %v3254 = vmul.f32 %v3186, 0.25
        %v3255 = vmul.f32 %v3189, 0.25
        %3256 = vmax.xlane.f32.xlu0 %v3192
        %v3257 = vpop.xlane.xlu0 %3256
        %3258 = vmax.xlane.f32.xlu0 %v3193
        %v3259 = vpop.xlane.xlu0 %3258
        %3260 = vmax.xlane.f32.xlu0 %v3194
        %v3261 = vpop.xlane.xlu0 %3260
        %3262 = vmax.xlane.f32.xlu0 %v3195
        %v3263 = vpop.xlane.xlu0 %3262
        %3264 = vmax.xlane.f32.xlu0 %v3196
        %v3265 = vpop.xlane.xlu0 %3264
        %3266 = vmax.xlane.f32.xlu0 %v3197
        %v3267 = vpop.xlane.xlu0 %3266
        %3268 = vmax.xlane.f32.xlu0 %v3198
        %v3269 = vpop.xlane.xlu0 %3268
        %3270 = vmax.xlane.f32.xlu0 %v3199
        %v3271 = vpop.xlane.xlu0 %3270
        %3272 = vmax.xlane.f32.xlu0 %v3200
        %v3273 = vpop.xlane.xlu0 %3272
        %3274 = vmax.xlane.f32.xlu0 %v3201
        %v3275 = vpop.xlane.xlu0 %3274
        %3276 = vmax.xlane.f32.xlu0 %v3202
        %v3277 = vpop.xlane.xlu0 %3276
        %3278 = vmax.xlane.f32.xlu0 %v3203
        %v3279 = vpop.xlane.xlu0 %3278
        %3280 = vmax.xlane.f32.xlu0 %v3204
        %v3281 = vpop.xlane.xlu0 %3280
        %3282 = vmax.xlane.f32.xlu0 %v3205
        %v3283 = vpop.xlane.xlu0 %3282
        %3284 = vmax.xlane.f32.xlu0 %v3206
        %v3285 = vpop.xlane.xlu0 %3284
        %3286 = vmax.xlane.f32.xlu0 %v3207
        %v3287 = vpop.xlane.xlu0 %3286
        %3288 = vmax.xlane.f32.xlu0 %v3208
        %v3289 = vpop.xlane.xlu0 %3288
        %3290 = vmax.xlane.f32.xlu0 %v3209
        %v3291 = vpop.xlane.xlu0 %3290
        %3292 = vmax.xlane.f32.xlu0 %v3210
        %v3293 = vpop.xlane.xlu0 %3292
        %3294 = vmax.xlane.f32.xlu0 %v3211
        %v3295 = vpop.xlane.xlu0 %3294
        %3296 = vmax.xlane.f32.xlu0 %v3212
        %v3297 = vpop.xlane.xlu0 %3296
        %3298 = vmax.xlane.f32.xlu0 %v3213
        %v3299 = vpop.xlane.xlu0 %3298
        %3300 = vmax.xlane.f32.xlu0 %v3214
        %v3301 = vpop.xlane.xlu0 %3300
        %3302 = vmax.xlane.f32.xlu0 %v3215
        %v3303 = vpop.xlane.xlu0 %3302
        %3304 = vmax.xlane.f32.xlu0 %v3216
        %v3305 = vpop.xlane.xlu0 %3304
        %3306 = vmax.xlane.f32.xlu0 %v3217
        %v3307 = vpop.xlane.xlu0 %3306
        %3308 = vmax.xlane.f32.xlu0 %v3218
        %v3309 = vpop.xlane.xlu0 %3308
        %3310 = vmax.xlane.f32.xlu0 %v3219
        %v3311 = vpop.xlane.xlu0 %3310
        %3312 = vmax.xlane.f32.xlu0 %v3220
        %v3313 = vpop.xlane.xlu0 %3312
        %3314 = vmax.xlane.f32.xlu0 %v3221
        %v3315 = vpop.xlane.xlu0 %3314
        %3316 = vmax.xlane.f32.xlu0 %v3222
        %v3317 = vpop.xlane.xlu0 %3316
        %3318 = vmax.xlane.f32.xlu0 %v3223
        %v3319 = vpop.xlane.xlu0 %3318
        %3320 = vmax.xlane.f32.xlu0 %v3224
        %v3321 = vpop.xlane.xlu0 %3320
        %3322 = vmax.xlane.f32.xlu0 %v3225
        %v3323 = vpop.xlane.xlu0 %3322
        %3324 = vmax.xlane.f32.xlu0 %v3226
        %v3325 = vpop.xlane.xlu0 %3324
        %3326 = vmax.xlane.f32.xlu0 %v3227
        %v3327 = vpop.xlane.xlu0 %3326
        %3328 = vmax.xlane.f32.xlu0 %v3228
        %v3329 = vpop.xlane.xlu0 %3328
        %3330 = vmax.xlane.f32.xlu0 %v3229
        %v3331 = vpop.xlane.xlu0 %3330
        %3332 = vmax.xlane.f32.xlu0 %v3230
        %v3333 = vpop.xlane.xlu0 %3332
        %3334 = vmax.xlane.f32.xlu0 %v3231
        %v3335 = vpop.xlane.xlu0 %3334
        %3336 = vmax.xlane.f32.xlu0 %v3232
        %v3337 = vpop.xlane.xlu0 %3336
        %3338 = vmax.xlane.f32.xlu0 %v3233
        %v3339 = vpop.xlane.xlu0 %3338
        %3340 = vmax.xlane.f32.xlu0 %v3234
        %v3341 = vpop.xlane.xlu0 %3340
        %3342 = vmax.xlane.f32.xlu0 %v3235
        %v3343 = vpop.xlane.xlu0 %3342
        %3344 = vmax.xlane.f32.xlu0 %v3236
        %v3345 = vpop.xlane.xlu0 %3344
        %3346 = vmax.xlane.f32.xlu0 %v3237
        %v3347 = vpop.xlane.xlu0 %3346
        %3348 = vmax.xlane.f32.xlu0 %v3238
        %v3349 = vpop.xlane.xlu0 %3348
        %3350 = vmax.xlane.f32.xlu0 %v3239
        %v3351 = vpop.xlane.xlu0 %3350
        %3352 = vmax.xlane.f32.xlu0 %v3240
        %v3353 = vpop.xlane.xlu0 %3352
        %3354 = vmax.xlane.f32.xlu0 %v3241
        %v3355 = vpop.xlane.xlu0 %3354
        %3356 = vmax.xlane.f32.xlu0 %v3242
        %v3357 = vpop.xlane.xlu0 %3356
        %3358 = vmax.xlane.f32.xlu0 %v3243
        %v3359 = vpop.xlane.xlu0 %3358
        %3360 = vmax.xlane.f32.xlu0 %v3244
        %v3361 = vpop.xlane.xlu0 %3360
        %3362 = vmax.xlane.f32.xlu0 %v3245
        %v3363 = vpop.xlane.xlu0 %3362
        %3364 = vmax.xlane.f32.xlu0 %v3246
        %v3365 = vpop.xlane.xlu0 %3364
        %3366 = vmax.xlane.f32.xlu0 %v3247
        %v3367 = vpop.xlane.xlu0 %3366
        %3368 = vmax.xlane.f32.xlu0 %v3248
        %v3369 = vpop.xlane.xlu0 %3368
        %3370 = vmax.xlane.f32.xlu0 %v3249
        %v3371 = vpop.xlane.xlu0 %3370
        %3372 = vmax.xlane.f32.xlu0 %v3250
        %v3373 = vpop.xlane.xlu0 %3372
        %3374 = vmax.xlane.f32.xlu0 %v3251
        %v3375 = vpop.xlane.xlu0 %3374
        %3376 = vmax.xlane.f32.xlu0 %v3252
        %v3377 = vpop.xlane.xlu0 %3376
        %3378 = vmax.xlane.f32.xlu0 %v3253
        %v3379 = vpop.xlane.xlu0 %3378
        %3380 = vmax.xlane.f32.xlu0 %v3254
        %v3381 = vpop.xlane.xlu0 %3380
        %3382 = vmax.xlane.f32.xlu0 %v3255
        %v3383 = vpop.xlane.xlu0 %3382
        %v3384 = vsub.f32 %v3192, %v3257
        %v3385 = vsub.f32 %v3193, %v3259
        %v3386 = vsub.f32 %v3194, %v3261
        %v3387 = vsub.f32 %v3195, %v3263
        %v3388 = vsub.f32 %v3196, %v3265
        %v3389 = vsub.f32 %v3197, %v3267
        %v3390 = vsub.f32 %v3198, %v3269
        %v3391 = vsub.f32 %v3199, %v3271
        %v3392 = vsub.f32 %v3200, %v3273
        %v3393 = vsub.f32 %v3201, %v3275
        %v3394 = vsub.f32 %v3202, %v3277
        %v3395 = vsub.f32 %v3203, %v3279
        %v3396 = vsub.f32 %v3204, %v3281
        %v3397 = vsub.f32 %v3205, %v3283
        %v3398 = vsub.f32 %v3206, %v3285
        %v3399 = vsub.f32 %v3207, %v3287
        %v3400 = vsub.f32 %v3208, %v3289
        %v3401 = vsub.f32 %v3209, %v3291
        %v3402 = vsub.f32 %v3210, %v3293
        %v3403 = vsub.f32 %v3211, %v3295
        %v3404 = vsub.f32 %v3212, %v3297
        %v3405 = vsub.f32 %v3213, %v3299
        %v3406 = vsub.f32 %v3214, %v3301
        %v3407 = vsub.f32 %v3215, %v3303
        %v3408 = vsub.f32 %v3216, %v3305
        %v3409 = vsub.f32 %v3217, %v3307
        %v3410 = vsub.f32 %v3218, %v3309
        %v3411 = vsub.f32 %v3219, %v3311
        %v3412 = vsub.f32 %v3220, %v3313
        %v3413 = vsub.f32 %v3221, %v3315
        %v3414 = vsub.f32 %v3222, %v3317
        %v3415 = vsub.f32 %v3223, %v3319
        %v3416 = vsub.f32 %v3224, %v3321
        %v3417 = vsub.f32 %v3225, %v3323
        %v3418 = vsub.f32 %v3226, %v3325
        %v3419 = vsub.f32 %v3227, %v3327
        %v3420 = vsub.f32 %v3228, %v3329
        %v3421 = vsub.f32 %v3229, %v3331
        %v3422 = vsub.f32 %v3230, %v3333
        %v3423 = vsub.f32 %v3231, %v3335
        %v3424 = vsub.f32 %v3232, %v3337
        %v3425 = vsub.f32 %v3233, %v3339
        %v3426 = vsub.f32 %v3234, %v3341
        %v3427 = vsub.f32 %v3235, %v3343
        %v3428 = vsub.f32 %v3236, %v3345
        %v3429 = vsub.f32 %v3237, %v3347
        %v3430 = vsub.f32 %v3238, %v3349
        %v3431 = vsub.f32 %v3239, %v3351
        %v3432 = vsub.f32 %v3240, %v3353
        %v3433 = vsub.f32 %v3241, %v3355
        %v3434 = vsub.f32 %v3242, %v3357
        %v3435 = vsub.f32 %v3243, %v3359
        %v3436 = vsub.f32 %v3244, %v3361
        %v3437 = vsub.f32 %v3245, %v3363
        %v3438 = vsub.f32 %v3246, %v3365
        %v3439 = vsub.f32 %v3247, %v3367
        %v3440 = vsub.f32 %v3248, %v3369
        %v3441 = vsub.f32 %v3249, %v3371
        %v3442 = vsub.f32 %v3250, %v3373
        %v3443 = vsub.f32 %v3251, %v3375
        %v3444 = vsub.f32 %v3252, %v3377
        %v3445 = vsub.f32 %v3253, %v3379
        %v3446 = vsub.f32 %v3254, %v3381
        %v3447 = vsub.f32 %v3255, %v3383
        %v3448 = vmul.f32 %v3384, 1.442695
        %v3449 = vpow.pop %v3448
        %v3450 = vmul.f32 %v3385, 1.442695
        %v3451 = vpow.pop %v3450
        %v3452 = vmul.f32 %v3386, 1.442695
        %v3453 = vpow.pop %v3452
        %v3454 = vmul.f32 %v3387, 1.442695
        %v3455 = vpow.pop %v3454
        %v3456 = vmul.f32 %v3388, 1.442695
        %v3457 = vpow.pop %v3456
        %v3458 = vmul.f32 %v3389, 1.442695
        %v3459 = vpow.pop %v3458
        %v3460 = vmul.f32 %v3390, 1.442695
        %v3461 = vpow.pop %v3460
        %v3462 = vmul.f32 %v3391, 1.442695
        %v3463 = vpow.pop %v3462
        %v3464 = vmul.f32 %v3392, 1.442695
        %v3465 = vpow.pop %v3464
        %v3466 = vmul.f32 %v3393, 1.442695
        %v3467 = vpow.pop %v3466
        %v3468 = vmul.f32 %v3394, 1.442695
        %v3469 = vpow.pop %v3468
        %v3470 = vmul.f32 %v3395, 1.442695
        %v3471 = vpow.pop %v3470
        %v3472 = vmul.f32 %v3396, 1.442695
        %v3473 = vpow.pop %v3472
        %v3474 = vmul.f32 %v3397, 1.442695
        %v3475 = vpow.pop %v3474
        %v3476 = vmul.f32 %v3398, 1.442695
        %v3477 = vpow.pop %v3476
        %v3478 = vmul.f32 %v3399, 1.442695
        %v3479 = vpow.pop %v3478
        %v3480 = vmul.f32 %v3400, 1.442695
        %v3481 = vpow.pop %v3480
        %v3482 = vmul.f32 %v3401, 1.442695
        %v3483 = vpow.pop %v3482
        %v3484 = vmul.f32 %v3402, 1.442695
        %v3485 = vpow.pop %v3484
        %v3486 = vmul.f32 %v3403, 1.442695
        %v3487 = vpow.pop %v3486
        %v3488 = vmul.f32 %v3404, 1.442695
        %v3489 = vpow.pop %v3488
        %v3490 = vmul.f32 %v3405, 1.442695
        %v3491 = vpow.pop %v3490
        %v3492 = vmul.f32 %v3406, 1.442695
        %v3493 = vpow.pop %v3492
        %v3494 = vmul.f32 %v3407, 1.442695
        %v3495 = vpow.pop %v3494
        %v3496 = vmul.f32 %v3408, 1.442695
        %v3497 = vpow.pop %v3496
        %v3498 = vmul.f32 %v3409, 1.442695
        %v3499 = vpow.pop %v3498
        %v3500 = vmul.f32 %v3410, 1.442695
        %v3501 = vpow.pop %v3500
        %v3502 = vmul.f32 %v3411, 1.442695
        %v3503 = vpow.pop %v3502
        %v3504 = vmul.f32 %v3412, 1.442695
        %v3505 = vpow.pop %v3504
        %v3506 = vmul.f32 %v3413, 1.442695
        %v3507 = vpow.pop %v3506
        %v3508 = vmul.f32 %v3414, 1.442695
        %v3509 = vpow.pop %v3508
        %v3510 = vmul.f32 %v3415, 1.442695
        %v3511 = vpow.pop %v3510
        %v3512 = vmul.f32 %v3416, 1.442695
        %v3513 = vpow.pop %v3512
        %v3514 = vmul.f32 %v3417, 1.442695
        %v3515 = vpow.pop %v3514
        %v3516 = vmul.f32 %v3418, 1.442695
        %v3517 = vpow.pop %v3516
        %v3518 = vmul.f32 %v3419, 1.442695
        %v3519 = vpow.pop %v3518
        %v3520 = vmul.f32 %v3420, 1.442695
        %v3521 = vpow.pop %v3520
        %v3522 = vmul.f32 %v3421, 1.442695
        %v3523 = vpow.pop %v3522
        %v3524 = vmul.f32 %v3422, 1.442695
        %v3525 = vpow.pop %v3524
        %v3526 = vmul.f32 %v3423, 1.442695
        %v3527 = vpow.pop %v3526
        %v3528 = vmul.f32 %v3424, 1.442695
        %v3529 = vpow.pop %v3528
        %v3530 = vmul.f32 %v3425, 1.442695
        %v3531 = vpow.pop %v3530
        %v3532 = vmul.f32 %v3426, 1.442695
        %v3533 = vpow.pop %v3532
        %v3534 = vmul.f32 %v3427, 1.442695
        %v3535 = vpow.pop %v3534
        %v3536 = vmul.f32 %v3428, 1.442695
        %v3537 = vpow.pop %v3536
        %v3538 = vmul.f32 %v3429, 1.442695
        %v3539 = vpow.pop %v3538
        %v3540 = vmul.f32 %v3430, 1.442695
        %v3541 = vpow.pop %v3540
        %v3542 = vmul.f32 %v3431, 1.442695
        %v3543 = vpow.pop %v3542
        %v3544 = vmul.f32 %v3432, 1.442695
        %v3545 = vpow.pop %v3544
        %v3546 = vmul.f32 %v3433, 1.442695
        %v3547 = vpow.pop %v3546
        %v3548 = vmul.f32 %v3434, 1.442695
        %v3549 = vpow.pop %v3548
        %v3550 = vmul.f32 %v3435, 1.442695
        %v3551 = vpow.pop %v3550
        %v3552 = vmul.f32 %v3436, 1.442695
        %v3553 = vpow.pop %v3552
        %v3554 = vmul.f32 %v3437, 1.442695
        %v3555 = vpow.pop %v3554
        %v3556 = vmul.f32 %v3438, 1.442695
        %v3557 = vpow.pop %v3556
        %v3558 = vmul.f32 %v3439, 1.442695
        %v3559 = vpow.pop %v3558
        %v3560 = vmul.f32 %v3440, 1.442695
        %v3561 = vpow.pop %v3560
        %v3562 = vmul.f32 %v3441, 1.442695
        %v3563 = vpow.pop %v3562
        %v3564 = vmul.f32 %v3442, 1.442695
        %v3565 = vpow.pop %v3564
        %v3566 = vmul.f32 %v3443, 1.442695
        %v3567 = vpow.pop %v3566
        %v3568 = vmul.f32 %v3444, 1.442695
        %v3569 = vpow.pop %v3568
        %v3570 = vmul.f32 %v3445, 1.442695
        %v3571 = vpow.pop %v3570
        %v3572 = vmul.f32 %v3446, 1.442695
        %v3573 = vpow.pop %v3572
        %v3574 = vmul.f32 %v3447, 1.442695
        %v3575 = vpow.pop %v3574
        %3576 = vadd.xlane.f32.xlu0 %v3449
        %v3577 = vpop.xlane.xlu0 %3576
        %3578 = vadd.xlane.f32.xlu0 %v3451
        %v3579 = vpop.xlane.xlu0 %3578
        %3580 = vadd.xlane.f32.xlu0 %v3453
        %v3581 = vpop.xlane.xlu0 %3580
        %3582 = vadd.xlane.f32.xlu0 %v3455
        %v3583 = vpop.xlane.xlu0 %3582
        %3584 = vadd.xlane.f32.xlu0 %v3457
        %v3585 = vpop.xlane.xlu0 %3584
        %3586 = vadd.xlane.f32.xlu0 %v3459
        %v3587 = vpop.xlane.xlu0 %3586
        %3588 = vadd.xlane.f32.xlu0 %v3461
        %v3589 = vpop.xlane.xlu0 %3588
        %3590 = vadd.xlane.f32.xlu0 %v3463
        %v3591 = vpop.xlane.xlu0 %3590
        %3592 = vadd.xlane.f32.xlu0 %v3465
        %v3593 = vpop.xlane.xlu0 %3592
        %3594 = vadd.xlane.f32.xlu0 %v3467
        %v3595 = vpop.xlane.xlu0 %3594
        %3596 = vadd.xlane.f32.xlu0 %v3469
        %v3597 = vpop.xlane.xlu0 %3596
        %3598 = vadd.xlane.f32.xlu0 %v3471
        %v3599 = vpop.xlane.xlu0 %3598
        %3600 = vadd.xlane.f32.xlu0 %v3473
        %v3601 = vpop.xlane.xlu0 %3600
        %3602 = vadd.xlane.f32.xlu0 %v3475
        %v3603 = vpop.xlane.xlu0 %3602
        %3604 = vadd.xlane.f32.xlu0 %v3477
        %v3605 = vpop.xlane.xlu0 %3604
        %3606 = vadd.xlane.f32.xlu0 %v3479
        %v3607 = vpop.xlane.xlu0 %3606
        %3608 = vadd.xlane.f32.xlu0 %v3481
        %v3609 = vpop.xlane.xlu0 %3608
        %3610 = vadd.xlane.f32.xlu0 %v3483
        %v3611 = vpop.xlane.xlu0 %3610
        %3612 = vadd.xlane.f32.xlu0 %v3485
        %v3613 = vpop.xlane.xlu0 %3612
        %3614 = vadd.xlane.f32.xlu0 %v3487
        %v3615 = vpop.xlane.xlu0 %3614
        %3616 = vadd.xlane.f32.xlu0 %v3489
        %v3617 = vpop.xlane.xlu0 %3616
        %3618 = vadd.xlane.f32.xlu0 %v3491
        %v3619 = vpop.xlane.xlu0 %3618
        %3620 = vadd.xlane.f32.xlu0 %v3493
        %v3621 = vpop.xlane.xlu0 %3620
        %3622 = vadd.xlane.f32.xlu0 %v3495
        %v3623 = vpop.xlane.xlu0 %3622
        %3624 = vadd.xlane.f32.xlu0 %v3497
        %v3625 = vpop.xlane.xlu0 %3624
        %3626 = vadd.xlane.f32.xlu0 %v3499
        %v3627 = vpop.xlane.xlu0 %3626
        %3628 = vadd.xlane.f32.xlu0 %v3501
        %v3629 = vpop.xlane.xlu0 %3628
        %3630 = vadd.xlane.f32.xlu0 %v3503
        %v3631 = vpop.xlane.xlu0 %3630
        %3632 = vadd.xlane.f32.xlu0 %v3505
        %v3633 = vpop.xlane.xlu0 %3632
        %3634 = vadd.xlane.f32.xlu0 %v3507
        %v3635 = vpop.xlane.xlu0 %3634
        %3636 = vadd.xlane.f32.xlu0 %v3509
        %v3637 = vpop.xlane.xlu0 %3636
        %3638 = vadd.xlane.f32.xlu0 %v3511
        %v3639 = vpop.xlane.xlu0 %3638
        %3640 = vadd.xlane.f32.xlu0 %v3513
        %v3641 = vpop.xlane.xlu0 %3640
        %3642 = vadd.xlane.f32.xlu0 %v3515
        %v3643 = vpop.xlane.xlu0 %3642
        %3644 = vadd.xlane.f32.xlu0 %v3517
        %v3645 = vpop.xlane.xlu0 %3644
        %3646 = vadd.xlane.f32.xlu0 %v3519
        %v3647 = vpop.xlane.xlu0 %3646
        %3648 = vadd.xlane.f32.xlu0 %v3521
        %v3649 = vpop.xlane.xlu0 %3648
        %3650 = vadd.xlane.f32.xlu0 %v3523
        %v3651 = vpop.xlane.xlu0 %3650
        %3652 = vadd.xlane.f32.xlu0 %v3525
        %v3653 = vpop.xlane.xlu0 %3652
        %3654 = vadd.xlane.f32.xlu0 %v3527
        %v3655 = vpop.xlane.xlu0 %3654
        %3656 = vadd.xlane.f32.xlu0 %v3529
        %v3657 = vpop.xlane.xlu0 %3656
        %3658 = vadd.xlane.f32.xlu0 %v3531
        %v3659 = vpop.xlane.xlu0 %3658
        %3660 = vadd.xlane.f32.xlu0 %v3533
        %v3661 = vpop.xlane.xlu0 %3660
        %3662 = vadd.xlane.f32.xlu0 %v3535
        %v3663 = vpop.xlane.xlu0 %3662
        %3664 = vadd.xlane.f32.xlu0 %v3537
        %v3665 = vpop.xlane.xlu0 %3664
        %3666 = vadd.xlane.f32.xlu0 %v3539
        %v3667 = vpop.xlane.xlu0 %3666
        %3668 = vadd.xlane.f32.xlu0 %v3541
        %v3669 = vpop.xlane.xlu0 %3668
        %3670 = vadd.xlane.f32.xlu0 %v3543
        %v3671 = vpop.xlane.xlu0 %3670
        %3672 = vadd.xlane.f32.xlu0 %v3545
        %v3673 = vpop.xlane.xlu0 %3672
        %3674 = vadd.xlane.f32.xlu0 %v3547
        %v3675 = vpop.xlane.xlu0 %3674
        %3676 = vadd.xlane.f32.xlu0 %v3549
        %v3677 = vpop.xlane.xlu0 %3676
        %3678 = vadd.xlane.f32.xlu0 %v3551
        %v3679 = vpop.xlane.xlu0 %3678
        %3680 = vadd.xlane.f32.xlu0 %v3553
        %v3681 = vpop.xlane.xlu0 %3680
        %3682 = vadd.xlane.f32.xlu0 %v3555
        %v3683 = vpop.xlane.xlu0 %3682
        %3684 = vadd.xlane.f32.xlu0 %v3557
        %v3685 = vpop.xlane.xlu0 %3684
        %3686 = vadd.xlane.f32.xlu0 %v3559
        %v3687 = vpop.xlane.xlu0 %3686
        %3688 = vadd.xlane.f32.xlu0 %v3561
        %v3689 = vpop.xlane.xlu0 %3688
        %3690 = vadd.xlane.f32.xlu0 %v3563
        %v3691 = vpop.xlane.xlu0 %3690
        %3692 = vadd.xlane.f32.xlu0 %v3565
        %v3693 = vpop.xlane.xlu0 %3692
        %3694 = vadd.xlane.f32.xlu0 %v3567
        %v3695 = vpop.xlane.xlu0 %3694
        %3696 = vadd.xlane.f32.xlu0 %v3569
        %v3697 = vpop.xlane.xlu0 %3696
        %3698 = vadd.xlane.f32.xlu0 %v3571
        %v3699 = vpop.xlane.xlu0 %3698
        %3700 = vadd.xlane.f32.xlu0 %v3573
        %v3701 = vpop.xlane.xlu0 %3700
        %3702 = vadd.xlane.f32.xlu0 %v3575
        %v3703 = vpop.xlane.xlu0 %3702
        %v3704 = vrcp.pop %v3577
        %v3705 = vrcp.pop %v3579
        %v3706 = vrcp.pop %v3581
        %v3707 = vrcp.pop %v3583
        %v3708 = vrcp.pop %v3585
        %v3709 = vrcp.pop %v3587
        %v3710 = vrcp.pop %v3589
        %v3711 = vrcp.pop %v3591
        %v3712 = vrcp.pop %v3593
        %v3713 = vrcp.pop %v3595
        %v3714 = vrcp.pop %v3597
        %v3715 = vrcp.pop %v3599
        %v3716 = vrcp.pop %v3601
        %v3717 = vrcp.pop %v3603
        %v3718 = vrcp.pop %v3605
        %v3719 = vrcp.pop %v3607
        %v3720 = vrcp.pop %v3609
        %v3721 = vrcp.pop %v3611
        %v3722 = vrcp.pop %v3613
        %v3723 = vrcp.pop %v3615
        %v3724 = vrcp.pop %v3617
        %v3725 = vrcp.pop %v3619
        %v3726 = vrcp.pop %v3621
        %v3727 = vrcp.pop %v3623
        %v3728 = vrcp.pop %v3625
        %v3729 = vrcp.pop %v3627
        %v3730 = vrcp.pop %v3629
        %v3731 = vrcp.pop %v3631
        %v3732 = vrcp.pop %v3633
        %v3733 = vrcp.pop %v3635
        %v3734 = vrcp.pop %v3637
        %v3735 = vrcp.pop %v3639
        %v3736 = vrcp.pop %v3641
        %v3737 = vrcp.pop %v3643
        %v3738 = vrcp.pop %v3645
        %v3739 = vrcp.pop %v3647
        %v3740 = vrcp.pop %v3649
        %v3741 = vrcp.pop %v3651
        %v3742 = vrcp.pop %v3653
        %v3743 = vrcp.pop %v3655
        %v3744 = vrcp.pop %v3657
        %v3745 = vrcp.pop %v3659
        %v3746 = vrcp.pop %v3661
        %v3747 = vrcp.pop %v3663
        %v3748 = vrcp.pop %v3665
        %v3749 = vrcp.pop %v3667
        %v3750 = vrcp.pop %v3669
        %v3751 = vrcp.pop %v3671
        %v3752 = vrcp.pop %v3673
        %v3753 = vrcp.pop %v3675
        %v3754 = vrcp.pop %v3677
        %v3755 = vrcp.pop %v3679
        %v3756 = vrcp.pop %v3681
        %v3757 = vrcp.pop %v3683
        %v3758 = vrcp.pop %v3685
        %v3759 = vrcp.pop %v3687
        %v3760 = vrcp.pop %v3689
        %v3761 = vrcp.pop %v3691
        %v3762 = vrcp.pop %v3693
        %v3763 = vrcp.pop %v3695
        %v3764 = vrcp.pop %v3697
        %v3765 = vrcp.pop %v3699
        %v3766 = vrcp.pop %v3701
        %v3767 = vrcp.pop %v3703
        %v3768 = vmul.f32 %v3449, %v3704
        %v3769 = vmul.f32 %v3451, %v3705
        %v3770 = vmul.f32 %v3453, %v3706
        %v3771 = vmul.f32 %v3455, %v3707
        %v3772 = vmul.f32 %v3457, %v3708
        %v3773 = vmul.f32 %v3459, %v3709
        %v3774 = vmul.f32 %v3461, %v3710
        %v3775 = vmul.f32 %v3463, %v3711
        %v3776 = vmul.f32 %v3465, %v3712
        %v3777 = vmul.f32 %v3467, %v3713
        %v3778 = vmul.f32 %v3469, %v3714
        %v3779 = vmul.f32 %v3471, %v3715
        %v3780 = vmul.f32 %v3473, %v3716
        %v3781 = vmul.f32 %v3475, %v3717
        %v3782 = vmul.f32 %v3477, %v3718
        %v3783 = vmul.f32 %v3479, %v3719
        %v3784 = vmul.f32 %v3481, %v3720
        %v3785 = vmul.f32 %v3483, %v3721
        %v3786 = vmul.f32 %v3485, %v3722
        %v3787 = vmul.f32 %v3487, %v3723
        %v3788 = vmul.f32 %v3489, %v3724
        %v3789 = vmul.f32 %v3491, %v3725
        %v3790 = vmul.f32 %v3493, %v3726
        %v3791 = vmul.f32 %v3495, %v3727
        %v3792 = vmul.f32 %v3497, %v3728
        %v3793 = vmul.f32 %v3499, %v3729
        %v3794 = vmul.f32 %v3501, %v3730
        %v3795 = vmul.f32 %v3503, %v3731
        %v3796 = vmul.f32 %v3505, %v3732
        %v3797 = vmul.f32 %v3507, %v3733
        %v3798 = vmul.f32 %v3509, %v3734
        %v3799 = vmul.f32 %v3511, %v3735
        %v3800 = vmul.f32 %v3513, %v3736
        %v3801 = vmul.f32 %v3515, %v3737
        %v3802 = vmul.f32 %v3517, %v3738
        %v3803 = vmul.f32 %v3519, %v3739
        %v3804 = vmul.f32 %v3521, %v3740
        %v3805 = vmul.f32 %v3523, %v3741
        %v3806 = vmul.f32 %v3525, %v3742
        %v3807 = vmul.f32 %v3527, %v3743
        %v3808 = vmul.f32 %v3529, %v3744
        %v3809 = vmul.f32 %v3531, %v3745
        %v3810 = vmul.f32 %v3533, %v3746
        %v3811 = vmul.f32 %v3535, %v3747
        %v3812 = vmul.f32 %v3537, %v3748
        %v3813 = vmul.f32 %v3539, %v3749
        %v3814 = vmul.f32 %v3541, %v3750
        %v3815 = vmul.f32 %v3543, %v3751
        %v3816 = vmul.f32 %v3545, %v3752
        %v3817 = vmul.f32 %v3547, %v3753
        %v3818 = vmul.f32 %v3549, %v3754
        %v3819 = vmul.f32 %v3551, %v3755
        %v3820 = vmul.f32 %v3553, %v3756
        %v3821 = vmul.f32 %v3555, %v3757
        %v3822 = vmul.f32 %v3557, %v3758
        %v3823 = vmul.f32 %v3559, %v3759
        %v3824 = vmul.f32 %v3561, %v3760
        %v3825 = vmul.f32 %v3563, %v3761
        %v3826 = vmul.f32 %v3565, %v3762
        %v3827 = vmul.f32 %v3567, %v3763
        %v3828 = vmul.f32 %v3569, %v3764
        %v3829 = vmul.f32 %v3571, %v3765
        %v3830 = vmul.f32 %v3573, %v3766
        %v3831 = vmul.f32 %v3575, %v3767
        %v3832 = vpack.c.bf16 %v3769, %v3768
        %v3833 = vpack.c.bf16 %v3771, %v3770
        %v3834 = vpack.c.bf16 %v3773, %v3772
        %v3835 = vpack.c.bf16 %v3775, %v3774
        %v3836 = vpack.c.bf16 %v3777, %v3776
        %v3837 = vpack.c.bf16 %v3779, %v3778
        %v3838 = vpack.c.bf16 %v3781, %v3780
        %v3839 = vpack.c.bf16 %v3783, %v3782
        %v3840 = vpack.c.bf16 %v3785, %v3784
        %v3841 = vpack.c.bf16 %v3787, %v3786
        %v3842 = vpack.c.bf16 %v3789, %v3788
        %v3843 = vpack.c.bf16 %v3791, %v3790
        %v3844 = vpack.c.bf16 %v3793, %v3792
        %v3845 = vpack.c.bf16 %v3795, %v3794
        %v3846 = vpack.c.bf16 %v3797, %v3796
        %v3847 = vpack.c.bf16 %v3799, %v3798
        %v3848 = vpack.c.bf16 %v3801, %v3800
        %v3849 = vpack.c.bf16 %v3803, %v3802
        %v3850 = vpack.c.bf16 %v3805, %v3804
        %v3851 = vpack.c.bf16 %v3807, %v3806
        %v3852 = vpack.c.bf16 %v3809, %v3808
        %v3853 = vpack.c.bf16 %v3811, %v3810
        %v3854 = vpack.c.bf16 %v3813, %v3812
        %v3855 = vpack.c.bf16 %v3815, %v3814
        %v3856 = vpack.c.bf16 %v3817, %v3816
        %v3857 = vpack.c.bf16 %v3819, %v3818
        %v3858 = vpack.c.bf16 %v3821, %v3820
        %v3859 = vpack.c.bf16 %v3823, %v3822
        %v3860 = vpack.c.bf16 %v3825, %v3824
        %v3861 = vpack.c.bf16 %v3827, %v3826
        %v3862 = vpack.c.bf16 %v3829, %v3828
        %v3863 = vpack.c.bf16 %v3831, %v3830
        %3864 = vmatprep.subr.bf16.mxu0 0
        %3865 = vmatpush1.bf16.xpose.msra.mxu0 %v3832
        %3866 = vmatprep.subr.bf16.mxu0 0
        %3867 = vmatpush1.bf16.xpose.msra.mxu0 %v3833
        %3868 = vmatprep.subr.bf16.mxu0 0
        %3869 = vmatpush1.bf16.xpose.msra.mxu0 %v3834
        %3870 = vmatprep.subr.bf16.mxu0 0
        %3871 = vmatpush1.bf16.xpose.msra.mxu0 %v3835
        %3872 = vmatprep.subr.bf16.mxu0 0
        %3873 = vmatpush1.bf16.xpose.msra.mxu0 %v3836
        %3874 = vmatprep.subr.bf16.mxu0 0
        %3875 = vmatpush1.bf16.xpose.msra.mxu0 %v3837
        %3876 = vmatprep.subr.bf16.mxu0 0
        %3877 = vmatpush1.bf16.xpose.msra.mxu0 %v3838
        %3878 = vmatprep.subr.bf16.mxu0 0
        %3879 = vmatpush1.bf16.xpose.msra.mxu0 %v3839
        %3880 = vmatprep.subr.bf16.mxu0 0
        %3881 = vmatpush1.bf16.xpose.msra.mxu0 0
        %3882 = vmatprep.subr.bf16.mxu0 0
        %3883 = vmatpush1.bf16.xpose.msra.mxu0 0
        %3884 = vmatprep.subr.bf16.mxu0 0
        %3885 = vmatpush1.bf16.xpose.msra.mxu0 0
        %3886 = vmatprep.subr.bf16.mxu0 0
        %3887 = vmatpush1.bf16.xpose.msra.mxu0 0
        %3888 = vmatprep.subr.bf16.mxu0 0
        %3889 = vmatpush1.bf16.xpose.msra.mxu0 0
        %3890 = vmatprep.subr.bf16.mxu0 0
        %3891 = vmatpush1.bf16.xpose.msra.mxu0 0
        %3892 = vmatprep.subr.bf16.mxu0 0
        %3893 = vmatpush1.bf16.xpose.msra.mxu0 0
        %3894 = vmatprep.subr.bf16.mxu0 0
        %3895 = vmatpush1.bf16.xpose.msra.mxu0 0
        %3896 = vmatprep.mubr.bf16.mxu0 0
        %3897 = vmatmul.mubr.bf16.gmra.mrb[0].mxu0 %v1240
        %v3898 = vpop.f32.mrb[0].mxu0
        %v3899 = vadd.f32 0.0, %v3898
        %v3900 = vpop.f32.mrb[0].mxu0
        %v3901 = vpop.f32.mrb[0].mxu0
        %v3902 = vadd.f32 0.0, %v3901
        %v3903 = vpop.f32.mrb[0].mxu0
        %3904 = vdwg.mxu0
        %3905 = vmatprep.subr.bf16.mxu0 0
        %3906 = vmatpush1.bf16.xpose.msra.mxu0 %v3840
        %3907 = vmatprep.subr.bf16.mxu0 0
        %3908 = vmatpush1.bf16.xpose.msra.mxu0 %v3841
        %3909 = vmatprep.subr.bf16.mxu0 0
        %3910 = vmatpush1.bf16.xpose.msra.mxu0 %v3842
        %3911 = vmatprep.subr.bf16.mxu0 0
        %3912 = vmatpush1.bf16.xpose.msra.mxu0 %v3843
        %3913 = vmatprep.subr.bf16.mxu0 0
        %3914 = vmatpush1.bf16.xpose.msra.mxu0 %v3844
        %3915 = vmatprep.subr.bf16.mxu0 0
        %3916 = vmatpush1.bf16.xpose.msra.mxu0 %v3845
        %3917 = vmatprep.subr.bf16.mxu0 0
        %3918 = vmatpush1.bf16.xpose.msra.mxu0 %v3846
        %3919 = vmatprep.subr.bf16.mxu0 0
        %3920 = vmatpush1.bf16.xpose.msra.mxu0 %v3847
        %3921 = vmatprep.subr.bf16.mxu0 0
        %3922 = vmatpush1.bf16.xpose.msra.mxu0 0
        %3923 = vmatprep.subr.bf16.mxu0 0
        %3924 = vmatpush1.bf16.xpose.msra.mxu0 0
        %3925 = vmatprep.subr.bf16.mxu0 0
        %3926 = vmatpush1.bf16.xpose.msra.mxu0 0
        %3927 = vmatprep.subr.bf16.mxu0 0
        %3928 = vmatpush1.bf16.xpose.msra.mxu0 0
        %3929 = vmatprep.subr.bf16.mxu0 0
        %3930 = vmatpush1.bf16.xpose.msra.mxu0 0
        %3931 = vmatprep.subr.bf16.mxu0 0
        %3932 = vmatpush1.bf16.xpose.msra.mxu0 0
        %3933 = vmatprep.subr.bf16.mxu0 0
        %3934 = vmatpush1.bf16.xpose.msra.mxu0 0
        %3935 = vmatprep.subr.bf16.mxu0 0
        %3936 = vmatpush1.bf16.xpose.msra.mxu0 0
        %3937 = vmatprep.mubr.bf16.mxu0 0
        %3938 = vmatmul.mubr.bf16.gmra.mrb[0].mxu0 %v1244
        %v3939 = vpop.f32.mrb[0].mxu0
        %v3940 = vadd.f32 0.0, %v3939
        %v3941 = vpop.f32.mrb[0].mxu0
        %v3942 = vpop.f32.mrb[0].mxu0
        %v3943 = vadd.f32 0.0, %v3942
        %v3944 = vpop.f32.mrb[0].mxu0
        %3945 = vdwg.mxu0
        %3946 = vmatprep.subr.bf16.mxu0 0
        %3947 = vmatpush1.bf16.xpose.msra.mxu0 %v3848
        %3948 = vmatprep.subr.bf16.mxu0 0
        %3949 = vmatpush1.bf16.xpose.msra.mxu0 %v3849
        %3950 = vmatprep.subr.bf16.mxu0 0
        %3951 = vmatpush1.bf16.xpose.msra.mxu0 %v3850
        %3952 = vmatprep.subr.bf16.mxu0 0
        %3953 = vmatpush1.bf16.xpose.msra.mxu0 %v3851
        %3954 = vmatprep.subr.bf16.mxu0 0
        %3955 = vmatpush1.bf16.xpose.msra.mxu0 %v3852
        %3956 = vmatprep.subr.bf16.mxu0 0
        %3957 = vmatpush1.bf16.xpose.msra.mxu0 %v3853
        %3958 = vmatprep.subr.bf16.mxu0 0
        %3959 = vmatpush1.bf16.xpose.msra.mxu0 %v3854
        %3960 = vmatprep.subr.bf16.mxu0 0
        %3961 = vmatpush1.bf16.xpose.msra.mxu0 %v3855
        %3962 = vmatprep.subr.bf16.mxu0 0
        %3963 = vmatpush1.bf16.xpose.msra.mxu0 0
        %3964 = vmatprep.subr.bf16.mxu0 0
        %3965 = vmatpush1.bf16.xpose.msra.mxu0 0
        %3966 = vmatprep.subr.bf16.mxu0 0
        %3967 = vmatpush1.bf16.xpose.msra.mxu0 0
        %3968 = vmatprep.subr.bf16.mxu0 0
        %3969 = vmatpush1.bf16.xpose.msra.mxu0 0
        %3970 = vmatprep.subr.bf16.mxu0 0
        %3971 = vmatpush1.bf16.xpose.msra.mxu0 0
        %3972 = vmatprep.subr.bf16.mxu0 0
        %3973 = vmatpush1.bf16.xpose.msra.mxu0 0
        %3974 = vmatprep.subr.bf16.mxu0 0
        %3975 = vmatpush1.bf16.xpose.msra.mxu0 0
        %3976 = vmatprep.subr.bf16.mxu0 0
        %3977 = vmatpush1.bf16.xpose.msra.mxu0 0
        %3978 = vmatprep.mubr.bf16.mxu0 0
        %3979 = vmatmul.mubr.bf16.gmra.mrb[0].mxu0 %v1248
        %v3980 = vpop.f32.mrb[0].mxu0
        %v3981 = vadd.f32 0.0, %v3980
        %v3982 = vpop.f32.mrb[0].mxu0
        %v3983 = vpop.f32.mrb[0].mxu0
        %v3984 = vadd.f32 0.0, %v3983
        %v3985 = vpop.f32.mrb[0].mxu0
        %3986 = vdwg.mxu0
        %3987 = vmatprep.subr.bf16.mxu0 0
        %3988 = vmatpush1.bf16.xpose.msra.mxu0 %v3856
        %3989 = vmatprep.subr.bf16.mxu0 0
        %3990 = vmatpush1.bf16.xpose.msra.mxu0 %v3857
        %3991 = vmatprep.subr.bf16.mxu0 0
        %3992 = vmatpush1.bf16.xpose.msra.mxu0 %v3858
        %3993 = vmatprep.subr.bf16.mxu0 0
        %3994 = vmatpush1.bf16.xpose.msra.mxu0 %v3859
        %3995 = vmatprep.subr.bf16.mxu0 0
        %3996 = vmatpush1.bf16.xpose.msra.mxu0 %v3860
        %3997 = vmatprep.subr.bf16.mxu0 0
        %3998 = vmatpush1.bf16.xpose.msra.mxu0 %v3861
        %3999 = vmatprep.subr.bf16.mxu0 0
        %4000 = vmatpush1.bf16.xpose.msra.mxu0 %v3862
        %4001 = vmatprep.subr.bf16.mxu0 0
        %4002 = vmatpush1.bf16.xpose.msra.mxu0 %v3863
        %4003 = vmatprep.subr.bf16.mxu0 0
        %4004 = vmatpush1.bf16.xpose.msra.mxu0 0
        %4005 = vmatprep.subr.bf16.mxu0 0
        %4006 = vmatpush1.bf16.xpose.msra.mxu0 0
        %4007 = vmatprep.subr.bf16.mxu0 0
        %4008 = vmatpush1.bf16.xpose.msra.mxu0 0
        %4009 = vmatprep.subr.bf16.mxu0 0
        %4010 = vmatpush1.bf16.xpose.msra.mxu0 0
        %4011 = vmatprep.subr.bf16.mxu0 0
        %4012 = vmatpush1.bf16.xpose.msra.mxu0 0
        %4013 = vmatprep.subr.bf16.mxu0 0
        %4014 = vmatpush1.bf16.xpose.msra.mxu0 0
        %4015 = vmatprep.subr.bf16.mxu0 0
        %4016 = vmatpush1.bf16.xpose.msra.mxu0 0
        %4017 = vmatprep.subr.bf16.mxu0 0
        %4018 = vmatpush1.bf16.xpose.msra.mxu0 0
        %4019 = vmatprep.mubr.bf16.mxu0 0
        %4020 = vmatmul.mubr.bf16.gmra.mrb[0].mxu0 %v1252
        %v4021 = vpop.f32.mrb[0].mxu0
        %v4022 = vadd.f32 0.0, %v4021
        %v4023 = vpop.f32.mrb[0].mxu0
        %v4024 = vpop.f32.mrb[0].mxu0
        %v4025 = vadd.f32 0.0, %v4024
        %v4026 = vpop.f32.mrb[0].mxu0
        %4027 = vdwg.mxu0
        %v4028 = vpack.c.bf16 %v3902, %v3899
        %v4029 = vpack.c.bf16 %v3943, %v3940
        %v4030 = vpack.c.bf16 %v3984, %v3981
        %v4031 = vpack.c.bf16 %v4025, %v4022
        %4032 = vxpose.xlu0.c.b16.start [1/8] %v1209, 128
        %4033 = vxpose.xlu0.c.b16.cont [2/8] 0, 128
        %4034 = vxpose.xlu0.c.b16.cont [3/8] 0, 128
        %4035 = vxpose.xlu0.c.b16.cont [4/8] 0, 128
        %4036 = vxpose.xlu0.c.b16.cont [5/8] 0, 128
        %4037 = vxpose.xlu0.c.b16.cont [6/8] 0, 128
        %4038 = vxpose.xlu0.c.b16.cont [7/8] 0, 128
        %4039 = vxpose.xlu0.c.b16.end [8/8] 0, 128
        %v4040 = vpop.trf.xlu0
        %v4041 = vpop.trf.xlu0
        %v4042 = vpop.trf.xlu0
        %v4043 = vpop.trf.xlu0
        %v4044 = vpop.trf.xlu0
        %v4045 = vpop.trf.xlu0
        %v4046 = vpop.trf.xlu0
        %v4047 = vpop.trf.xlu0
        %4048 = vxpose.xlu0.c.b16.start [1/8] %v1213, 128
        %4049 = vxpose.xlu0.c.b16.cont [2/8] 0, 128
        %4050 = vxpose.xlu0.c.b16.cont [3/8] 0, 128
        %4051 = vxpose.xlu0.c.b16.cont [4/8] 0, 128
        %4052 = vxpose.xlu0.c.b16.cont [5/8] 0, 128
        %4053 = vxpose.xlu0.c.b16.cont [6/8] 0, 128
        %4054 = vxpose.xlu0.c.b16.cont [7/8] 0, 128
        %4055 = vxpose.xlu0.c.b16.end [8/8] 0, 128
        %v4056 = vpop.trf.xlu0
        %v4057 = vpop.trf.xlu0
        %v4058 = vpop.trf.xlu0
        %v4059 = vpop.trf.xlu0
        %v4060 = vpop.trf.xlu0
        %v4061 = vpop.trf.xlu0
        %v4062 = vpop.trf.xlu0
        %v4063 = vpop.trf.xlu0
        %4064 = vxpose.xlu0.c.b16.start [1/8] %v1217, 128
        %4065 = vxpose.xlu0.c.b16.cont [2/8] 0, 128
        %4066 = vxpose.xlu0.c.b16.cont [3/8] 0, 128
        %4067 = vxpose.xlu0.c.b16.cont [4/8] 0, 128
        %4068 = vxpose.xlu0.c.b16.cont [5/8] 0, 128
        %4069 = vxpose.xlu0.c.b16.cont [6/8] 0, 128
        %4070 = vxpose.xlu0.c.b16.cont [7/8] 0, 128
        %4071 = vxpose.xlu0.c.b16.end [8/8] 0, 128
        %v4072 = vpop.trf.xlu0
        %v4073 = vpop.trf.xlu0
        %v4074 = vpop.trf.xlu0
        %v4075 = vpop.trf.xlu0
        %v4076 = vpop.trf.xlu0
        %v4077 = vpop.trf.xlu0
        %v4078 = vpop.trf.xlu0
        %v4079 = vpop.trf.xlu0
        %4080 = vxpose.xlu0.c.b16.start [1/8] %v1221, 128
        %4081 = vxpose.xlu0.c.b16.cont [2/8] 0, 128
        %4082 = vxpose.xlu0.c.b16.cont [3/8] 0, 128
        %4083 = vxpose.xlu0.c.b16.cont [4/8] 0, 128
        %4084 = vxpose.xlu0.c.b16.cont [5/8] 0, 128
        %4085 = vxpose.xlu0.c.b16.cont [6/8] 0, 128
        %4086 = vxpose.xlu0.c.b16.cont [7/8] 0, 128
        %4087 = vxpose.xlu0.c.b16.end [8/8] 0, 128
        %v4088 = vpop.trf.xlu0
        %v4089 = vpop.trf.xlu0
        %v4090 = vpop.trf.xlu0
        %v4091 = vpop.trf.xlu0
        %v4092 = vpop.trf.xlu0
        %v4093 = vpop.trf.xlu0
        %v4094 = vpop.trf.xlu0
        %v4095 = vpop.trf.xlu0
        %v4097 = vsel %vm1319, %v4040, 0
        %v4100 = vsel %vm1319, %v4041, 0
        %v4103 = vsel %vm1319, %v4042, 0
        %v4106 = vsel %vm1319, %v4043, 0
        %v4109 = vsel %vm1319, %v4044, 0
        %v4112 = vsel %vm1319, %v4045, 0
        %v4115 = vsel %vm1319, %v4046, 0
        %v4118 = vsel %vm1319, %v4047, 0
        %4120 = vmatprep.subr.bf16.mxu0 0
        %4121 = vmatpush1.bf16.msra.mxu0 %v1225
        %4122 = vmatprep.subr.bf16.mxu0 0
        %4123 = vmatpush1.bf16.msra.mxu0 0
        %4124 = vmatprep.subr.bf16.mxu0 0
        %4125 = vmatpush1.bf16.msra.mxu0 0
        %4126 = vmatprep.subr.bf16.mxu0 0
        %4127 = vmatpush1.bf16.msra.mxu0 0
        %4128 = vmatprep.subr.bf16.mxu0 0
        %4129 = vmatpush1.bf16.msra.mxu0 0
        %4130 = vmatprep.subr.bf16.mxu0 0
        %4131 = vmatpush1.bf16.msra.mxu0 0
        %4132 = vmatprep.subr.bf16.mxu0 0
        %4133 = vmatpush1.bf16.msra.mxu0 0
        %4134 = vmatprep.subr.bf16.mxu0 0
        %4135 = vmatpush1.bf16.msra.mxu0 0
        %4136 = vmatprep.subr.bf16.mxu0 0
        %4137 = vmatpush1.bf16.msra.mxu0 0
        %4138 = vmatprep.subr.bf16.mxu0 0
        %4139 = vmatpush1.bf16.msra.mxu0 0
        %4140 = vmatprep.subr.bf16.mxu0 0
        %4141 = vmatpush1.bf16.msra.mxu0 0
        %4142 = vmatprep.subr.bf16.mxu0 0
        %4143 = vmatpush1.bf16.msra.mxu0 0
        %4144 = vmatprep.subr.bf16.mxu0 0
        %4145 = vmatpush1.bf16.msra.mxu0 0
        %4146 = vmatprep.subr.bf16.mxu0 0
        %4147 = vmatpush1.bf16.msra.mxu0 0
        %4148 = vmatprep.subr.bf16.mxu0 0
        %4149 = vmatpush1.bf16.msra.mxu0 0
        %4150 = vmatprep.subr.bf16.mxu0 0
        %4151 = vmatpush1.bf16.msra.mxu0 0
        %4152 = vmatprep.mubr.bf16.mxu0 0
        %4153 = vmatmul.mubr.bf16.gmra.mrb[0].mxu0 %v4097
        %v4154 = vpop.f32.mrb[0].mxu0
        %v4155 = vadd.f32 0.0, %v4154
        %v4156 = vpop.f32.mrb[0].mxu0
        %v4157 = vpop.f32.mrb[0].mxu0
        %v4158 = vadd.f32 0.0, %v4157
        %v4159 = vpop.f32.mrb[0].mxu0
        %4160 = vmatprep.mubr.bf16.mxu0 0
        %4161 = vmatmul.mubr.bf16.gmra.mrb[0].mxu0 %v4100
        %v4162 = vpop.f32.mrb[0].mxu0
        %v4163 = vadd.f32 0.0, %v4162
        %v4164 = vpop.f32.mrb[0].mxu0
        %v4165 = vpop.f32.mrb[0].mxu0
        %v4166 = vadd.f32 0.0, %v4165
        %v4167 = vpop.f32.mrb[0].mxu0
        %4168 = vmatprep.mubr.bf16.mxu0 0
        %4169 = vmatmul.mubr.bf16.gmra.mrb[0].mxu0 %v4103
        %v4170 = vpop.f32.mrb[0].mxu0
        %v4171 = vadd.f32 0.0, %v4170
        %v4172 = vpop.f32.mrb[0].mxu0
        %v4173 = vpop.f32.mrb[0].mxu0
        %v4174 = vadd.f32 0.0, %v4173
        %v4175 = vpop.f32.mrb[0].mxu0
        %4176 = vmatprep.mubr.bf16.mxu0 0
        %4177 = vmatmul.mubr.bf16.gmra.mrb[0].mxu0 %v4106
        %v4178 = vpop.f32.mrb[0].mxu0
        %v4179 = vadd.f32 0.0, %v4178
        %v4180 = vpop.f32.mrb[0].mxu0
        %v4181 = vpop.f32.mrb[0].mxu0
        %v4182 = vadd.f32 0.0, %v4181
        %v4183 = vpop.f32.mrb[0].mxu0
        %4184 = vmatprep.mubr.bf16.mxu0 0
        %4185 = vmatmul.mubr.bf16.gmra.mrb[0].mxu0 %v4109
        %v4186 = vpop.f32.mrb[0].mxu0
        %v4187 = vadd.f32 0.0, %v4186
        %v4188 = vpop.f32.mrb[0].mxu0
        %v4189 = vpop.f32.mrb[0].mxu0
        %v4190 = vadd.f32 0.0, %v4189
        %v4191 = vpop.f32.mrb[0].mxu0
        %4192 = vmatprep.mubr.bf16.mxu0 0
        %4193 = vmatmul.mubr.bf16.gmra.mrb[0].mxu0 %v4112
        %v4194 = vpop.f32.mrb[0].mxu0
        %v4195 = vadd.f32 0.0, %v4194
        %v4196 = vpop.f32.mrb[0].mxu0
        %v4197 = vpop.f32.mrb[0].mxu0
        %v4198 = vadd.f32 0.0, %v4197
        %v4199 = vpop.f32.mrb[0].mxu0
        %4200 = vmatprep.mubr.bf16.mxu0 0
        %4201 = vmatmul.mubr.bf16.gmra.mrb[0].mxu0 %v4115
        %v4202 = vpop.f32.mrb[0].mxu0
        %v4203 = vadd.f32 0.0, %v4202
        %v4204 = vpop.f32.mrb[0].mxu0
        %v4205 = vpop.f32.mrb[0].mxu0
        %v4206 = vadd.f32 0.0, %v4205
        %v4207 = vpop.f32.mrb[0].mxu0
        %4208 = vmatprep.mubr.bf16.mxu0 0
        %4209 = vmatmul.mubr.bf16.gmra.mrb[0].mxu0 %v4118
        %v4210 = vpop.f32.mrb[0].mxu0
        %v4211 = vadd.f32 0.0, %v4210
        %v4212 = vpop.f32.mrb[0].mxu0
        %v4213 = vpop.f32.mrb[0].mxu0
        %v4214 = vadd.f32 0.0, %v4213
        %v4215 = vpop.f32.mrb[0].mxu0
        %4216 = vdwg.mxu0
        %v4218 = vsel %vm1319, %v4056, 0
        %v4221 = vsel %vm1319, %v4057, 0
        %v4224 = vsel %vm1319, %v4058, 0
        %v4227 = vsel %vm1319, %v4059, 0
        %v4230 = vsel %vm1319, %v4060, 0
        %v4233 = vsel %vm1319, %v4061, 0
        %v4236 = vsel %vm1319, %v4062, 0
        %v4239 = vsel %vm1319, %v4063, 0
        %4241 = vmatprep.subr.bf16.mxu0 0
        %4242 = vmatpush1.bf16.msra.mxu0 %v1229
        %4243 = vmatprep.subr.bf16.mxu0 0
        %4244 = vmatpush1.bf16.msra.mxu0 0
        %4245 = vmatprep.subr.bf16.mxu0 0
        %4246 = vmatpush1.bf16.msra.mxu0 0
        %4247 = vmatprep.subr.bf16.mxu0 0
        %4248 = vmatpush1.bf16.msra.mxu0 0
        %4249 = vmatprep.subr.bf16.mxu0 0
        %4250 = vmatpush1.bf16.msra.mxu0 0
        %4251 = vmatprep.subr.bf16.mxu0 0
        %4252 = vmatpush1.bf16.msra.mxu0 0
        %4253 = vmatprep.subr.bf16.mxu0 0
        %4254 = vmatpush1.bf16.msra.mxu0 0
        %4255 = vmatprep.subr.bf16.mxu0 0
        %4256 = vmatpush1.bf16.msra.mxu0 0
        %4257 = vmatprep.subr.bf16.mxu0 0
        %4258 = vmatpush1.bf16.msra.mxu0 0
        %4259 = vmatprep.subr.bf16.mxu0 0
        %4260 = vmatpush1.bf16.msra.mxu0 0
        %4261 = vmatprep.subr.bf16.mxu0 0
        %4262 = vmatpush1.bf16.msra.mxu0 0
        %4263 = vmatprep.subr.bf16.mxu0 0
        %4264 = vmatpush1.bf16.msra.mxu0 0
        %4265 = vmatprep.subr.bf16.mxu0 0
        %4266 = vmatpush1.bf16.msra.mxu0 0
        %4267 = vmatprep.subr.bf16.mxu0 0
        %4268 = vmatpush1.bf16.msra.mxu0 0
        %4269 = vmatprep.subr.bf16.mxu0 0
        %4270 = vmatpush1.bf16.msra.mxu0 0
        %4271 = vmatprep.subr.bf16.mxu0 0
        %4272 = vmatpush1.bf16.msra.mxu0 0
        %4273 = vmatprep.mubr.bf16.mxu0 0
        %4274 = vmatmul.mubr.bf16.gmra.mrb[0].mxu0 %v4218
        %v4275 = vpop.f32.mrb[0].mxu0
        %v4276 = vadd.f32 0.0, %v4275
        %v4277 = vpop.f32.mrb[0].mxu0
        %v4278 = vpop.f32.mrb[0].mxu0
        %v4279 = vadd.f32 0.0, %v4278
        %v4280 = vpop.f32.mrb[0].mxu0
        %4281 = vmatprep.mubr.bf16.mxu0 0
        %4282 = vmatmul.mubr.bf16.gmra.mrb[0].mxu0 %v4221
        %v4283 = vpop.f32.mrb[0].mxu0
        %v4284 = vadd.f32 0.0, %v4283
        %v4285 = vpop.f32.mrb[0].mxu0
        %v4286 = vpop.f32.mrb[0].mxu0
        %v4287 = vadd.f32 0.0, %v4286
        %v4288 = vpop.f32.mrb[0].mxu0
        %4289 = vmatprep.mubr.bf16.mxu0 0
        %4290 = vmatmul.mubr.bf16.gmra.mrb[0].mxu0 %v4224
        %v4291 = vpop.f32.mrb[0].mxu0
        %v4292 = vadd.f32 0.0, %v4291
        %v4293 = vpop.f32.mrb[0].mxu0
        %v4294 = vpop.f32.mrb[0].mxu0
        %v4295 = vadd.f32 0.0, %v4294
        %v4296 = vpop.f32.mrb[0].mxu0
        %4297 = vmatprep.mubr.bf16.mxu0 0
        %4298 = vmatmul.mubr.bf16.gmra.mrb[0].mxu0 %v4227
        %v4299 = vpop.f32.mrb[0].mxu0
        %v4300 = vadd.f32 0.0, %v4299
        %v4301 = vpop.f32.mrb[0].mxu0
        %v4302 = vpop.f32.mrb[0].mxu0
        %v4303 = vadd.f32 0.0, %v4302
        %v4304 = vpop.f32.mrb[0].mxu0
        %4305 = vmatprep.mubr.bf16.mxu0 0
        %4306 = vmatmul.mubr.bf16.gmra.mrb[0].mxu0 %v4230
        %v4307 = vpop.f32.mrb[0].mxu0
        %v4308 = vadd.f32 0.0, %v4307
        %v4309 = vpop.f32.mrb[0].mxu0
        %v4310 = vpop.f32.mrb[0].mxu0
        %v4311 = vadd.f32 0.0, %v4310
        %v4312 = vpop.f32.mrb[0].mxu0
        %4313 = vmatprep.mubr.bf16.mxu0 0
        %4314 = vmatmul.mubr.bf16.gmra.mrb[0].mxu0 %v4233
        %v4315 = vpop.f32.mrb[0].mxu0
        %v4316 = vadd.f32 0.0, %v4315
        %v4317 = vpop.f32.mrb[0].mxu0
        %v4318 = vpop.f32.mrb[0].mxu0
        %v4319 = vadd.f32 0.0, %v4318
        %v4320 = vpop.f32.mrb[0].mxu0
        %4321 = vmatprep.mubr.bf16.mxu0 0
        %4322 = vmatmul.mubr.bf16.gmra.mrb[0].mxu0 %v4236
        %v4323 = vpop.f32.mrb[0].mxu0
        %v4324 = vadd.f32 0.0, %v4323
        %v4325 = vpop.f32.mrb[0].mxu0
        %v4326 = vpop.f32.mrb[0].mxu0
        %v4327 = vadd.f32 0.0, %v4326
        %v4328 = vpop.f32.mrb[0].mxu0
        %4329 = vmatprep.mubr.bf16.mxu0 0
        %4330 = vmatmul.mubr.bf16.gmra.mrb[0].mxu0 %v4239
        %v4331 = vpop.f32.mrb[0].mxu0
        %v4332 = vadd.f32 0.0, %v4331
        %v4333 = vpop.f32.mrb[0].mxu0
        %v4334 = vpop.f32.mrb[0].mxu0
        %v4335 = vadd.f32 0.0, %v4334
        %v4336 = vpop.f32.mrb[0].mxu0
        %4337 = vdwg.mxu0
        %v4339 = vsel %vm1319, %v4072, 0
        %v4342 = vsel %vm1319, %v4073, 0
        %v4345 = vsel %vm1319, %v4074, 0
        %v4348 = vsel %vm1319, %v4075, 0
        %v4351 = vsel %vm1319, %v4076, 0
        %v4354 = vsel %vm1319, %v4077, 0
        %v4357 = vsel %vm1319, %v4078, 0
        %v4360 = vsel %vm1319, %v4079, 0
        %4362 = vmatprep.subr.bf16.mxu0 0
        %4363 = vmatpush1.bf16.msra.mxu0 %v1233
        %4364 = vmatprep.subr.bf16.mxu0 0
        %4365 = vmatpush1.bf16.msra.mxu0 0
        %4366 = vmatprep.subr.bf16.mxu0 0
        %4367 = vmatpush1.bf16.msra.mxu0 0
        %4368 = vmatprep.subr.bf16.mxu0 0
        %4369 = vmatpush1.bf16.msra.mxu0 0
        %4370 = vmatprep.subr.bf16.mxu0 0
        %4371 = vmatpush1.bf16.msra.mxu0 0
        %4372 = vmatprep.subr.bf16.mxu0 0
        %4373 = vmatpush1.bf16.msra.mxu0 0
        %4374 = vmatprep.subr.bf16.mxu0 0
        %4375 = vmatpush1.bf16.msra.mxu0 0
        %4376 = vmatprep.subr.bf16.mxu0 0
        %4377 = vmatpush1.bf16.msra.mxu0 0
        %4378 = vmatprep.subr.bf16.mxu0 0
        %4379 = vmatpush1.bf16.msra.mxu0 0
        %4380 = vmatprep.subr.bf16.mxu0 0
        %4381 = vmatpush1.bf16.msra.mxu0 0
        %4382 = vmatprep.subr.bf16.mxu0 0
        %4383 = vmatpush1.bf16.msra.mxu0 0
        %4384 = vmatprep.subr.bf16.mxu0 0
        %4385 = vmatpush1.bf16.msra.mxu0 0
        %4386 = vmatprep.subr.bf16.mxu0 0
        %4387 = vmatpush1.bf16.msra.mxu0 0
        %4388 = vmatprep.subr.bf16.mxu0 0
        %4389 = vmatpush1.bf16.msra.mxu0 0
        %4390 = vmatprep.subr.bf16.mxu0 0
        %4391 = vmatpush1.bf16.msra.mxu0 0
        %4392 = vmatprep.subr.bf16.mxu0 0
        %4393 = vmatpush1.bf16.msra.mxu0 0
        %4394 = vmatprep.mubr.bf16.mxu0 0
        %4395 = vmatmul.mubr.bf16.gmra.mrb[0].mxu0 %v4339
        %v4396 = vpop.f32.mrb[0].mxu0
        %v4397 = vadd.f32 0.0, %v4396
        %v4398 = vpop.f32.mrb[0].mxu0
        %v4399 = vpop.f32.mrb[0].mxu0
        %v4400 = vadd.f32 0.0, %v4399
        %v4401 = vpop.f32.mrb[0].mxu0
        %4402 = vmatprep.mubr.bf16.mxu0 0
        %4403 = vmatmul.mubr.bf16.gmra.mrb[0].mxu0 %v4342
        %v4404 = vpop.f32.mrb[0].mxu0
        %v4405 = vadd.f32 0.0, %v4404
        %v4406 = vpop.f32.mrb[0].mxu0
        %v4407 = vpop.f32.mrb[0].mxu0
        %v4408 = vadd.f32 0.0, %v4407
        %v4409 = vpop.f32.mrb[0].mxu0
        %4410 = vmatprep.mubr.bf16.mxu0 0
        %4411 = vmatmul.mubr.bf16.gmra.mrb[0].mxu0 %v4345
        %v4412 = vpop.f32.mrb[0].mxu0
        %v4413 = vadd.f32 0.0, %v4412
        %v4414 = vpop.f32.mrb[0].mxu0
        %v4415 = vpop.f32.mrb[0].mxu0
        %v4416 = vadd.f32 0.0, %v4415
        %v4417 = vpop.f32.mrb[0].mxu0
        %4418 = vmatprep.mubr.bf16.mxu0 0
        %4419 = vmatmul.mubr.bf16.gmra.mrb[0].mxu0 %v4348
        %v4420 = vpop.f32.mrb[0].mxu0
        %v4421 = vadd.f32 0.0, %v4420
        %v4422 = vpop.f32.mrb[0].mxu0
        %v4423 = vpop.f32.mrb[0].mxu0
        %v4424 = vadd.f32 0.0, %v4423
        %v4425 = vpop.f32.mrb[0].mxu0
        %4426 = vmatprep.mubr.bf16.mxu0 0
        %4427 = vmatmul.mubr.bf16.gmra.mrb[0].mxu0 %v4351
        %v4428 = vpop.f32.mrb[0].mxu0
        %v4429 = vadd.f32 0.0, %v4428
        %v4430 = vpop.f32.mrb[0].mxu0
        %v4431 = vpop.f32.mrb[0].mxu0
        %v4432 = vadd.f32 0.0, %v4431
        %v4433 = vpop.f32.mrb[0].mxu0
        %4434 = vmatprep.mubr.bf16.mxu0 0
        %4435 = vmatmul.mubr.bf16.gmra.mrb[0].mxu0 %v4354
        %v4436 = vpop.f32.mrb[0].mxu0
        %v4437 = vadd.f32 0.0, %v4436
        %v4438 = vpop.f32.mrb[0].mxu0
        %v4439 = vpop.f32.mrb[0].mxu0
        %v4440 = vadd.f32 0.0, %v4439
        %v4441 = vpop.f32.mrb[0].mxu0
        %4442 = vmatprep.mubr.bf16.mxu0 0
        %4443 = vmatmul.mubr.bf16.gmra.mrb[0].mxu0 %v4357
        %v4444 = vpop.f32.mrb[0].mxu0
        %v4445 = vadd.f32 0.0, %v4444
        %v4446 = vpop.f32.mrb[0].mxu0
        %v4447 = vpop.f32.mrb[0].mxu0
        %v4448 = vadd.f32 0.0, %v4447
        %v4449 = vpop.f32.mrb[0].mxu0
        %4450 = vmatprep.mubr.bf16.mxu0 0
        %4451 = vmatmul.mubr.bf16.gmra.mrb[0].mxu0 %v4360
        %v4452 = vpop.f32.mrb[0].mxu0
        %v4453 = vadd.f32 0.0, %v4452
        %v4454 = vpop.f32.mrb[0].mxu0
        %v4455 = vpop.f32.mrb[0].mxu0
        %v4456 = vadd.f32 0.0, %v4455
        %v4457 = vpop.f32.mrb[0].mxu0
        %4458 = vdwg.mxu0
        %v4460 = vsel %vm1319, %v4088, 0
        %v4463 = vsel %vm1319, %v4089, 0
        %v4466 = vsel %vm1319, %v4090, 0
        %v4469 = vsel %vm1319, %v4091, 0
        %v4472 = vsel %vm1319, %v4092, 0
        %v4475 = vsel %vm1319, %v4093, 0
        %v4478 = vsel %vm1319, %v4094, 0
        %v4481 = vsel %vm1319, %v4095, 0
        %4483 = vmatprep.subr.bf16.mxu0 0
        %4484 = vmatpush1.bf16.msra.mxu0 %v1237
        %4485 = vmatprep.subr.bf16.mxu0 0
        %4486 = vmatpush1.bf16.msra.mxu0 0
        %4487 = vmatprep.subr.bf16.mxu0 0
        %4488 = vmatpush1.bf16.msra.mxu0 0
        %4489 = vmatprep.subr.bf16.mxu0 0
        %4490 = vmatpush1.bf16.msra.mxu0 0
        %4491 = vmatprep.subr.bf16.mxu0 0
        %4492 = vmatpush1.bf16.msra.mxu0 0
        %4493 = vmatprep.subr.bf16.mxu0 0
        %4494 = vmatpush1.bf16.msra.mxu0 0
        %4495 = vmatprep.subr.bf16.mxu0 0
        %4496 = vmatpush1.bf16.msra.mxu0 0
        %4497 = vmatprep.subr.bf16.mxu0 0
        %4498 = vmatpush1.bf16.msra.mxu0 0
        %4499 = vmatprep.subr.bf16.mxu0 0
        %4500 = vmatpush1.bf16.msra.mxu0 0
        %4501 = vmatprep.subr.bf16.mxu0 0
        %4502 = vmatpush1.bf16.msra.mxu0 0
        %4503 = vmatprep.subr.bf16.mxu0 0
        %4504 = vmatpush1.bf16.msra.mxu0 0
        %4505 = vmatprep.subr.bf16.mxu0 0
        %4506 = vmatpush1.bf16.msra.mxu0 0
        %4507 = vmatprep.subr.bf16.mxu0 0
        %4508 = vmatpush1.bf16.msra.mxu0 0
        %4509 = vmatprep.subr.bf16.mxu0 0
        %4510 = vmatpush1.bf16.msra.mxu0 0
        %4511 = vmatprep.subr.bf16.mxu0 0
        %4512 = vmatpush1.bf16.msra.mxu0 0
        %4513 = vmatprep.subr.bf16.mxu0 0
        %4514 = vmatpush1.bf16.msra.mxu0 0
        %4515 = vmatprep.mubr.bf16.mxu0 0
        %4516 = vmatmul.mubr.bf16.gmra.mrb[0].mxu0 %v4460
        %v4517 = vpop.f32.mrb[0].mxu0
        %v4518 = vadd.f32 0.0, %v4517
        %v4519 = vpop.f32.mrb[0].mxu0
        %v4520 = vpop.f32.mrb[0].mxu0
        %v4521 = vadd.f32 0.0, %v4520
        %v4522 = vpop.f32.mrb[0].mxu0
        %4523 = vmatprep.mubr.bf16.mxu0 0
        %4524 = vmatmul.mubr.bf16.gmra.mrb[0].mxu0 %v4463
        %v4525 = vpop.f32.mrb[0].mxu0
        %v4526 = vadd.f32 0.0, %v4525
        %v4527 = vpop.f32.mrb[0].mxu0
        %v4528 = vpop.f32.mrb[0].mxu0
        %v4529 = vadd.f32 0.0, %v4528
        %v4530 = vpop.f32.mrb[0].mxu0
        %4531 = vmatprep.mubr.bf16.mxu0 0
        %4532 = vmatmul.mubr.bf16.gmra.mrb[0].mxu0 %v4466
        %v4533 = vpop.f32.mrb[0].mxu0
        %v4534 = vadd.f32 0.0, %v4533
        %v4535 = vpop.f32.mrb[0].mxu0
        %v4536 = vpop.f32.mrb[0].mxu0
        %v4537 = vadd.f32 0.0, %v4536
        %v4538 = vpop.f32.mrb[0].mxu0
        %4539 = vmatprep.mubr.bf16.mxu0 0
        %4540 = vmatmul.mubr.bf16.gmra.mrb[0].mxu0 %v4469
        %v4541 = vpop.f32.mrb[0].mxu0
        %v4542 = vadd.f32 0.0, %v4541
        %v4543 = vpop.f32.mrb[0].mxu0
        %v4544 = vpop.f32.mrb[0].mxu0
        %v4545 = vadd.f32 0.0, %v4544
        %v4546 = vpop.f32.mrb[0].mxu0
        %4547 = vmatprep.mubr.bf16.mxu0 0
        %4548 = vmatmul.mubr.bf16.gmra.mrb[0].mxu0 %v4472
        %v4549 = vpop.f32.mrb[0].mxu0
        %v4550 = vadd.f32 0.0, %v4549
        %v4551 = vpop.f32.mrb[0].mxu0
        %v4552 = vpop.f32.mrb[0].mxu0
        %v4553 = vadd.f32 0.0, %v4552
        %v4554 = vpop.f32.mrb[0].mxu0
        %4555 = vmatprep.mubr.bf16.mxu0 0
        %4556 = vmatmul.mubr.bf16.gmra.mrb[0].mxu0 %v4475
        %v4557 = vpop.f32.mrb[0].mxu0
        %v4558 = vadd.f32 0.0, %v4557
        %v4559 = vpop.f32.mrb[0].mxu0
        %v4560 = vpop.f32.mrb[0].mxu0
        %v4561 = vadd.f32 0.0, %v4560
        %v4562 = vpop.f32.mrb[0].mxu0
        %4563 = vmatprep.mubr.bf16.mxu0 0
        %4564 = vmatmul.mubr.bf16.gmra.mrb[0].mxu0 %v4478
        %v4565 = vpop.f32.mrb[0].mxu0
        %v4566 = vadd.f32 0.0, %v4565
        %v4567 = vpop.f32.mrb[0].mxu0
        %v4568 = vpop.f32.mrb[0].mxu0
        %v4569 = vadd.f32 0.0, %v4568
        %v4570 = vpop.f32.mrb[0].mxu0
        %4571 = vmatprep.mubr.bf16.mxu0 0
        %4572 = vmatmul.mubr.bf16.gmra.mrb[0].mxu0 %v4481
        %v4573 = vpop.f32.mrb[0].mxu0
        %v4574 = vadd.f32 0.0, %v4573
        %v4575 = vpop.f32.mrb[0].mxu0
        %v4576 = vpop.f32.mrb[0].mxu0
        %v4577 = vadd.f32 0.0, %v4576
        %v4578 = vpop.f32.mrb[0].mxu0
        %4579 = vdwg.mxu0
        %v4580 = vmul.f32 %v4155, 0.25
        %v4581 = vmul.f32 %v4158, 0.25
        %v4582 = vmul.f32 %v4163, 0.25
        %v4583 = vmul.f32 %v4166, 0.25
        %v4584 = vmul.f32 %v4171, 0.25
        %v4585 = vmul.f32 %v4174, 0.25
        %v4586 = vmul.f32 %v4179, 0.25
        %v4587 = vmul.f32 %v4182, 0.25
        %v4588 = vmul.f32 %v4187, 0.25
        %v4589 = vmul.f32 %v4190, 0.25
        %v4590 = vmul.f32 %v4195, 0.25
        %v4591 = vmul.f32 %v4198, 0.25
        %v4592 = vmul.f32 %v4203, 0.25
        %v4593 = vmul.f32 %v4206, 0.25
        %v4594 = vmul.f32 %v4211, 0.25
        %v4595 = vmul.f32 %v4214, 0.25
        %v4596 = vmul.f32 %v4276, 0.25
        %v4597 = vmul.f32 %v4279, 0.25
        %v4598 = vmul.f32 %v4284, 0.25
        %v4599 = vmul.f32 %v4287, 0.25
        %v4600 = vmul.f32 %v4292, 0.25
        %v4601 = vmul.f32 %v4295, 0.25
        %v4602 = vmul.f32 %v4300, 0.25
        %v4603 = vmul.f32 %v4303, 0.25
        %v4604 = vmul.f32 %v4308, 0.25
        %v4605 = vmul.f32 %v4311, 0.25
        %v4606 = vmul.f32 %v4316, 0.25
        %v4607 = vmul.f32 %v4319, 0.25
        %v4608 = vmul.f32 %v4324, 0.25
        %v4609 = vmul.f32 %v4327, 0.25
        %v4610 = vmul.f32 %v4332, 0.25
        %v4611 = vmul.f32 %v4335, 0.25
        %v4612 = vmul.f32 %v4397, 0.25
        %v4613 = vmul.f32 %v4400, 0.25
        %v4614 = vmul.f32 %v4405, 0.25
        %v4615 = vmul.f32 %v4408, 0.25
        %v4616 = vmul.f32 %v4413, 0.25
        %v4617 = vmul.f32 %v4416, 0.25
        %v4618 = vmul.f32 %v4421, 0.25
        %v4619 = vmul.f32 %v4424, 0.25
        %v4620 = vmul.f32 %v4429, 0.25
        %v4621 = vmul.f32 %v4432, 0.25
        %v4622 = vmul.f32 %v4437, 0.25
        %v4623 = vmul.f32 %v4440, 0.25
        %v4624 = vmul.f32 %v4445, 0.25
        %v4625 = vmul.f32 %v4448, 0.25
        %v4626 = vmul.f32 %v4453, 0.25
        %v4627 = vmul.f32 %v4456, 0.25
        %v4628 = vmul.f32 %v4518, 0.25
        %v4629 = vmul.f32 %v4521, 0.25
        %v4630 = vmul.f32 %v4526, 0.25
        %v4631 = vmul.f32 %v4529, 0.25
        %v4632 = vmul.f32 %v4534, 0.25
        %v4633 = vmul.f32 %v4537, 0.25
        %v4634 = vmul.f32 %v4542, 0.25
        %v4635 = vmul.f32 %v4545, 0.25
        %v4636 = vmul.f32 %v4550, 0.25
        %v4637 = vmul.f32 %v4553, 0.25
        %v4638 = vmul.f32 %v4558, 0.25
        %v4639 = vmul.f32 %v4561, 0.25
        %v4640 = vmul.f32 %v4566, 0.25
        %v4641 = vmul.f32 %v4569, 0.25
        %v4642 = vmul.f32 %v4574, 0.25
        %v4643 = vmul.f32 %v4577, 0.25
        %4644 = vmax.xlane.f32.xlu0 %v4580
        %v4645 = vpop.xlane.xlu0 %4644
        %4646 = vmax.xlane.f32.xlu0 %v4581
        %v4647 = vpop.xlane.xlu0 %4646
        %4648 = vmax.xlane.f32.xlu0 %v4582
        %v4649 = vpop.xlane.xlu0 %4648
        %4650 = vmax.xlane.f32.xlu0 %v4583
        %v4651 = vpop.xlane.xlu0 %4650
        %4652 = vmax.xlane.f32.xlu0 %v4584
        %v4653 = vpop.xlane.xlu0 %4652
        %4654 = vmax.xlane.f32.xlu0 %v4585
        %v4655 = vpop.xlane.xlu0 %4654
        %4656 = vmax.xlane.f32.xlu0 %v4586
        %v4657 = vpop.xlane.xlu0 %4656
        %4658 = vmax.xlane.f32.xlu0 %v4587
        %v4659 = vpop.xlane.xlu0 %4658
        %4660 = vmax.xlane.f32.xlu0 %v4588
        %v4661 = vpop.xlane.xlu0 %4660
        %4662 = vmax.xlane.f32.xlu0 %v4589
        %v4663 = vpop.xlane.xlu0 %4662
        %4664 = vmax.xlane.f32.xlu0 %v4590
        %v4665 = vpop.xlane.xlu0 %4664
        %4666 = vmax.xlane.f32.xlu0 %v4591
        %v4667 = vpop.xlane.xlu0 %4666
        %4668 = vmax.xlane.f32.xlu0 %v4592
        %v4669 = vpop.xlane.xlu0 %4668
        %4670 = vmax.xlane.f32.xlu0 %v4593
        %v4671 = vpop.xlane.xlu0 %4670
        %4672 = vmax.xlane.f32.xlu0 %v4594
        %v4673 = vpop.xlane.xlu0 %4672
        %4674 = vmax.xlane.f32.xlu0 %v4595
        %v4675 = vpop.xlane.xlu0 %4674
        %4676 = vmax.xlane.f32.xlu0 %v4596
        %v4677 = vpop.xlane.xlu0 %4676
        %4678 = vmax.xlane.f32.xlu0 %v4597
        %v4679 = vpop.xlane.xlu0 %4678
        %4680 = vmax.xlane.f32.xlu0 %v4598
        %v4681 = vpop.xlane.xlu0 %4680
        %4682 = vmax.xlane.f32.xlu0 %v4599
        %v4683 = vpop.xlane.xlu0 %4682
        %4684 = vmax.xlane.f32.xlu0 %v4600
        %v4685 = vpop.xlane.xlu0 %4684
        %4686 = vmax.xlane.f32.xlu0 %v4601
        %v4687 = vpop.xlane.xlu0 %4686
        %4688 = vmax.xlane.f32.xlu0 %v4602
        %v4689 = vpop.xlane.xlu0 %4688
        %4690 = vmax.xlane.f32.xlu0 %v4603
        %v4691 = vpop.xlane.xlu0 %4690
        %4692 = vmax.xlane.f32.xlu0 %v4604
        %v4693 = vpop.xlane.xlu0 %4692
        %4694 = vmax.xlane.f32.xlu0 %v4605
        %v4695 = vpop.xlane.xlu0 %4694
        %4696 = vmax.xlane.f32.xlu0 %v4606
        %v4697 = vpop.xlane.xlu0 %4696
        %4698 = vmax.xlane.f32.xlu0 %v4607
        %v4699 = vpop.xlane.xlu0 %4698
        %4700 = vmax.xlane.f32.xlu0 %v4608
        %v4701 = vpop.xlane.xlu0 %4700
        %4702 = vmax.xlane.f32.xlu0 %v4609
        %v4703 = vpop.xlane.xlu0 %4702
        %4704 = vmax.xlane.f32.xlu0 %v4610
        %v4705 = vpop.xlane.xlu0 %4704
        %4706 = vmax.xlane.f32.xlu0 %v4611
        %v4707 = vpop.xlane.xlu0 %4706
        %4708 = vmax.xlane.f32.xlu0 %v4612
        %v4709 = vpop.xlane.xlu0 %4708
        %4710 = vmax.xlane.f32.xlu0 %v4613
        %v4711 = vpop.xlane.xlu0 %4710
        %4712 = vmax.xlane.f32.xlu0 %v4614
        %v4713 = vpop.xlane.xlu0 %4712
        %4714 = vmax.xlane.f32.xlu0 %v4615
        %v4715 = vpop.xlane.xlu0 %4714
        %4716 = vmax.xlane.f32.xlu0 %v4616
        %v4717 = vpop.xlane.xlu0 %4716
        %4718 = vmax.xlane.f32.xlu0 %v4617
        %v4719 = vpop.xlane.xlu0 %4718
        %4720 = vmax.xlane.f32.xlu0 %v4618
        %v4721 = vpop.xlane.xlu0 %4720
        %4722 = vmax.xlane.f32.xlu0 %v4619
        %v4723 = vpop.xlane.xlu0 %4722
        %4724 = vmax.xlane.f32.xlu0 %v4620
        %v4725 = vpop.xlane.xlu0 %4724
        %4726 = vmax.xlane.f32.xlu0 %v4621
        %v4727 = vpop.xlane.xlu0 %4726
        %4728 = vmax.xlane.f32.xlu0 %v4622
        %v4729 = vpop.xlane.xlu0 %4728
        %4730 = vmax.xlane.f32.xlu0 %v4623
        %v4731 = vpop.xlane.xlu0 %4730
        %4732 = vmax.xlane.f32.xlu0 %v4624
        %v4733 = vpop.xlane.xlu0 %4732
        %4734 = vmax.xlane.f32.xlu0 %v4625
        %v4735 = vpop.xlane.xlu0 %4734
        %4736 = vmax.xlane.f32.xlu0 %v4626
        %v4737 = vpop.xlane.xlu0 %4736
        %4738 = vmax.xlane.f32.xlu0 %v4627
        %v4739 = vpop.xlane.xlu0 %4738
        %4740 = vmax.xlane.f32.xlu0 %v4628
        %v4741 = vpop.xlane.xlu0 %4740
        %4742 = vmax.xlane.f32.xlu0 %v4629
        %v4743 = vpop.xlane.xlu0 %4742
        %4744 = vmax.xlane.f32.xlu0 %v4630
        %v4745 = vpop.xlane.xlu0 %4744
        %4746 = vmax.xlane.f32.xlu0 %v4631
        %v4747 = vpop.xlane.xlu0 %4746
        %4748 = vmax.xlane.f32.xlu0 %v4632
        %v4749 = vpop.xlane.xlu0 %4748
        %4750 = vmax.xlane.f32.xlu0 %v4633
        %v4751 = vpop.xlane.xlu0 %4750
        %4752 = vmax.xlane.f32.xlu0 %v4634
        %v4753 = vpop.xlane.xlu0 %4752
        %4754 = vmax.xlane.f32.xlu0 %v4635
        %v4755 = vpop.xlane.xlu0 %4754
        %4756 = vmax.xlane.f32.xlu0 %v4636
        %v4757 = vpop.xlane.xlu0 %4756
        %4758 = vmax.xlane.f32.xlu0 %v4637
        %v4759 = vpop.xlane.xlu0 %4758
        %4760 = vmax.xlane.f32.xlu0 %v4638
        %v4761 = vpop.xlane.xlu0 %4760
        %4762 = vmax.xlane.f32.xlu0 %v4639
        %v4763 = vpop.xlane.xlu0 %4762
        %4764 = vmax.xlane.f32.xlu0 %v4640
        %v4765 = vpop.xlane.xlu0 %4764
        %4766 = vmax.xlane.f32.xlu0 %v4641
        %v4767 = vpop.xlane.xlu0 %4766
        %4768 = vmax.xlane.f32.xlu0 %v4642
        %v4769 = vpop.xlane.xlu0 %4768
        %4770 = vmax.xlane.f32.xlu0 %v4643
        %v4771 = vpop.xlane.xlu0 %4770
        %v4772 = vsub.f32 %v4580, %v4645
        %v4773 = vsub.f32 %v4581, %v4647
        %v4774 = vsub.f32 %v4582, %v4649
        %v4775 = vsub.f32 %v4583, %v4651
        %v4776 = vsub.f32 %v4584, %v4653
        %v4777 = vsub.f32 %v4585, %v4655
        %v4778 = vsub.f32 %v4586, %v4657
        %v4779 = vsub.f32 %v4587, %v4659
        %v4780 = vsub.f32 %v4588, %v4661
        %v4781 = vsub.f32 %v4589, %v4663
        %v4782 = vsub.f32 %v4590, %v4665
        %v4783 = vsub.f32 %v4591, %v4667
        %v4784 = vsub.f32 %v4592, %v4669
        %v4785 = vsub.f32 %v4593, %v4671
        %v4786 = vsub.f32 %v4594, %v4673
        %v4787 = vsub.f32 %v4595, %v4675
        %v4788 = vsub.f32 %v4596, %v4677
        %v4789 = vsub.f32 %v4597, %v4679
        %v4790 = vsub.f32 %v4598, %v4681
        %v4791 = vsub.f32 %v4599, %v4683
        %v4792 = vsub.f32 %v4600, %v4685
        %v4793 = vsub.f32 %v4601, %v4687
        %v4794 = vsub.f32 %v4602, %v4689
        %v4795 = vsub.f32 %v4603, %v4691
        %v4796 = vsub.f32 %v4604, %v4693
        %v4797 = vsub.f32 %v4605, %v4695
        %v4798 = vsub.f32 %v4606, %v4697
        %v4799 = vsub.f32 %v4607, %v4699
        %v4800 = vsub.f32 %v4608, %v4701
        %v4801 = vsub.f32 %v4609, %v4703
        %v4802 = vsub.f32 %v4610, %v4705
        %v4803 = vsub.f32 %v4611, %v4707
        %v4804 = vsub.f32 %v4612, %v4709
        %v4805 = vsub.f32 %v4613, %v4711
        %v4806 = vsub.f32 %v4614, %v4713
        %v4807 = vsub.f32 %v4615, %v4715
        %v4808 = vsub.f32 %v4616, %v4717
        %v4809 = vsub.f32 %v4617, %v4719
        %v4810 = vsub.f32 %v4618, %v4721
        %v4811 = vsub.f32 %v4619, %v4723
        %v4812 = vsub.f32 %v4620, %v4725
        %v4813 = vsub.f32 %v4621, %v4727
        %v4814 = vsub.f32 %v4622, %v4729
        %v4815 = vsub.f32 %v4623, %v4731
        %v4816 = vsub.f32 %v4624, %v4733
        %v4817 = vsub.f32 %v4625, %v4735
        %v4818 = vsub.f32 %v4626, %v4737
        %v4819 = vsub.f32 %v4627, %v4739
        %v4820 = vsub.f32 %v4628, %v4741
        %v4821 = vsub.f32 %v4629, %v4743
        %v4822 = vsub.f32 %v4630, %v4745
        %v4823 = vsub.f32 %v4631, %v4747
        %v4824 = vsub.f32 %v4632, %v4749
        %v4825 = vsub.f32 %v4633, %v4751
        %v4826 = vsub.f32 %v4634, %v4753
        %v4827 = vsub.f32 %v4635, %v4755
        %v4828 = vsub.f32 %v4636, %v4757
        %v4829 = vsub.f32 %v4637, %v4759
        %v4830 = vsub.f32 %v4638, %v4761
        %v4831 = vsub.f32 %v4639, %v4763
        %v4832 = vsub.f32 %v4640, %v4765
        %v4833 = vsub.f32 %v4641, %v4767
        %v4834 = vsub.f32 %v4642, %v4769
        %v4835 = vsub.f32 %v4643, %v4771
        %v4836 = vmul.f32 %v4772, 1.442695
        %v4837 = vpow.pop %v4836
        %v4838 = vmul.f32 %v4773, 1.442695
        %v4839 = vpow.pop %v4838
        %v4840 = vmul.f32 %v4774, 1.442695
        %v4841 = vpow.pop %v4840
        %v4842 = vmul.f32 %v4775, 1.442695
        %v4843 = vpow.pop %v4842
        %v4844 = vmul.f32 %v4776, 1.442695
        %v4845 = vpow.pop %v4844
        %v4846 = vmul.f32 %v4777, 1.442695
        %v4847 = vpow.pop %v4846
        %v4848 = vmul.f32 %v4778, 1.442695
        %v4849 = vpow.pop %v4848
        %v4850 = vmul.f32 %v4779, 1.442695
        %v4851 = vpow.pop %v4850
        %v4852 = vmul.f32 %v4780, 1.442695
        %v4853 = vpow.pop %v4852
        %v4854 = vmul.f32 %v4781, 1.442695
        %v4855 = vpow.pop %v4854
        %v4856 = vmul.f32 %v4782, 1.442695
        %v4857 = vpow.pop %v4856
        %v4858 = vmul.f32 %v4783, 1.442695
        %v4859 = vpow.pop %v4858
        %v4860 = vmul.f32 %v4784, 1.442695
        %v4861 = vpow.pop %v4860
        %v4862 = vmul.f32 %v4785, 1.442695
        %v4863 = vpow.pop %v4862
        %v4864 = vmul.f32 %v4786, 1.442695
        %v4865 = vpow.pop %v4864
        %v4866 = vmul.f32 %v4787, 1.442695
        %v4867 = vpow.pop %v4866
        %v4868 = vmul.f32 %v4788, 1.442695
        %v4869 = vpow.pop %v4868
        %v4870 = vmul.f32 %v4789, 1.442695
        %v4871 = vpow.pop %v4870
        %v4872 = vmul.f32 %v4790, 1.442695
        %v4873 = vpow.pop %v4872
        %v4874 = vmul.f32 %v4791, 1.442695
        %v4875 = vpow.pop %v4874
        %v4876 = vmul.f32 %v4792, 1.442695
        %v4877 = vpow.pop %v4876
        %v4878 = vmul.f32 %v4793, 1.442695
        %v4879 = vpow.pop %v4878
        %v4880 = vmul.f32 %v4794, 1.442695
        %v4881 = vpow.pop %v4880
        %v4882 = vmul.f32 %v4795, 1.442695
        %v4883 = vpow.pop %v4882
        %v4884 = vmul.f32 %v4796, 1.442695
        %v4885 = vpow.pop %v4884
        %v4886 = vmul.f32 %v4797, 1.442695
        %v4887 = vpow.pop %v4886
        %v4888 = vmul.f32 %v4798, 1.442695
        %v4889 = vpow.pop %v4888
        %v4890 = vmul.f32 %v4799, 1.442695
        %v4891 = vpow.pop %v4890
        %v4892 = vmul.f32 %v4800, 1.442695
        %v4893 = vpow.pop %v4892
        %v4894 = vmul.f32 %v4801, 1.442695
        %v4895 = vpow.pop %v4894
        %v4896 = vmul.f32 %v4802, 1.442695
        %v4897 = vpow.pop %v4896
        %v4898 = vmul.f32 %v4803, 1.442695
        %v4899 = vpow.pop %v4898
        %v4900 = vmul.f32 %v4804, 1.442695
        %v4901 = vpow.pop %v4900
        %v4902 = vmul.f32 %v4805, 1.442695
        %v4903 = vpow.pop %v4902
        %v4904 = vmul.f32 %v4806, 1.442695
        %v4905 = vpow.pop %v4904
        %v4906 = vmul.f32 %v4807, 1.442695
        %v4907 = vpow.pop %v4906
        %v4908 = vmul.f32 %v4808, 1.442695
        %v4909 = vpow.pop %v4908
        %v4910 = vmul.f32 %v4809, 1.442695
        %v4911 = vpow.pop %v4910
        %v4912 = vmul.f32 %v4810, 1.442695
        %v4913 = vpow.pop %v4912
        %v4914 = vmul.f32 %v4811, 1.442695
        %v4915 = vpow.pop %v4914
        %v4916 = vmul.f32 %v4812, 1.442695
        %v4917 = vpow.pop %v4916
        %v4918 = vmul.f32 %v4813, 1.442695
        %v4919 = vpow.pop %v4918
        %v4920 = vmul.f32 %v4814, 1.442695
        %v4921 = vpow.pop %v4920
        %v4922 = vmul.f32 %v4815, 1.442695
        %v4923 = vpow.pop %v4922
        %v4924 = vmul.f32 %v4816, 1.442695
        %v4925 = vpow.pop %v4924
        %v4926 = vmul.f32 %v4817, 1.442695
        %v4927 = vpow.pop %v4926
        %v4928 = vmul.f32 %v4818, 1.442695
        %v4929 = vpow.pop %v4928
        %v4930 = vmul.f32 %v4819, 1.442695
        %v4931 = vpow.pop %v4930
        %v4932 = vmul.f32 %v4820, 1.442695
        %v4933 = vpow.pop %v4932
        %v4934 = vmul.f32 %v4821, 1.442695
        %v4935 = vpow.pop %v4934
        %v4936 = vmul.f32 %v4822, 1.442695
        %v4937 = vpow.pop %v4936
        %v4938 = vmul.f32 %v4823, 1.442695
        %v4939 = vpow.pop %v4938
        %v4940 = vmul.f32 %v4824, 1.442695
        %v4941 = vpow.pop %v4940
        %v4942 = vmul.f32 %v4825, 1.442695
        %v4943 = vpow.pop %v4942
        %v4944 = vmul.f32 %v4826, 1.442695
        %v4945 = vpow.pop %v4944
        %v4946 = vmul.f32 %v4827, 1.442695
        %v4947 = vpow.pop %v4946
        %v4948 = vmul.f32 %v4828, 1.442695
        %v4949 = vpow.pop %v4948
        %v4950 = vmul.f32 %v4829, 1.442695
        %v4951 = vpow.pop %v4950
        %v4952 = vmul.f32 %v4830, 1.442695
        %v4953 = vpow.pop %v4952
        %v4954 = vmul.f32 %v4831, 1.442695
        %v4955 = vpow.pop %v4954
        %v4956 = vmul.f32 %v4832, 1.442695
        %v4957 = vpow.pop %v4956
        %v4958 = vmul.f32 %v4833, 1.442695
        %v4959 = vpow.pop %v4958
        %v4960 = vmul.f32 %v4834, 1.442695
        %v4961 = vpow.pop %v4960
        %v4962 = vmul.f32 %v4835, 1.442695
        %v4963 = vpow.pop %v4962
        %4964 = vadd.xlane.f32.xlu0 %v4837
        %v4965 = vpop.xlane.xlu0 %4964
        %4966 = vadd.xlane.f32.xlu0 %v4839
        %v4967 = vpop.xlane.xlu0 %4966
        %4968 = vadd.xlane.f32.xlu0 %v4841
        %v4969 = vpop.xlane.xlu0 %4968
        %4970 = vadd.xlane.f32.xlu0 %v4843
        %v4971 = vpop.xlane.xlu0 %4970
        %4972 = vadd.xlane.f32.xlu0 %v4845
        %v4973 = vpop.xlane.xlu0 %4972
        %4974 = vadd.xlane.f32.xlu0 %v4847
        %v4975 = vpop.xlane.xlu0 %4974
        %4976 = vadd.xlane.f32.xlu0 %v4849
        %v4977 = vpop.xlane.xlu0 %4976
        %4978 = vadd.xlane.f32.xlu0 %v4851
        %v4979 = vpop.xlane.xlu0 %4978
        %4980 = vadd.xlane.f32.xlu0 %v4853
        %v4981 = vpop.xlane.xlu0 %4980
        %4982 = vadd.xlane.f32.xlu0 %v4855
        %v4983 = vpop.xlane.xlu0 %4982
        %4984 = vadd.xlane.f32.xlu0 %v4857
        %v4985 = vpop.xlane.xlu0 %4984
        %4986 = vadd.xlane.f32.xlu0 %v4859
        %v4987 = vpop.xlane.xlu0 %4986
        %4988 = vadd.xlane.f32.xlu0 %v4861
        %v4989 = vpop.xlane.xlu0 %4988
        %4990 = vadd.xlane.f32.xlu0 %v4863
        %v4991 = vpop.xlane.xlu0 %4990
        %4992 = vadd.xlane.f32.xlu0 %v4865
        %v4993 = vpop.xlane.xlu0 %4992
        %4994 = vadd.xlane.f32.xlu0 %v4867
        %v4995 = vpop.xlane.xlu0 %4994
        %4996 = vadd.xlane.f32.xlu0 %v4869
        %v4997 = vpop.xlane.xlu0 %4996
        %4998 = vadd.xlane.f32.xlu0 %v4871
        %v4999 = vpop.xlane.xlu0 %4998
        %5000 = vadd.xlane.f32.xlu0 %v4873
        %v5001 = vpop.xlane.xlu0 %5000
        %5002 = vadd.xlane.f32.xlu0 %v4875
        %v5003 = vpop.xlane.xlu0 %5002
        %5004 = vadd.xlane.f32.xlu0 %v4877
        %v5005 = vpop.xlane.xlu0 %5004
        %5006 = vadd.xlane.f32.xlu0 %v4879
        %v5007 = vpop.xlane.xlu0 %5006
        %5008 = vadd.xlane.f32.xlu0 %v4881
        %v5009 = vpop.xlane.xlu0 %5008
        %5010 = vadd.xlane.f32.xlu0 %v4883
        %v5011 = vpop.xlane.xlu0 %5010
        %5012 = vadd.xlane.f32.xlu0 %v4885
        %v5013 = vpop.xlane.xlu0 %5012
        %5014 = vadd.xlane.f32.xlu0 %v4887
        %v5015 = vpop.xlane.xlu0 %5014
        %5016 = vadd.xlane.f32.xlu0 %v4889
        %v5017 = vpop.xlane.xlu0 %5016
        %5018 = vadd.xlane.f32.xlu0 %v4891
        %v5019 = vpop.xlane.xlu0 %5018
        %5020 = vadd.xlane.f32.xlu0 %v4893
        %v5021 = vpop.xlane.xlu0 %5020
        %5022 = vadd.xlane.f32.xlu0 %v4895
        %v5023 = vpop.xlane.xlu0 %5022
        %5024 = vadd.xlane.f32.xlu0 %v4897
        %v5025 = vpop.xlane.xlu0 %5024
        %5026 = vadd.xlane.f32.xlu0 %v4899
        %v5027 = vpop.xlane.xlu0 %5026
        %5028 = vadd.xlane.f32.xlu0 %v4901
        %v5029 = vpop.xlane.xlu0 %5028
        %5030 = vadd.xlane.f32.xlu0 %v4903
        %v5031 = vpop.xlane.xlu0 %5030
        %5032 = vadd.xlane.f32.xlu0 %v4905
        %v5033 = vpop.xlane.xlu0 %5032
        %5034 = vadd.xlane.f32.xlu0 %v4907
        %v5035 = vpop.xlane.xlu0 %5034
        %5036 = vadd.xlane.f32.xlu0 %v4909
        %v5037 = vpop.xlane.xlu0 %5036
        %5038 = vadd.xlane.f32.xlu0 %v4911
        %v5039 = vpop.xlane.xlu0 %5038
        %5040 = vadd.xlane.f32.xlu0 %v4913
        %v5041 = vpop.xlane.xlu0 %5040
        %5042 = vadd.xlane.f32.xlu0 %v4915
        %v5043 = vpop.xlane.xlu0 %5042
        %5044 = vadd.xlane.f32.xlu0 %v4917
        %v5045 = vpop.xlane.xlu0 %5044
        %5046 = vadd.xlane.f32.xlu0 %v4919
        %v5047 = vpop.xlane.xlu0 %5046
        %5048 = vadd.xlane.f32.xlu0 %v4921
        %v5049 = vpop.xlane.xlu0 %5048
        %5050 = vadd.xlane.f32.xlu0 %v4923
        %v5051 = vpop.xlane.xlu0 %5050
        %5052 = vadd.xlane.f32.xlu0 %v4925
        %v5053 = vpop.xlane.xlu0 %5052
        %5054 = vadd.xlane.f32.xlu0 %v4927
        %v5055 = vpop.xlane.xlu0 %5054
        %5056 = vadd.xlane.f32.xlu0 %v4929
        %v5057 = vpop.xlane.xlu0 %5056
        %5058 = vadd.xlane.f32.xlu0 %v4931
        %v5059 = vpop.xlane.xlu0 %5058
        %5060 = vadd.xlane.f32.xlu0 %v4933
        %v5061 = vpop.xlane.xlu0 %5060
        %5062 = vadd.xlane.f32.xlu0 %v4935
        %v5063 = vpop.xlane.xlu0 %5062
        %5064 = vadd.xlane.f32.xlu0 %v4937
        %v5065 = vpop.xlane.xlu0 %5064
        %5066 = vadd.xlane.f32.xlu0 %v4939
        %v5067 = vpop.xlane.xlu0 %5066
        %5068 = vadd.xlane.f32.xlu0 %v4941
        %v5069 = vpop.xlane.xlu0 %5068
        %5070 = vadd.xlane.f32.xlu0 %v4943
        %v5071 = vpop.xlane.xlu0 %5070
        %5072 = vadd.xlane.f32.xlu0 %v4945
        %v5073 = vpop.xlane.xlu0 %5072
        %5074 = vadd.xlane.f32.xlu0 %v4947
        %v5075 = vpop.xlane.xlu0 %5074
        %5076 = vadd.xlane.f32.xlu0 %v4949
        %v5077 = vpop.xlane.xlu0 %5076
        %5078 = vadd.xlane.f32.xlu0 %v4951
        %v5079 = vpop.xlane.xlu0 %5078
        %5080 = vadd.xlane.f32.xlu0 %v4953
        %v5081 = vpop.xlane.xlu0 %5080
        %5082 = vadd.xlane.f32.xlu0 %v4955
        %v5083 = vpop.xlane.xlu0 %5082
        %5084 = vadd.xlane.f32.xlu0 %v4957
        %v5085 = vpop.xlane.xlu0 %5084
        %5086 = vadd.xlane.f32.xlu0 %v4959
        %v5087 = vpop.xlane.xlu0 %5086
        %5088 = vadd.xlane.f32.xlu0 %v4961
        %v5089 = vpop.xlane.xlu0 %5088
        %5090 = vadd.xlane.f32.xlu0 %v4963
        %v5091 = vpop.xlane.xlu0 %5090
        %v5092 = vrcp.pop %v4965
        %v5093 = vrcp.pop %v4967
        %v5094 = vrcp.pop %v4969
        %v5095 = vrcp.pop %v4971
        %v5096 = vrcp.pop %v4973
        %v5097 = vrcp.pop %v4975
        %v5098 = vrcp.pop %v4977
        %v5099 = vrcp.pop %v4979
        %v5100 = vrcp.pop %v4981
        %v5101 = vrcp.pop %v4983
        %v5102 = vrcp.pop %v4985
        %v5103 = vrcp.pop %v4987
        %v5104 = vrcp.pop %v4989
        %v5105 = vrcp.pop %v4991
        %v5106 = vrcp.pop %v4993
        %v5107 = vrcp.pop %v4995
        %v5108 = vrcp.pop %v4997
        %v5109 = vrcp.pop %v4999
        %v5110 = vrcp.pop %v5001
        %v5111 = vrcp.pop %v5003
        %v5112 = vrcp.pop %v5005
        %v5113 = vrcp.pop %v5007
        %v5114 = vrcp.pop %v5009
        %v5115 = vrcp.pop %v5011
        %v5116 = vrcp.pop %v5013
        %v5117 = vrcp.pop %v5015
        %v5118 = vrcp.pop %v5017
        %v5119 = vrcp.pop %v5019
        %v5120 = vrcp.pop %v5021
        %v5121 = vrcp.pop %v5023
        %v5122 = vrcp.pop %v5025
        %v5123 = vrcp.pop %v5027
        %v5124 = vrcp.pop %v5029
        %v5125 = vrcp.pop %v5031
        %v5126 = vrcp.pop %v5033
        %v5127 = vrcp.pop %v5035
        %v5128 = vrcp.pop %v5037
        %v5129 = vrcp.pop %v5039
        %v5130 = vrcp.pop %v5041
        %v5131 = vrcp.pop %v5043
        %v5132 = vrcp.pop %v5045
        %v5133 = vrcp.pop %v5047
        %v5134 = vrcp.pop %v5049
        %v5135 = vrcp.pop %v5051
        %v5136 = vrcp.pop %v5053
        %v5137 = vrcp.pop %v5055
        %v5138 = vrcp.pop %v5057
        %v5139 = vrcp.pop %v5059
        %v5140 = vrcp.pop %v5061
        %v5141 = vrcp.pop %v5063
        %v5142 = vrcp.pop %v5065
        %v5143 = vrcp.pop %v5067
        %v5144 = vrcp.pop %v5069
        %v5145 = vrcp.pop %v5071
        %v5146 = vrcp.pop %v5073
        %v5147 = vrcp.pop %v5075
        %v5148 = vrcp.pop %v5077
        %v5149 = vrcp.pop %v5079
        %v5150 = vrcp.pop %v5081
        %v5151 = vrcp.pop %v5083
        %v5152 = vrcp.pop %v5085
        %v5153 = vrcp.pop %v5087
        %v5154 = vrcp.pop %v5089
        %v5155 = vrcp.pop %v5091
        %v5156 = vmul.f32 %v4837, %v5092
        %v5157 = vmul.f32 %v4839, %v5093
        %v5158 = vmul.f32 %v4841, %v5094
        %v5159 = vmul.f32 %v4843, %v5095
        %v5160 = vmul.f32 %v4845, %v5096
        %v5161 = vmul.f32 %v4847, %v5097
        %v5162 = vmul.f32 %v4849, %v5098
        %v5163 = vmul.f32 %v4851, %v5099
        %v5164 = vmul.f32 %v4853, %v5100
        %v5165 = vmul.f32 %v4855, %v5101
        %v5166 = vmul.f32 %v4857, %v5102
        %v5167 = vmul.f32 %v4859, %v5103
        %v5168 = vmul.f32 %v4861, %v5104
        %v5169 = vmul.f32 %v4863, %v5105
        %v5170 = vmul.f32 %v4865, %v5106
        %v5171 = vmul.f32 %v4867, %v5107
        %v5172 = vmul.f32 %v4869, %v5108
        %v5173 = vmul.f32 %v4871, %v5109
        %v5174 = vmul.f32 %v4873, %v5110
        %v5175 = vmul.f32 %v4875, %v5111
        %v5176 = vmul.f32 %v4877, %v5112
        %v5177 = vmul.f32 %v4879, %v5113
        %v5178 = vmul.f32 %v4881, %v5114
        %v5179 = vmul.f32 %v4883, %v5115
        %v5180 = vmul.f32 %v4885, %v5116
        %v5181 = vmul.f32 %v4887, %v5117
        %v5182 = vmul.f32 %v4889, %v5118
        %v5183 = vmul.f32 %v4891, %v5119
        %v5184 = vmul.f32 %v4893, %v5120
        %v5185 = vmul.f32 %v4895, %v5121
        %v5186 = vmul.f32 %v4897, %v5122
        %v5187 = vmul.f32 %v4899, %v5123
        %v5188 = vmul.f32 %v4901, %v5124
        %v5189 = vmul.f32 %v4903, %v5125
        %v5190 = vmul.f32 %v4905, %v5126
        %v5191 = vmul.f32 %v4907, %v5127
        %v5192 = vmul.f32 %v4909, %v5128
        %v5193 = vmul.f32 %v4911, %v5129
        %v5194 = vmul.f32 %v4913, %v5130
        %v5195 = vmul.f32 %v4915, %v5131
        %v5196 = vmul.f32 %v4917, %v5132
        %v5197 = vmul.f32 %v4919, %v5133
        %v5198 = vmul.f32 %v4921, %v5134
        %v5199 = vmul.f32 %v4923, %v5135
        %v5200 = vmul.f32 %v4925, %v5136
        %v5201 = vmul.f32 %v4927, %v5137
        %v5202 = vmul.f32 %v4929, %v5138
        %v5203 = vmul.f32 %v4931, %v5139
        %v5204 = vmul.f32 %v4933, %v5140
        %v5205 = vmul.f32 %v4935, %v5141
        %v5206 = vmul.f32 %v4937, %v5142
        %v5207 = vmul.f32 %v4939, %v5143
        %v5208 = vmul.f32 %v4941, %v5144
        %v5209 = vmul.f32 %v4943, %v5145
        %v5210 = vmul.f32 %v4945, %v5146
        %v5211 = vmul.f32 %v4947, %v5147
        %v5212 = vmul.f32 %v4949, %v5148
        %v5213 = vmul.f32 %v4951, %v5149
        %v5214 = vmul.f32 %v4953, %v5150
        %v5215 = vmul.f32 %v4955, %v5151
        %v5216 = vmul.f32 %v4957, %v5152
        %v5217 = vmul.f32 %v4959, %v5153
        %v5218 = vmul.f32 %v4961, %v5154
        %v5219 = vmul.f32 %v4963, %v5155
        %v5220 = vpack.c.bf16 %v5157, %v5156
        %v5221 = vpack.c.bf16 %v5159, %v5158
        %v5222 = vpack.c.bf16 %v5161, %v5160
        %v5223 = vpack.c.bf16 %v5163, %v5162
        %v5224 = vpack.c.bf16 %v5165, %v5164
        %v5225 = vpack.c.bf16 %v5167, %v5166
        %v5226 = vpack.c.bf16 %v5169, %v5168
        %v5227 = vpack.c.bf16 %v5171, %v5170
        %v5228 = vpack.c.bf16 %v5173, %v5172
        %v5229 = vpack.c.bf16 %v5175, %v5174
        %v5230 = vpack.c.bf16 %v5177, %v5176
        %v5231 = vpack.c.bf16 %v5179, %v5178
        %v5232 = vpack.c.bf16 %v5181, %v5180
        %v5233 = vpack.c.bf16 %v5183, %v5182
        %v5234 = vpack.c.bf16 %v5185, %v5184
        %v5235 = vpack.c.bf16 %v5187, %v5186
        %v5236 = vpack.c.bf16 %v5189, %v5188
        %v5237 = vpack.c.bf16 %v5191, %v5190
        %v5238 = vpack.c.bf16 %v5193, %v5192
        %v5239 = vpack.c.bf16 %v5195, %v5194
        %v5240 = vpack.c.bf16 %v5197, %v5196
        %v5241 = vpack.c.bf16 %v5199, %v5198
        %v5242 = vpack.c.bf16 %v5201, %v5200
        %v5243 = vpack.c.bf16 %v5203, %v5202
        %v5244 = vpack.c.bf16 %v5205, %v5204
        %v5245 = vpack.c.bf16 %v5207, %v5206
        %v5246 = vpack.c.bf16 %v5209, %v5208
        %v5247 = vpack.c.bf16 %v5211, %v5210
        %v5248 = vpack.c.bf16 %v5213, %v5212
        %v5249 = vpack.c.bf16 %v5215, %v5214
        %v5250 = vpack.c.bf16 %v5217, %v5216
        %v5251 = vpack.c.bf16 %v5219, %v5218
        %5252 = vmatprep.subr.bf16.mxu0 0
        %5253 = vmatpush1.bf16.xpose.msra.mxu0 %v5220
        %5254 = vmatprep.subr.bf16.mxu0 0
        %5255 = vmatpush1.bf16.xpose.msra.mxu0 %v5221
        %5256 = vmatprep.subr.bf16.mxu0 0
        %5257 = vmatpush1.bf16.xpose.msra.mxu0 %v5222
        %5258 = vmatprep.subr.bf16.mxu0 0
        %5259 = vmatpush1.bf16.xpose.msra.mxu0 %v5223
        %5260 = vmatprep.subr.bf16.mxu0 0
        %5261 = vmatpush1.bf16.xpose.msra.mxu0 %v5224
        %5262 = vmatprep.subr.bf16.mxu0 0
        %5263 = vmatpush1.bf16.xpose.msra.mxu0 %v5225
        %5264 = vmatprep.subr.bf16.mxu0 0
        %5265 = vmatpush1.bf16.xpose.msra.mxu0 %v5226
        %5266 = vmatprep.subr.bf16.mxu0 0
        %5267 = vmatpush1.bf16.xpose.msra.mxu0 %v5227
        %5268 = vmatprep.subr.bf16.mxu0 0
        %5269 = vmatpush1.bf16.xpose.msra.mxu0 0
        %5270 = vmatprep.subr.bf16.mxu0 0
        %5271 = vmatpush1.bf16.xpose.msra.mxu0 0
        %5272 = vmatprep.subr.bf16.mxu0 0
        %5273 = vmatpush1.bf16.xpose.msra.mxu0 0
        %5274 = vmatprep.subr.bf16.mxu0 0
        %5275 = vmatpush1.bf16.xpose.msra.mxu0 0
        %5276 = vmatprep.subr.bf16.mxu0 0
        %5277 = vmatpush1.bf16.xpose.msra.mxu0 0
        %5278 = vmatprep.subr.bf16.mxu0 0
        %5279 = vmatpush1.bf16.xpose.msra.mxu0 0
        %5280 = vmatprep.subr.bf16.mxu0 0
        %5281 = vmatpush1.bf16.xpose.msra.mxu0 0
        %5282 = vmatprep.subr.bf16.mxu0 0
        %5283 = vmatpush1.bf16.xpose.msra.mxu0 0
        %5284 = vmatprep.mubr.bf16.mxu0 0
        %5285 = vmatmul.mubr.bf16.gmra.mrb[0].mxu0 %v1241
        %v5286 = vpop.f32.mrb[0].mxu0
        %v5287 = vadd.f32 0.0, %v5286
        %v5288 = vpop.f32.mrb[0].mxu0
        %v5289 = vpop.f32.mrb[0].mxu0
        %v5290 = vadd.f32 0.0, %v5289
        %v5291 = vpop.f32.mrb[0].mxu0
        %5292 = vdwg.mxu0
        %5293 = vmatprep.subr.bf16.mxu0 0
        %5294 = vmatpush1.bf16.xpose.msra.mxu0 %v5228
        %5295 = vmatprep.subr.bf16.mxu0 0
        %5296 = vmatpush1.bf16.xpose.msra.mxu0 %v5229
        %5297 = vmatprep.subr.bf16.mxu0 0
        %5298 = vmatpush1.bf16.xpose.msra.mxu0 %v5230
        %5299 = vmatprep.subr.bf16.mxu0 0
        %5300 = vmatpush1.bf16.xpose.msra.mxu0 %v5231
        %5301 = vmatprep.subr.bf16.mxu0 0
        %5302 = vmatpush1.bf16.xpose.msra.mxu0 %v5232
        %5303 = vmatprep.subr.bf16.mxu0 0
        %5304 = vmatpush1.bf16.xpose.msra.mxu0 %v5233
        %5305 = vmatprep.subr.bf16.mxu0 0
        %5306 = vmatpush1.bf16.xpose.msra.mxu0 %v5234
        %5307 = vmatprep.subr.bf16.mxu0 0
        %5308 = vmatpush1.bf16.xpose.msra.mxu0 %v5235
        %5309 = vmatprep.subr.bf16.mxu0 0
        %5310 = vmatpush1.bf16.xpose.msra.mxu0 0
        %5311 = vmatprep.subr.bf16.mxu0 0
        %5312 = vmatpush1.bf16.xpose.msra.mxu0 0
        %5313 = vmatprep.subr.bf16.mxu0 0
        %5314 = vmatpush1.bf16.xpose.msra.mxu0 0
        %5315 = vmatprep.subr.bf16.mxu0 0
        %5316 = vmatpush1.bf16.xpose.msra.mxu0 0
        %5317 = vmatprep.subr.bf16.mxu0 0
        %5318 = vmatpush1.bf16.xpose.msra.mxu0 0
        %5319 = vmatprep.subr.bf16.mxu0 0
        %5320 = vmatpush1.bf16.xpose.msra.mxu0 0
        %5321 = vmatprep.subr.bf16.mxu0 0
        %5322 = vmatpush1.bf16.xpose.msra.mxu0 0
        %5323 = vmatprep.subr.bf16.mxu0 0
        %5324 = vmatpush1.bf16.xpose.msra.mxu0 0
        %5325 = vmatprep.mubr.bf16.mxu0 0
        %5326 = vmatmul.mubr.bf16.gmra.mrb[0].mxu0 %v1245
        %v5327 = vpop.f32.mrb[0].mxu0
        %v5328 = vadd.f32 0.0, %v5327
        %v5329 = vpop.f32.mrb[0].mxu0
        %v5330 = vpop.f32.mrb[0].mxu0
        %v5331 = vadd.f32 0.0, %v5330
        %v5332 = vpop.f32.mrb[0].mxu0
        %5333 = vdwg.mxu0
        %5334 = vmatprep.subr.bf16.mxu0 0
        %5335 = vmatpush1.bf16.xpose.msra.mxu0 %v5236
        %5336 = vmatprep.subr.bf16.mxu0 0
        %5337 = vmatpush1.bf16.xpose.msra.mxu0 %v5237
        %5338 = vmatprep.subr.bf16.mxu0 0
        %5339 = vmatpush1.bf16.xpose.msra.mxu0 %v5238
        %5340 = vmatprep.subr.bf16.mxu0 0
        %5341 = vmatpush1.bf16.xpose.msra.mxu0 %v5239
        %5342 = vmatprep.subr.bf16.mxu0 0
        %5343 = vmatpush1.bf16.xpose.msra.mxu0 %v5240
        %5344 = vmatprep.subr.bf16.mxu0 0
        %5345 = vmatpush1.bf16.xpose.msra.mxu0 %v5241
        %5346 = vmatprep.subr.bf16.mxu0 0
        %5347 = vmatpush1.bf16.xpose.msra.mxu0 %v5242
        %5348 = vmatprep.subr.bf16.mxu0 0
        %5349 = vmatpush1.bf16.xpose.msra.mxu0 %v5243
        %5350 = vmatprep.subr.bf16.mxu0 0
        %5351 = vmatpush1.bf16.xpose.msra.mxu0 0
        %5352 = vmatprep.subr.bf16.mxu0 0
        %5353 = vmatpush1.bf16.xpose.msra.mxu0 0
        %5354 = vmatprep.subr.bf16.mxu0 0
        %5355 = vmatpush1.bf16.xpose.msra.mxu0 0
        %5356 = vmatprep.subr.bf16.mxu0 0
        %5357 = vmatpush1.bf16.xpose.msra.mxu0 0
        %5358 = vmatprep.subr.bf16.mxu0 0
        %5359 = vmatpush1.bf16.xpose.msra.mxu0 0
        %5360 = vmatprep.subr.bf16.mxu0 0
        %5361 = vmatpush1.bf16.xpose.msra.mxu0 0
        %5362 = vmatprep.subr.bf16.mxu0 0
        %5363 = vmatpush1.bf16.xpose.msra.mxu0 0
        %5364 = vmatprep.subr.bf16.mxu0 0
        %5365 = vmatpush1.bf16.xpose.msra.mxu0 0
        %5366 = vmatprep.mubr.bf16.mxu0 0
        %5367 = vmatmul.mubr.bf16.gmra.mrb[0].mxu0 %v1249
        %v5368 = vpop.f32.mrb[0].mxu0
        %v5369 = vadd.f32 0.0, %v5368
        %v5370 = vpop.f32.mrb[0].mxu0
        %v5371 = vpop.f32.mrb[0].mxu0
        %v5372 = vadd.f32 0.0, %v5371
        %v5373 = vpop.f32.mrb[0].mxu0
        %5374 = vdwg.mxu0
        %5375 = vmatprep.subr.bf16.mxu0 0
        %5376 = vmatpush1.bf16.xpose.msra.mxu0 %v5244
        %5377 = vmatprep.subr.bf16.mxu0 0
        %5378 = vmatpush1.bf16.xpose.msra.mxu0 %v5245
        %5379 = vmatprep.subr.bf16.mxu0 0
        %5380 = vmatpush1.bf16.xpose.msra.mxu0 %v5246
        %5381 = vmatprep.subr.bf16.mxu0 0
        %5382 = vmatpush1.bf16.xpose.msra.mxu0 %v5247
        %5383 = vmatprep.subr.bf16.mxu0 0
        %5384 = vmatpush1.bf16.xpose.msra.mxu0 %v5248
        %5385 = vmatprep.subr.bf16.mxu0 0
        %5386 = vmatpush1.bf16.xpose.msra.mxu0 %v5249
        %5387 = vmatprep.subr.bf16.mxu0 0
        %5388 = vmatpush1.bf16.xpose.msra.mxu0 %v5250
        %5389 = vmatprep.subr.bf16.mxu0 0
        %5390 = vmatpush1.bf16.xpose.msra.mxu0 %v5251
        %5391 = vmatprep.subr.bf16.mxu0 0
        %5392 = vmatpush1.bf16.xpose.msra.mxu0 0
        %5393 = vmatprep.subr.bf16.mxu0 0
        %5394 = vmatpush1.bf16.xpose.msra.mxu0 0
        %5395 = vmatprep.subr.bf16.mxu0 0
        %5396 = vmatpush1.bf16.xpose.msra.mxu0 0
        %5397 = vmatprep.subr.bf16.mxu0 0
        %5398 = vmatpush1.bf16.xpose.msra.mxu0 0
        %5399 = vmatprep.subr.bf16.mxu0 0
        %5400 = vmatpush1.bf16.xpose.msra.mxu0 0
        %5401 = vmatprep.subr.bf16.mxu0 0
        %5402 = vmatpush1.bf16.xpose.msra.mxu0 0
        %5403 = vmatprep.subr.bf16.mxu0 0
        %5404 = vmatpush1.bf16.xpose.msra.mxu0 0
        %5405 = vmatprep.subr.bf16.mxu0 0
        %5406 = vmatpush1.bf16.xpose.msra.mxu0 0
        %5407 = vmatprep.mubr.bf16.mxu0 0
        %5408 = vmatmul.mubr.bf16.gmra.mrb[0].mxu0 %v1253
        %v5409 = vpop.f32.mrb[0].mxu0
        %v5410 = vadd.f32 0.0, %v5409
        %v5411 = vpop.f32.mrb[0].mxu0
        %v5412 = vpop.f32.mrb[0].mxu0
        %v5413 = vadd.f32 0.0, %v5412
        %v5414 = vpop.f32.mrb[0].mxu0
        %5415 = vdwg.mxu0
        %v5416 = vpack.c.bf16 %v5290, %v5287
        %v5417 = vpack.c.bf16 %v5331, %v5328
        %v5418 = vpack.c.bf16 %v5372, %v5369
        %v5419 = vpack.c.bf16 %v5413, %v5410
        %5420 = vxpose.xlu0.c.b16.start [1/8] %v1210, 128
        %5421 = vxpose.xlu0.c.b16.cont [2/8] 0, 128
        %5422 = vxpose.xlu0.c.b16.cont [3/8] 0, 128
        %5423 = vxpose.xlu0.c.b16.cont [4/8] 0, 128
        %5424 = vxpose.xlu0.c.b16.cont [5/8] 0, 128
        %5425 = vxpose.xlu0.c.b16.cont [6/8] 0, 128
        %5426 = vxpose.xlu0.c.b16.cont [7/8] 0, 128
        %5427 = vxpose.xlu0.c.b16.end [8/8] 0, 128
        %v5428 = vpop.trf.xlu0
        %v5429 = vpop.trf.xlu0
        %v5430 = vpop.trf.xlu0
        %v5431 = vpop.trf.xlu0
        %v5432 = vpop.trf.xlu0
        %v5433 = vpop.trf.xlu0
        %v5434 = vpop.trf.xlu0
        %v5435 = vpop.trf.xlu0
        %5436 = vxpose.xlu0.c.b16.start [1/8] %v1214, 128
        %5437 = vxpose.xlu0.c.b16.cont [2/8] 0, 128
        %5438 = vxpose.xlu0.c.b16.cont [3/8] 0, 128
        %5439 = vxpose.xlu0.c.b16.cont [4/8] 0, 128
        %5440 = vxpose.xlu0.c.b16.cont [5/8] 0, 128
        %5441 = vxpose.xlu0.c.b16.cont [6/8] 0, 128
        %5442 = vxpose.xlu0.c.b16.cont [7/8] 0, 128
        %5443 = vxpose.xlu0.c.b16.end [8/8] 0, 128
        %v5444 = vpop.trf.xlu0
        %v5445 = vpop.trf.xlu0
        %v5446 = vpop.trf.xlu0
        %v5447 = vpop.trf.xlu0
        %v5448 = vpop.trf.xlu0
        %v5449 = vpop.trf.xlu0
        %v5450 = vpop.trf.xlu0
        %v5451 = vpop.trf.xlu0
        %5452 = vxpose.xlu0.c.b16.start [1/8] %v1218, 128
        %5453 = vxpose.xlu0.c.b16.cont [2/8] 0, 128
        %5454 = vxpose.xlu0.c.b16.cont [3/8] 0, 128
        %5455 = vxpose.xlu0.c.b16.cont [4/8] 0, 128
        %5456 = vxpose.xlu0.c.b16.cont [5/8] 0, 128
        %5457 = vxpose.xlu0.c.b16.cont [6/8] 0, 128
        %5458 = vxpose.xlu0.c.b16.cont [7/8] 0, 128
        %5459 = vxpose.xlu0.c.b16.end [8/8] 0, 128
        %v5460 = vpop.trf.xlu0
        %v5461 = vpop.trf.xlu0
        %v5462 = vpop.trf.xlu0
        %v5463 = vpop.trf.xlu0
        %v5464 = vpop.trf.xlu0
        %v5465 = vpop.trf.xlu0
        %v5466 = vpop.trf.xlu0
        %v5467 = vpop.trf.xlu0
        %5468 = vxpose.xlu0.c.b16.start [1/8] %v1222, 128
        %5469 = vxpose.xlu0.c.b16.cont [2/8] 0, 128
        %5470 = vxpose.xlu0.c.b16.cont [3/8] 0, 128
        %5471 = vxpose.xlu0.c.b16.cont [4/8] 0, 128
        %5472 = vxpose.xlu0.c.b16.cont [5/8] 0, 128
        %5473 = vxpose.xlu0.c.b16.cont [6/8] 0, 128
        %5474 = vxpose.xlu0.c.b16.cont [7/8] 0, 128
        %5475 = vxpose.xlu0.c.b16.end [8/8] 0, 128
        %v5476 = vpop.trf.xlu0
        %v5477 = vpop.trf.xlu0
        %v5478 = vpop.trf.xlu0
        %v5479 = vpop.trf.xlu0
        %v5480 = vpop.trf.xlu0
        %v5481 = vpop.trf.xlu0
        %v5482 = vpop.trf.xlu0
        %v5483 = vpop.trf.xlu0
        %v5485 = vsel %vm1319, %v5428, 0
        %v5488 = vsel %vm1319, %v5429, 0
        %v5491 = vsel %vm1319, %v5430, 0
        %v5494 = vsel %vm1319, %v5431, 0
        %v5497 = vsel %vm1319, %v5432, 0
        %v5500 = vsel %vm1319, %v5433, 0
        %v5503 = vsel %vm1319, %v5434, 0
        %v5506 = vsel %vm1319, %v5435, 0
        %5508 = vmatprep.subr.bf16.mxu0 0
        %5509 = vmatpush1.bf16.msra.mxu0 %v1226
        %5510 = vmatprep.subr.bf16.mxu0 0
        %5511 = vmatpush1.bf16.msra.mxu0 0
        %5512 = vmatprep.subr.bf16.mxu0 0
        %5513 = vmatpush1.bf16.msra.mxu0 0
        %5514 = vmatprep.subr.bf16.mxu0 0
        %5515 = vmatpush1.bf16.msra.mxu0 0
        %5516 = vmatprep.subr.bf16.mxu0 0
        %5517 = vmatpush1.bf16.msra.mxu0 0
        %5518 = vmatprep.subr.bf16.mxu0 0
        %5519 = vmatpush1.bf16.msra.mxu0 0
        %5520 = vmatprep.subr.bf16.mxu0 0
        %5521 = vmatpush1.bf16.msra.mxu0 0
        %5522 = vmatprep.subr.bf16.mxu0 0
        %5523 = vmatpush1.bf16.msra.mxu0 0
        %5524 = vmatprep.subr.bf16.mxu0 0
        %5525 = vmatpush1.bf16.msra.mxu0 0
        %5526 = vmatprep.subr.bf16.mxu0 0
        %5527 = vmatpush1.bf16.msra.mxu0 0
        %5528 = vmatprep.subr.bf16.mxu0 0
        %5529 = vmatpush1.bf16.msra.mxu0 0
        %5530 = vmatprep.subr.bf16.mxu0 0
        %5531 = vmatpush1.bf16.msra.mxu0 0
        %5532 = vmatprep.subr.bf16.mxu0 0
        %5533 = vmatpush1.bf16.msra.mxu0 0
        %5534 = vmatprep.subr.bf16.mxu0 0
        %5535 = vmatpush1.bf16.msra.mxu0 0
        %5536 = vmatprep.subr.bf16.mxu0 0
        %5537 = vmatpush1.bf16.msra.mxu0 0
        %5538 = vmatprep.subr.bf16.mxu0 0
        %5539 = vmatpush1.bf16.msra.mxu0 0
        %5540 = vmatprep.mubr.bf16.mxu0 0
        %5541 = vmatmul.mubr.bf16.gmra.mrb[0].mxu0 %v5485
        %v5542 = vpop.f32.mrb[0].mxu0
        %v5543 = vadd.f32 0.0, %v5542
        %v5544 = vpop.f32.mrb[0].mxu0
        %v5545 = vpop.f32.mrb[0].mxu0
        %v5546 = vadd.f32 0.0, %v5545
        %v5547 = vpop.f32.mrb[0].mxu0
        %5548 = vmatprep.mubr.bf16.mxu0 0
        %5549 = vmatmul.mubr.bf16.gmra.mrb[0].mxu0 %v5488
        %v5550 = vpop.f32.mrb[0].mxu0
        %v5551 = vadd.f32 0.0, %v5550
        %v5552 = vpop.f32.mrb[0].mxu0
        %v5553 = vpop.f32.mrb[0].mxu0
        %v5554 = vadd.f32 0.0, %v5553
        %v5555 = vpop.f32.mrb[0].mxu0
        %5556 = vmatprep.mubr.bf16.mxu0 0
        %5557 = vmatmul.mubr.bf16.gmra.mrb[0].mxu0 %v5491
        %v5558 = vpop.f32.mrb[0].mxu0
        %v5559 = vadd.f32 0.0, %v5558
        %v5560 = vpop.f32.mrb[0].mxu0
        %v5561 = vpop.f32.mrb[0].mxu0
        %v5562 = vadd.f32 0.0, %v5561
        %v5563 = vpop.f32.mrb[0].mxu0
        %5564 = vmatprep.mubr.bf16.mxu0 0
        %5565 = vmatmul.mubr.bf16.gmra.mrb[0].mxu0 %v5494
        %v5566 = vpop.f32.mrb[0].mxu0
        %v5567 = vadd.f32 0.0, %v5566
        %v5568 = vpop.f32.mrb[0].mxu0
        %v5569 = vpop.f32.mrb[0].mxu0
        %v5570 = vadd.f32 0.0, %v5569
        %v5571 = vpop.f32.mrb[0].mxu0
        %5572 = vmatprep.mubr.bf16.mxu0 0
        %5573 = vmatmul.mubr.bf16.gmra.mrb[0].mxu0 %v5497
        %v5574 = vpop.f32.mrb[0].mxu0
        %v5575 = vadd.f32 0.0, %v5574
        %v5576 = vpop.f32.mrb[0].mxu0
        %v5577 = vpop.f32.mrb[0].mxu0
        %v5578 = vadd.f32 0.0, %v5577
        %v5579 = vpop.f32.mrb[0].mxu0
        %5580 = vmatprep.mubr.bf16.mxu0 0
        %5581 = vmatmul.mubr.bf16.gmra.mrb[0].mxu0 %v5500
        %v5582 = vpop.f32.mrb[0].mxu0
        %v5583 = vadd.f32 0.0, %v5582
        %v5584 = vpop.f32.mrb[0].mxu0
        %v5585 = vpop.f32.mrb[0].mxu0
        %v5586 = vadd.f32 0.0, %v5585
        %v5587 = vpop.f32.mrb[0].mxu0
        %5588 = vmatprep.mubr.bf16.mxu0 0
        %5589 = vmatmul.mubr.bf16.gmra.mrb[0].mxu0 %v5503
        %v5590 = vpop.f32.mrb[0].mxu0
        %v5591 = vadd.f32 0.0, %v5590
        %v5592 = vpop.f32.mrb[0].mxu0
        %v5593 = vpop.f32.mrb[0].mxu0
        %v5594 = vadd.f32 0.0, %v5593
        %v5595 = vpop.f32.mrb[0].mxu0
        %5596 = vmatprep.mubr.bf16.mxu0 0
        %5597 = vmatmul.mubr.bf16.gmra.mrb[0].mxu0 %v5506
        %v5598 = vpop.f32.mrb[0].mxu0
        %v5599 = vadd.f32 0.0, %v5598
        %v5600 = vpop.f32.mrb[0].mxu0
        %v5601 = vpop.f32.mrb[0].mxu0
        %v5602 = vadd.f32 0.0, %v5601
        %v5603 = vpop.f32.mrb[0].mxu0
        %5604 = vdwg.mxu0
        %v5606 = vsel %vm1319, %v5444, 0
        %v5609 = vsel %vm1319, %v5445, 0
        %v5612 = vsel %vm1319, %v5446, 0
        %v5615 = vsel %vm1319, %v5447, 0
        %v5618 = vsel %vm1319, %v5448, 0
        %v5621 = vsel %vm1319, %v5449, 0
        %v5624 = vsel %vm1319, %v5450, 0
        %v5627 = vsel %vm1319, %v5451, 0
        %5629 = vmatprep.subr.bf16.mxu0 0
        %5630 = vmatpush1.bf16.msra.mxu0 %v1230
        %5631 = vmatprep.subr.bf16.mxu0 0
        %5632 = vmatpush1.bf16.msra.mxu0 0
        %5633 = vmatprep.subr.bf16.mxu0 0
        %5634 = vmatpush1.bf16.msra.mxu0 0
        %5635 = vmatprep.subr.bf16.mxu0 0
        %5636 = vmatpush1.bf16.msra.mxu0 0
        %5637 = vmatprep.subr.bf16.mxu0 0
        %5638 = vmatpush1.bf16.msra.mxu0 0
        %5639 = vmatprep.subr.bf16.mxu0 0
        %5640 = vmatpush1.bf16.msra.mxu0 0
        %5641 = vmatprep.subr.bf16.mxu0 0
        %5642 = vmatpush1.bf16.msra.mxu0 0
        %5643 = vmatprep.subr.bf16.mxu0 0
        %5644 = vmatpush1.bf16.msra.mxu0 0
        %5645 = vmatprep.subr.bf16.mxu0 0
        %5646 = vmatpush1.bf16.msra.mxu0 0
        %5647 = vmatprep.subr.bf16.mxu0 0
        %5648 = vmatpush1.bf16.msra.mxu0 0
        %5649 = vmatprep.subr.bf16.mxu0 0
        %5650 = vmatpush1.bf16.msra.mxu0 0
        %5651 = vmatprep.subr.bf16.mxu0 0
        %5652 = vmatpush1.bf16.msra.mxu0 0
        %5653 = vmatprep.subr.bf16.mxu0 0
        %5654 = vmatpush1.bf16.msra.mxu0 0
        %5655 = vmatprep.subr.bf16.mxu0 0
        %5656 = vmatpush1.bf16.msra.mxu0 0
        %5657 = vmatprep.subr.bf16.mxu0 0
        %5658 = vmatpush1.bf16.msra.mxu0 0
        %5659 = vmatprep.subr.bf16.mxu0 0
        %5660 = vmatpush1.bf16.msra.mxu0 0
        %5661 = vmatprep.mubr.bf16.mxu0 0
        %5662 = vmatmul.mubr.bf16.gmra.mrb[0].mxu0 %v5606
        %v5663 = vpop.f32.mrb[0].mxu0
        %v5664 = vadd.f32 0.0, %v5663
        %v5665 = vpop.f32.mrb[0].mxu0
        %v5666 = vpop.f32.mrb[0].mxu0
        %v5667 = vadd.f32 0.0, %v5666
        %v5668 = vpop.f32.mrb[0].mxu0
        %5669 = vmatprep.mubr.bf16.mxu0 0
        %5670 = vmatmul.mubr.bf16.gmra.mrb[0].mxu0 %v5609
        %v5671 = vpop.f32.mrb[0].mxu0
        %v5672 = vadd.f32 0.0, %v5671
        %v5673 = vpop.f32.mrb[0].mxu0
        %v5674 = vpop.f32.mrb[0].mxu0
        %v5675 = vadd.f32 0.0, %v5674
        %v5676 = vpop.f32.mrb[0].mxu0
        %5677 = vmatprep.mubr.bf16.mxu0 0
        %5678 = vmatmul.mubr.bf16.gmra.mrb[0].mxu0 %v5612
        %v5679 = vpop.f32.mrb[0].mxu0
        %v5680 = vadd.f32 0.0, %v5679
        %v5681 = vpop.f32.mrb[0].mxu0
        %v5682 = vpop.f32.mrb[0].mxu0
        %v5683 = vadd.f32 0.0, %v5682
        %v5684 = vpop.f32.mrb[0].mxu0
        %5685 = vmatprep.mubr.bf16.mxu0 0
        %5686 = vmatmul.mubr.bf16.gmra.mrb[0].mxu0 %v5615
        %v5687 = vpop.f32.mrb[0].mxu0
        %v5688 = vadd.f32 0.0, %v5687
        %v5689 = vpop.f32.mrb[0].mxu0
        %v5690 = vpop.f32.mrb[0].mxu0
        %v5691 = vadd.f32 0.0, %v5690
        %v5692 = vpop.f32.mrb[0].mxu0
        %5693 = vmatprep.mubr.bf16.mxu0 0
        %5694 = vmatmul.mubr.bf16.gmra.mrb[0].mxu0 %v5618
        %v5695 = vpop.f32.mrb[0].mxu0
        %v5696 = vadd.f32 0.0, %v5695
        %v5697 = vpop.f32.mrb[0].mxu0
        %v5698 = vpop.f32.mrb[0].mxu0
        %v5699 = vadd.f32 0.0, %v5698
        %v5700 = vpop.f32.mrb[0].mxu0
        %5701 = vmatprep.mubr.bf16.mxu0 0
        %5702 = vmatmul.mubr.bf16.gmra.mrb[0].mxu0 %v5621
        %v5703 = vpop.f32.mrb[0].mxu0
        %v5704 = vadd.f32 0.0, %v5703
        %v5705 = vpop.f32.mrb[0].mxu0
        %v5706 = vpop.f32.mrb[0].mxu0
        %v5707 = vadd.f32 0.0, %v5706
        %v5708 = vpop.f32.mrb[0].mxu0
        %5709 = vmatprep.mubr.bf16.mxu0 0
        %5710 = vmatmul.mubr.bf16.gmra.mrb[0].mxu0 %v5624
        %v5711 = vpop.f32.mrb[0].mxu0
        %v5712 = vadd.f32 0.0, %v5711
        %v5713 = vpop.f32.mrb[0].mxu0
        %v5714 = vpop.f32.mrb[0].mxu0
        %v5715 = vadd.f32 0.0, %v5714
        %v5716 = vpop.f32.mrb[0].mxu0
        %5717 = vmatprep.mubr.bf16.mxu0 0
        %5718 = vmatmul.mubr.bf16.gmra.mrb[0].mxu0 %v5627
        %v5719 = vpop.f32.mrb[0].mxu0
        %v5720 = vadd.f32 0.0, %v5719
        %v5721 = vpop.f32.mrb[0].mxu0
        %v5722 = vpop.f32.mrb[0].mxu0
        %v5723 = vadd.f32 0.0, %v5722
        %v5724 = vpop.f32.mrb[0].mxu0
        %5725 = vdwg.mxu0
        %v5727 = vsel %vm1319, %v5460, 0
        %v5730 = vsel %vm1319, %v5461, 0
        %v5733 = vsel %vm1319, %v5462, 0
        %v5736 = vsel %vm1319, %v5463, 0
        %v5739 = vsel %vm1319, %v5464, 0
        %v5742 = vsel %vm1319, %v5465, 0
        %v5745 = vsel %vm1319, %v5466, 0
        %v5748 = vsel %vm1319, %v5467, 0
        %5750 = vmatprep.subr.bf16.mxu0 0
        %5751 = vmatpush1.bf16.msra.mxu0 %v1234
        %5752 = vmatprep.subr.bf16.mxu0 0
        %5753 = vmatpush1.bf16.msra.mxu0 0
        %5754 = vmatprep.subr.bf16.mxu0 0
        %5755 = vmatpush1.bf16.msra.mxu0 0
        %5756 = vmatprep.subr.bf16.mxu0 0
        %5757 = vmatpush1.bf16.msra.mxu0 0
        %5758 = vmatprep.subr.bf16.mxu0 0
        %5759 = vmatpush1.bf16.msra.mxu0 0
        %5760 = vmatprep.subr.bf16.mxu0 0
        %5761 = vmatpush1.bf16.msra.mxu0 0
        %5762 = vmatprep.subr.bf16.mxu0 0
        %5763 = vmatpush1.bf16.msra.mxu0 0
        %5764 = vmatprep.subr.bf16.mxu0 0
        %5765 = vmatpush1.bf16.msra.mxu0 0
        %5766 = vmatprep.subr.bf16.mxu0 0
        %5767 = vmatpush1.bf16.msra.mxu0 0
        %5768 = vmatprep.subr.bf16.mxu0 0
        %5769 = vmatpush1.bf16.msra.mxu0 0
        %5770 = vmatprep.subr.bf16.mxu0 0
        %5771 = vmatpush1.bf16.msra.mxu0 0
        %5772 = vmatprep.subr.bf16.mxu0 0
        %5773 = vmatpush1.bf16.msra.mxu0 0
        %5774 = vmatprep.subr.bf16.mxu0 0
        %5775 = vmatpush1.bf16.msra.mxu0 0
        %5776 = vmatprep.subr.bf16.mxu0 0
        %5777 = vmatpush1.bf16.msra.mxu0 0
        %5778 = vmatprep.subr.bf16.mxu0 0
        %5779 = vmatpush1.bf16.msra.mxu0 0
        %5780 = vmatprep.subr.bf16.mxu0 0
        %5781 = vmatpush1.bf16.msra.mxu0 0
        %5782 = vmatprep.mubr.bf16.mxu0 0
        %5783 = vmatmul.mubr.bf16.gmra.mrb[0].mxu0 %v5727
        %v5784 = vpop.f32.mrb[0].mxu0
        %v5785 = vadd.f32 0.0, %v5784
        %v5786 = vpop.f32.mrb[0].mxu0
        %v5787 = vpop.f32.mrb[0].mxu0
        %v5788 = vadd.f32 0.0, %v5787
        %v5789 = vpop.f32.mrb[0].mxu0
        %5790 = vmatprep.mubr.bf16.mxu0 0
        %5791 = vmatmul.mubr.bf16.gmra.mrb[0].mxu0 %v5730
        %v5792 = vpop.f32.mrb[0].mxu0
        %v5793 = vadd.f32 0.0, %v5792
        %v5794 = vpop.f32.mrb[0].mxu0
        %v5795 = vpop.f32.mrb[0].mxu0
        %v5796 = vadd.f32 0.0, %v5795
        %v5797 = vpop.f32.mrb[0].mxu0
        %5798 = vmatprep.mubr.bf16.mxu0 0
        %5799 = vmatmul.mubr.bf16.gmra.mrb[0].mxu0 %v5733
        %v5800 = vpop.f32.mrb[0].mxu0
        %v5801 = vadd.f32 0.0, %v5800
        %v5802 = vpop.f32.mrb[0].mxu0
        %v5803 = vpop.f32.mrb[0].mxu0
        %v5804 = vadd.f32 0.0, %v5803
        %v5805 = vpop.f32.mrb[0].mxu0
        %5806 = vmatprep.mubr.bf16.mxu0 0
        %5807 = vmatmul.mubr.bf16.gmra.mrb[0].mxu0 %v5736
        %v5808 = vpop.f32.mrb[0].mxu0
        %v5809 = vadd.f32 0.0, %v5808
        %v5810 = vpop.f32.mrb[0].mxu0
        %v5811 = vpop.f32.mrb[0].mxu0
        %v5812 = vadd.f32 0.0, %v5811
        %v5813 = vpop.f32.mrb[0].mxu0
        %5814 = vmatprep.mubr.bf16.mxu0 0
        %5815 = vmatmul.mubr.bf16.gmra.mrb[0].mxu0 %v5739
        %v5816 = vpop.f32.mrb[0].mxu0
        %v5817 = vadd.f32 0.0, %v5816
        %v5818 = vpop.f32.mrb[0].mxu0
        %v5819 = vpop.f32.mrb[0].mxu0
        %v5820 = vadd.f32 0.0, %v5819
        %v5821 = vpop.f32.mrb[0].mxu0
        %5822 = vmatprep.mubr.bf16.mxu0 0
        %5823 = vmatmul.mubr.bf16.gmra.mrb[0].mxu0 %v5742
        %v5824 = vpop.f32.mrb[0].mxu0
        %v5825 = vadd.f32 0.0, %v5824
        %v5826 = vpop.f32.mrb[0].mxu0
        %v5827 = vpop.f32.mrb[0].mxu0
        %v5828 = vadd.f32 0.0, %v5827
        %v5829 = vpop.f32.mrb[0].mxu0
        %5830 = vmatprep.mubr.bf16.mxu0 0
        %5831 = vmatmul.mubr.bf16.gmra.mrb[0].mxu0 %v5745
        %v5832 = vpop.f32.mrb[0].mxu0
        %v5833 = vadd.f32 0.0, %v5832
        %v5834 = vpop.f32.mrb[0].mxu0
        %v5835 = vpop.f32.mrb[0].mxu0
        %v5836 = vadd.f32 0.0, %v5835
        %v5837 = vpop.f32.mrb[0].mxu0
        %5838 = vmatprep.mubr.bf16.mxu0 0
        %5839 = vmatmul.mubr.bf16.gmra.mrb[0].mxu0 %v5748
        %v5840 = vpop.f32.mrb[0].mxu0
        %v5841 = vadd.f32 0.0, %v5840
        %v5842 = vpop.f32.mrb[0].mxu0
        %v5843 = vpop.f32.mrb[0].mxu0
        %v5844 = vadd.f32 0.0, %v5843
        %v5845 = vpop.f32.mrb[0].mxu0
        %5846 = vdwg.mxu0
        %v5848 = vsel %vm1319, %v5476, 0
        %v5851 = vsel %vm1319, %v5477, 0
        %v5854 = vsel %vm1319, %v5478, 0
        %v5857 = vsel %vm1319, %v5479, 0
        %v5860 = vsel %vm1319, %v5480, 0
        %v5863 = vsel %vm1319, %v5481, 0
        %v5866 = vsel %vm1319, %v5482, 0
        %v5869 = vsel %vm1319, %v5483, 0
        %5871 = vmatprep.subr.bf16.mxu0 0
        %5872 = vmatpush1.bf16.msra.mxu0 %v1238
        %5873 = vmatprep.subr.bf16.mxu0 0
        %5874 = vmatpush1.bf16.msra.mxu0 0
        %5875 = vmatprep.subr.bf16.mxu0 0
        %5876 = vmatpush1.bf16.msra.mxu0 0
        %5877 = vmatprep.subr.bf16.mxu0 0
        %5878 = vmatpush1.bf16.msra.mxu0 0
        %5879 = vmatprep.subr.bf16.mxu0 0
        %5880 = vmatpush1.bf16.msra.mxu0 0
        %5881 = vmatprep.subr.bf16.mxu0 0
        %5882 = vmatpush1.bf16.msra.mxu0 0
        %5883 = vmatprep.subr.bf16.mxu0 0
        %5884 = vmatpush1.bf16.msra.mxu0 0
        %5885 = vmatprep.subr.bf16.mxu0 0
        %5886 = vmatpush1.bf16.msra.mxu0 0
        %5887 = vmatprep.subr.bf16.mxu0 0
        %5888 = vmatpush1.bf16.msra.mxu0 0
        %5889 = vmatprep.subr.bf16.mxu0 0
        %5890 = vmatpush1.bf16.msra.mxu0 0
        %5891 = vmatprep.subr.bf16.mxu0 0
        %5892 = vmatpush1.bf16.msra.mxu0 0
        %5893 = vmatprep.subr.bf16.mxu0 0
        %5894 = vmatpush1.bf16.msra.mxu0 0
        %5895 = vmatprep.subr.bf16.mxu0 0
        %5896 = vmatpush1.bf16.msra.mxu0 0
        %5897 = vmatprep.subr.bf16.mxu0 0
        %5898 = vmatpush1.bf16.msra.mxu0 0
        %5899 = vmatprep.subr.bf16.mxu0 0
        %5900 = vmatpush1.bf16.msra.mxu0 0
        %5901 = vmatprep.subr.bf16.mxu0 0
        %5902 = vmatpush1.bf16.msra.mxu0 0
        %5903 = vmatprep.mubr.bf16.mxu0 0
        %5904 = vmatmul.mubr.bf16.gmra.mrb[0].mxu0 %v5848
        %v5905 = vpop.f32.mrb[0].mxu0
        %v5906 = vadd.f32 0.0, %v5905
        %v5907 = vpop.f32.mrb[0].mxu0
        %v5908 = vpop.f32.mrb[0].mxu0
        %v5909 = vadd.f32 0.0, %v5908
        %v5910 = vpop.f32.mrb[0].mxu0
        %5911 = vmatprep.mubr.bf16.mxu0 0
        %5912 = vmatmul.mubr.bf16.gmra.mrb[0].mxu0 %v5851
        %v5913 = vpop.f32.mrb[0].mxu0
        %v5914 = vadd.f32 0.0, %v5913
        %v5915 = vpop.f32.mrb[0].mxu0
        %v5916 = vpop.f32.mrb[0].mxu0
        %v5917 = vadd.f32 0.0, %v5916
        %v5918 = vpop.f32.mrb[0].mxu0
        %5919 = vmatprep.mubr.bf16.mxu0 0
        %5920 = vmatmul.mubr.bf16.gmra.mrb[0].mxu0 %v5854
        %v5921 = vpop.f32.mrb[0].mxu0
        %v5922 = vadd.f32 0.0, %v5921
        %v5923 = vpop.f32.mrb[0].mxu0
        %v5924 = vpop.f32.mrb[0].mxu0
        %v5925 = vadd.f32 0.0, %v5924
        %v5926 = vpop.f32.mrb[0].mxu0
        %5927 = vmatprep.mubr.bf16.mxu0 0
        %5928 = vmatmul.mubr.bf16.gmra.mrb[0].mxu0 %v5857
        %v5929 = vpop.f32.mrb[0].mxu0
        %v5930 = vadd.f32 0.0, %v5929
        %v5931 = vpop.f32.mrb[0].mxu0
        %v5932 = vpop.f32.mrb[0].mxu0
        %v5933 = vadd.f32 0.0, %v5932
        %v5934 = vpop.f32.mrb[0].mxu0
        %5935 = vmatprep.mubr.bf16.mxu0 0
        %5936 = vmatmul.mubr.bf16.gmra.mrb[0].mxu0 %v5860
        %v5937 = vpop.f32.mrb[0].mxu0
        %v5938 = vadd.f32 0.0, %v5937
        %v5939 = vpop.f32.mrb[0].mxu0
        %v5940 = vpop.f32.mrb[0].mxu0
        %v5941 = vadd.f32 0.0, %v5940
        %v5942 = vpop.f32.mrb[0].mxu0
        %5943 = vmatprep.mubr.bf16.mxu0 0
        %5944 = vmatmul.mubr.bf16.gmra.mrb[0].mxu0 %v5863
        %v5945 = vpop.f32.mrb[0].mxu0
        %v5946 = vadd.f32 0.0, %v5945
        %v5947 = vpop.f32.mrb[0].mxu0
        %v5948 = vpop.f32.mrb[0].mxu0
        %v5949 = vadd.f32 0.0, %v5948
        %v5950 = vpop.f32.mrb[0].mxu0
        %5951 = vmatprep.mubr.bf16.mxu0 0
        %5952 = vmatmul.mubr.bf16.gmra.mrb[0].mxu0 %v5866
        %v5953 = vpop.f32.mrb[0].mxu0
        %v5954 = vadd.f32 0.0, %v5953
        %v5955 = vpop.f32.mrb[0].mxu0
        %v5956 = vpop.f32.mrb[0].mxu0
        %v5957 = vadd.f32 0.0, %v5956
        %v5958 = vpop.f32.mrb[0].mxu0
        %5959 = vmatprep.mubr.bf16.mxu0 0
        %5960 = vmatmul.mubr.bf16.gmra.mrb[0].mxu0 %v5869
        %v5961 = vpop.f32.mrb[0].mxu0
        %v5962 = vadd.f32 0.0, %v5961
        %v5963 = vpop.f32.mrb[0].mxu0
        %v5964 = vpop.f32.mrb[0].mxu0
        %v5965 = vadd.f32 0.0, %v5964
        %v5966 = vpop.f32.mrb[0].mxu0
        %5967 = vdwg.mxu0
        %v5968 = vmul.f32 %v5543, 0.25
        %v5969 = vmul.f32 %v5546, 0.25
        %v5970 = vmul.f32 %v5551, 0.25
        %v5971 = vmul.f32 %v5554, 0.25
        %v5972 = vmul.f32 %v5559, 0.25
        %v5973 = vmul.f32 %v5562, 0.25
        %v5974 = vmul.f32 %v5567, 0.25
        %v5975 = vmul.f32 %v5570, 0.25
        %v5976 = vmul.f32 %v5575, 0.25
        %v5977 = vmul.f32 %v5578, 0.25
        %v5978 = vmul.f32 %v5583, 0.25
        %v5979 = vmul.f32 %v5586, 0.25
        %v5980 = vmul.f32 %v5591, 0.25
        %v5981 = vmul.f32 %v5594, 0.25
        %v5982 = vmul.f32 %v5599, 0.25
        %v5983 = vmul.f32 %v5602, 0.25
        %v5984 = vmul.f32 %v5664, 0.25
        %v5985 = vmul.f32 %v5667, 0.25
        %v5986 = vmul.f32 %v5672, 0.25
        %v5987 = vmul.f32 %v5675, 0.25
        %v5988 = vmul.f32 %v5680, 0.25
        %v5989 = vmul.f32 %v5683, 0.25
        %v5990 = vmul.f32 %v5688, 0.25
        %v5991 = vmul.f32 %v5691, 0.25
        %v5992 = vmul.f32 %v5696, 0.25
        %v5993 = vmul.f32 %v5699, 0.25
        %v5994 = vmul.f32 %v5704, 0.25
        %v5995 = vmul.f32 %v5707, 0.25
        %v5996 = vmul.f32 %v5712, 0.25
        %v5997 = vmul.f32 %v5715, 0.25
        %v5998 = vmul.f32 %v5720, 0.25
        %v5999 = vmul.f32 %v5723, 0.25
        %v6000 = vmul.f32 %v5785, 0.25
        %v6001 = vmul.f32 %v5788, 0.25
        %v6002 = vmul.f32 %v5793, 0.25
        %v6003 = vmul.f32 %v5796, 0.25
        %v6004 = vmul.f32 %v5801, 0.25
        %v6005 = vmul.f32 %v5804, 0.25
        %v6006 = vmul.f32 %v5809, 0.25
        %v6007 = vmul.f32 %v5812, 0.25
        %v6008 = vmul.f32 %v5817, 0.25
        %v6009 = vmul.f32 %v5820, 0.25
        %v6010 = vmul.f32 %v5825, 0.25
        %v6011 = vmul.f32 %v5828, 0.25
        %v6012 = vmul.f32 %v5833, 0.25
        %v6013 = vmul.f32 %v5836, 0.25
        %v6014 = vmul.f32 %v5841, 0.25
        %v6015 = vmul.f32 %v5844, 0.25
        %v6016 = vmul.f32 %v5906, 0.25
        %v6017 = vmul.f32 %v5909, 0.25
        %v6018 = vmul.f32 %v5914, 0.25
        %v6019 = vmul.f32 %v5917, 0.25
        %v6020 = vmul.f32 %v5922, 0.25
        %v6021 = vmul.f32 %v5925, 0.25
        %v6022 = vmul.f32 %v5930, 0.25
        %v6023 = vmul.f32 %v5933, 0.25
        %v6024 = vmul.f32 %v5938, 0.25
        %v6025 = vmul.f32 %v5941, 0.25
        %v6026 = vmul.f32 %v5946, 0.25
        %v6027 = vmul.f32 %v5949, 0.25
        %v6028 = vmul.f32 %v5954, 0.25
        %v6029 = vmul.f32 %v5957, 0.25
        %v6030 = vmul.f32 %v5962, 0.25
        %v6031 = vmul.f32 %v5965, 0.25
        %6032 = vmax.xlane.f32.xlu0 %v5968
        %v6033 = vpop.xlane.xlu0 %6032
        %6034 = vmax.xlane.f32.xlu0 %v5969
        %v6035 = vpop.xlane.xlu0 %6034
        %6036 = vmax.xlane.f32.xlu0 %v5970
        %v6037 = vpop.xlane.xlu0 %6036
        %6038 = vmax.xlane.f32.xlu0 %v5971
        %v6039 = vpop.xlane.xlu0 %6038
        %6040 = vmax.xlane.f32.xlu0 %v5972
        %v6041 = vpop.xlane.xlu0 %6040
        %6042 = vmax.xlane.f32.xlu0 %v5973
        %v6043 = vpop.xlane.xlu0 %6042
        %6044 = vmax.xlane.f32.xlu0 %v5974
        %v6045 = vpop.xlane.xlu0 %6044
        %6046 = vmax.xlane.f32.xlu0 %v5975
        %v6047 = vpop.xlane.xlu0 %6046
        %6048 = vmax.xlane.f32.xlu0 %v5976
        %v6049 = vpop.xlane.xlu0 %6048
        %6050 = vmax.xlane.f32.xlu0 %v5977
        %v6051 = vpop.xlane.xlu0 %6050
        %6052 = vmax.xlane.f32.xlu0 %v5978
        %v6053 = vpop.xlane.xlu0 %6052
        %6054 = vmax.xlane.f32.xlu0 %v5979
        %v6055 = vpop.xlane.xlu0 %6054
        %6056 = vmax.xlane.f32.xlu0 %v5980
        %v6057 = vpop.xlane.xlu0 %6056
        %6058 = vmax.xlane.f32.xlu0 %v5981
        %v6059 = vpop.xlane.xlu0 %6058
        %6060 = vmax.xlane.f32.xlu0 %v5982
        %v6061 = vpop.xlane.xlu0 %6060
        %6062 = vmax.xlane.f32.xlu0 %v5983
        %v6063 = vpop.xlane.xlu0 %6062
        %6064 = vmax.xlane.f32.xlu0 %v5984
        %v6065 = vpop.xlane.xlu0 %6064
        %6066 = vmax.xlane.f32.xlu0 %v5985
        %v6067 = vpop.xlane.xlu0 %6066
        %6068 = vmax.xlane.f32.xlu0 %v5986
        %v6069 = vpop.xlane.xlu0 %6068
        %6070 = vmax.xlane.f32.xlu0 %v5987
        %v6071 = vpop.xlane.xlu0 %6070
        %6072 = vmax.xlane.f32.xlu0 %v5988
        %v6073 = vpop.xlane.xlu0 %6072
        %6074 = vmax.xlane.f32.xlu0 %v5989
        %v6075 = vpop.xlane.xlu0 %6074
        %6076 = vmax.xlane.f32.xlu0 %v5990
        %v6077 = vpop.xlane.xlu0 %6076
        %6078 = vmax.xlane.f32.xlu0 %v5991
        %v6079 = vpop.xlane.xlu0 %6078
        %6080 = vmax.xlane.f32.xlu0 %v5992
        %v6081 = vpop.xlane.xlu0 %6080
        %6082 = vmax.xlane.f32.xlu0 %v5993
        %v6083 = vpop.xlane.xlu0 %6082
        %6084 = vmax.xlane.f32.xlu0 %v5994
        %v6085 = vpop.xlane.xlu0 %6084
        %6086 = vmax.xlane.f32.xlu0 %v5995
        %v6087 = vpop.xlane.xlu0 %6086
        %6088 = vmax.xlane.f32.xlu0 %v5996
        %v6089 = vpop.xlane.xlu0 %6088
        %6090 = vmax.xlane.f32.xlu0 %v5997
        %v6091 = vpop.xlane.xlu0 %6090
        %6092 = vmax.xlane.f32.xlu0 %v5998
        %v6093 = vpop.xlane.xlu0 %6092
        %6094 = vmax.xlane.f32.xlu0 %v5999
        %v6095 = vpop.xlane.xlu0 %6094
        %6096 = vmax.xlane.f32.xlu0 %v6000
        %v6097 = vpop.xlane.xlu0 %6096
        %6098 = vmax.xlane.f32.xlu0 %v6001
        %v6099 = vpop.xlane.xlu0 %6098
        %6100 = vmax.xlane.f32.xlu0 %v6002
        %v6101 = vpop.xlane.xlu0 %6100
        %6102 = vmax.xlane.f32.xlu0 %v6003
        %v6103 = vpop.xlane.xlu0 %6102
        %6104 = vmax.xlane.f32.xlu0 %v6004
        %v6105 = vpop.xlane.xlu0 %6104
        %6106 = vmax.xlane.f32.xlu0 %v6005
        %v6107 = vpop.xlane.xlu0 %6106
        %6108 = vmax.xlane.f32.xlu0 %v6006
        %v6109 = vpop.xlane.xlu0 %6108
        %6110 = vmax.xlane.f32.xlu0 %v6007
        %v6111 = vpop.xlane.xlu0 %6110
        %6112 = vmax.xlane.f32.xlu0 %v6008
        %v6113 = vpop.xlane.xlu0 %6112
        %6114 = vmax.xlane.f32.xlu0 %v6009
        %v6115 = vpop.xlane.xlu0 %6114
        %6116 = vmax.xlane.f32.xlu0 %v6010
        %v6117 = vpop.xlane.xlu0 %6116
        %6118 = vmax.xlane.f32.xlu0 %v6011
        %v6119 = vpop.xlane.xlu0 %6118
        %6120 = vmax.xlane.f32.xlu0 %v6012
        %v6121 = vpop.xlane.xlu0 %6120
        %6122 = vmax.xlane.f32.xlu0 %v6013
        %v6123 = vpop.xlane.xlu0 %6122
        %6124 = vmax.xlane.f32.xlu0 %v6014
        %v6125 = vpop.xlane.xlu0 %6124
        %6126 = vmax.xlane.f32.xlu0 %v6015
        %v6127 = vpop.xlane.xlu0 %6126
        %6128 = vmax.xlane.f32.xlu0 %v6016
        %v6129 = vpop.xlane.xlu0 %6128
        %6130 = vmax.xlane.f32.xlu0 %v6017
        %v6131 = vpop.xlane.xlu0 %6130
        %6132 = vmax.xlane.f32.xlu0 %v6018
        %v6133 = vpop.xlane.xlu0 %6132
        %6134 = vmax.xlane.f32.xlu0 %v6019
        %v6135 = vpop.xlane.xlu0 %6134
        %6136 = vmax.xlane.f32.xlu0 %v6020
        %v6137 = vpop.xlane.xlu0 %6136
        %6138 = vmax.xlane.f32.xlu0 %v6021
        %v6139 = vpop.xlane.xlu0 %6138
        %6140 = vmax.xlane.f32.xlu0 %v6022
        %v6141 = vpop.xlane.xlu0 %6140
        %6142 = vmax.xlane.f32.xlu0 %v6023
        %v6143 = vpop.xlane.xlu0 %6142
        %6144 = vmax.xlane.f32.xlu0 %v6024
        %v6145 = vpop.xlane.xlu0 %6144
        %6146 = vmax.xlane.f32.xlu0 %v6025
        %v6147 = vpop.xlane.xlu0 %6146
        %6148 = vmax.xlane.f32.xlu0 %v6026
        %v6149 = vpop.xlane.xlu0 %6148
        %6150 = vmax.xlane.f32.xlu0 %v6027
        %v6151 = vpop.xlane.xlu0 %6150
        %6152 = vmax.xlane.f32.xlu0 %v6028
        %v6153 = vpop.xlane.xlu0 %6152
        %6154 = vmax.xlane.f32.xlu0 %v6029
        %v6155 = vpop.xlane.xlu0 %6154
        %6156 = vmax.xlane.f32.xlu0 %v6030
        %v6157 = vpop.xlane.xlu0 %6156
        %6158 = vmax.xlane.f32.xlu0 %v6031
        %v6159 = vpop.xlane.xlu0 %6158
        %v6160 = vsub.f32 %v5968, %v6033
        %v6161 = vsub.f32 %v5969, %v6035
        %v6162 = vsub.f32 %v5970, %v6037
        %v6163 = vsub.f32 %v5971, %v6039
        %v6164 = vsub.f32 %v5972, %v6041
        %v6165 = vsub.f32 %v5973, %v6043
        %v6166 = vsub.f32 %v5974, %v6045
        %v6167 = vsub.f32 %v5975, %v6047
        %v6168 = vsub.f32 %v5976, %v6049
        %v6169 = vsub.f32 %v5977, %v6051
        %v6170 = vsub.f32 %v5978, %v6053
        %v6171 = vsub.f32 %v5979, %v6055
        %v6172 = vsub.f32 %v5980, %v6057
        %v6173 = vsub.f32 %v5981, %v6059
        %v6174 = vsub.f32 %v5982, %v6061
        %v6175 = vsub.f32 %v5983, %v6063
        %v6176 = vsub.f32 %v5984, %v6065
        %v6177 = vsub.f32 %v5985, %v6067
        %v6178 = vsub.f32 %v5986, %v6069
        %v6179 = vsub.f32 %v5987, %v6071
        %v6180 = vsub.f32 %v5988, %v6073
        %v6181 = vsub.f32 %v5989, %v6075
        %v6182 = vsub.f32 %v5990, %v6077
        %v6183 = vsub.f32 %v5991, %v6079
        %v6184 = vsub.f32 %v5992, %v6081
        %v6185 = vsub.f32 %v5993, %v6083
        %v6186 = vsub.f32 %v5994, %v6085
        %v6187 = vsub.f32 %v5995, %v6087
        %v6188 = vsub.f32 %v5996, %v6089
        %v6189 = vsub.f32 %v5997, %v6091
        %v6190 = vsub.f32 %v5998, %v6093
        %v6191 = vsub.f32 %v5999, %v6095
        %v6192 = vsub.f32 %v6000, %v6097
        %v6193 = vsub.f32 %v6001, %v6099
        %v6194 = vsub.f32 %v6002, %v6101
        %v6195 = vsub.f32 %v6003, %v6103
        %v6196 = vsub.f32 %v6004, %v6105
        %v6197 = vsub.f32 %v6005, %v6107
        %v6198 = vsub.f32 %v6006, %v6109
        %v6199 = vsub.f32 %v6007, %v6111
        %v6200 = vsub.f32 %v6008, %v6113
        %v6201 = vsub.f32 %v6009, %v6115
        %v6202 = vsub.f32 %v6010, %v6117
        %v6203 = vsub.f32 %v6011, %v6119
        %v6204 = vsub.f32 %v6012, %v6121
        %v6205 = vsub.f32 %v6013, %v6123
        %v6206 = vsub.f32 %v6014, %v6125
        %v6207 = vsub.f32 %v6015, %v6127
        %v6208 = vsub.f32 %v6016, %v6129
        %v6209 = vsub.f32 %v6017, %v6131
        %v6210 = vsub.f32 %v6018, %v6133
        %v6211 = vsub.f32 %v6019, %v6135
        %v6212 = vsub.f32 %v6020, %v6137
        %v6213 = vsub.f32 %v6021, %v6139
        %v6214 = vsub.f32 %v6022, %v6141
        %v6215 = vsub.f32 %v6023, %v6143
        %v6216 = vsub.f32 %v6024, %v6145
        %v6217 = vsub.f32 %v6025, %v6147
        %v6218 = vsub.f32 %v6026, %v6149
        %v6219 = vsub.f32 %v6027, %v6151
        %v6220 = vsub.f32 %v6028, %v6153
        %v6221 = vsub.f32 %v6029, %v6155
        %v6222 = vsub.f32 %v6030, %v6157
        %v6223 = vsub.f32 %v6031, %v6159
        %v6224 = vmul.f32 %v6160, 1.442695
        %v6225 = vpow.pop %v6224
        %v6226 = vmul.f32 %v6161, 1.442695
        %v6227 = vpow.pop %v6226
        %v6228 = vmul.f32 %v6162, 1.442695
        %v6229 = vpow.pop %v6228
        %v6230 = vmul.f32 %v6163, 1.442695
        %v6231 = vpow.pop %v6230
        %v6232 = vmul.f32 %v6164, 1.442695
        %v6233 = vpow.pop %v6232
        %v6234 = vmul.f32 %v6165, 1.442695
        %v6235 = vpow.pop %v6234
        %v6236 = vmul.f32 %v6166, 1.442695
        %v6237 = vpow.pop %v6236
        %v6238 = vmul.f32 %v6167, 1.442695
        %v6239 = vpow.pop %v6238
        %v6240 = vmul.f32 %v6168, 1.442695
        %v6241 = vpow.pop %v6240
        %v6242 = vmul.f32 %v6169, 1.442695
        %v6243 = vpow.pop %v6242
        %v6244 = vmul.f32 %v6170, 1.442695
        %v6245 = vpow.pop %v6244
        %v6246 = vmul.f32 %v6171, 1.442695
        %v6247 = vpow.pop %v6246
        %v6248 = vmul.f32 %v6172, 1.442695
        %v6249 = vpow.pop %v6248
        %v6250 = vmul.f32 %v6173, 1.442695
        %v6251 = vpow.pop %v6250
        %v6252 = vmul.f32 %v6174, 1.442695
        %v6253 = vpow.pop %v6252
        %v6254 = vmul.f32 %v6175, 1.442695
        %v6255 = vpow.pop %v6254
        %v6256 = vmul.f32 %v6176, 1.442695
        %v6257 = vpow.pop %v6256
        %v6258 = vmul.f32 %v6177, 1.442695
        %v6259 = vpow.pop %v6258
        %v6260 = vmul.f32 %v6178, 1.442695
        %v6261 = vpow.pop %v6260
        %v6262 = vmul.f32 %v6179, 1.442695
        %v6263 = vpow.pop %v6262
        %v6264 = vmul.f32 %v6180, 1.442695
        %v6265 = vpow.pop %v6264
        %v6266 = vmul.f32 %v6181, 1.442695
        %v6267 = vpow.pop %v6266
        %v6268 = vmul.f32 %v6182, 1.442695
        %v6269 = vpow.pop %v6268
        %v6270 = vmul.f32 %v6183, 1.442695
        %v6271 = vpow.pop %v6270
        %v6272 = vmul.f32 %v6184, 1.442695
        %v6273 = vpow.pop %v6272
        %v6274 = vmul.f32 %v6185, 1.442695
        %v6275 = vpow.pop %v6274
        %v6276 = vmul.f32 %v6186, 1.442695
        %v6277 = vpow.pop %v6276
        %v6278 = vmul.f32 %v6187, 1.442695
        %v6279 = vpow.pop %v6278
        %v6280 = vmul.f32 %v6188, 1.442695
        %v6281 = vpow.pop %v6280
        %v6282 = vmul.f32 %v6189, 1.442695
        %v6283 = vpow.pop %v6282
        %v6284 = vmul.f32 %v6190, 1.442695
        %v6285 = vpow.pop %v6284
        %v6286 = vmul.f32 %v6191, 1.442695
        %v6287 = vpow.pop %v6286
        %v6288 = vmul.f32 %v6192, 1.442695
        %v6289 = vpow.pop %v6288
        %v6290 = vmul.f32 %v6193, 1.442695
        %v6291 = vpow.pop %v6290
        %v6292 = vmul.f32 %v6194, 1.442695
        %v6293 = vpow.pop %v6292
        %v6294 = vmul.f32 %v6195, 1.442695
        %v6295 = vpow.pop %v6294
        %v6296 = vmul.f32 %v6196, 1.442695
        %v6297 = vpow.pop %v6296
        %v6298 = vmul.f32 %v6197, 1.442695
        %v6299 = vpow.pop %v6298
        %v6300 = vmul.f32 %v6198, 1.442695
        %v6301 = vpow.pop %v6300
        %v6302 = vmul.f32 %v6199, 1.442695
        %v6303 = vpow.pop %v6302
        %v6304 = vmul.f32 %v6200, 1.442695
        %v6305 = vpow.pop %v6304
        %v6306 = vmul.f32 %v6201, 1.442695
        %v6307 = vpow.pop %v6306
        %v6308 = vmul.f32 %v6202, 1.442695
        %v6309 = vpow.pop %v6308
        %v6310 = vmul.f32 %v6203, 1.442695
        %v6311 = vpow.pop %v6310
        %v6312 = vmul.f32 %v6204, 1.442695
        %v6313 = vpow.pop %v6312
        %v6314 = vmul.f32 %v6205, 1.442695
        %v6315 = vpow.pop %v6314
        %v6316 = vmul.f32 %v6206, 1.442695
        %v6317 = vpow.pop %v6316
        %v6318 = vmul.f32 %v6207, 1.442695
        %v6319 = vpow.pop %v6318
        %v6320 = vmul.f32 %v6208, 1.442695
        %v6321 = vpow.pop %v6320
        %v6322 = vmul.f32 %v6209, 1.442695
        %v6323 = vpow.pop %v6322
        %v6324 = vmul.f32 %v6210, 1.442695
        %v6325 = vpow.pop %v6324
        %v6326 = vmul.f32 %v6211, 1.442695
        %v6327 = vpow.pop %v6326
        %v6328 = vmul.f32 %v6212, 1.442695
        %v6329 = vpow.pop %v6328
        %v6330 = vmul.f32 %v6213, 1.442695
        %v6331 = vpow.pop %v6330
        %v6332 = vmul.f32 %v6214, 1.442695
        %v6333 = vpow.pop %v6332
        %v6334 = vmul.f32 %v6215, 1.442695
        %v6335 = vpow.pop %v6334
        %v6336 = vmul.f32 %v6216, 1.442695
        %v6337 = vpow.pop %v6336
        %v6338 = vmul.f32 %v6217, 1.442695
        %v6339 = vpow.pop %v6338
        %v6340 = vmul.f32 %v6218, 1.442695
        %v6341 = vpow.pop %v6340
        %v6342 = vmul.f32 %v6219, 1.442695
        %v6343 = vpow.pop %v6342
        %v6344 = vmul.f32 %v6220, 1.442695
        %v6345 = vpow.pop %v6344
        %v6346 = vmul.f32 %v6221, 1.442695
        %v6347 = vpow.pop %v6346
        %v6348 = vmul.f32 %v6222, 1.442695
        %v6349 = vpow.pop %v6348
        %v6350 = vmul.f32 %v6223, 1.442695
        %v6351 = vpow.pop %v6350
        %6352 = vadd.xlane.f32.xlu0 %v6225
        %v6353 = vpop.xlane.xlu0 %6352
        %6354 = vadd.xlane.f32.xlu0 %v6227
        %v6355 = vpop.xlane.xlu0 %6354
        %6356 = vadd.xlane.f32.xlu0 %v6229
        %v6357 = vpop.xlane.xlu0 %6356
        %6358 = vadd.xlane.f32.xlu0 %v6231
        %v6359 = vpop.xlane.xlu0 %6358
        %6360 = vadd.xlane.f32.xlu0 %v6233
        %v6361 = vpop.xlane.xlu0 %6360
        %6362 = vadd.xlane.f32.xlu0 %v6235
        %v6363 = vpop.xlane.xlu0 %6362
        %6364 = vadd.xlane.f32.xlu0 %v6237
        %v6365 = vpop.xlane.xlu0 %6364
        %6366 = vadd.xlane.f32.xlu0 %v6239
        %v6367 = vpop.xlane.xlu0 %6366
        %6368 = vadd.xlane.f32.xlu0 %v6241
        %v6369 = vpop.xlane.xlu0 %6368
        %6370 = vadd.xlane.f32.xlu0 %v6243
        %v6371 = vpop.xlane.xlu0 %6370
        %6372 = vadd.xlane.f32.xlu0 %v6245
        %v6373 = vpop.xlane.xlu0 %6372
        %6374 = vadd.xlane.f32.xlu0 %v6247
        %v6375 = vpop.xlane.xlu0 %6374
        %6376 = vadd.xlane.f32.xlu0 %v6249
        %v6377 = vpop.xlane.xlu0 %6376
        %6378 = vadd.xlane.f32.xlu0 %v6251
        %v6379 = vpop.xlane.xlu0 %6378
        %6380 = vadd.xlane.f32.xlu0 %v6253
        %v6381 = vpop.xlane.xlu0 %6380
        %6382 = vadd.xlane.f32.xlu0 %v6255
        %v6383 = vpop.xlane.xlu0 %6382
        %6384 = vadd.xlane.f32.xlu0 %v6257
        %v6385 = vpop.xlane.xlu0 %6384
        %6386 = vadd.xlane.f32.xlu0 %v6259
        %v6387 = vpop.xlane.xlu0 %6386
        %6388 = vadd.xlane.f32.xlu0 %v6261
        %v6389 = vpop.xlane.xlu0 %6388
        %6390 = vadd.xlane.f32.xlu0 %v6263
        %v6391 = vpop.xlane.xlu0 %6390
        %6392 = vadd.xlane.f32.xlu0 %v6265
        %v6393 = vpop.xlane.xlu0 %6392
        %6394 = vadd.xlane.f32.xlu0 %v6267
        %v6395 = vpop.xlane.xlu0 %6394
        %6396 = vadd.xlane.f32.xlu0 %v6269
        %v6397 = vpop.xlane.xlu0 %6396
        %6398 = vadd.xlane.f32.xlu0 %v6271
        %v6399 = vpop.xlane.xlu0 %6398
        %6400 = vadd.xlane.f32.xlu0 %v6273
        %v6401 = vpop.xlane.xlu0 %6400
        %6402 = vadd.xlane.f32.xlu0 %v6275
        %v6403 = vpop.xlane.xlu0 %6402
        %6404 = vadd.xlane.f32.xlu0 %v6277
        %v6405 = vpop.xlane.xlu0 %6404
        %6406 = vadd.xlane.f32.xlu0 %v6279
        %v6407 = vpop.xlane.xlu0 %6406
        %6408 = vadd.xlane.f32.xlu0 %v6281
        %v6409 = vpop.xlane.xlu0 %6408
        %6410 = vadd.xlane.f32.xlu0 %v6283
        %v6411 = vpop.xlane.xlu0 %6410
        %6412 = vadd.xlane.f32.xlu0 %v6285
        %v6413 = vpop.xlane.xlu0 %6412
        %6414 = vadd.xlane.f32.xlu0 %v6287
        %v6415 = vpop.xlane.xlu0 %6414
        %6416 = vadd.xlane.f32.xlu0 %v6289
        %v6417 = vpop.xlane.xlu0 %6416
        %6418 = vadd.xlane.f32.xlu0 %v6291
        %v6419 = vpop.xlane.xlu0 %6418
        %6420 = vadd.xlane.f32.xlu0 %v6293
        %v6421 = vpop.xlane.xlu0 %6420
        %6422 = vadd.xlane.f32.xlu0 %v6295
        %v6423 = vpop.xlane.xlu0 %6422
        %6424 = vadd.xlane.f32.xlu0 %v6297
        %v6425 = vpop.xlane.xlu0 %6424
        %6426 = vadd.xlane.f32.xlu0 %v6299
        %v6427 = vpop.xlane.xlu0 %6426
        %6428 = vadd.xlane.f32.xlu0 %v6301
        %v6429 = vpop.xlane.xlu0 %6428
        %6430 = vadd.xlane.f32.xlu0 %v6303
        %v6431 = vpop.xlane.xlu0 %6430
        %6432 = vadd.xlane.f32.xlu0 %v6305
        %v6433 = vpop.xlane.xlu0 %6432
        %6434 = vadd.xlane.f32.xlu0 %v6307
        %v6435 = vpop.xlane.xlu0 %6434
        %6436 = vadd.xlane.f32.xlu0 %v6309
        %v6437 = vpop.xlane.xlu0 %6436
        %6438 = vadd.xlane.f32.xlu0 %v6311
        %v6439 = vpop.xlane.xlu0 %6438
        %6440 = vadd.xlane.f32.xlu0 %v6313
        %v6441 = vpop.xlane.xlu0 %6440
        %6442 = vadd.xlane.f32.xlu0 %v6315
        %v6443 = vpop.xlane.xlu0 %6442
        %6444 = vadd.xlane.f32.xlu0 %v6317
        %v6445 = vpop.xlane.xlu0 %6444
        %6446 = vadd.xlane.f32.xlu0 %v6319
        %v6447 = vpop.xlane.xlu0 %6446
        %6448 = vadd.xlane.f32.xlu0 %v6321
        %v6449 = vpop.xlane.xlu0 %6448
        %6450 = vadd.xlane.f32.xlu0 %v6323
        %v6451 = vpop.xlane.xlu0 %6450
        %6452 = vadd.xlane.f32.xlu0 %v6325
        %v6453 = vpop.xlane.xlu0 %6452
        %6454 = vadd.xlane.f32.xlu0 %v6327
        %v6455 = vpop.xlane.xlu0 %6454
        %6456 = vadd.xlane.f32.xlu0 %v6329
        %v6457 = vpop.xlane.xlu0 %6456
        %6458 = vadd.xlane.f32.xlu0 %v6331
        %v6459 = vpop.xlane.xlu0 %6458
        %6460 = vadd.xlane.f32.xlu0 %v6333
        %v6461 = vpop.xlane.xlu0 %6460
        %6462 = vadd.xlane.f32.xlu0 %v6335
        %v6463 = vpop.xlane.xlu0 %6462
        %6464 = vadd.xlane.f32.xlu0 %v6337
        %v6465 = vpop.xlane.xlu0 %6464
        %6466 = vadd.xlane.f32.xlu0 %v6339
        %v6467 = vpop.xlane.xlu0 %6466
        %6468 = vadd.xlane.f32.xlu0 %v6341
        %v6469 = vpop.xlane.xlu0 %6468
        %6470 = vadd.xlane.f32.xlu0 %v6343
        %v6471 = vpop.xlane.xlu0 %6470
        %6472 = vadd.xlane.f32.xlu0 %v6345
        %v6473 = vpop.xlane.xlu0 %6472
        %6474 = vadd.xlane.f32.xlu0 %v6347
        %v6475 = vpop.xlane.xlu0 %6474
        %6476 = vadd.xlane.f32.xlu0 %v6349
        %v6477 = vpop.xlane.xlu0 %6476
        %6478 = vadd.xlane.f32.xlu0 %v6351
        %v6479 = vpop.xlane.xlu0 %6478
        %v6480 = vrcp.pop %v6353
        %v6481 = vrcp.pop %v6355
        %v6482 = vrcp.pop %v6357
        %v6483 = vrcp.pop %v6359
        %v6484 = vrcp.pop %v6361
        %v6485 = vrcp.pop %v6363
        %v6486 = vrcp.pop %v6365
        %v6487 = vrcp.pop %v6367
        %v6488 = vrcp.pop %v6369
        %v6489 = vrcp.pop %v6371
        %v6490 = vrcp.pop %v6373
        %v6491 = vrcp.pop %v6375
        %v6492 = vrcp.pop %v6377
        %v6493 = vrcp.pop %v6379
        %v6494 = vrcp.pop %v6381
        %v6495 = vrcp.pop %v6383
        %v6496 = vrcp.pop %v6385
        %v6497 = vrcp.pop %v6387
        %v6498 = vrcp.pop %v6389
        %v6499 = vrcp.pop %v6391
        %v6500 = vrcp.pop %v6393
        %v6501 = vrcp.pop %v6395
        %v6502 = vrcp.pop %v6397
        %v6503 = vrcp.pop %v6399
        %v6504 = vrcp.pop %v6401
        %v6505 = vrcp.pop %v6403
        %v6506 = vrcp.pop %v6405
        %v6507 = vrcp.pop %v6407
        %v6508 = vrcp.pop %v6409
        %v6509 = vrcp.pop %v6411
        %v6510 = vrcp.pop %v6413
        %v6511 = vrcp.pop %v6415
        %v6512 = vrcp.pop %v6417
        %v6513 = vrcp.pop %v6419
        %v6514 = vrcp.pop %v6421
        %v6515 = vrcp.pop %v6423
        %v6516 = vrcp.pop %v6425
        %v6517 = vrcp.pop %v6427
        %v6518 = vrcp.pop %v6429
        %v6519 = vrcp.pop %v6431
        %v6520 = vrcp.pop %v6433
        %v6521 = vrcp.pop %v6435
        %v6522 = vrcp.pop %v6437
        %v6523 = vrcp.pop %v6439
        %v6524 = vrcp.pop %v6441
        %v6525 = vrcp.pop %v6443
        %v6526 = vrcp.pop %v6445
        %v6527 = vrcp.pop %v6447
        %v6528 = vrcp.pop %v6449
        %v6529 = vrcp.pop %v6451
        %v6530 = vrcp.pop %v6453
        %v6531 = vrcp.pop %v6455
        %v6532 = vrcp.pop %v6457
        %v6533 = vrcp.pop %v6459
        %v6534 = vrcp.pop %v6461
        %v6535 = vrcp.pop %v6463
        %v6536 = vrcp.pop %v6465
        %v6537 = vrcp.pop %v6467
        %v6538 = vrcp.pop %v6469
        %v6539 = vrcp.pop %v6471
        %v6540 = vrcp.pop %v6473
        %v6541 = vrcp.pop %v6475
        %v6542 = vrcp.pop %v6477
        %v6543 = vrcp.pop %v6479
        %v6544 = vmul.f32 %v6225, %v6480
        %v6545 = vmul.f32 %v6227, %v6481
        %v6546 = vmul.f32 %v6229, %v6482
        %v6547 = vmul.f32 %v6231, %v6483
        %v6548 = vmul.f32 %v6233, %v6484
        %v6549 = vmul.f32 %v6235, %v6485
        %v6550 = vmul.f32 %v6237, %v6486
        %v6551 = vmul.f32 %v6239, %v6487
        %v6552 = vmul.f32 %v6241, %v6488
        %v6553 = vmul.f32 %v6243, %v6489
        %v6554 = vmul.f32 %v6245, %v6490
        %v6555 = vmul.f32 %v6247, %v6491
        %v6556 = vmul.f32 %v6249, %v6492
        %v6557 = vmul.f32 %v6251, %v6493
        %v6558 = vmul.f32 %v6253, %v6494
        %v6559 = vmul.f32 %v6255, %v6495
        %v6560 = vmul.f32 %v6257, %v6496
        %v6561 = vmul.f32 %v6259, %v6497
        %v6562 = vmul.f32 %v6261, %v6498
        %v6563 = vmul.f32 %v6263, %v6499
        %v6564 = vmul.f32 %v6265, %v6500
        %v6565 = vmul.f32 %v6267, %v6501
        %v6566 = vmul.f32 %v6269, %v6502
        %v6567 = vmul.f32 %v6271, %v6503
        %v6568 = vmul.f32 %v6273, %v6504
        %v6569 = vmul.f32 %v6275, %v6505
        %v6570 = vmul.f32 %v6277, %v6506
        %v6571 = vmul.f32 %v6279, %v6507
        %v6572 = vmul.f32 %v6281, %v6508
        %v6573 = vmul.f32 %v6283, %v6509
        %v6574 = vmul.f32 %v6285, %v6510
        %v6575 = vmul.f32 %v6287, %v6511
        %v6576 = vmul.f32 %v6289, %v6512
        %v6577 = vmul.f32 %v6291, %v6513
        %v6578 = vmul.f32 %v6293, %v6514
        %v6579 = vmul.f32 %v6295, %v6515
        %v6580 = vmul.f32 %v6297, %v6516
        %v6581 = vmul.f32 %v6299, %v6517
        %v6582 = vmul.f32 %v6301, %v6518
        %v6583 = vmul.f32 %v6303, %v6519
        %v6584 = vmul.f32 %v6305, %v6520
        %v6585 = vmul.f32 %v6307, %v6521
        %v6586 = vmul.f32 %v6309, %v6522
        %v6587 = vmul.f32 %v6311, %v6523
        %v6588 = vmul.f32 %v6313, %v6524
        %v6589 = vmul.f32 %v6315, %v6525
        %v6590 = vmul.f32 %v6317, %v6526
        %v6591 = vmul.f32 %v6319, %v6527
        %v6592 = vmul.f32 %v6321, %v6528
        %v6593 = vmul.f32 %v6323, %v6529
        %v6594 = vmul.f32 %v6325, %v6530
        %v6595 = vmul.f32 %v6327, %v6531
        %v6596 = vmul.f32 %v6329, %v6532
        %v6597 = vmul.f32 %v6331, %v6533
        %v6598 = vmul.f32 %v6333, %v6534
        %v6599 = vmul.f32 %v6335, %v6535
        %v6600 = vmul.f32 %v6337, %v6536
        %v6601 = vmul.f32 %v6339, %v6537
        %v6602 = vmul.f32 %v6341, %v6538
        %v6603 = vmul.f32 %v6343, %v6539
        %v6604 = vmul.f32 %v6345, %v6540
        %v6605 = vmul.f32 %v6347, %v6541
        %v6606 = vmul.f32 %v6349, %v6542
        %v6607 = vmul.f32 %v6351, %v6543
        %v6608 = vpack.c.bf16 %v6545, %v6544
        %v6609 = vpack.c.bf16 %v6547, %v6546
        %v6610 = vpack.c.bf16 %v6549, %v6548
        %v6611 = vpack.c.bf16 %v6551, %v6550
        %v6612 = vpack.c.bf16 %v6553, %v6552
        %v6613 = vpack.c.bf16 %v6555, %v6554
        %v6614 = vpack.c.bf16 %v6557, %v6556
        %v6615 = vpack.c.bf16 %v6559, %v6558
        %v6616 = vpack.c.bf16 %v6561, %v6560
        %v6617 = vpack.c.bf16 %v6563, %v6562
        %v6618 = vpack.c.bf16 %v6565, %v6564
        %v6619 = vpack.c.bf16 %v6567, %v6566
        %v6620 = vpack.c.bf16 %v6569, %v6568
        %v6621 = vpack.c.bf16 %v6571, %v6570
        %v6622 = vpack.c.bf16 %v6573, %v6572
        %v6623 = vpack.c.bf16 %v6575, %v6574
        %v6624 = vpack.c.bf16 %v6577, %v6576
        %v6625 = vpack.c.bf16 %v6579, %v6578
        %v6626 = vpack.c.bf16 %v6581, %v6580
        %v6627 = vpack.c.bf16 %v6583, %v6582
        %v6628 = vpack.c.bf16 %v6585, %v6584
        %v6629 = vpack.c.bf16 %v6587, %v6586
        %v6630 = vpack.c.bf16 %v6589, %v6588
        %v6631 = vpack.c.bf16 %v6591, %v6590
        %v6632 = vpack.c.bf16 %v6593, %v6592
        %v6633 = vpack.c.bf16 %v6595, %v6594
        %v6634 = vpack.c.bf16 %v6597, %v6596
        %v6635 = vpack.c.bf16 %v6599, %v6598
        %v6636 = vpack.c.bf16 %v6601, %v6600
        %v6637 = vpack.c.bf16 %v6603, %v6602
        %v6638 = vpack.c.bf16 %v6605, %v6604
        %v6639 = vpack.c.bf16 %v6607, %v6606
        %6640 = vmatprep.subr.bf16.mxu0 0
        %6641 = vmatpush1.bf16.xpose.msra.mxu0 %v6608
        %6642 = vmatprep.subr.bf16.mxu0 0
        %6643 = vmatpush1.bf16.xpose.msra.mxu0 %v6609
        %6644 = vmatprep.subr.bf16.mxu0 0
        %6645 = vmatpush1.bf16.xpose.msra.mxu0 %v6610
        %6646 = vmatprep.subr.bf16.mxu0 0
        %6647 = vmatpush1.bf16.xpose.msra.mxu0 %v6611
        %6648 = vmatprep.subr.bf16.mxu0 0
        %6649 = vmatpush1.bf16.xpose.msra.mxu0 %v6612
        %6650 = vmatprep.subr.bf16.mxu0 0
        %6651 = vmatpush1.bf16.xpose.msra.mxu0 %v6613
        %6652 = vmatprep.subr.bf16.mxu0 0
        %6653 = vmatpush1.bf16.xpose.msra.mxu0 %v6614
        %6654 = vmatprep.subr.bf16.mxu0 0
        %6655 = vmatpush1.bf16.xpose.msra.mxu0 %v6615
        %6656 = vmatprep.subr.bf16.mxu0 0
        %6657 = vmatpush1.bf16.xpose.msra.mxu0 0
        %6658 = vmatprep.subr.bf16.mxu0 0
        %6659 = vmatpush1.bf16.xpose.msra.mxu0 0
        %6660 = vmatprep.subr.bf16.mxu0 0
        %6661 = vmatpush1.bf16.xpose.msra.mxu0 0
        %6662 = vmatprep.subr.bf16.mxu0 0
        %6663 = vmatpush1.bf16.xpose.msra.mxu0 0
        %6664 = vmatprep.subr.bf16.mxu0 0
        %6665 = vmatpush1.bf16.xpose.msra.mxu0 0
        %6666 = vmatprep.subr.bf16.mxu0 0
        %6667 = vmatpush1.bf16.xpose.msra.mxu0 0
        %6668 = vmatprep.subr.bf16.mxu0 0
        %6669 = vmatpush1.bf16.xpose.msra.mxu0 0
        %6670 = vmatprep.subr.bf16.mxu0 0
        %6671 = vmatpush1.bf16.xpose.msra.mxu0 0
        %6672 = vmatprep.mubr.bf16.mxu0 0
        %6673 = vmatmul.mubr.bf16.gmra.mrb[0].mxu0 %v1242
        %v6674 = vpop.f32.mrb[0].mxu0
        %v6675 = vadd.f32 0.0, %v6674
        %v6676 = vpop.f32.mrb[0].mxu0
        %v6677 = vpop.f32.mrb[0].mxu0
        %v6678 = vadd.f32 0.0, %v6677
        %v6679 = vpop.f32.mrb[0].mxu0
        %6680 = vdwg.mxu0
        %6681 = vmatprep.subr.bf16.mxu0 0
        %6682 = vmatpush1.bf16.xpose.msra.mxu0 %v6616
        %6683 = vmatprep.subr.bf16.mxu0 0
        %6684 = vmatpush1.bf16.xpose.msra.mxu0 %v6617
        %6685 = vmatprep.subr.bf16.mxu0 0
        %6686 = vmatpush1.bf16.xpose.msra.mxu0 %v6618
        %6687 = vmatprep.subr.bf16.mxu0 0
        %6688 = vmatpush1.bf16.xpose.msra.mxu0 %v6619
        %6689 = vmatprep.subr.bf16.mxu0 0
        %6690 = vmatpush1.bf16.xpose.msra.mxu0 %v6620
        %6691 = vmatprep.subr.bf16.mxu0 0
        %6692 = vmatpush1.bf16.xpose.msra.mxu0 %v6621
        %6693 = vmatprep.subr.bf16.mxu0 0
        %6694 = vmatpush1.bf16.xpose.msra.mxu0 %v6622
        %6695 = vmatprep.subr.bf16.mxu0 0
        %6696 = vmatpush1.bf16.xpose.msra.mxu0 %v6623
        %6697 = vmatprep.subr.bf16.mxu0 0
        %6698 = vmatpush1.bf16.xpose.msra.mxu0 0
        %6699 = vmatprep.subr.bf16.mxu0 0
        %6700 = vmatpush1.bf16.xpose.msra.mxu0 0
        %6701 = vmatprep.subr.bf16.mxu0 0
        %6702 = vmatpush1.bf16.xpose.msra.mxu0 0
        %6703 = vmatprep.subr.bf16.mxu0 0
        %6704 = vmatpush1.bf16.xpose.msra.mxu0 0
        %6705 = vmatprep.subr.bf16.mxu0 0
        %6706 = vmatpush1.bf16.xpose.msra.mxu0 0
        %6707 = vmatprep.subr.bf16.mxu0 0
        %6708 = vmatpush1.bf16.xpose.msra.mxu0 0
        %6709 = vmatprep.subr.bf16.mxu0 0
        %6710 = vmatpush1.bf16.xpose.msra.mxu0 0
        %6711 = vmatprep.subr.bf16.mxu0 0
        %6712 = vmatpush1.bf16.xpose.msra.mxu0 0
        %6713 = vmatprep.mubr.bf16.mxu0 0
        %6714 = vmatmul.mubr.bf16.gmra.mrb[0].mxu0 %v1246
        %v6715 = vpop.f32.mrb[0].mxu0
        %v6716 = vadd.f32 0.0, %v6715
        %v6717 = vpop.f32.mrb[0].mxu0
        %v6718 = vpop.f32.mrb[0].mxu0
        %v6719 = vadd.f32 0.0, %v6718
        %v6720 = vpop.f32.mrb[0].mxu0
        %6721 = vdwg.mxu0
        %6722 = vmatprep.subr.bf16.mxu0 0
        %6723 = vmatpush1.bf16.xpose.msra.mxu0 %v6624
        %6724 = vmatprep.subr.bf16.mxu0 0
        %6725 = vmatpush1.bf16.xpose.msra.mxu0 %v6625
        %6726 = vmatprep.subr.bf16.mxu0 0
        %6727 = vmatpush1.bf16.xpose.msra.mxu0 %v6626
        %6728 = vmatprep.subr.bf16.mxu0 0
        %6729 = vmatpush1.bf16.xpose.msra.mxu0 %v6627
        %6730 = vmatprep.subr.bf16.mxu0 0
        %6731 = vmatpush1.bf16.xpose.msra.mxu0 %v6628
        %6732 = vmatprep.subr.bf16.mxu0 0
        %6733 = vmatpush1.bf16.xpose.msra.mxu0 %v6629
        %6734 = vmatprep.subr.bf16.mxu0 0
        %6735 = vmatpush1.bf16.xpose.msra.mxu0 %v6630
        %6736 = vmatprep.subr.bf16.mxu0 0
        %6737 = vmatpush1.bf16.xpose.msra.mxu0 %v6631
        %6738 = vmatprep.subr.bf16.mxu0 0
        %6739 = vmatpush1.bf16.xpose.msra.mxu0 0
        %6740 = vmatprep.subr.bf16.mxu0 0
        %6741 = vmatpush1.bf16.xpose.msra.mxu0 0
        %6742 = vmatprep.subr.bf16.mxu0 0
        %6743 = vmatpush1.bf16.xpose.msra.mxu0 0
        %6744 = vmatprep.subr.bf16.mxu0 0
        %6745 = vmatpush1.bf16.xpose.msra.mxu0 0
        %6746 = vmatprep.subr.bf16.mxu0 0
        %6747 = vmatpush1.bf16.xpose.msra.mxu0 0
        %6748 = vmatprep.subr.bf16.mxu0 0
        %6749 = vmatpush1.bf16.xpose.msra.mxu0 0
        %6750 = vmatprep.subr.bf16.mxu0 0
        %6751 = vmatpush1.bf16.xpose.msra.mxu0 0
        %6752 = vmatprep.subr.bf16.mxu0 0
        %6753 = vmatpush1.bf16.xpose.msra.mxu0 0
        %6754 = vmatprep.mubr.bf16.mxu0 0
        %6755 = vmatmul.mubr.bf16.gmra.mrb[0].mxu0 %v1250
        %v6756 = vpop.f32.mrb[0].mxu0
        %v6757 = vadd.f32 0.0, %v6756
        %v6758 = vpop.f32.mrb[0].mxu0
        %v6759 = vpop.f32.mrb[0].mxu0
        %v6760 = vadd.f32 0.0, %v6759
        %v6761 = vpop.f32.mrb[0].mxu0
        %6762 = vdwg.mxu0
        %6763 = vmatprep.subr.bf16.mxu0 0
        %6764 = vmatpush1.bf16.xpose.msra.mxu0 %v6632
        %6765 = vmatprep.subr.bf16.mxu0 0
        %6766 = vmatpush1.bf16.xpose.msra.mxu0 %v6633
        %6767 = vmatprep.subr.bf16.mxu0 0
        %6768 = vmatpush1.bf16.xpose.msra.mxu0 %v6634
        %6769 = vmatprep.subr.bf16.mxu0 0
        %6770 = vmatpush1.bf16.xpose.msra.mxu0 %v6635
        %6771 = vmatprep.subr.bf16.mxu0 0
        %6772 = vmatpush1.bf16.xpose.msra.mxu0 %v6636
        %6773 = vmatprep.subr.bf16.mxu0 0
        %6774 = vmatpush1.bf16.xpose.msra.mxu0 %v6637
        %6775 = vmatprep.subr.bf16.mxu0 0
        %6776 = vmatpush1.bf16.xpose.msra.mxu0 %v6638
        %6777 = vmatprep.subr.bf16.mxu0 0
        %6778 = vmatpush1.bf16.xpose.msra.mxu0 %v6639
        %6779 = vmatprep.subr.bf16.mxu0 0
        %6780 = vmatpush1.bf16.xpose.msra.mxu0 0
        %6781 = vmatprep.subr.bf16.mxu0 0
        %6782 = vmatpush1.bf16.xpose.msra.mxu0 0
        %6783 = vmatprep.subr.bf16.mxu0 0
        %6784 = vmatpush1.bf16.xpose.msra.mxu0 0
        %6785 = vmatprep.subr.bf16.mxu0 0
        %6786 = vmatpush1.bf16.xpose.msra.mxu0 0
        %6787 = vmatprep.subr.bf16.mxu0 0
        %6788 = vmatpush1.bf16.xpose.msra.mxu0 0
        %6789 = vmatprep.subr.bf16.mxu0 0
        %6790 = vmatpush1.bf16.xpose.msra.mxu0 0
        %6791 = vmatprep.subr.bf16.mxu0 0
        %6792 = vmatpush1.bf16.xpose.msra.mxu0 0
        %6793 = vmatprep.subr.bf16.mxu0 0
        %6794 = vmatpush1.bf16.xpose.msra.mxu0 0
        %6795 = vmatprep.mubr.bf16.mxu0 0
        %6796 = vmatmul.mubr.bf16.gmra.mrb[0].mxu0 %v1254
        %v6797 = vpop.f32.mrb[0].mxu0
        %v6798 = vadd.f32 0.0, %v6797
        %v6799 = vpop.f32.mrb[0].mxu0
        %v6800 = vpop.f32.mrb[0].mxu0
        %v6801 = vadd.f32 0.0, %v6800
        %v6802 = vpop.f32.mrb[0].mxu0
        %6803 = vdwg.mxu0
        %v6804 = vpack.c.bf16 %v6678, %v6675
        %v6805 = vpack.c.bf16 %v6719, %v6716
        %v6806 = vpack.c.bf16 %v6760, %v6757
        %v6807 = vpack.c.bf16 %v6801, %v6798
        %v6808 = vld [vmem:[%s4] sm:$0xf]
        %v6809 = vld [vmem:[%s4 + $0x4] sm:$0xf]
        %v6810 = vld [vmem:[%s4 + $0x8] sm:$0xf]
        %v6811 = vld [vmem:[%s4 + $0xc] sm:$0xf]
        %6812 = vset.pattern.permute.xlu0 1
        %6813 = vperm.xlu0 %6812, %v365
        %v6814 = vpop.permute.xlu0 %6813
        %6816 = vset.pattern.permute.xlu0 1
        %6817 = vperm.xlu0 %6816, %v366
        %v6818 = vpop.permute.xlu0 %6817
        %6820 = vset.pattern.permute.xlu0 1
        %6821 = vperm.xlu0 %6820, %v367
        %v6822 = vpop.permute.xlu0 %6821
        %6824 = vset.pattern.permute.xlu0 1
        %6825 = vperm.xlu0 %6824, %v368
        %v6826 = vpop.permute.xlu0 %6825
        %v6832 = vunpack.c.l.b16 %v6808
        %v6833 = vunpack.c.l.b16 %v6809
        %v6834 = vunpack.c.l.b16 %v6810
        %v6835 = vunpack.c.l.b16 %v6811
        %v6836 = vpack.c.b16 %v6833, %v6832
        %v6837 = vpack.c.b16 %v6835, %v6834
        %vm6838 = vcmask 523264
        %v6840 = vsel %vm6838, %v6836, 0
        %v6843 = vsel %vm6838, %v6837, 0
        %6845 = vmatprep.subr.bf16.mxu0 %v4028
        %6846 = vmatpush1.bf16.msra.mxu0 %v2640
        %6847 = vmatprep.subr.bf16.mxu0 %v4029
        %6848 = vmatpush1.bf16.msra.mxu0 %v2641
        %6849 = vmatprep.subr.bf16.mxu0 %v4030
        %6850 = vmatpush1.bf16.msra.mxu0 %v2642
        %6851 = vmatprep.subr.bf16.mxu0 %v4031
        %6852 = vmatpush1.bf16.msra.mxu0 %v2643
        %6853 = vmatprep.subr.bf16.mxu0 0
        %6854 = vmatpush1.bf16.msra.mxu0 0
        %6855 = vmatprep.subr.bf16.mxu0 0
        %6856 = vmatpush1.bf16.msra.mxu0 0
        %6857 = vmatprep.subr.bf16.mxu0 0
        %6858 = vmatpush1.bf16.msra.mxu0 0
        %6859 = vmatprep.subr.bf16.mxu0 0
        %6860 = vmatpush1.bf16.msra.mxu0 0
        %6861 = vmatprep.subr.bf16.mxu0 0
        %6862 = vmatpush1.bf16.msra.mxu0 0
        %6863 = vmatprep.subr.bf16.mxu0 0
        %6864 = vmatpush1.bf16.msra.mxu0 0
        %6865 = vmatprep.subr.bf16.mxu0 0
        %6866 = vmatpush1.bf16.msra.mxu0 0
        %6867 = vmatprep.subr.bf16.mxu0 0
        %6868 = vmatpush1.bf16.msra.mxu0 0
        %6869 = vmatprep.subr.bf16.mxu0 0
        %6870 = vmatpush1.bf16.msra.mxu0 0
        %6871 = vmatprep.subr.bf16.mxu0 0
        %6872 = vmatpush1.bf16.msra.mxu0 0
        %6873 = vmatprep.subr.bf16.mxu0 0
        %6874 = vmatpush1.bf16.msra.mxu0 0
        %6875 = vmatprep.subr.bf16.mxu0 0
        %6876 = vmatpush1.bf16.msra.mxu0 0
        %6877 = vmatprep.mubr.bf16.mxu0 0
        %6878 = vmatmul.mubr.bf16.gmra.mrb[0].mxu0 %v6840
        %v6879 = vpop.f32.mrb[0].mxu0
        %v6880 = vadd.f32 %v6814, %v6879
        %v6881 = vpop.f32.mrb[0].mxu0
        %v6882 = vadd.f32 %v6814, %v6881
        %v6883 = vpop.f32.mrb[0].mxu0
        %v6884 = vadd.f32 %v6818, %v6883
        %v6885 = vpop.f32.mrb[0].mxu0
        %v6886 = vadd.f32 %v6818, %v6885
        %6887 = vmatprep.mubr.bf16.mxu0 0
        %6888 = vmatmul.mubr.bf16.gmra.mrb[0].mxu0 %v6843
        %v6889 = vpop.f32.mrb[0].mxu0
        %v6890 = vadd.f32 %v6822, %v6889
        %v6891 = vpop.f32.mrb[0].mxu0
        %v6892 = vadd.f32 %v6822, %v6891
        %v6893 = vpop.f32.mrb[0].mxu0
        %v6894 = vadd.f32 %v6826, %v6893
        %v6895 = vpop.f32.mrb[0].mxu0
        %v6896 = vadd.f32 %v6826, %v6895
        %6897 = vdwg.mxu0
        %6898 = vmatprep.subr.bf16.mxu0 %v6804
        %6899 = vmatpush1.bf16.msra.mxu0 %v5416
        %6900 = vmatprep.subr.bf16.mxu0 %v6805
        %6901 = vmatpush1.bf16.msra.mxu0 %v5417
        %6902 = vmatprep.subr.bf16.mxu0 %v6806
        %6903 = vmatpush1.bf16.msra.mxu0 %v5418
        %6904 = vmatprep.subr.bf16.mxu0 %v6807
        %6905 = vmatpush1.bf16.msra.mxu0 %v5419
        %6906 = vmatprep.subr.bf16.mxu0 0
        %6907 = vmatpush1.bf16.msra.mxu0 0
        %6908 = vmatprep.subr.bf16.mxu0 0
        %6909 = vmatpush1.bf16.msra.mxu0 0
        %6910 = vmatprep.subr.bf16.mxu0 0
        %6911 = vmatpush1.bf16.msra.mxu0 0
        %6912 = vmatprep.subr.bf16.mxu0 0
        %6913 = vmatpush1.bf16.msra.mxu0 0
        %6914 = vmatprep.subr.bf16.mxu0 0
        %6915 = vmatpush1.bf16.msra.mxu0 0
        %6916 = vmatprep.subr.bf16.mxu0 0
        %6917 = vmatpush1.bf16.msra.mxu0 0
        %6918 = vmatprep.subr.bf16.mxu0 0
        %6919 = vmatpush1.bf16.msra.mxu0 0
        %6920 = vmatprep.subr.bf16.mxu0 0
        %6921 = vmatpush1.bf16.msra.mxu0 0
        %6922 = vmatprep.subr.bf16.mxu0 0
        %6923 = vmatpush1.bf16.msra.mxu0 0
        %6924 = vmatprep.subr.bf16.mxu0 0
        %6925 = vmatpush1.bf16.msra.mxu0 0
        %6926 = vmatprep.subr.bf16.mxu0 0
        %6927 = vmatpush1.bf16.msra.mxu0 0
        %6928 = vmatprep.subr.bf16.mxu0 0
        %6929 = vmatpush1.bf16.msra.mxu0 0
        %6930 = vmatprep.mubr.bf16.mxu0 0
        %6931 = vmatmul.mubr.bf16.gmra.mrb[0].mxu0 %v6840
        %v6932 = vpop.f32.mrb[0].mxu0
        %v6933 = vadd.f32 %v6814, %v6932
        %v6934 = vpop.f32.mrb[0].mxu0
        %v6935 = vadd.f32 %v6814, %v6934
        %v6936 = vpop.f32.mrb[0].mxu0
        %v6937 = vadd.f32 %v6818, %v6936
        %v6938 = vpop.f32.mrb[0].mxu0
        %v6939 = vadd.f32 %v6818, %v6938
        %6940 = vmatprep.mubr.bf16.mxu0 0
        %6941 = vmatmul.mubr.bf16.gmra.mrb[0].mxu0 %v6843
        %v6942 = vpop.f32.mrb[0].mxu0
        %v6943 = vadd.f32 %v6822, %v6942
        %v6944 = vpop.f32.mrb[0].mxu0
        %v6945 = vadd.f32 %v6822, %v6944
        %v6946 = vpop.f32.mrb[0].mxu0
        %v6947 = vadd.f32 %v6826, %v6946
        %v6948 = vpop.f32.mrb[0].mxu0
        %v6949 = vadd.f32 %v6826, %v6948
        %6950 = vdwg.mxu0
        %v6951 = vadd.f32 %v6880, %v781
        %v6952 = vadd.f32 %v6882, %v782
        %v6953 = vadd.f32 %v6933, %v783
        %v6954 = vadd.f32 %v6935, %v784
        %v6955 = vadd.f32 %v6884, %v785
        %v6956 = vadd.f32 %v6886, %v786
        %v6957 = vadd.f32 %v6937, %v787
        %v6958 = vadd.f32 %v6939, %v788
        %v6959 = vadd.f32 %v6890, %v789
        %v6960 = vadd.f32 %v6892, %v790
        %v6961 = vadd.f32 %v6943, %v791
        %v6962 = vadd.f32 %v6945, %v792
        %v6963 = vadd.f32 %v6894, %v793
        %v6964 = vadd.f32 %v6896, %v794
        %v6965 = vadd.f32 %v6947, %v795
        %v6966 = vadd.f32 %v6949, %v796
        %v6967 = vmax.f32 %v6951, 0.0
        %v6968 = vmax.f32 %v6952, 0.0
        %v6969 = vmax.f32 %v6953, 0.0
        %v6970 = vmax.f32 %v6954, 0.0
        %v6971 = vmax.f32 %v6955, 0.0
        %v6972 = vmax.f32 %v6956, 0.0
        %v6973 = vmax.f32 %v6957, 0.0
        %v6974 = vmax.f32 %v6958, 0.0
        %v6975 = vmax.f32 %v6959, 0.0
        %v6976 = vmax.f32 %v6960, 0.0
        %v6977 = vmax.f32 %v6961, 0.0
        %v6978 = vmax.f32 %v6962, 0.0
        %v6979 = vmax.f32 %v6963, 0.0
        %v6980 = vmax.f32 %v6964, 0.0
        %v6981 = vmax.f32 %v6965, 0.0
        %v6982 = vmax.f32 %v6966, 0.0
        %v6983 = vpack.c.bf16 %v6971, %v6967
        %v6984 = vpack.c.bf16 %v6972, %v6968
        %v6985 = vpack.c.bf16 %v6973, %v6969
        %v6986 = vpack.c.bf16 %v6974, %v6970
        %v6987 = vpack.c.bf16 %v6979, %v6975
        %v6988 = vpack.c.bf16 %v6980, %v6976
        %v6989 = vpack.c.bf16 %v6981, %v6977
        %v6990 = vpack.c.bf16 %v6982, %v6978
        %6991 = vset.pattern.permute.xlu0 2
        %6992 = vperm.xlu0 %6991, %v365
        %v6993 = vpop.permute.xlu0 %6992
        %6995 = vset.pattern.permute.xlu0 2
        %6996 = vperm.xlu0 %6995, %v366
        %v6997 = vpop.permute.xlu0 %6996
        %6999 = vset.pattern.permute.xlu0 2
        %7000 = vperm.xlu0 %6999, %v367
        %v7001 = vpop.permute.xlu0 %7000
        %7003 = vset.pattern.permute.xlu0 2
        %7004 = vperm.xlu0 %7003, %v368
        %v7005 = vpop.permute.xlu0 %7004
        %v7011 = vunpack.c.l.b16 %v357
        %v7012 = vunpack.c.l.b16 %v358
        %v7013 = vunpack.c.l.b16 %v359
        %v7014 = vunpack.c.l.b16 %v360
        %v7015 = vpack.c.b16 %v7012, %v7011
        %v7016 = vpack.c.b16 %v7014, %v7013
        %v7018 = vsel %vm652, %v7015, 0
        %v7021 = vsel %vm652, %v7016, 0
        %7023 = vmatprep.subr.bf16.mxu0 %v6984
        %7024 = vmatpush1.bf16.msra.mxu0 %v6983
        %7025 = vmatprep.subr.bf16.mxu0 %v6988
        %7026 = vmatpush1.bf16.msra.mxu0 %v6987
        %7027 = vmatprep.subr.bf16.mxu0 0
        %7028 = vmatpush1.bf16.msra.mxu0 0
        %7029 = vmatprep.subr.bf16.mxu0 0
        %7030 = vmatpush1.bf16.msra.mxu0 0
        %7031 = vmatprep.subr.bf16.mxu0 0
        %7032 = vmatpush1.bf16.msra.mxu0 0
        %7033 = vmatprep.subr.bf16.mxu0 0
        %7034 = vmatpush1.bf16.msra.mxu0 0
        %7035 = vmatprep.subr.bf16.mxu0 0
        %7036 = vmatpush1.bf16.msra.mxu0 0
        %7037 = vmatprep.subr.bf16.mxu0 0
        %7038 = vmatpush1.bf16.msra.mxu0 0
        %7039 = vmatprep.subr.bf16.mxu0 0
        %7040 = vmatpush1.bf16.msra.mxu0 0
        %7041 = vmatprep.subr.bf16.mxu0 0
        %7042 = vmatpush1.bf16.msra.mxu0 0
        %7043 = vmatprep.subr.bf16.mxu0 0
        %7044 = vmatpush1.bf16.msra.mxu0 0
        %7045 = vmatprep.subr.bf16.mxu0 0
        %7046 = vmatpush1.bf16.msra.mxu0 0
        %7047 = vmatprep.subr.bf16.mxu0 0
        %7048 = vmatpush1.bf16.msra.mxu0 0
        %7049 = vmatprep.subr.bf16.mxu0 0
        %7050 = vmatpush1.bf16.msra.mxu0 0
        %7051 = vmatprep.subr.bf16.mxu0 0
        %7052 = vmatpush1.bf16.msra.mxu0 0
        %7053 = vmatprep.subr.bf16.mxu0 0
        %7054 = vmatpush1.bf16.msra.mxu0 0
        %7055 = vmatprep.mubr.bf16.mxu0 0
        %7056 = vmatmul.mubr.bf16.gmra.mrb[0].mxu0 %v7018
        %v7057 = vpop.f32.mrb[0].mxu0
        %v7058 = vadd.f32 %v6993, %v7057
        %v7059 = vpop.f32.mrb[0].mxu0
        %v7060 = vadd.f32 %v6993, %v7059
        %v7061 = vpop.f32.mrb[0].mxu0
        %v7062 = vadd.f32 %v6997, %v7061
        %v7063 = vpop.f32.mrb[0].mxu0
        %v7064 = vadd.f32 %v6997, %v7063
        %7065 = vmatprep.mubr.bf16.mxu0 0
        %7066 = vmatmul.mubr.bf16.gmra.mrb[0].mxu0 %v7021
        %v7067 = vpop.f32.mrb[0].mxu0
        %v7068 = vadd.f32 %v7001, %v7067
        %v7069 = vpop.f32.mrb[0].mxu0
        %v7070 = vadd.f32 %v7001, %v7069
        %v7071 = vpop.f32.mrb[0].mxu0
        %v7072 = vadd.f32 %v7005, %v7071
        %v7073 = vpop.f32.mrb[0].mxu0
        %v7074 = vadd.f32 %v7005, %v7073
        %7075 = vdwg.mxu0
        %7076 = vmatprep.subr.bf16.mxu0 %v6986
        %7077 = vmatpush1.bf16.msra.mxu0 %v6985
        %7078 = vmatprep.subr.bf16.mxu0 %v6990
        %7079 = vmatpush1.bf16.msra.mxu0 %v6989
        %7080 = vmatprep.subr.bf16.mxu0 0
        %7081 = vmatpush1.bf16.msra.mxu0 0
        %7082 = vmatprep.subr.bf16.mxu0 0
        %7083 = vmatpush1.bf16.msra.mxu0 0
        %7084 = vmatprep.subr.bf16.mxu0 0
        %7085 = vmatpush1.bf16.msra.mxu0 0
        %7086 = vmatprep.subr.bf16.mxu0 0
        %7087 = vmatpush1.bf16.msra.mxu0 0
        %7088 = vmatprep.subr.bf16.mxu0 0
        %7089 = vmatpush1.bf16.msra.mxu0 0
        %7090 = vmatprep.subr.bf16.mxu0 0
        %7091 = vmatpush1.bf16.msra.mxu0 0
        %7092 = vmatprep.subr.bf16.mxu0 0
        %7093 = vmatpush1.bf16.msra.mxu0 0
        %7094 = vmatprep.subr.bf16.mxu0 0
        %7095 = vmatpush1.bf16.msra.mxu0 0
        %7096 = vmatprep.subr.bf16.mxu0 0
        %7097 = vmatpush1.bf16.msra.mxu0 0
        %7098 = vmatprep.subr.bf16.mxu0 0
        %7099 = vmatpush1.bf16.msra.mxu0 0
        %7100 = vmatprep.subr.bf16.mxu0 0
        %7101 = vmatpush1.bf16.msra.mxu0 0
        %7102 = vmatprep.subr.bf16.mxu0 0
        %7103 = vmatpush1.bf16.msra.mxu0 0
        %7104 = vmatprep.subr.bf16.mxu0 0
        %7105 = vmatpush1.bf16.msra.mxu0 0
        %7106 = vmatprep.subr.bf16.mxu0 0
        %7107 = vmatpush1.bf16.msra.mxu0 0
        %7108 = vmatprep.mubr.bf16.mxu0 0
        %7109 = vmatmul.mubr.bf16.gmra.mrb[0].mxu0 %v7018
        %v7110 = vpop.f32.mrb[0].mxu0
        %v7111 = vadd.f32 %v6993, %v7110
        %v7112 = vpop.f32.mrb[0].mxu0
        %v7113 = vadd.f32 %v6993, %v7112
        %v7114 = vpop.f32.mrb[0].mxu0
        %v7115 = vadd.f32 %v6997, %v7114
        %v7116 = vpop.f32.mrb[0].mxu0
        %v7117 = vadd.f32 %v6997, %v7116
        %7118 = vmatprep.mubr.bf16.mxu0 0
        %7119 = vmatmul.mubr.bf16.gmra.mrb[0].mxu0 %v7021
        %v7120 = vpop.f32.mrb[0].mxu0
        %v7121 = vadd.f32 %v7001, %v7120
        %v7122 = vpop.f32.mrb[0].mxu0
        %v7123 = vadd.f32 %v7001, %v7122
        %v7124 = vpop.f32.mrb[0].mxu0
        %v7125 = vadd.f32 %v7005, %v7124
        %v7126 = vpop.f32.mrb[0].mxu0
        %v7127 = vadd.f32 %v7005, %v7126
        %7128 = vdwg.mxu0
        %v7129 = vmax.f32 %v7058, 0.0
        %v7130 = vmax.f32 %v7060, 0.0
        %v7131 = vmax.f32 %v7111, 0.0
        %v7132 = vmax.f32 %v7113, 0.0
        %v7133 = vmax.f32 %v7062, 0.0
        %v7134 = vmax.f32 %v7064, 0.0
        %v7135 = vmax.f32 %v7115, 0.0
        %v7136 = vmax.f32 %v7117, 0.0
        %v7137 = vmax.f32 %v7068, 0.0
        %v7138 = vmax.f32 %v7070, 0.0
        %v7139 = vmax.f32 %v7121, 0.0
        %v7140 = vmax.f32 %v7123, 0.0
        %v7141 = vmax.f32 %v7072, 0.0
        %v7142 = vmax.f32 %v7074, 0.0
        %v7143 = vmax.f32 %v7125, 0.0
        %v7144 = vmax.f32 %v7127, 0.0
        %v7145 = vpack.c.bf16 %v7133, %v7129
        %v7146 = vpack.c.bf16 %v7134, %v7130
        %v7147 = vpack.c.bf16 %v7135, %v7131
        %v7148 = vpack.c.bf16 %v7136, %v7132
        %v7149 = vpack.c.bf16 %v7141, %v7137
        %v7150 = vpack.c.bf16 %v7142, %v7138
        %v7151 = vpack.c.bf16 %v7143, %v7139
        %v7152 = vpack.c.bf16 %v7144, %v7140
        %7153 = vset.pattern.permute.xlu0 3
        %7154 = vperm.xlu0 %7153, %v365
        %v7155 = vpop.permute.xlu0 %7154
        %7157 = vset.pattern.permute.xlu0 3
        %7158 = vperm.xlu0 %7157, %v366
        %v7159 = vpop.permute.xlu0 %7158
        %7161 = vset.pattern.permute.xlu0 3
        %7162 = vperm.xlu0 %7161, %v367
        %v7163 = vpop.permute.xlu0 %7162
        %7165 = vset.pattern.permute.xlu0 3
        %7166 = vperm.xlu0 %7165, %v368
        %v7167 = vpop.permute.xlu0 %7166
        %v7173 = vunpack.c.l.b16 %v361
        %v7174 = vunpack.c.l.b16 %v362
        %v7175 = vunpack.c.l.b16 %v363
        %v7176 = vunpack.c.l.b16 %v364
        %v7177 = vpack.c.b16 %v7174, %v7173
        %v7178 = vpack.c.b16 %v7176, %v7175
        %v7180 = vsel %vm652, %v7177, 0
        %v7183 = vsel %vm652, %v7178, 0
        %7185 = vmatprep.subr.bf16.mxu0 %v7146
        %7186 = vmatpush1.bf16.msra.mxu0 %v7145
        %7187 = vmatprep.subr.bf16.mxu0 %v7150
        %7188 = vmatpush1.bf16.msra.mxu0 %v7149
        %7189 = vmatprep.subr.bf16.mxu0 0
        %7190 = vmatpush1.bf16.msra.mxu0 0
        %7191 = vmatprep.subr.bf16.mxu0 0
        %7192 = vmatpush1.bf16.msra.mxu0 0
        %7193 = vmatprep.subr.bf16.mxu0 0
        %7194 = vmatpush1.bf16.msra.mxu0 0
        %7195 = vmatprep.subr.bf16.mxu0 0
        %7196 = vmatpush1.bf16.msra.mxu0 0
        %7197 = vmatprep.subr.bf16.mxu0 0
        %7198 = vmatpush1.bf16.msra.mxu0 0
        %7199 = vmatprep.subr.bf16.mxu0 0
        %7200 = vmatpush1.bf16.msra.mxu0 0
        %7201 = vmatprep.subr.bf16.mxu0 0
        %7202 = vmatpush1.bf16.msra.mxu0 0
        %7203 = vmatprep.subr.bf16.mxu0 0
        %7204 = vmatpush1.bf16.msra.mxu0 0
        %7205 = vmatprep.subr.bf16.mxu0 0
        %7206 = vmatpush1.bf16.msra.mxu0 0
        %7207 = vmatprep.subr.bf16.mxu0 0
        %7208 = vmatpush1.bf16.msra.mxu0 0
        %7209 = vmatprep.subr.bf16.mxu0 0
        %7210 = vmatpush1.bf16.msra.mxu0 0
        %7211 = vmatprep.subr.bf16.mxu0 0
        %7212 = vmatpush1.bf16.msra.mxu0 0
        %7213 = vmatprep.subr.bf16.mxu0 0
        %7214 = vmatpush1.bf16.msra.mxu0 0
        %7215 = vmatprep.subr.bf16.mxu0 0
        %7216 = vmatpush1.bf16.msra.mxu0 0
        %7217 = vmatprep.mubr.bf16.mxu0 0
        %7218 = vmatmul.mubr.bf16.gmra.mrb[0].mxu0 %v7180
        %v7219 = vpop.f32.mrb[0].mxu0
        %v7220 = vadd.f32 %v7155, %v7219
        %v7221 = vpop.f32.mrb[0].mxu0
        %v7222 = vadd.f32 %v7155, %v7221
        %v7223 = vpop.f32.mrb[0].mxu0
        %v7224 = vadd.f32 %v7159, %v7223
        %v7225 = vpop.f32.mrb[0].mxu0
        %v7226 = vadd.f32 %v7159, %v7225
        %7227 = vmatprep.mubr.bf16.mxu0 0
        %7228 = vmatmul.mubr.bf16.gmra.mrb[0].mxu0 %v7183
        %v7229 = vpop.f32.mrb[0].mxu0
        %v7230 = vadd.f32 %v7163, %v7229
        %v7231 = vpop.f32.mrb[0].mxu0
        %v7232 = vadd.f32 %v7163, %v7231
        %v7233 = vpop.f32.mrb[0].mxu0
        %v7234 = vadd.f32 %v7167, %v7233
        %v7235 = vpop.f32.mrb[0].mxu0
        %v7236 = vadd.f32 %v7167, %v7235
        %7237 = vdwg.mxu0
        %7238 = vmatprep.subr.bf16.mxu0 %v7148
        %7239 = vmatpush1.bf16.msra.mxu0 %v7147
        %7240 = vmatprep.subr.bf16.mxu0 %v7152
        %7241 = vmatpush1.bf16.msra.mxu0 %v7151
        %7242 = vmatprep.subr.bf16.mxu0 0
        %7243 = vmatpush1.bf16.msra.mxu0 0
        %7244 = vmatprep.subr.bf16.mxu0 0
        %7245 = vmatpush1.bf16.msra.mxu0 0
        %7246 = vmatprep.subr.bf16.mxu0 0
        %7247 = vmatpush1.bf16.msra.mxu0 0
        %7248 = vmatprep.subr.bf16.mxu0 0
        %7249 = vmatpush1.bf16.msra.mxu0 0
        %7250 = vmatprep.subr.bf16.mxu0 0
        %7251 = vmatpush1.bf16.msra.mxu0 0
        %7252 = vmatprep.subr.bf16.mxu0 0
        %7253 = vmatpush1.bf16.msra.mxu0 0
        %7254 = vmatprep.subr.bf16.mxu0 0
        %7255 = vmatpush1.bf16.msra.mxu0 0
        %7256 = vmatprep.subr.bf16.mxu0 0
        %7257 = vmatpush1.bf16.msra.mxu0 0
        %7258 = vmatprep.subr.bf16.mxu0 0
        %7259 = vmatpush1.bf16.msra.mxu0 0
        %7260 = vmatprep.subr.bf16.mxu0 0
        %7261 = vmatpush1.bf16.msra.mxu0 0
        %7262 = vmatprep.subr.bf16.mxu0 0
        %7263 = vmatpush1.bf16.msra.mxu0 0
        %7264 = vmatprep.subr.bf16.mxu0 0
        %7265 = vmatpush1.bf16.msra.mxu0 0
        %7266 = vmatprep.subr.bf16.mxu0 0
        %7267 = vmatpush1.bf16.msra.mxu0 0
        %7268 = vmatprep.subr.bf16.mxu0 0
        %7269 = vmatpush1.bf16.msra.mxu0 0
        %7270 = vmatprep.mubr.bf16.mxu0 0
        %7271 = vmatmul.mubr.bf16.gmra.mrb[0].mxu0 %v7180
        %v7272 = vpop.f32.mrb[0].mxu0
        %v7273 = vadd.f32 %v7155, %v7272
        %v7274 = vpop.f32.mrb[0].mxu0
        %v7275 = vadd.f32 %v7155, %v7274
        %v7276 = vpop.f32.mrb[0].mxu0
        %v7277 = vadd.f32 %v7159, %v7276
        %v7278 = vpop.f32.mrb[0].mxu0
        %v7279 = vadd.f32 %v7159, %v7278
        %7280 = vmatprep.mubr.bf16.mxu0 0
        %7281 = vmatmul.mubr.bf16.gmra.mrb[0].mxu0 %v7183
        %v7282 = vpop.f32.mrb[0].mxu0
        %v7283 = vadd.f32 %v7163, %v7282
        %v7284 = vpop.f32.mrb[0].mxu0
        %v7285 = vadd.f32 %v7163, %v7284
        %v7286 = vpop.f32.mrb[0].mxu0
        %v7287 = vadd.f32 %v7167, %v7286
        %v7288 = vpop.f32.mrb[0].mxu0
        %v7289 = vadd.f32 %v7167, %v7288
        %7290 = vdwg.mxu0
        %v7291 = vadd.f32 %v6967, %v7220
        %v7292 = vadd.f32 %v6968, %v7222
        %v7293 = vadd.f32 %v6969, %v7273
        %v7294 = vadd.f32 %v6970, %v7275
        %v7295 = vadd.f32 %v6971, %v7224
        %v7296 = vadd.f32 %v6972, %v7226
        %v7297 = vadd.f32 %v6973, %v7277
        %v7298 = vadd.f32 %v6974, %v7279
        %v7299 = vadd.f32 %v6975, %v7230
        %v7300 = vadd.f32 %v6976, %v7232
        %v7301 = vadd.f32 %v6977, %v7283
        %v7302 = vadd.f32 %v6978, %v7285
        %v7303 = vadd.f32 %v6979, %v7234
        %v7304 = vadd.f32 %v6980, %v7236
        %v7305 = vadd.f32 %v6981, %v7287
        %v7306 = vadd.f32 %v6982, %v7289
        %v7307 = vmax.f32 %v7291, 0.0
        %v7308 = vmax.f32 %v7292, 0.0
        %v7309 = vmax.f32 %v7293, 0.0
        %v7310 = vmax.f32 %v7294, 0.0
        %v7311 = vmax.f32 %v7295, 0.0
        %v7312 = vmax.f32 %v7296, 0.0
        %v7313 = vmax.f32 %v7297, 0.0
        %v7314 = vmax.f32 %v7298, 0.0
        %v7315 = vmax.f32 %v7299, 0.0
        %v7316 = vmax.f32 %v7300, 0.0
        %v7317 = vmax.f32 %v7301, 0.0
        %v7318 = vmax.f32 %v7302, 0.0
        %v7319 = vmax.f32 %v7303, 0.0
        %v7320 = vmax.f32 %v7304, 0.0
        %v7321 = vmax.f32 %v7305, 0.0
        %v7322 = vmax.f32 %v7306, 0.0
        %7323 = vst [vmem:[%s295] sm:$0xff] %v7307
        %7324 = vst [vmem:[%s295 + $0x8] sm:$0xff] %v7308
        %7325 = vst [vmem:[%s295 + $0x10] sm:$0xff] %v7309
        %7326 = vst [vmem:[%s295 + $0x18] sm:$0xff] %v7310
        %7327 = vst [vmem:[%s295 + $0x20] sm:$0xff] %v7311
        %7328 = vst [vmem:[%s295 + $0x28] sm:$0xff] %v7312
        %7329 = vst [vmem:[%s295 + $0x30] sm:$0xff] %v7313
        %7330 = vst [vmem:[%s295 + $0x38] sm:$0xff] %v7314
        %7331 = vst [vmem:[%s295 + $0x40] sm:$0xff] %v7315
        %7332 = vst [vmem:[%s295 + $0x48] sm:$0xff] %v7316
        %7333 = vst [vmem:[%s295 + $0x50] sm:$0xff] %v7317
        %7334 = vst [vmem:[%s295 + $0x58] sm:$0xff] %v7318
        %7335 = vst [vmem:[%s295 + $0x60] sm:$0xff] %v7319
        %7336 = vst [vmem:[%s295 + $0x68] sm:$0xff] %v7320
        %7337 = vst [vmem:[%s295 + $0x70] sm:$0xff] %v7321
        %7338 = vst [vmem:[%s295 + $0x78] sm:$0xff] %v7322
        %s7339 = sand.u32 %s161, 1
        %s7340 = sand.u32 %s161, 1
        %s7341 = smul.addr %s7340, 128
        %s7342 = scalar_lea.vmem [#allocation3], %s7341
        // Predicated region
        $region68: #{pos_extraction.1} parent=62 // pred_check
          %p7343 = pneg %p171
        $region69: #{pos_extraction.1} parent=62 // pred_check_branch
          %7345 = sbr.rel (%p7343) target = $region71
        $region70: #{pos_extraction.1} parent=62 // pred_region
          %s7346 = smul.u32 4, %s17
          %s7347 = smul.addr %s7346, 8
          %s7348 = scalar_lea.vmem %s6, %s7347
          // Predicated region
          $region72: #{pos_extraction.1} parent=70 // pred_check
            _
          $region73: #{pos_extraction.1} parent=70 // pred_check_branch
            %7350 = sbr.rel (0) target = $region75
          $region74: #{pos_extraction.1} parent=70 // pred_region
            // Predicated region
            $region76: #{pos_extraction.1} parent=74 // pred_check
              _
            $region77: #{pos_extraction.1} parent=74 // pred_check_branch
              %7352 = sbr.rel (0) target = $region79
            $region78: #{pos_extraction.1} parent=74 // pred_region
              loop: start=0, step=1, limit=1
              $region80: #{pos_extraction.1} parent=78 // loop_pre_header
                _
              $region81: #{pos_extraction.1} parent=78 // loop_header
                %s7354 = sphi 0, %s7358
                %p7355 = scmp.ge.s32.totalorder %s7354, 1
                %s7359 = sphi %s7342, %s7342
                %s7360 = sphi %s7348, %s7348
              $region82: #{pos_extraction.1} parent=78 // loop_header_branch
                %7357 = sbr.rel (%p7355) target = $region86
              $region83: #{pos_extraction.1} parent=78 // loop_body
                %v7361 = vld [vmem:[%s7359] sm:$0xff]
                %7362 = vst [vmem:[%s7360] sm:$0xff] %v7361
                %v7363 = vld [vmem:[%s7359 + $0x8] sm:$0xff]
                %7364 = vst [vmem:[%s7360 + $0x8] sm:$0xff] %v7363
                %v7365 = vld [vmem:[%s7359 + $0x10] sm:$0xff]
                %7366 = vst [vmem:[%s7360 + $0x10] sm:$0xff] %v7365
                %v7367 = vld [vmem:[%s7359 + $0x18] sm:$0xff]
                %7368 = vst [vmem:[%s7360 + $0x18] sm:$0xff] %v7367
                %v7369 = vld [vmem:[%s7359 + $0x20] sm:$0xff]
                %7370 = vst [vmem:[%s7360 + $0x40] sm:$0xff] %v7369
                %v7371 = vld [vmem:[%s7359 + $0x28] sm:$0xff]
                %7372 = vst [vmem:[%s7360 + $0x48] sm:$0xff] %v7371
                %v7373 = vld [vmem:[%s7359 + $0x30] sm:$0xff]
                %7374 = vst [vmem:[%s7360 + $0x50] sm:$0xff] %v7373
                %v7375 = vld [vmem:[%s7359 + $0x38] sm:$0xff]
                %7376 = vst [vmem:[%s7360 + $0x58] sm:$0xff] %v7375
                %v7377 = vld [vmem:[%s7359 + $0x40] sm:$0xff]
                %7378 = vst [vmem:[%s7360 + $0x80] sm:$0xff] %v7377
                %v7379 = vld [vmem:[%s7359 + $0x48] sm:$0xff]
                %7380 = vst [vmem:[%s7360 + $0x88] sm:$0xff] %v7379
                %v7381 = vld [vmem:[%s7359 + $0x50] sm:$0xff]
                %7382 = vst [vmem:[%s7360 + $0x90] sm:$0xff] %v7381
                %v7383 = vld [vmem:[%s7359 + $0x58] sm:$0xff]
                %7384 = vst [vmem:[%s7360 + $0x98] sm:$0xff] %v7383
                %v7385 = vld [vmem:[%s7359 + $0x60] sm:$0xff]
                %7386 = vst [vmem:[%s7360 + $0xc0] sm:$0xff] %v7385
                %v7387 = vld [vmem:[%s7359 + $0x68] sm:$0xff]
                %7388 = vst [vmem:[%s7360 + $0xc8] sm:$0xff] %v7387
                %v7389 = vld [vmem:[%s7359 + $0x70] sm:$0xff]
                %7390 = vst [vmem:[%s7360 + $0xd0] sm:$0xff] %v7389
                %v7391 = vld [vmem:[%s7359 + $0x78] sm:$0xff]
                %7392 = vst [vmem:[%s7360 + $0xd8] sm:$0xff] %v7391
              $region84: #{pos_extraction.1} parent=78 // loop_footer
                %s7358 = sadd.s32 1, %s7354
              $region85: #{pos_extraction.1} parent=78 // loop_footer_branch
                %7353 = sbr.rel target = $region81
              $region86: #{pos_extraction.1} parent=78 // loop_exit
                _
            $region79: #{pos_extraction.1} parent=74 // pred_fallthru
              _
            // Predicated region
            $region87: #{pos_extraction.1} parent=74 // pred_check
              _
            $region88: #{pos_extraction.1} parent=74 // pred_check_branch
              %7394 = sbr.rel target = $region90
            $region89: #{pos_extraction.1} parent=74 // pred_region
              _
            $region90: #{pos_extraction.1} parent=74 // pred_fallthru
              _
          $region75: #{pos_extraction.1} parent=70 // pred_fallthru
            _
          %7395 = vnop
        $region71: #{pos_extraction.1} parent=62 // pred_fallthru
          _
      $region63: #{pos_extraction.1} parent=5 // pred_fallthru
        _
      %p7396 = scmp.le.s32.totalorder 2, %s12
      // Predicated region
      $region91: #{pos_extraction.1} parent=5 // pred_check
        %p7397 = pneg %p7396
      $region92: #{pos_extraction.1} parent=5 // pred_check_branch
        %7399 = sbr.rel (%p7397) target = $region94
      $region93: #{pos_extraction.1} parent=5 // pred_region
        %s7400 = ssub.s32 %s12, 2
        // Predicated region
        $region95: #{pos_extraction.1} parent=93 // pred_check
          %p7401 = pneg %p177
        $region96: #{pos_extraction.1} parent=93 // pred_check_branch
          %7403 = sbr.rel (%p7401) target = $region98
        $region97: #{pos_extraction.1} parent=93 // pred_region
          %s7404 = sand.u32 %s162, 1
          %s7405 = sand.u32 %s162, 1
          %s7406 = smul.addr %s7405, 128
          %s7407 = scalar_lea.vmem [#allocation3], %s7406
        $region98: #{pos_extraction.1} parent=93 // pred_fallthru
          _
      $region94: #{pos_extraction.1} parent=5 // pred_fallthru
        _
    $region6: #{pos_extraction.1} parent=1 // loop_footer
      %s16 = sadd.s32 1, %s12
    $region7: #{pos_extraction.1} parent=1 // loop_footer_branch
      %11 = sbr.rel target = $region3
    $region8: #{pos_extraction.1} parent=1 // loop_exit
      _

</llo_original>
